<compile_context>
chip_gen: v5e
topology: v5e:2x2
jax: 0.10.0
libtpu: 0.0.40
codegen_flags: <defaults>
</compile_context>

<pallas_src>
import jax
import jax.numpy as jnp
from jax import lax
from jax.experimental import pallas as pl
from jax.experimental.pallas import tpu as pltpu


_VMEM_LIMIT_BYTES = 32 * 1024 * 1024   # explicit: v5e scoped default is only 16 MiB
_VMEM_TILE_BUDGET = 20 * 1024 * 1024   # per-step working-set budget used to size TB
_MIN_GRID_STEPS = 4                    # keep prefetch/writeback pipeline non-degenerate


def _basic_block_kernel(x_ref, w1_ref, w2_ref, s1_ref, b1_ref, s2_ref, b2_ref,
                        o_ref, pad_ref):
    """Fused conv3x3+bn1+relu -> conv3x3+bn2 -> +identity -> relu for TB images.

    x_ref  : (TB, H+2, W+2, C)  zero-padded NHWC input block (compute dtype)
    w*_ref : (9, C, C)          conv weights, tap-major (kh*3+kw) (compute dtype)
    s*/b*  : (TB, 1, C)         per-image folded BN scale / bias (f32)
    o_ref  : (TB, H*W, C)       output block (f32)
    pad_ref: VMEM (TB, H+2, W+2, C)  conv2 padded-activation scratch (compute dtype)
    """
    TB, Hp, Wp, C = x_ref.shape
    H, W = Hp - 2, Wp - 2
    M = TB * H * W

    def conv3x3(src_ref, w_ref):
        # Shifted-window formulation: 9 accumulating matmuls with K = C and a
        # single f32 accumulator; no materialized im2col matrix.
        # TODO(synk): chunk M (lax.fori_loop, unroll=True) at very large TB so
        #             the MXU of chunk i+1 overlaps the VPU epilogue of chunk i.
        acc = None
        for t in range(9):
            kh, kw = divmod(t, 3)
            patch = src_ref[:, kh:kh + H, kw:kw + W, :].reshape(M, C)
            part = jnp.dot(patch, w_ref[t], preferred_element_type=jnp.float32)
            acc = part if acc is None else acc + part
        return acc.reshape(TB, H * W, C)

    # ---- conv1 (reads the pre-padded input block directly) + bn1 + relu -----
    y1 = jnp.maximum(conv3x3(x_ref, w1_ref) * s1_ref[...] + b1_ref[...], 0.0)

    # conv1's epilogue store IS conv2's padded input.  Refresh only the
    # 1-pixel zero border (cheap, megacore-safe), then write the interior.
    zrow = jnp.zeros((TB, 1, Wp, C), pad_ref.dtype)
    zcol = jnp.zeros((TB, Hp, 1, C), pad_ref.dtype)
    pad_ref[:, 0:1, :, :] = zrow
    pad_ref[:, Hp - 1:Hp, :, :] = zrow
    pad_ref[:, :, 0:1, :] = zcol
    pad_ref[:, :, Wp - 1:Wp, :] = zcol
    pad_ref[:, 1:1 + H, 1:1 + W, :] = (
        y1.reshape(TB, H, W, C).astype(pad_ref.dtype))

    # ---- conv2 + bn2 + identity residual + relu ------------------------------
    y2 = conv3x3(pad_ref, w2_ref) * s2_ref[...] + b2_ref[...]
    identity = x_ref[:, 1:1 + H, 1:1 + W, :].reshape(TB, H * W, C)
    # TODO(synk): for C < 128 a lane-dense (TB, H*W*C) store layout would avoid
    #             masked vst; requires a lane-repacking relayout of the matmul
    #             output that is not validated here.
    o_ref[...] = jnp.maximum(y2 + identity.astype(jnp.float32), 0.0
                             ).astype(o_ref.dtype)


def _pick_tile_images(B, H, W, C, in_itemsize, cmp_itemsize, fixed_bytes,
                      budget_bytes, min_steps=_MIN_GRID_STEPS):
    """Largest images-per-step tile that fits the VMEM budget and (if possible)
    still leaves >= min_steps grid steps for the software pipeline."""
    Hp, Wp = H + 2, W + 2
    per_img = (2 * Hp * Wp * C * in_itemsize      # input block, double-buffered
               + 2 * H * W * C * 4                # f32 output block, double-buffered
               + Hp * Wp * C * cmp_itemsize       # conv2 padded-activation scratch
               + 4 * H * W * C * 4)               # f32 accumulator / epilogue temps
    avail = max(budget_bytes - fixed_bytes, per_img)
    divisors = [d for d in range(1, B + 1) if B % d == 0]
    fits = [d for d in divisors if d * per_img <= avail] or [1]
    stepped = [d for d in fits if B // d >= min_steps]
    return max(stepped) if stepped else max(fits)


def basic_block_forward(xs, params, eps=1e-5, compute_dtype=jnp.bfloat16,
                        tile_images=None):
    """xs: list (len = num_parallel) of NCHW f32 arrays.  Returns the same."""
    w1, w2 = params["w1"], params["w2"]
    kh_, kw_, cin, cout = w1.shape
    if (kh_, kw_) != (3, 3) or cin != cout or w2.shape != (3, 3, cout, cout):
        raise NotImplementedError(
            "only the stride=1 / downsample=None BasicBlock "
            "(inplanes == planes, 3x3 kernels) is supported")

    # Fold inference-mode BatchNorm into per-branch scale / bias.
    s1 = params["gamma1"] / jnp.sqrt(params["var1"] + eps)        # (P, C)
    b1 = params["beta1"] - params["mean1"] * s1
    s2 = params["gamma2"] / jnp.sqrt(params["var2"] + eps)
    b2 = params["beta2"] - params["mean2"] * s2

    P = len(xs)
    N, C, H, W = xs[0].shape
    assert C == cin
    B = P * N                                   # branch axis folded into batch
    Hp, Wp = H + 2, W + 2

    # NCHW per branch -> one (B, H+2, W+2, C) zero-padded NHWC batch, already
    # in the compute dtype (halves input DMA bytes on the bf16 path; the
    # residual is then the compute-dtype identity, covered by the tolerance).
    x = jnp.stack(xs, axis=0)                           # (P, N, C, H, W)
    x = jnp.transpose(x, (0, 1, 3, 4, 2))               # (P, N, H, W, C)
    x = x.reshape(B, H, W, C).astype(compute_dtype)
    x = jnp.pad(x, ((0, 0), (1, 1), (1, 1), (0, 0)))

    # Per-image (= branch-repeated) folded BN params, shaped for broadcast.
    def per_image(v):
        return jnp.repeat(v.astype(jnp.float32), N, axis=0).reshape(B, 1, cout)
    s1r, b1r, s2r, b2r = (per_image(v) for v in (s1, b1, s2, b2))

    # Shared conv weights, tap-major (kh*3+kw, Cin, Cout), pre-cast once.
    w1f = w1.astype(compute_dtype).reshape(9, cin, cout)
    w2f = w2.astype(compute_dtype).reshape(9, cout, cout)

    in_isz = jnp.dtype(compute_dtype).itemsize
    fixed_bytes = 2 * 2 * 9 * cin * cout * in_isz + 4 * B * cout * 4
    if tile_images is None:
        tile_images = _pick_tile_images(B, H, W, C, in_isz, in_isz,
                                        fixed_bytes, _VMEM_TILE_BUDGET)
    TB = tile_images
    assert B % TB == 0, "tile_images must divide num_parallel * batch"
    # Note: B // TB == 1 is correct but defeats pipelining / megacore sharding.
    # TODO(synk): for very large images additionally tile H with a 1-row halo
    #             (manual DMA) so a single image's working set fits VMEM.

    out = pl.pallas_call(
        _basic_block_kernel,
        out_shape=jax.ShapeDtypeStruct((B, H * W, cout), jnp.float32),
        grid_spec=pltpu.PrefetchScalarGridSpec(
            num_scalar_prefetch=0,
            grid=(B // TB,),
            in_specs=[
                pl.BlockSpec((TB, Hp, Wp, C), lambda i: (i, 0, 0, 0)),
                # TODO(synk): single-buffer these constant weight blocks
                # (pipeline_mode=pl.Buffered(1)) once validated on all targets.
                pl.BlockSpec((9, cin, cout), lambda i: (0, 0, 0)),
                pl.BlockSpec((9, cout, cout), lambda i: (0, 0, 0)),
                pl.BlockSpec((TB, 1, cout), lambda i: (i, 0, 0)),
                pl.BlockSpec((TB, 1, cout), lambda i: (i, 0, 0)),
                pl.BlockSpec((TB, 1, cout), lambda i: (i, 0, 0)),
                pl.BlockSpec((TB, 1, cout), lambda i: (i, 0, 0)),
            ],
            out_specs=pl.BlockSpec((TB, H * W, cout), lambda i: (i, 0, 0)),
            scratch_shapes=[
                pltpu.VMEM((TB, Hp, Wp, cout), compute_dtype),   # conv2 padded act
            ],
        ),
        compiler_params=pltpu.CompilerParams(
            dimension_semantics=("parallel",),
            vmem_limit_bytes=_VMEM_LIMIT_BYTES),
    )(x, w1f, w2f, s1r, b1r, s2r, b2r)

    out = out.reshape(P, N, H, W, cout)
    out = jnp.transpose(out, (0, 1, 4, 2, 3))           # (P, N, C, H, W)
    return [out[p] for p in range(P)]


def _reference_forward(xs, params, eps=1e-5, compute_dtype=jnp.float32):
    """Plain-JAX reference mirroring the PyTorch forward.

    compute_dtype controls the conv-operand (and identity) precision, matching
    the kernel's contract: f32 = exact PyTorch semantics, bf16 = bf16 operands
    with f32 accumulation.
    """
    s1 = params["gamma1"] / jnp.sqrt(params["var1"] + eps)
    b1 = params["beta1"] - params["mean1"] * s1
    s2 = params["gamma2"] / jnp.sqrt(params["var2"] + eps)
    b2 = params["beta2"] - params["mean2"] * s2
    dn = ("NHWC", "HWIO", "NHWC")
    w1 = params["w1"].astype(compute_dtype)
    w2 = params["w2"].astype(compute_dtype)
    outs = []
    for p, x in enumerate(xs):
        xh = jnp.transpose(x, (0, 2, 3, 1)).astype(compute_dtype)
        y = lax.conv_general_dilated(xh, w1, (1, 1), [(1, 1), (1, 1)],
                                     dimension_numbers=dn,
                                     preferred_element_type=jnp.float32,
                                     precision="highest")
        y = jnp.maximum(y * s1[p] + b1[p], 0.0)
        y = lax.conv_general_dilated(y.astype(compute_dtype), w2, (1, 1),
                                     [(1, 1), (1, 1)], dimension_numbers=dn,
                                     preferred_element_type=jnp.float32,
                                     precision="highest")
        y = y * s2[p] + b2[p]
        y = jnp.maximum(y + xh.astype(jnp.float32), 0.0)
        outs.append(jnp.transpose(y, (0, 3, 1, 2)))
    return outs


if __name__ == "__main__":
    key = jax.random.PRNGKey(0)
    num_parallel = 5
    N, C, H, W = 2, 4, 16, 16               # inplanes == planes (stride-1 block)
    planes = C

    keys = jax.random.split(key, 16)
    xs = [jax.random.normal(keys[i], (N, C, H, W), jnp.float32)
          for i in range(num_parallel)]

    params = dict(
        w1=jax.random.normal(keys[5], (3, 3, C, planes), jnp.float32) * 0.2,
        w2=jax.random.normal(keys[6], (3, 3, planes, planes), jnp.float32) * 0.2,
        gamma1=jax.random.uniform(keys[7], (num_parallel, planes),
                                  minval=0.5, maxval=1.5),
        beta1=jax.random.normal(keys[8], (num_parallel, planes)) * 0.1,
        mean1=jax.random.normal(keys[9], (num_parallel, planes)) * 0.1,
        var1=jax.random.uniform(keys[10], (num_parallel, planes),
                                minval=0.5, maxval=1.5),
        gamma2=jax.random.uniform(keys[11], (num_parallel, planes),
                                  minval=0.5, maxval=1.5),
        beta2=jax.random.normal(keys[12], (num_parallel, planes)) * 0.1,
        mean2=jax.random.normal(keys[13], (num_parallel, planes)) * 0.1,
        var2=jax.random.uniform(keys[14], (num_parallel, planes),
                                minval=0.5, maxval=1.5),
    )

    # 1) Numerical-fidelity check: f32 compute path vs the plain-JAX f32
    #    reference (PyTorch semantics).  Tolerance leaves headroom for MXU
    #    f32-matmul pass differences vs lax.conv.
    outs_f32 = jax.block_until_ready(
        basic_block_forward(xs, params, compute_dtype=jnp.float32))
    refs_f32 = _reference_forward(xs, params, compute_dtype=jnp.float32)
    for o, r in zip(outs_f32, refs_f32):
        assert o.shape == r.shape and o.dtype == r.dtype
        if not jnp.allclose(o, r, rtol=1e-2, atol=1e-2):
            raise AssertionError("Pallas BasicBlock (f32) mismatch vs reference")

    # 2) Performance default: bf16 matmul operands / f32 accumulation, checked
    #    against a reference with the same precision contract.
    outs = jax.block_until_ready(basic_block_forward(xs, params))
    refs_bf16 = _reference_forward(xs, params, compute_dtype=jnp.bfloat16)
    for o, r in zip(outs, refs_bf16):
        assert o.shape == r.shape and o.dtype == r.dtype
        if not jnp.allclose(o, r, rtol=3e-2, atol=3e-2):
            raise AssertionError("Pallas BasicBlock (bf16) mismatch vs reference")

    print("KERNEL_OK")
</pallas_src>

<mosaic_0001>
module attributes {stable_mosaic.version = 11 : i64} {
  func.func @_basic_block_kernel(%arg0: i32, %arg1: memref<2x18x18x4xf32, #tpu.memory_space<vmem>>, %arg2: memref<9x4x4xf32, #tpu.memory_space<vmem>>, %arg3: memref<9x4x4xf32, #tpu.memory_space<vmem>>, %arg4: memref<2x1x4xf32, #tpu.memory_space<vmem>>, %arg5: memref<2x1x4xf32, #tpu.memory_space<vmem>>, %arg6: memref<2x1x4xf32, #tpu.memory_space<vmem>>, %arg7: memref<2x1x4xf32, #tpu.memory_space<vmem>>, %arg8: memref<2x256x4xf32, #tpu.memory_space<vmem>>, %arg9: memref<2x18x18x4xf32, #tpu.memory_space<vmem>>) attributes {dimension_semantics = [#tpu.dimension_semantics<parallel>], iteration_bounds = array<i64: 5>, scalar_prefetch = 0 : i64, scratch_operands = 1 : i64, tpu.core_type = #tpu.core_type<tc>, window_params = [{transform_indices = @transform_0, window_bounds = array<i64: 2, 18, 18, 4>}, {pipeline_mode = #tpu.pipeline_mode<synchronous>, transform_indices = @transform_1, window_bounds = array<i64: 9, 4, 4>}, {pipeline_mode = #tpu.pipeline_mode<synchronous>, transform_indices = @transform_2, window_bounds = array<i64: 9, 4, 4>}, {transform_indices = @transform_3, window_bounds = array<i64: 2, 1, 4>}, {transform_indices = @transform_4, window_bounds = array<i64: 2, 1, 4>}, {transform_indices = @transform_5, window_bounds = array<i64: 2, 1, 4>}, {transform_indices = @transform_6, window_bounds = array<i64: 2, 1, 4>}, {transform_indices = @transform_7, window_bounds = array<i64: 2, 256, 4>}]} {
    %c0 = arith.constant 0 : index
    %c0_0 = arith.constant 0 : index
    %c0_1 = arith.constant 0 : index
    %c0_2 = arith.constant 0 : index
    %0 = vector.load %arg1[%c0, %c0_0, %c0_1, %c0_2] : memref<2x18x18x4xf32, #tpu.memory_space<vmem>>, vector<2x16x16x4xf32>
    %1 = vector.shape_cast %0 : vector<2x16x16x4xf32> to vector<512x4xf32>
    %c0_3 = arith.constant 0 : index
    %c0_4 = arith.constant 0 : index
    %c0_5 = arith.constant 0 : index
    %2 = vector.load %arg2[%c0_3, %c0_4, %c0_5] : memref<9x4x4xf32, #tpu.memory_space<vmem>>, vector<1x4x4xf32>
    %3 = vector.shape_cast %2 : vector<1x4x4xf32> to vector<4x4xf32>
    %cst = arith.constant dense<0.000000e+00> : vector<512x4xf32>
    %4 = tpu.matmul %1, %3, %cst {dimension_numbers = #tpu.dot_dimension_numbers<[1], [0], [0], [1], [0, 0, 1, 1], [], []>} : vector<512x4xf32>, vector<4x4xf32>, vector<512x4xf32> -> vector<512x4xf32>
    %c0_6 = arith.constant 0 : index
    %c0_7 = arith.constant 0 : index
    %c1 = arith.constant 1 : index
    %c0_8 = arith.constant 0 : index
    %5 = vector.load %arg1[%c0_6, %c0_7, %c1, %c0_8] : memref<2x18x18x4xf32, #tpu.memory_space<vmem>>, vector<2x16x16x4xf32>
    %6 = vector.shape_cast %5 : vector<2x16x16x4xf32> to vector<512x4xf32>
    %c1_9 = arith.constant 1 : index
    %c0_10 = arith.constant 0 : index
    %c0_11 = arith.constant 0 : index
    %7 = vector.load %arg2[%c1_9, %c0_10, %c0_11] : memref<9x4x4xf32, #tpu.memory_space<vmem>>, vector<1x4x4xf32>
    %8 = vector.shape_cast %7 : vector<1x4x4xf32> to vector<4x4xf32>
    %cst_12 = arith.constant dense<0.000000e+00> : vector<512x4xf32>
    %9 = tpu.matmul %6, %8, %cst_12 {dimension_numbers = #tpu.dot_dimension_numbers<[1], [0], [0], [1], [0, 0, 1, 1], [], []>} : vector<512x4xf32>, vector<4x4xf32>, vector<512x4xf32> -> vector<512x4xf32>
    %10 = arith.addf %4, %9 : vector<512x4xf32>
    %c0_13 = arith.constant 0 : index
    %c0_14 = arith.constant 0 : index
    %c2 = arith.constant 2 : index
    %c0_15 = arith.constant 0 : index
    %11 = vector.load %arg1[%c0_13, %c0_14, %c2, %c0_15] : memref<2x18x18x4xf32, #tpu.memory_space<vmem>>, vector<2x16x16x4xf32>
    %12 = vector.shape_cast %11 : vector<2x16x16x4xf32> to vector<512x4xf32>
    %c2_16 = arith.constant 2 : index
    %c0_17 = arith.constant 0 : index
    %c0_18 = arith.constant 0 : index
    %13 = vector.load %arg2[%c2_16, %c0_17, %c0_18] : memref<9x4x4xf32, #tpu.memory_space<vmem>>, vector<1x4x4xf32>
    %14 = vector.shape_cast %13 : vector<1x4x4xf32> to vector<4x4xf32>
    %cst_19 = arith.constant dense<0.000000e+00> : vector<512x4xf32>
    %15 = tpu.matmul %12, %14, %cst_19 {dimension_numbers = #tpu.dot_dimension_numbers<[1], [0], [0], [1], [0, 0, 1, 1], [], []>} : vector<512x4xf32>, vector<4x4xf32>, vector<512x4xf32> -> vector<512x4xf32>
    %16 = arith.addf %10, %15 : vector<512x4xf32>
    %c0_20 = arith.constant 0 : index
    %c1_21 = arith.constant 1 : index
    %c0_22 = arith.constant 0 : index
    %c0_23 = arith.constant 0 : index
    %17 = vector.load %arg1[%c0_20, %c1_21, %c0_22, %c0_23] : memref<2x18x18x4xf32, #tpu.memory_space<vmem>>, vector<2x16x16x4xf32>
    %18 = vector.shape_cast %17 : vector<2x16x16x4xf32> to vector<512x4xf32>
    %c3 = arith.constant 3 : index
    %c0_24 = arith.constant 0 : index
    %c0_25 = arith.constant 0 : index
    %19 = vector.load %arg2[%c3, %c0_24, %c0_25] : memref<9x4x4xf32, #tpu.memory_space<vmem>>, vector<1x4x4xf32>
    %20 = vector.shape_cast %19 : vector<1x4x4xf32> to vector<4x4xf32>
    %cst_26 = arith.constant dense<0.000000e+00> : vector<512x4xf32>
    %21 = tpu.matmul %18, %20, %cst_26 {dimension_numbers = #tpu.dot_dimension_numbers<[1], [0], [0], [1], [0, 0, 1, 1], [], []>} : vector<512x4xf32>, vector<4x4xf32>, vector<512x4xf32> -> vector<512x4xf32>
    %22 = arith.addf %16, %21 : vector<512x4xf32>
    %c0_27 = arith.constant 0 : index
    %c1_28 = arith.constant 1 : index
    %c1_29 = arith.constant 1 : index
    %c0_30 = arith.constant 0 : index
    %23 = vector.load %arg1[%c0_27, %c1_28, %c1_29, %c0_30] : memref<2x18x18x4xf32, #tpu.memory_space<vmem>>, vector<2x16x16x4xf32>
    %24 = vector.shape_cast %23 : vector<2x16x16x4xf32> to vector<512x4xf32>
    %c4 = arith.constant 4 : index
    %c0_31 = arith.constant 0 : index
    %c0_32 = arith.constant 0 : index
    %25 = vector.load %arg2[%c4, %c0_31, %c0_32] : memref<9x4x4xf32, #tpu.memory_space<vmem>>, vector<1x4x4xf32>
    %26 = vector.shape_cast %25 : vector<1x4x4xf32> to vector<4x4xf32>
    %cst_33 = arith.constant dense<0.000000e+00> : vector<512x4xf32>
    %27 = tpu.matmul %24, %26, %cst_33 {dimension_numbers = #tpu.dot_dimension_numbers<[1], [0], [0], [1], [0, 0, 1, 1], [], []>} : vector<512x4xf32>, vector<4x4xf32>, vector<512x4xf32> -> vector<512x4xf32>
    %28 = arith.addf %22, %27 : vector<512x4xf32>
    %c0_34 = arith.constant 0 : index
    %c1_35 = arith.constant 1 : index
    %c2_36 = arith.constant 2 : index
    %c0_37 = arith.constant 0 : index
    %29 = vector.load %arg1[%c0_34, %c1_35, %c2_36, %c0_37] : memref<2x18x18x4xf32, #tpu.memory_space<vmem>>, vector<2x16x16x4xf32>
    %30 = vector.shape_cast %29 : vector<2x16x16x4xf32> to vector<512x4xf32>
    %c5 = arith.constant 5 : index
    %c0_38 = arith.constant 0 : index
    %c0_39 = arith.constant 0 : index
    %31 = vector.load %arg2[%c5, %c0_38, %c0_39] : memref<9x4x4xf32, #tpu.memory_space<vmem>>, vector<1x4x4xf32>
    %32 = vector.shape_cast %31 : vector<1x4x4xf32> to vector<4x4xf32>
    %cst_40 = arith.constant dense<0.000000e+00> : vector<512x4xf32>
    %33 = tpu.matmul %30, %32, %cst_40 {dimension_numbers = #tpu.dot_dimension_numbers<[1], [0], [0], [1], [0, 0, 1, 1], [], []>} : vector<512x4xf32>, vector<4x4xf32>, vector<512x4xf32> -> vector<512x4xf32>
    %34 = arith.addf %28, %33 : vector<512x4xf32>
    %c0_41 = arith.constant 0 : index
    %c2_42 = arith.constant 2 : index
    %c0_43 = arith.constant 0 : index
    %c0_44 = arith.constant 0 : index
    %35 = vector.load %arg1[%c0_41, %c2_42, %c0_43, %c0_44] : memref<2x18x18x4xf32, #tpu.memory_space<vmem>>, vector<2x16x16x4xf32>
    %36 = vector.shape_cast %35 : vector<2x16x16x4xf32> to vector<512x4xf32>
    %c6 = arith.constant 6 : index
    %c0_45 = arith.constant 0 : index
    %c0_46 = arith.constant 0 : index
    %37 = vector.load %arg2[%c6, %c0_45, %c0_46] : memref<9x4x4xf32, #tpu.memory_space<vmem>>, vector<1x4x4xf32>
    %38 = vector.shape_cast %37 : vector<1x4x4xf32> to vector<4x4xf32>
    %cst_47 = arith.constant dense<0.000000e+00> : vector<512x4xf32>
    %39 = tpu.matmul %36, %38, %cst_47 {dimension_numbers = #tpu.dot_dimension_numbers<[1], [0], [0], [1], [0, 0, 1, 1], [], []>} : vector<512x4xf32>, vector<4x4xf32>, vector<512x4xf32> -> vector<512x4xf32>
    %40 = arith.addf %34, %39 : vector<512x4xf32>
    %c0_48 = arith.constant 0 : index
    %c2_49 = arith.constant 2 : index
    %c1_50 = arith.constant 1 : index
    %c0_51 = arith.constant 0 : index
    %41 = vector.load %arg1[%c0_48, %c2_49, %c1_50, %c0_51] : memref<2x18x18x4xf32, #tpu.memory_space<vmem>>, vector<2x16x16x4xf32>
    %42 = vector.shape_cast %41 : vector<2x16x16x4xf32> to vector<512x4xf32>
    %c7 = arith.constant 7 : index
    %c0_52 = arith.constant 0 : index
    %c0_53 = arith.constant 0 : index
    %43 = vector.load %arg2[%c7, %c0_52, %c0_53] : memref<9x4x4xf32, #tpu.memory_space<vmem>>, vector<1x4x4xf32>
    %44 = vector.shape_cast %43 : vector<1x4x4xf32> to vector<4x4xf32>
    %cst_54 = arith.constant dense<0.000000e+00> : vector<512x4xf32>
    %45 = tpu.matmul %42, %44, %cst_54 {dimension_numbers = #tpu.dot_dimension_numbers<[1], [0], [0], [1], [0, 0, 1, 1], [], []>} : vector<512x4xf32>, vector<4x4xf32>, vector<512x4xf32> -> vector<512x4xf32>
    %46 = arith.addf %40, %45 : vector<512x4xf32>
    %c0_55 = arith.constant 0 : index
    %c2_56 = arith.constant 2 : index
    %c2_57 = arith.constant 2 : index
    %c0_58 = arith.constant 0 : index
    %47 = vector.load %arg1[%c0_55, %c2_56, %c2_57, %c0_58] : memref<2x18x18x4xf32, #tpu.memory_space<vmem>>, vector<2x16x16x4xf32>
    %48 = vector.shape_cast %47 : vector<2x16x16x4xf32> to vector<512x4xf32>
    %c8 = arith.constant 8 : index
    %c0_59 = arith.constant 0 : index
    %c0_60 = arith.constant 0 : index
    %49 = vector.load %arg2[%c8, %c0_59, %c0_60] : memref<9x4x4xf32, #tpu.memory_space<vmem>>, vector<1x4x4xf32>
    %50 = vector.shape_cast %49 : vector<1x4x4xf32> to vector<4x4xf32>
    %cst_61 = arith.constant dense<0.000000e+00> : vector<512x4xf32>
    %51 = tpu.matmul %48, %50, %cst_61 {dimension_numbers = #tpu.dot_dimension_numbers<[1], [0], [0], [1], [0, 0, 1, 1], [], []>} : vector<512x4xf32>, vector<4x4xf32>, vector<512x4xf32> -> vector<512x4xf32>
    %52 = arith.addf %46, %51 : vector<512x4xf32>
    %53 = vector.shape_cast %52 : vector<512x4xf32> to vector<2x256x4xf32>
    %c0_62 = arith.constant 0 : index
    %c0_63 = arith.constant 0 : index
    %c0_64 = arith.constant 0 : index
    %54 = vector.load %arg4[%c0_62, %c0_63, %c0_64] : memref<2x1x4xf32, #tpu.memory_space<vmem>>, vector<2x1x4xf32>
    %55 = vector.broadcast %54 : vector<2x1x4xf32> to vector<2x256x4xf32>
    %56 = arith.mulf %53, %55 : vector<2x256x4xf32>
    %c0_65 = arith.constant 0 : index
    %c0_66 = arith.constant 0 : index
    %c0_67 = arith.constant 0 : index
    %57 = vector.load %arg5[%c0_65, %c0_66, %c0_67] : memref<2x1x4xf32, #tpu.memory_space<vmem>>, vector<2x1x4xf32>
    %58 = vector.broadcast %57 : vector<2x1x4xf32> to vector<2x256x4xf32>
    %59 = arith.addf %56, %58 : vector<2x256x4xf32>
    %cst_68 = arith.constant 0.000000e+00 : f32
    %60 = vector.broadcast %cst_68 : f32 to vector<2x256x4xf32>
    %61 = arith.maximumf %59, %60 : vector<2x256x4xf32>
    %cst_69 = arith.constant 0.000000e+00 : f32
    %62 = vector.broadcast %cst_69 : f32 to vector<2x1x18x4xf32>
    %cst_70 = arith.constant 0.000000e+00 : f32
    %63 = vector.broadcast %cst_70 : f32 to vector<2x18x1x4xf32>
    %c0_71 = arith.constant 0 : index
    %c0_72 = arith.constant 0 : index
    %c0_73 = arith.constant 0 : index
    %c0_74 = arith.constant 0 : index
    %64 = vector.load %arg9[%c0_71, %c0_72, %c0_73, %c0_74] : memref<2x18x18x4xf32, #tpu.memory_space<vmem>>, vector<2x1x18x4xf32>
    tpu.vector_store %arg9[%c0_71, %c0_72, %c0_73, %c0_74], %62 {strides = array<i32>} : memref<2x18x18x4xf32, #tpu.memory_space<vmem>>, vector<2x1x18x4xf32>,
    %c0_75 = arith.constant 0 : index
    %c17 = arith.constant 17 : index
    %c0_76 = arith.constant 0 : index
    %c0_77 = arith.constant 0 : index
    %65 = vector.load %arg9[%c0_75, %c17, %c0_76, %c0_77] : memref<2x18x18x4xf32, #tpu.memory_space<vmem>>, vector<2x1x18x4xf32>
    tpu.vector_store %arg9[%c0_75, %c17, %c0_76, %c0_77], %62 {strides = array<i32>} : memref<2x18x18x4xf32, #tpu.memory_space<vmem>>, vector<2x1x18x4xf32>,
    %c0_78 = arith.constant 0 : index
    %c0_79 = arith.constant 0 : index
    %c0_80 = arith.constant 0 : index
    %c0_81 = arith.constant 0 : index
    %66 = vector.load %arg9[%c0_78, %c0_79, %c0_80, %c0_81] : memref<2x18x18x4xf32, #tpu.memory_space<vmem>>, vector<2x18x1x4xf32>
    tpu.vector_store %arg9[%c0_78, %c0_79, %c0_80, %c0_81], %63 {strides = array<i32>} : memref<2x18x18x4xf32, #tpu.memory_space<vmem>>, vector<2x18x1x4xf32>,
    %c0_82 = arith.constant 0 : index
    %c0_83 = arith.constant 0 : index
    %c17_84 = arith.constant 17 : index
    %c0_85 = arith.constant 0 : index
    %67 = vector.load %arg9[%c0_82, %c0_83, %c17_84, %c0_85] : memref<2x18x18x4xf32, #tpu.memory_space<vmem>>, vector<2x18x1x4xf32>
    tpu.vector_store %arg9[%c0_82, %c0_83, %c17_84, %c0_85], %63 {strides = array<i32>} : memref<2x18x18x4xf32, #tpu.memory_space<vmem>>, vector<2x18x1x4xf32>,
    %68 = vector.shape_cast %61 : vector<2x256x4xf32> to vector<2x16x16x4xf32>
    %c0_86 = arith.constant 0 : index
    %c1_87 = arith.constant 1 : index
    %c1_88 = arith.constant 1 : index
    %c0_89 = arith.constant 0 : index
    %69 = vector.load %arg9[%c0_86, %c1_87, %c1_88, %c0_89] : memref<2x18x18x4xf32, #tpu.memory_space<vmem>>, vector<2x16x16x4xf32>
    tpu.vector_store %arg9[%c0_86, %c1_87, %c1_88, %c0_89], %68 {strides = array<i32>} : memref<2x18x18x4xf32, #tpu.memory_space<vmem>>, vector<2x16x16x4xf32>,
    %c0_90 = arith.constant 0 : index
    %c0_91 = arith.constant 0 : index
    %c0_92 = arith.constant 0 : index
    %c0_93 = arith.constant 0 : index
    %70 = vector.load %arg9[%c0_90, %c0_91, %c0_92, %c0_93] : memref<2x18x18x4xf32, #tpu.memory_space<vmem>>, vector<2x16x16x4xf32>
    %71 = vector.shape_cast %70 : vector<2x16x16x4xf32> to vector<512x4xf32>
    %c0_94 = arith.constant 0 : index
    %c0_95 = arith.constant 0 : index
    %c0_96 = arith.constant 0 : index
    %72 = vector.load %arg3[%c0_94, %c0_95, %c0_96] : memref<9x4x4xf32, #tpu.memory_space<vmem>>, vector<1x4x4xf32>
    %73 = vector.shape_cast %72 : vector<1x4x4xf32> to vector<4x4xf32>
    %cst_97 = arith.constant dense<0.000000e+00> : vector<512x4xf32>
    %74 = tpu.matmul %71, %73, %cst_97 {dimension_numbers = #tpu.dot_dimension_numbers<[1], [0], [0], [1], [0, 0, 1, 1], [], []>} : vector<512x4xf32>, vector<4x4xf32>, vector<512x4xf32> -> vector<512x4xf32>
    %c0_98 = arith.constant 0 : index
    %c0_99 = arith.constant 0 : index
    %c1_100 = arith.constant 1 : index
    %c0_101 = arith.constant 0 : index
    %75 = vector.load %arg9[%c0_98, %c0_99, %c1_100, %c0_101] : memref<2x18x18x4xf32, #tpu.memory_space<vmem>>, vector<2x16x16x4xf32>
    %76 = vector.shape_cast %75 : vector<2x16x16x4xf32> to vector<512x4xf32>
    %c1_102 = arith.constant 1 : index
    %c0_103 = arith.constant 0 : index
    %c0_104 = arith.constant 0 : index
    %77 = vector.load %arg3[%c1_102, %c0_103, %c0_104] : memref<9x4x4xf32, #tpu.memory_space<vmem>>, vector<1x4x4xf32>
    %78 = vector.shape_cast %77 : vector<1x4x4xf32> to vector<4x4xf32>
    %cst_105 = arith.constant dense<0.000000e+00> : vector<512x4xf32>
    %79 = tpu.matmul %76, %78, %cst_105 {dimension_numbers = #tpu.dot_dimension_numbers<[1], [0], [0], [1], [0, 0, 1, 1], [], []>} : vector<512x4xf32>, vector<4x4xf32>, vector<512x4xf32> -> vector<512x4xf32>
    %80 = arith.addf %74, %79 : vector<512x4xf32>
    %c0_106 = arith.constant 0 : index
    %c0_107 = arith.constant 0 : index
    %c2_108 = arith.constant 2 : index
    %c0_109 = arith.constant 0 : index
    %81 = vector.load %arg9[%c0_106, %c0_107, %c2_108, %c0_109] : memref<2x18x18x4xf32, #tpu.memory_space<vmem>>, vector<2x16x16x4xf32>
    %82 = vector.shape_cast %81 : vector<2x16x16x4xf32> to vector<512x4xf32>
    %c2_110 = arith.constant 2 : index
    %c0_111 = arith.constant 0 : index
    %c0_112 = arith.constant 0 : index
    %83 = vector.load %arg3[%c2_110, %c0_111, %c0_112] : memref<9x4x4xf32, #tpu.memory_space<vmem>>, vector<1x4x4xf32>
    %84 = vector.shape_cast %83 : vector<1x4x4xf32> to vector<4x4xf32>
    %cst_113 = arith.constant dense<0.000000e+00> : vector<512x4xf32>
    %85 = tpu.matmul %82, %84, %cst_113 {dimension_numbers = #tpu.dot_dimension_numbers<[1], [0], [0], [1], [0, 0, 1, 1], [], []>} : vector<512x4xf32>, vector<4x4xf32>, vector<512x4xf32> -> vector<512x4xf32>
    %86 = arith.addf %80, %85 : vector<512x4xf32>
    %c0_114 = arith.constant 0 : index
    %c1_115 = arith.constant 1 : index
    %c0_116 = arith.constant 0 : index
    %c0_117 = arith.constant 0 : index
    %87 = vector.load %arg9[%c0_114, %c1_115, %c0_116, %c0_117] : memref<2x18x18x4xf32, #tpu.memory_space<vmem>>, vector<2x16x16x4xf32>
    %88 = vector.shape_cast %87 : vector<2x16x16x4xf32> to vector<512x4xf32>
    %c3_118 = arith.constant 3 : index
    %c0_119 = arith.constant 0 : index
    %c0_120 = arith.constant 0 : index
    %89 = vector.load %arg3[%c3_118, %c0_119, %c0_120] : memref<9x4x4xf32, #tpu.memory_space<vmem>>, vector<1x4x4xf32>
    %90 = vector.shape_cast %89 : vector<1x4x4xf32> to vector<4x4xf32>
    %cst_121 = arith.constant dense<0.000000e+00> : vector<512x4xf32>
    %91 = tpu.matmul %88, %90, %cst_121 {dimension_numbers = #tpu.dot_dimension_numbers<[1], [0], [0], [1], [0, 0, 1, 1], [], []>} : vector<512x4xf32>, vector<4x4xf32>, vector<512x4xf32> -> vector<512x4xf32>
    %92 = arith.addf %86, %91 : vector<512x4xf32>
    %c0_122 = arith.constant 0 : index
    %c1_123 = arith.constant 1 : index
    %c1_124 = arith.constant 1 : index
    %c0_125 = arith.constant 0 : index
    %93 = vector.load %arg9[%c0_122, %c1_123, %c1_124, %c0_125] : memref<2x18x18x4xf32, #tpu.memory_space<vmem>>, vector<2x16x16x4xf32>
    %94 = vector.shape_cast %93 : vector<2x16x16x4xf32> to vector<512x4xf32>
    %c4_126 = arith.constant 4 : index
    %c0_127 = arith.constant 0 : index
    %c0_128 = arith.constant 0 : index
    %95 = vector.load %arg3[%c4_126, %c0_127, %c0_128] : memref<9x4x4xf32, #tpu.memory_space<vmem>>, vector<1x4x4xf32>
    %96 = vector.shape_cast %95 : vector<1x4x4xf32> to vector<4x4xf32>
    %cst_129 = arith.constant dense<0.000000e+00> : vector<512x4xf32>
    %97 = tpu.matmul %94, %96, %cst_129 {dimension_numbers = #tpu.dot_dimension_numbers<[1], [0], [0], [1], [0, 0, 1, 1], [], []>} : vector<512x4xf32>, vector<4x4xf32>, vector<512x4xf32> -> vector<512x4xf32>
    %98 = arith.addf %92, %97 : vector<512x4xf32>
    %c0_130 = arith.constant 0 : index
    %c1_131 = arith.constant 1 : index
    %c2_132 = arith.constant 2 : index
    %c0_133 = arith.constant 0 : index
    %99 = vector.load %arg9[%c0_130, %c1_131, %c2_132, %c0_133] : memref<2x18x18x4xf32, #tpu.memory_space<vmem>>, vector<2x16x16x4xf32>
    %100 = vector.shape_cast %99 : vector<2x16x16x4xf32> to vector<512x4xf32>
    %c5_134 = arith.constant 5 : index
    %c0_135 = arith.constant 0 : index
    %c0_136 = arith.constant 0 : index
    %101 = vector.load %arg3[%c5_134, %c0_135, %c0_136] : memref<9x4x4xf32, #tpu.memory_space<vmem>>, vector<1x4x4xf32>
    %102 = vector.shape_cast %101 : vector<1x4x4xf32> to vector<4x4xf32>
    %cst_137 = arith.constant dense<0.000000e+00> : vector<512x4xf32>
    %103 = tpu.matmul %100, %102, %cst_137 {dimension_numbers = #tpu.dot_dimension_numbers<[1], [0], [0], [1], [0, 0, 1, 1], [], []>} : vector<512x4xf32>, vector<4x4xf32>, vector<512x4xf32> -> vector<512x4xf32>
    %104 = arith.addf %98, %103 : vector<512x4xf32>
    %c0_138 = arith.constant 0 : index
    %c2_139 = arith.constant 2 : index
    %c0_140 = arith.constant 0 : index
    %c0_141 = arith.constant 0 : index
    %105 = vector.load %arg9[%c0_138, %c2_139, %c0_140, %c0_141] : memref<2x18x18x4xf32, #tpu.memory_space<vmem>>, vector<2x16x16x4xf32>
    %106 = vector.shape_cast %105 : vector<2x16x16x4xf32> to vector<512x4xf32>
    %c6_142 = arith.constant 6 : index
    %c0_143 = arith.constant 0 : index
    %c0_144 = arith.constant 0 : index
    %107 = vector.load %arg3[%c6_142, %c0_143, %c0_144] : memref<9x4x4xf32, #tpu.memory_space<vmem>>, vector<1x4x4xf32>
    %108 = vector.shape_cast %107 : vector<1x4x4xf32> to vector<4x4xf32>
    %cst_145 = arith.constant dense<0.000000e+00> : vector<512x4xf32>
    %109 = tpu.matmul %106, %108, %cst_145 {dimension_numbers = #tpu.dot_dimension_numbers<[1], [0], [0], [1], [0, 0, 1, 1], [], []>} : vector<512x4xf32>, vector<4x4xf32>, vector<512x4xf32> -> vector<512x4xf32>
    %110 = arith.addf %104, %109 : vector<512x4xf32>
    %c0_146 = arith.constant 0 : index
    %c2_147 = arith.constant 2 : index
    %c1_148 = arith.constant 1 : index
    %c0_149 = arith.constant 0 : index
    %111 = vector.load %arg9[%c0_146, %c2_147, %c1_148, %c0_149] : memref<2x18x18x4xf32, #tpu.memory_space<vmem>>, vector<2x16x16x4xf32>
    %112 = vector.shape_cast %111 : vector<2x16x16x4xf32> to vector<512x4xf32>
    %c7_150 = arith.constant 7 : index
    %c0_151 = arith.constant 0 : index
    %c0_152 = arith.constant 0 : index
    %113 = vector.load %arg3[%c7_150, %c0_151, %c0_152] : memref<9x4x4xf32, #tpu.memory_space<vmem>>, vector<1x4x4xf32>
    %114 = vector.shape_cast %113 : vector<1x4x4xf32> to vector<4x4xf32>
    %cst_153 = arith.constant dense<0.000000e+00> : vector<512x4xf32>
    %115 = tpu.matmul %112, %114, %cst_153 {dimension_numbers = #tpu.dot_dimension_numbers<[1], [0], [0], [1], [0, 0, 1, 1], [], []>} : vector<512x4xf32>, vector<4x4xf32>, vector<512x4xf32> -> vector<512x4xf32>
    %116 = arith.addf %110, %115 : vector<512x4xf32>
    %c0_154 = arith.constant 0 : index
    %c2_155 = arith.constant 2 : index
    %c2_156 = arith.constant 2 : index
    %c0_157 = arith.constant 0 : index
    %117 = vector.load %arg9[%c0_154, %c2_155, %c2_156, %c0_157] : memref<2x18x18x4xf32, #tpu.memory_space<vmem>>, vector<2x16x16x4xf32>
    %118 = vector.shape_cast %117 : vector<2x16x16x4xf32> to vector<512x4xf32>
    %c8_158 = arith.constant 8 : index
    %c0_159 = arith.constant 0 : index
    %c0_160 = arith.constant 0 : index
    %119 = vector.load %arg3[%c8_158, %c0_159, %c0_160] : memref<9x4x4xf32, #tpu.memory_space<vmem>>, vector<1x4x4xf32>
    %120 = vector.shape_cast %119 : vector<1x4x4xf32> to vector<4x4xf32>
    %cst_161 = arith.constant dense<0.000000e+00> : vector<512x4xf32>
    %121 = tpu.matmul %118, %120, %cst_161 {dimension_numbers = #tpu.dot_dimension_numbers<[1], [0], [0], [1], [0, 0, 1, 1], [], []>} : vector<512x4xf32>, vector<4x4xf32>, vector<512x4xf32> -> vector<512x4xf32>
    %122 = arith.addf %116, %121 : vector<512x4xf32>
    %123 = vector.shape_cast %122 : vector<512x4xf32> to vector<2x256x4xf32>
    %c0_162 = arith.constant 0 : index
    %c0_163 = arith.constant 0 : index
    %c0_164 = arith.constant 0 : index
    %124 = vector.load %arg6[%c0_162, %c0_163, %c0_164] : memref<2x1x4xf32, #tpu.memory_space<vmem>>, vector<2x1x4xf32>
    %125 = vector.broadcast %124 : vector<2x1x4xf32> to vector<2x256x4xf32>
    %126 = arith.mulf %123, %125 : vector<2x256x4xf32>
    %c0_165 = arith.constant 0 : index
    %c0_166 = arith.constant 0 : index
    %c0_167 = arith.constant 0 : index
    %127 = vector.load %arg7[%c0_165, %c0_166, %c0_167] : memref<2x1x4xf32, #tpu.memory_space<vmem>>, vector<2x1x4xf32>
    %128 = vector.broadcast %127 : vector<2x1x4xf32> to vector<2x256x4xf32>
    %129 = arith.addf %126, %128 : vector<2x256x4xf32>
    %c0_168 = arith.constant 0 : index
    %c1_169 = arith.constant 1 : index
    %c1_170 = arith.constant 1 : index
    %c0_171 = arith.constant 0 : index
    %130 = vector.load %arg1[%c0_168, %c1_169, %c1_170, %c0_171] : memref<2x18x18x4xf32, #tpu.memory_space<vmem>>, vector<2x16x16x4xf32>
    %131 = vector.shape_cast %130 : vector<2x16x16x4xf32> to vector<2x256x4xf32>
    %132 = arith.addf %129, %131 : vector<2x256x4xf32>
    %cst_172 = arith.constant 0.000000e+00 : f32
    %133 = vector.broadcast %cst_172 : f32 to vector<2x256x4xf32>
    %134 = arith.maximumf %132, %133 : vector<2x256x4xf32>
    %c0_173 = arith.constant 0 : index
    %c0_174 = arith.constant 0 : index
    %c0_175 = arith.constant 0 : index
    %135 = vector.load %arg8[%c0_173, %c0_174, %c0_175] : memref<2x256x4xf32, #tpu.memory_space<vmem>>, vector<2x256x4xf32>
    tpu.vector_store %arg8[%c0_173, %c0_174, %c0_175], %134 {strides = array<i32>} : memref<2x256x4xf32, #tpu.memory_space<vmem>>, vector<2x256x4xf32>,
    return
  }
  func.func @transform_0(%arg0: i32) -> (i32, i32, i32, i32) {
    %c0_i32 = arith.constant 0 : i32
    %c0_i32_0 = arith.constant 0 : i32
    %c0_i32_1 = arith.constant 0 : i32
    %c0_i32_2 = arith.constant 0 : i32
    return %arg0, %c0_i32, %c0_i32_0, %c0_i32_1 : i32, i32, i32, i32
  }
  func.func @transform_1(%arg0: i32) -> (i32, i32, i32) {
    %c0_i32 = arith.constant 0 : i32
    %c0_i32_0 = arith.constant 0 : i32
    %c0_i32_1 = arith.constant 0 : i32
    %c0_i32_2 = arith.constant 0 : i32
    return %c0_i32, %c0_i32_0, %c0_i32_1 : i32, i32, i32
  }
  func.func @transform_2(%arg0: i32) -> (i32, i32, i32) {
    %c0_i32 = arith.constant 0 : i32
    %c0_i32_0 = arith.constant 0 : i32
    %c0_i32_1 = arith.constant 0 : i32
    %c0_i32_2 = arith.constant 0 : i32
    return %c0_i32, %c0_i32_0, %c0_i32_1 : i32, i32, i32
  }
  func.func @transform_3(%arg0: i32) -> (i32, i32, i32) {
    %c0_i32 = arith.constant 0 : i32
    %c0_i32_0 = arith.constant 0 : i32
    %c0_i32_1 = arith.constant 0 : i32
    return %arg0, %c0_i32, %c0_i32_0 : i32, i32, i32
  }
  func.func @transform_4(%arg0: i32) -> (i32, i32, i32) {
    %c0_i32 = arith.constant 0 : i32
    %c0_i32_0 = arith.constant 0 : i32
    %c0_i32_1 = arith.constant 0 : i32
    return %arg0, %c0_i32, %c0_i32_0 : i32, i32, i32
  }
  func.func @transform_5(%arg0: i32) -> (i32, i32, i32) {
    %c0_i32 = arith.constant 0 : i32
    %c0_i32_0 = arith.constant 0 : i32
    %c0_i32_1 = arith.constant 0 : i32
    return %arg0, %c0_i32, %c0_i32_0 : i32, i32, i32
  }
  func.func @transform_6(%arg0: i32) -> (i32, i32, i32) {
    %c0_i32 = arith.constant 0 : i32
    %c0_i32_0 = arith.constant 0 : i32
    %c0_i32_1 = arith.constant 0 : i32
    return %arg0, %c0_i32, %c0_i32_0 : i32, i32, i32
  }
  func.func @transform_7(%arg0: i32) -> (i32, i32, i32) {
    %c0_i32 = arith.constant 0 : i32
    %c0_i32_0 = arith.constant 0 : i32
    %c0_i32_1 = arith.constant 0 : i32
    return %arg0, %c0_i32, %c0_i32_0 : i32, i32, i32
  }
}

</mosaic_0001>

<llo_original>
// kernel: tpu_custom_call.1
$region0: #{tpu_custom_call.1}
  #allocation0 [shape = 'u32[]', space=smem, size = 0x4, offset = 0x4, fixed_abs, tag = 'smem constant byte address 0x4 - core index']
  #allocation1 [shape = 'u32[72,128]{1,0:T(1,128)}', space=vmem, size = 0x9000, scoped, tag = 'internal scratch']
  #allocation2 [shape = 'f32[2,18,18,4]{3,2,1,0:T(8,128)}', space=vmem, size = 0x6c000, scoped, tag = 'scratch operand']
  %s0 = inlined_call_operand.vmem [shape: f32[10,18,18,4], index: 0, kind: input, shape index: {}]
  %s1 = inlined_call_operand.vmem [shape: f32[9,4,4], index: 1, kind: input, shape index: {}]
  %s2 = inlined_call_operand.vmem [shape: f32[9,4,4], index: 2, kind: input, shape index: {}]
  %s3 = inlined_call_operand.vmem [shape: f32[10,1,4], index: 3, kind: input, shape index: {}]
  %s4 = inlined_call_operand.vmem [shape: f32[10,1,4], index: 4, kind: input, shape index: {}]
  %s5 = inlined_call_operand.vmem [shape: f32[10,1,4], index: 5, kind: input, shape index: {}]
  %s6 = inlined_call_operand.vmem [shape: f32[10,1,4], index: 6, kind: input, shape index: {}]
  %s7 = inlined_call_operand.vmem [shape: f32[10,256,4], index: 7, kind: output, shape index: {}]
  %s8 = sld [smem:[#allocation0]]
  $region61: #{tpu_custom_call.1} parent=0
    _
  %s10 = ssub.s32 1, %s8
  %s11 = scalar_select 0, %s10, %s8
  loop: start=0, step=1, limit=7
  $region2: #{tpu_custom_call.1} parent=0 // loop_pre_header
    _
  $region3: #{tpu_custom_call.1} parent=0 // loop_header
    %s13 = sphi 0, %s17
    %p14 = scmp.ge.s32.totalorder %s13, 7
    %s23 = sphi 0, %s25
    %s26 = sphi 0, %s23
    %s27 = sphi 0, %s26
    %s43 = sphi 0, %s27
    %s47 = sphi 0, %s47
    %s49 = sphi 0, %s47
    %s50 = sphi 0, %s49
    %s64 = sphi 0, %s50
    %s68 = sphi 0, %s68
    %s70 = sphi 0, %s68
    %s71 = sphi 0, %s70
    %s85 = sphi 0, %s71
    %s91 = sphi 0, %s93
    %s94 = sphi 0, %s91
    %s95 = sphi 0, %s94
    %s111 = sphi 0, %s95
    %s117 = sphi 0, %s119
    %s120 = sphi 0, %s117
    %s121 = sphi 0, %s120
    %s137 = sphi 0, %s121
    %s143 = sphi 0, %s145
    %s146 = sphi 0, %s143
    %s147 = sphi 0, %s146
    %s163 = sphi 0, %s147
    %s169 = sphi 0, %s171
    %s172 = sphi 0, %s169
    %s173 = sphi 0, %s172
    %s189 = sphi 0, %s173
    %s195 = sphi 0, %s197
    %s198 = sphi 0, %s195
    %s199 = sphi 0, %s198
    %s215 = sphi 0, %s199
  $region4: #{tpu_custom_call.1} parent=0 // loop_header_branch
    %16 = sbr.rel (%p14) target = $region8
  $region5: #{tpu_custom_call.1} parent=0 // loop_body
    %s18 = ssub.s32 %s13, 1
    %s19 = ssub.s32 %s13, 2
    %s20 = sadd.s32 %s13, 1
    %s21 = ssub.s32 %s13, %s20
    %p22 = scmp.eq.s32.totalorder %s21, 0
    %s24 = sadd.s32 %s23, 1
    %s25 = scalar_select %p22, %s23, %s24
    %p28 = pneg %p22
    %p29 = scmp.eq.s32.totalorder %s13, 4
    %p30 = por %p28, %p29
    %p31 = scmp.ne.s32.totalorder %s23, %s26
    %p32 = scmp.eq.s32.totalorder %s13, 0
    %p33 = por %p31, %p32
    %p34 = scmp.ne.s32.totalorder %s23, %s26
    %p35 = scmp.eq.s32.totalorder %s18, 4
    %p36 = por %p34, %p35
    %p37 = scmp.ne.s32.totalorder %s26, %s27
    %p38 = scmp.eq.s32.totalorder %s18, 0
    %p39 = por %p37, %p38
    %p40 = scmp.ne.s32.totalorder %s26, %s27
    %p41 = scmp.eq.s32.totalorder %s19, 4
    %p42 = por %p40, %p41
    %p44 = scmp.ne.s32.totalorder %s27, %s43
    %p45 = scmp.eq.s32.totalorder %s19, 0
    %p46 = por %p44, %p45
    %s48 = sadd.s32 %s47, 1
    %p51 = scmp.eq.s32.totalorder %s13, 4
    %p52 = scmp.ne.s32.totalorder %s47, %s49
    %p53 = scmp.eq.s32.totalorder %s13, 0
    %p54 = por %p52, %p53
    %p55 = scmp.ne.s32.totalorder %s47, %s49
    %p56 = scmp.eq.s32.totalorder %s18, 4
    %p57 = por %p55, %p56
    %p58 = scmp.ne.s32.totalorder %s49, %s50
    %p59 = scmp.eq.s32.totalorder %s18, 0
    %p60 = por %p58, %p59
    %p61 = scmp.ne.s32.totalorder %s49, %s50
    %p62 = scmp.eq.s32.totalorder %s19, 4
    %p63 = por %p61, %p62
    %p65 = scmp.ne.s32.totalorder %s50, %s64
    %p66 = scmp.eq.s32.totalorder %s19, 0
    %p67 = por %p65, %p66
    %s69 = sadd.s32 %s68, 1
    %p72 = scmp.eq.s32.totalorder %s13, 4
    %p73 = scmp.ne.s32.totalorder %s68, %s70
    %p74 = scmp.eq.s32.totalorder %s13, 0
    %p75 = por %p73, %p74
    %p76 = scmp.ne.s32.totalorder %s68, %s70
    %p77 = scmp.eq.s32.totalorder %s18, 4
    %p78 = por %p76, %p77
    %p79 = scmp.ne.s32.totalorder %s70, %s71
    %p80 = scmp.eq.s32.totalorder %s18, 0
    %p81 = por %p79, %p80
    %p82 = scmp.ne.s32.totalorder %s70, %s71
    %p83 = scmp.eq.s32.totalorder %s19, 4
    %p84 = por %p82, %p83
    %p86 = scmp.ne.s32.totalorder %s71, %s85
    %p87 = scmp.eq.s32.totalorder %s19, 0
    %p88 = por %p86, %p87
    %s89 = ssub.s32 %s13, %s20
    %p90 = scmp.eq.s32.totalorder %s89, 0
    %s92 = sadd.s32 %s91, 1
    %s93 = scalar_select %p90, %s91, %s92
    %p96 = pneg %p90
    %p97 = scmp.eq.s32.totalorder %s13, 4
    %p98 = por %p96, %p97
    %p99 = scmp.ne.s32.totalorder %s91, %s94
    %p100 = scmp.eq.s32.totalorder %s13, 0
    %p101 = por %p99, %p100
    %p102 = scmp.ne.s32.totalorder %s91, %s94
    %p103 = scmp.eq.s32.totalorder %s18, 4
    %p104 = por %p102, %p103
    %p105 = scmp.ne.s32.totalorder %s94, %s95
    %p106 = scmp.eq.s32.totalorder %s18, 0
    %p107 = por %p105, %p106
    %p108 = scmp.ne.s32.totalorder %s94, %s95
    %p109 = scmp.eq.s32.totalorder %s19, 4
    %p110 = por %p108, %p109
    %p112 = scmp.ne.s32.totalorder %s95, %s111
    %p113 = scmp.eq.s32.totalorder %s19, 0
    %p114 = por %p112, %p113
    %s115 = ssub.s32 %s13, %s20
    %p116 = scmp.eq.s32.totalorder %s115, 0
    %s118 = sadd.s32 %s117, 1
    %s119 = scalar_select %p116, %s117, %s118
    %p122 = pneg %p116
    %p123 = scmp.eq.s32.totalorder %s13, 4
    %p124 = por %p122, %p123
    %p125 = scmp.ne.s32.totalorder %s117, %s120
    %p126 = scmp.eq.s32.totalorder %s13, 0
    %p127 = por %p125, %p126
    %p128 = scmp.ne.s32.totalorder %s117, %s120
    %p129 = scmp.eq.s32.totalorder %s18, 4
    %p130 = por %p128, %p129
    %p131 = scmp.ne.s32.totalorder %s120, %s121
    %p132 = scmp.eq.s32.totalorder %s18, 0
    %p133 = por %p131, %p132
    %p134 = scmp.ne.s32.totalorder %s120, %s121
    %p135 = scmp.eq.s32.totalorder %s19, 4
    %p136 = por %p134, %p135
    %p138 = scmp.ne.s32.totalorder %s121, %s137
    %p139 = scmp.eq.s32.totalorder %s19, 0
    %p140 = por %p138, %p139
    %s141 = ssub.s32 %s13, %s20
    %p142 = scmp.eq.s32.totalorder %s141, 0
    %s144 = sadd.s32 %s143, 1
    %s145 = scalar_select %p142, %s143, %s144
    %p148 = pneg %p142
    %p149 = scmp.eq.s32.totalorder %s13, 4
    %p150 = por %p148, %p149
    %p151 = scmp.ne.s32.totalorder %s143, %s146
    %p152 = scmp.eq.s32.totalorder %s13, 0
    %p153 = por %p151, %p152
    %p154 = scmp.ne.s32.totalorder %s143, %s146
    %p155 = scmp.eq.s32.totalorder %s18, 4
    %p156 = por %p154, %p155
    %p157 = scmp.ne.s32.totalorder %s146, %s147
    %p158 = scmp.eq.s32.totalorder %s18, 0
    %p159 = por %p157, %p158
    %p160 = scmp.ne.s32.totalorder %s146, %s147
    %p161 = scmp.eq.s32.totalorder %s19, 4
    %p162 = por %p160, %p161
    %p164 = scmp.ne.s32.totalorder %s147, %s163
    %p165 = scmp.eq.s32.totalorder %s19, 0
    %p166 = por %p164, %p165
    %s167 = ssub.s32 %s13, %s20
    %p168 = scmp.eq.s32.totalorder %s167, 0
    %s170 = sadd.s32 %s169, 1
    %s171 = scalar_select %p168, %s169, %s170
    %p174 = pneg %p168
    %p175 = scmp.eq.s32.totalorder %s13, 4
    %p176 = por %p174, %p175
    %p177 = scmp.ne.s32.totalorder %s169, %s172
    %p178 = scmp.eq.s32.totalorder %s13, 0
    %p179 = por %p177, %p178
    %p180 = scmp.ne.s32.totalorder %s169, %s172
    %p181 = scmp.eq.s32.totalorder %s18, 4
    %p182 = por %p180, %p181
    %p183 = scmp.ne.s32.totalorder %s172, %s173
    %p184 = scmp.eq.s32.totalorder %s18, 0
    %p185 = por %p183, %p184
    %p186 = scmp.ne.s32.totalorder %s172, %s173
    %p187 = scmp.eq.s32.totalorder %s19, 4
    %p188 = por %p186, %p187
    %p190 = scmp.ne.s32.totalorder %s173, %s189
    %p191 = scmp.eq.s32.totalorder %s19, 0
    %p192 = por %p190, %p191
    %s193 = ssub.s32 %s13, %s20
    %p194 = scmp.eq.s32.totalorder %s193, 0
    %s196 = sadd.s32 %s195, 1
    %s197 = scalar_select %p194, %s195, %s196
    %p200 = pneg %p194
    %p201 = scmp.eq.s32.totalorder %s13, 4
    %p202 = por %p200, %p201
    %p203 = scmp.ne.s32.totalorder %s195, %s198
    %p204 = scmp.eq.s32.totalorder %s13, 0
    %p205 = por %p203, %p204
    %p206 = scmp.ne.s32.totalorder %s195, %s198
    %p207 = scmp.eq.s32.totalorder %s18, 4
    %p208 = por %p206, %p207
    %p209 = scmp.ne.s32.totalorder %s198, %s199
    %p210 = scmp.eq.s32.totalorder %s18, 0
    %p211 = por %p209, %p210
    %p212 = scmp.ne.s32.totalorder %s198, %s199
    %p213 = scmp.eq.s32.totalorder %s19, 4
    %p214 = por %p212, %p213
    %p216 = scmp.ne.s32.totalorder %s199, %s215
    %p217 = scmp.eq.s32.totalorder %s19, 0
    %p218 = por %p216, %p217
    %p219 = scmp.le.s32.totalorder 1, %s13
    %p220 = scmp.lt.s32.totalorder %s13, 6
    %p221 = pnand %p219, %p220
    %p222 = pneg %p221
    // Predicated region
    $region9: #{tpu_custom_call.1} parent=5 // pred_check
      _
    $region10: #{tpu_custom_call.1} parent=5 // pred_check_branch
      %224 = sbr.rel (%p221) target = $region12
    $region11: #{tpu_custom_call.1} parent=5 // pred_region
      %s225 = ssub.s32 %s13, 1
      // Predicated region
      $region13: #{tpu_custom_call.1} parent=11 // pred_check
        %p226 = pneg %p60
      $region14: #{tpu_custom_call.1} parent=11 // pred_check_branch
        %228 = sbr.rel (%p226) target = $region16
      $region15: #{tpu_custom_call.1} parent=11 // pred_region
        _
      $region16: #{tpu_custom_call.1} parent=11 // pred_fallthru
        _
      // Predicated region
      $region17: #{tpu_custom_call.1} parent=11 // pred_check
        %p229 = pneg %p81
      $region18: #{tpu_custom_call.1} parent=11 // pred_check_branch
        %231 = sbr.rel (%p229) target = $region20
      $region19: #{tpu_custom_call.1} parent=11 // pred_region
        _
      $region20: #{tpu_custom_call.1} parent=11 // pred_fallthru
        _
    $region12: #{tpu_custom_call.1} parent=5 // pred_fallthru
      _
    %p232 = scmp.lt.s32.totalorder %s13, 5
    // Predicated region
    $region21: #{tpu_custom_call.1} parent=5 // pred_check
      %p233 = pneg %p232
    $region22: #{tpu_custom_call.1} parent=5 // pred_check_branch
      %235 = sbr.rel (%p233) target = $region24
    $region23: #{tpu_custom_call.1} parent=5 // pred_region
      // Predicated region
      $region25: #{tpu_custom_call.1} parent=23 // pred_check
        %p236 = pneg %p33
      $region26: #{tpu_custom_call.1} parent=23 // pred_check_branch
        %238 = sbr.rel (%p236) target = $region28
      $region27: #{tpu_custom_call.1} parent=23 // pred_region
        %s239 = smul.u32 2, %s13
        %p240 = scmp.lt.s32.totalorder %s239, 9
        %s241 = scalar_select %p240, %s239, 9
        %s242 = smul.addr %s241, 54
        %s243 = smul.addr %s242, 8
        %s244 = scalar_lea.vmem %s0, %s243
        %s245 = smul.u32 2, %s13
      $region28: #{tpu_custom_call.1} parent=23 // pred_fallthru
        _
      // Predicated region
      $region29: #{tpu_custom_call.1} parent=23 // pred_check
        %p246 = pneg %p101
      $region30: #{tpu_custom_call.1} parent=23 // pred_check_branch
        %248 = sbr.rel (%p246) target = $region32
      $region31: #{tpu_custom_call.1} parent=23 // pred_region
        %s249 = smul.u32 2, %s13
        %p250 = scmp.lt.s32.totalorder %s249, 9
        %s251 = scalar_select %p250, %s249, 9
        %s252 = scalar_lea.vmem %s3, %s251
        %s253 = smul.u32 2, %s13
      $region32: #{tpu_custom_call.1} parent=23 // pred_fallthru
        _
      // Predicated region
      $region33: #{tpu_custom_call.1} parent=23 // pred_check
        %p254 = pneg %p127
      $region34: #{tpu_custom_call.1} parent=23 // pred_check_branch
        %256 = sbr.rel (%p254) target = $region36
      $region35: #{tpu_custom_call.1} parent=23 // pred_region
        %s257 = smul.u32 2, %s13
        %p258 = scmp.lt.s32.totalorder %s257, 9
        %s259 = scalar_select %p258, %s257, 9
        %s260 = scalar_lea.vmem %s4, %s259
        %s261 = smul.u32 2, %s13
      $region36: #{tpu_custom_call.1} parent=23 // pred_fallthru
        _
      // Predicated region
      $region37: #{tpu_custom_call.1} parent=23 // pred_check
        %p262 = pneg %p153
      $region38: #{tpu_custom_call.1} parent=23 // pred_check_branch
        %264 = sbr.rel (%p262) target = $region40
      $region39: #{tpu_custom_call.1} parent=23 // pred_region
        %s265 = smul.u32 2, %s13
        %p266 = scmp.lt.s32.totalorder %s265, 9
        %s267 = scalar_select %p266, %s265, 9
        %s268 = scalar_lea.vmem %s5, %s267
        %s269 = smul.u32 2, %s13
      $region40: #{tpu_custom_call.1} parent=23 // pred_fallthru
        _
      // Predicated region
      $region41: #{tpu_custom_call.1} parent=23 // pred_check
        %p270 = pneg %p179
      $region42: #{tpu_custom_call.1} parent=23 // pred_check_branch
        %272 = sbr.rel (%p270) target = $region44
      $region43: #{tpu_custom_call.1} parent=23 // pred_region
        %s273 = smul.u32 2, %s13
        %p274 = scmp.lt.s32.totalorder %s273, 9
        %s275 = scalar_select %p274, %s273, 9
        %s276 = scalar_lea.vmem %s6, %s275
        %s277 = smul.u32 2, %s13
      $region44: #{tpu_custom_call.1} parent=23 // pred_fallthru
        _
    $region24: #{tpu_custom_call.1} parent=5 // pred_fallthru
      _
    %p278 = scmp.le.s32.totalorder 1, %s13
    %p279 = scmp.lt.s32.totalorder %s13, 6
    %p280 = pnand %p278, %p279
    %p281 = pneg %p280
    // Predicated region
    $region45: #{tpu_custom_call.1} parent=5 // pred_check
      _
    $region46: #{tpu_custom_call.1} parent=5 // pred_check_branch
      %283 = sbr.rel (%p280) target = $region48
    $region47: #{tpu_custom_call.1} parent=5 // pred_region
      %s284 = ssub.s32 %s13, 1
      %s285 = smul.u32 2, %s18
      %p286 = scmp.lt.s32.totalorder %s285, 9
      %s287 = scalar_select %p286, %s285, 9
      %s288 = smul.addr %s287, 54
      %s289 = smul.addr %s288, 8
      %s290 = scalar_lea.vmem %s0, %s289
      %p291 = pneg %p39
      %p292 = pneg %p36
      %p293 = pneg %p60
      %p294 = pneg %p57
      %p295 = pneg %p81
      %p296 = pneg %p78
      %s297 = smul.u32 2, %s18
      %p298 = scmp.lt.s32.totalorder %s297, 9
      %s299 = scalar_select %p298, %s297, 9
      %s300 = scalar_lea.vmem %s3, %s299
      %p301 = pneg %p107
      %p302 = pneg %p104
      %s303 = smul.u32 2, %s18
      %p304 = scmp.lt.s32.totalorder %s303, 9
      %s305 = scalar_select %p304, %s303, 9
      %s306 = scalar_lea.vmem %s4, %s305
      %p307 = pneg %p133
      %p308 = pneg %p130
      %s309 = smul.u32 2, %s18
      %p310 = scmp.lt.s32.totalorder %s309, 9
      %s311 = scalar_select %p310, %s309, 9
      %s312 = scalar_lea.vmem %s5, %s311
      %p313 = pneg %p159
      %p314 = pneg %p156
      %s315 = smul.u32 2, %s18
      %p316 = scmp.lt.s32.totalorder %s315, 9
      %s317 = scalar_select %p316, %s315, 9
      %s318 = scalar_lea.vmem %s6, %s317
      %p319 = pneg %p185
      %p320 = pneg %p182
      %p321 = pneg %p211
      %p322 = pneg %p208
      %s323 = smul.u32 2, %s18
      %p324 = scmp.lt.s32.totalorder %s323, 9
      %s325 = scalar_select %p324, %s323, 9
      %s326 = smul.addr %s325, 32
      %s327 = smul.addr %s326, 8
      %s328 = scalar_lea.vmem %s7, %s327
      %s329 = smul.u32 2, %s18
      %p330 = scmp.lt.s32.totalorder %s329, 9
      %s331 = scalar_select %p330, %s329, 9
      %s332 = smul.addr %s331, 54
      %s333 = smul.addr %s332, 8
      %s334 = scalar_lea.vmem %s0, %s333
      %s335 = smul.u32 2, %s18
      %s336 = smul.u32 2, %s18
      %p337 = scmp.lt.s32.totalorder %s336, 9
      %s338 = scalar_select %p337, %s336, 9
      %s339 = scalar_lea.vmem %s3, %s338
      %s340 = smul.u32 2, %s18
      %s341 = smul.u32 2, %s18
      %p342 = scmp.lt.s32.totalorder %s341, 9
      %s343 = scalar_select %p342, %s341, 9
      %s344 = scalar_lea.vmem %s4, %s343
      %s345 = smul.u32 2, %s18
      %s346 = smul.u32 2, %s18
      %p347 = scmp.lt.s32.totalorder %s346, 9
      %s348 = scalar_select %p347, %s346, 9
      %s349 = scalar_lea.vmem %s5, %s348
      %s350 = smul.u32 2, %s18
      %s351 = smul.u32 2, %s18
      %p352 = scmp.lt.s32.totalorder %s351, 9
      %s353 = scalar_select %p352, %s351, 9
      %s354 = scalar_lea.vmem %s6, %s353
      %s355 = smul.u32 2, %s18
      %s356 = smul.u32 2, %s18
      %p357 = scmp.lt.s32.totalorder %s356, 9
      %s358 = scalar_select %p357, %s356, 9
      %s359 = smul.addr %s358, 32
      %s360 = smul.addr %s359, 8
      %s361 = scalar_lea.vmem %s7, %s360
      %s362 = smul.u32 2, %s18
      %v363 = vld [vmem:[%s334] sm:$0xff]
      %v364 = vld [vmem:[%s334 + $0x8] sm:$0xff]
      %v365 = vld [vmem:[%s334 + $0x18] sm:$0xff]
      %v366 = vld [vmem:[%s334 + $0x20] sm:$0xff]
      %v367 = vld [vmem:[%s334 + $0x30] sm:$0xff]
      %v368 = vld [vmem:[%s334 + $0x38] sm:$0xff]
      %v369 = vld [vmem:[%s334 + $0x48] sm:$0xff]
      %v370 = vld [vmem:[%s334 + $0x50] sm:$0xff]
      %v371 = vld [vmem:[%s334 + $0x60] sm:$0xff]
      %v372 = vld [vmem:[%s334 + $0x68] sm:$0xff]
      %v373 = vld [vmem:[%s334 + $0x78] sm:$0xff]
      %v374 = vld [vmem:[%s334 + $0x80] sm:$0xff]
      %v375 = vld [vmem:[%s334 + $0x90] sm:$0xff]
      %v376 = vld [vmem:[%s334 + $0x98] sm:$0xff]
      %v377 = vld [vmem:[%s334 + $0xa8] sm:$0xff]
      %v378 = vld [vmem:[%s334 + $0xb0] sm:$0xff]
      %v379 = vld [vmem:[%s334 + $0xc0] sm:$0xff]
      %v380 = vld [vmem:[%s334 + $0xc8] sm:$0xff]
      %v381 = vld [vmem:[%s334 + $0xd8] sm:$0xff]
      %v382 = vld [vmem:[%s334 + $0xe0] sm:$0xff]
      %v383 = vld [vmem:[%s334 + $0xf0] sm:$0xff]
      %v384 = vld [vmem:[%s334 + $0xf8] sm:$0xff]
      %v385 = vld [vmem:[%s334 + $0x108] sm:$0xff]
      %v386 = vld [vmem:[%s334 + $0x110] sm:$0xff]
      %v387 = vld [vmem:[%s334 + $0x120] sm:$0xff]
      %v388 = vld [vmem:[%s334 + $0x128] sm:$0xff]
      %v389 = vld [vmem:[%s334 + $0x138] sm:$0xff]
      %v390 = vld [vmem:[%s334 + $0x140] sm:$0xff]
      %v391 = vld [vmem:[%s334 + $0x150] sm:$0xff]
      %v392 = vld [vmem:[%s334 + $0x158] sm:$0xff]
      %v393 = vld [vmem:[%s334 + $0x168] sm:$0xff]
      %v394 = vld [vmem:[%s334 + $0x170] sm:$0xff]
      %v395 = vld [vmem:[%s334 + $0x1b0] sm:$0xff]
      %v396 = vld [vmem:[%s334 + $0x1b8] sm:$0xff]
      %v397 = vld [vmem:[%s334 + $0x1c8] sm:$0xff]
      %v398 = vld [vmem:[%s334 + $0x1d0] sm:$0xff]
      %v399 = vld [vmem:[%s334 + $0x1e0] sm:$0xff]
      %v400 = vld [vmem:[%s334 + $0x1e8] sm:$0xff]
      %v401 = vld [vmem:[%s334 + $0x1f8] sm:$0xff]
      %v402 = vld [vmem:[%s334 + $0x200] sm:$0xff]
      %v403 = vld [vmem:[%s334 + $0x210] sm:$0xff]
      %v404 = vld [vmem:[%s334 + $0x218] sm:$0xff]
      %v405 = vld [vmem:[%s334 + $0x228] sm:$0xff]
      %v406 = vld [vmem:[%s334 + $0x230] sm:$0xff]
      %v407 = vld [vmem:[%s334 + $0x240] sm:$0xff]
      %v408 = vld [vmem:[%s334 + $0x248] sm:$0xff]
      %v409 = vld [vmem:[%s334 + $0x258] sm:$0xff]
      %v410 = vld [vmem:[%s334 + $0x260] sm:$0xff]
      %v411 = vld [vmem:[%s334 + $0x270] sm:$0xff]
      %v412 = vld [vmem:[%s334 + $0x278] sm:$0xff]
      %v413 = vld [vmem:[%s334 + $0x288] sm:$0xff]
      %v414 = vld [vmem:[%s334 + $0x290] sm:$0xff]
      %v415 = vld [vmem:[%s334 + $0x2a0] sm:$0xff]
      %v416 = vld [vmem:[%s334 + $0x2a8] sm:$0xff]
      %v417 = vld [vmem:[%s334 + $0x2b8] sm:$0xff]
      %v418 = vld [vmem:[%s334 + $0x2c0] sm:$0xff]
      %v419 = vld [vmem:[%s334 + $0x2d0] sm:$0xff]
      %v420 = vld [vmem:[%s334 + $0x2d8] sm:$0xff]
      %v421 = vld [vmem:[%s334 + $0x2e8] sm:$0xff]
      %v422 = vld [vmem:[%s334 + $0x2f0] sm:$0xff]
      %v423 = vld [vmem:[%s334 + $0x300] sm:$0xff]
      %v424 = vld [vmem:[%s334 + $0x308] sm:$0xff]
      %v425 = vld [vmem:[%s334 + $0x318] sm:$0xff]
      %v426 = vld [vmem:[%s334 + $0x320] sm:$0xff]
      %v427 = vld [vmem:[%s1] sm:$0xf]
      %v428 = vld [vmem:[%s334 + $0x1] sm:$0xff]
      %v429 = vld [vmem:[%s334 + $0x9] sm:$0xff]
      %v430 = vld [vmem:[%s334 + $0x19] sm:$0xff]
      %v431 = vld [vmem:[%s334 + $0x21] sm:$0xff]
      %v432 = vld [vmem:[%s334 + $0x31] sm:$0xff]
      %v433 = vld [vmem:[%s334 + $0x39] sm:$0xff]
      %v434 = vld [vmem:[%s334 + $0x49] sm:$0xff]
      %v435 = vld [vmem:[%s334 + $0x51] sm:$0xff]
      %v436 = vld [vmem:[%s334 + $0x61] sm:$0xff]
      %v437 = vld [vmem:[%s334 + $0x69] sm:$0xff]
      %v438 = vld [vmem:[%s334 + $0x79] sm:$0xff]
      %v439 = vld [vmem:[%s334 + $0x81] sm:$0xff]
      %v440 = vld [vmem:[%s334 + $0x91] sm:$0xff]
      %v441 = vld [vmem:[%s334 + $0x99] sm:$0xff]
      %v442 = vld [vmem:[%s334 + $0xa9] sm:$0xff]
      %v443 = vld [vmem:[%s334 + $0xb1] sm:$0xff]
      %v444 = vld [vmem:[%s334 + $0xc1] sm:$0xff]
      %v445 = vld [vmem:[%s334 + $0xc9] sm:$0xff]
      %v446 = vld [vmem:[%s334 + $0xd9] sm:$0xff]
      %v447 = vld [vmem:[%s334 + $0xe1] sm:$0xff]
      %v448 = vld [vmem:[%s334 + $0xf1] sm:$0xff]
      %v449 = vld [vmem:[%s334 + $0xf9] sm:$0xff]
      %v450 = vld [vmem:[%s334 + $0x109] sm:$0xff]
      %v451 = vld [vmem:[%s334 + $0x111] sm:$0xff]
      %v452 = vld [vmem:[%s334 + $0x121] sm:$0xff]
      %v453 = vld [vmem:[%s334 + $0x129] sm:$0xff]
      %v454 = vld [vmem:[%s334 + $0x139] sm:$0xff]
      %v455 = vld [vmem:[%s334 + $0x141] sm:$0xff]
      %v456 = vld [vmem:[%s334 + $0x151] sm:$0xff]
      %v457 = vld [vmem:[%s334 + $0x159] sm:$0xff]
      %v458 = vld [vmem:[%s334 + $0x169] sm:$0xff]
      %v459 = vld [vmem:[%s334 + $0x171] sm:$0xff]
      %v460 = vld [vmem:[%s334 + $0x1b1] sm:$0xff]
      %v461 = vld [vmem:[%s334 + $0x1b9] sm:$0xff]
      %v462 = vld [vmem:[%s334 + $0x1c9] sm:$0xff]
      %v463 = vld [vmem:[%s334 + $0x1d1] sm:$0xff]
      %v464 = vld [vmem:[%s334 + $0x1e1] sm:$0xff]
      %v465 = vld [vmem:[%s334 + $0x1e9] sm:$0xff]
      %v466 = vld [vmem:[%s334 + $0x1f9] sm:$0xff]
      %v467 = vld [vmem:[%s334 + $0x201] sm:$0xff]
      %v468 = vld [vmem:[%s334 + $0x211] sm:$0xff]
      %v469 = vld [vmem:[%s334 + $0x219] sm:$0xff]
      %v470 = vld [vmem:[%s334 + $0x229] sm:$0xff]
      %v471 = vld [vmem:[%s334 + $0x231] sm:$0xff]
      %v472 = vld [vmem:[%s334 + $0x241] sm:$0xff]
      %v473 = vld [vmem:[%s334 + $0x249] sm:$0xff]
      %v474 = vld [vmem:[%s334 + $0x259] sm:$0xff]
      %v475 = vld [vmem:[%s334 + $0x261] sm:$0xff]
      %v476 = vld [vmem:[%s334 + $0x271] sm:$0xff]
      %v477 = vld [vmem:[%s334 + $0x279] sm:$0xff]
      %v478 = vld [vmem:[%s334 + $0x289] sm:$0xff]
      %v479 = vld [vmem:[%s334 + $0x291] sm:$0xff]
      %v480 = vld [vmem:[%s334 + $0x2a1] sm:$0xff]
      %v481 = vld [vmem:[%s334 + $0x2a9] sm:$0xff]
      %v482 = vld [vmem:[%s334 + $0x2b9] sm:$0xff]
      %v483 = vld [vmem:[%s334 + $0x2c1] sm:$0xff]
      %v484 = vld [vmem:[%s334 + $0x2d1] sm:$0xff]
      %v485 = vld [vmem:[%s334 + $0x2d9] sm:$0xff]
      %v486 = vld [vmem:[%s334 + $0x2e9] sm:$0xff]
      %v487 = vld [vmem:[%s334 + $0x2f1] sm:$0xff]
      %v488 = vld [vmem:[%s334 + $0x301] sm:$0xff]
      %v489 = vld [vmem:[%s334 + $0x309] sm:$0xff]
      %v490 = vld [vmem:[%s334 + $0x319] sm:$0xff]
      %v491 = vld [vmem:[%s334 + $0x321] sm:$0xff]
      %s492 = scalar_lea.vmem %s1, 4
      %v493 = vld [vmem:[%s492] sm:$0xf]
      %vm494 = vcmask 31744
      %v496 = vsel %vm494, %v428, 0
      %v499 = vsel %vm494, %v429, 0
      %v502 = vsel %vm494, %v430, 0
      %v505 = vsel %vm494, %v431, 0
      %v508 = vsel %vm494, %v432, 0
      %v511 = vsel %vm494, %v433, 0
      %v514 = vsel %vm494, %v434, 0
      %v517 = vsel %vm494, %v435, 0
      %v520 = vsel %vm494, %v436, 0
      %v523 = vsel %vm494, %v437, 0
      %v526 = vsel %vm494, %v438, 0
      %v529 = vsel %vm494, %v439, 0
      %v532 = vsel %vm494, %v440, 0
      %v535 = vsel %vm494, %v441, 0
      %v538 = vsel %vm494, %v442, 0
      %v541 = vsel %vm494, %v443, 0
      %v544 = vsel %vm494, %v444, 0
      %v547 = vsel %vm494, %v445, 0
      %v550 = vsel %vm494, %v446, 0
      %v553 = vsel %vm494, %v447, 0
      %v556 = vsel %vm494, %v448, 0
      %v559 = vsel %vm494, %v449, 0
      %v562 = vsel %vm494, %v450, 0
      %v565 = vsel %vm494, %v451, 0
      %v568 = vsel %vm494, %v452, 0
      %v571 = vsel %vm494, %v453, 0
      %v574 = vsel %vm494, %v454, 0
      %v577 = vsel %vm494, %v455, 0
      %v580 = vsel %vm494, %v456, 0
      %v583 = vsel %vm494, %v457, 0
      %v586 = vsel %vm494, %v458, 0
      %v589 = vsel %vm494, %v459, 0
      %v592 = vsel %vm494, %v460, 0
      %v595 = vsel %vm494, %v461, 0
      %v598 = vsel %vm494, %v462, 0
      %v601 = vsel %vm494, %v463, 0
      %v604 = vsel %vm494, %v464, 0
      %v607 = vsel %vm494, %v465, 0
      %v610 = vsel %vm494, %v466, 0
      %v613 = vsel %vm494, %v467, 0
      %v616 = vsel %vm494, %v468, 0
      %v619 = vsel %vm494, %v469, 0
      %v622 = vsel %vm494, %v470, 0
      %v625 = vsel %vm494, %v471, 0
      %v628 = vsel %vm494, %v472, 0
      %v631 = vsel %vm494, %v473, 0
      %v634 = vsel %vm494, %v474, 0
      %v637 = vsel %vm494, %v475, 0
      %v640 = vsel %vm494, %v476, 0
      %v643 = vsel %vm494, %v477, 0
      %v646 = vsel %vm494, %v478, 0
      %v649 = vsel %vm494, %v479, 0
      %v652 = vsel %vm494, %v480, 0
      %v655 = vsel %vm494, %v481, 0
      %v658 = vsel %vm494, %v482, 0
      %v661 = vsel %vm494, %v483, 0
      %v664 = vsel %vm494, %v484, 0
      %v667 = vsel %vm494, %v485, 0
      %v670 = vsel %vm494, %v486, 0
      %v673 = vsel %vm494, %v487, 0
      %v676 = vsel %vm494, %v488, 0
      %v679 = vsel %vm494, %v489, 0
      %v682 = vsel %vm494, %v490, 0
      %v685 = vsel %vm494, %v491, 0
      %vm687 = vcmask 1043456
      %v689 = vsel %vm687, %v493, 0
      %691 = vmatpush.msra.mxu0 0.0
      %692 = vmatpush.msra.mxu0 0.0
      %693 = vmatpush.msra.mxu0 0.0
      %694 = vmatpush.msra.mxu0 0.0
      %695 = vmatpush.msra.mxu0 0.0
      %696 = vmatpush.msra.mxu0 0.0
      %697 = vmatpush.msra.mxu0 0.0
      %698 = vmatpush.msra.mxu0 0.0
      %699 = vmatpush.msra.mxu0 0.0
      %700 = vmatpush.msra.mxu0 0.0
      %701 = vmatpush.msra.mxu0 0.0
      %702 = vmatpush.msra.mxu0 0.0
      %703 = vmatpush.msra.mxu0 0.0
      %704 = vmatpush.msra.mxu0 0.0
      %705 = vmatpush.msra.mxu0 0.0
      %706 = vmatpush.msra.mxu0 %v689
      %707 = vmatmul.f32.gmra.mxu0 %v496
      %v708 = vpop.f32.mrf.mxu0
      %v709 = vadd.f32 0.0, %v708
      %710 = vmatmul.f32.gmra.mxu0 %v499
      %v711 = vpop.f32.mrf.mxu0
      %v712 = vadd.f32 0.0, %v711
      %713 = vmatmul.f32.gmra.mxu0 %v502
      %v714 = vpop.f32.mrf.mxu0
      %v715 = vadd.f32 0.0, %v714
      %716 = vmatmul.f32.gmra.mxu0 %v505
      %v717 = vpop.f32.mrf.mxu0
      %v718 = vadd.f32 0.0, %v717
      %719 = vmatmul.f32.gmra.mxu0 %v508
      %v720 = vpop.f32.mrf.mxu0
      %v721 = vadd.f32 0.0, %v720
      %722 = vmatmul.f32.gmra.mxu0 %v511
      %v723 = vpop.f32.mrf.mxu0
      %v724 = vadd.f32 0.0, %v723
      %725 = vmatmul.f32.gmra.mxu0 %v514
      %v726 = vpop.f32.mrf.mxu0
      %v727 = vadd.f32 0.0, %v726
      %728 = vmatmul.f32.gmra.mxu0 %v517
      %v729 = vpop.f32.mrf.mxu0
      %v730 = vadd.f32 0.0, %v729
      %731 = vmatmul.f32.gmra.mxu0 %v520
      %v732 = vpop.f32.mrf.mxu0
      %v733 = vadd.f32 0.0, %v732
      %734 = vmatmul.f32.gmra.mxu0 %v523
      %v735 = vpop.f32.mrf.mxu0
      %v736 = vadd.f32 0.0, %v735
      %737 = vmatmul.f32.gmra.mxu0 %v526
      %v738 = vpop.f32.mrf.mxu0
      %v739 = vadd.f32 0.0, %v738
      %740 = vmatmul.f32.gmra.mxu0 %v529
      %v741 = vpop.f32.mrf.mxu0
      %v742 = vadd.f32 0.0, %v741
      %743 = vmatmul.f32.gmra.mxu0 %v532
      %v744 = vpop.f32.mrf.mxu0
      %v745 = vadd.f32 0.0, %v744
      %746 = vmatmul.f32.gmra.mxu0 %v535
      %v747 = vpop.f32.mrf.mxu0
      %v748 = vadd.f32 0.0, %v747
      %749 = vmatmul.f32.gmra.mxu0 %v538
      %v750 = vpop.f32.mrf.mxu0
      %v751 = vadd.f32 0.0, %v750
      %752 = vmatmul.f32.gmra.mxu0 %v541
      %v753 = vpop.f32.mrf.mxu0
      %v754 = vadd.f32 0.0, %v753
      %755 = vmatmul.f32.gmra.mxu0 %v544
      %v756 = vpop.f32.mrf.mxu0
      %v757 = vadd.f32 0.0, %v756
      %758 = vmatmul.f32.gmra.mxu0 %v547
      %v759 = vpop.f32.mrf.mxu0
      %v760 = vadd.f32 0.0, %v759
      %761 = vmatmul.f32.gmra.mxu0 %v550
      %v762 = vpop.f32.mrf.mxu0
      %v763 = vadd.f32 0.0, %v762
      %764 = vmatmul.f32.gmra.mxu0 %v553
      %v765 = vpop.f32.mrf.mxu0
      %v766 = vadd.f32 0.0, %v765
      %767 = vmatmul.f32.gmra.mxu0 %v556
      %v768 = vpop.f32.mrf.mxu0
      %v769 = vadd.f32 0.0, %v768
      %770 = vmatmul.f32.gmra.mxu0 %v559
      %v771 = vpop.f32.mrf.mxu0
      %v772 = vadd.f32 0.0, %v771
      %773 = vmatmul.f32.gmra.mxu0 %v562
      %v774 = vpop.f32.mrf.mxu0
      %v775 = vadd.f32 0.0, %v774
      %776 = vmatmul.f32.gmra.mxu0 %v565
      %v777 = vpop.f32.mrf.mxu0
      %v778 = vadd.f32 0.0, %v777
      %779 = vmatmul.f32.gmra.mxu0 %v568
      %v780 = vpop.f32.mrf.mxu0
      %v781 = vadd.f32 0.0, %v780
      %782 = vmatmul.f32.gmra.mxu0 %v571
      %v783 = vpop.f32.mrf.mxu0
      %v784 = vadd.f32 0.0, %v783
      %785 = vmatmul.f32.gmra.mxu0 %v574
      %v786 = vpop.f32.mrf.mxu0
      %v787 = vadd.f32 0.0, %v786
      %788 = vmatmul.f32.gmra.mxu0 %v577
      %v789 = vpop.f32.mrf.mxu0
      %v790 = vadd.f32 0.0, %v789
      %791 = vmatmul.f32.gmra.mxu0 %v580
      %v792 = vpop.f32.mrf.mxu0
      %v793 = vadd.f32 0.0, %v792
      %794 = vmatmul.f32.gmra.mxu0 %v583
      %v795 = vpop.f32.mrf.mxu0
      %v796 = vadd.f32 0.0, %v795
      %797 = vmatmul.f32.gmra.mxu0 %v586
      %v798 = vpop.f32.mrf.mxu0
      %v799 = vadd.f32 0.0, %v798
      %800 = vmatmul.f32.gmra.mxu0 %v589
      %v801 = vpop.f32.mrf.mxu0
      %v802 = vadd.f32 0.0, %v801
      %803 = vmatmul.f32.gmra.mxu0 %v592
      %v804 = vpop.f32.mrf.mxu0
      %v805 = vadd.f32 0.0, %v804
      %806 = vmatmul.f32.gmra.mxu0 %v595
      %v807 = vpop.f32.mrf.mxu0
      %v808 = vadd.f32 0.0, %v807
      %809 = vmatmul.f32.gmra.mxu0 %v598
      %v810 = vpop.f32.mrf.mxu0
      %v811 = vadd.f32 0.0, %v810
      %812 = vmatmul.f32.gmra.mxu0 %v601
      %v813 = vpop.f32.mrf.mxu0
      %v814 = vadd.f32 0.0, %v813
      %815 = vmatmul.f32.gmra.mxu0 %v604
      %v816 = vpop.f32.mrf.mxu0
      %v817 = vadd.f32 0.0, %v816
      %818 = vmatmul.f32.gmra.mxu0 %v607
      %v819 = vpop.f32.mrf.mxu0
      %v820 = vadd.f32 0.0, %v819
      %821 = vmatmul.f32.gmra.mxu0 %v610
      %v822 = vpop.f32.mrf.mxu0
      %v823 = vadd.f32 0.0, %v822
      %824 = vmatmul.f32.gmra.mxu0 %v613
      %v825 = vpop.f32.mrf.mxu0
      %v826 = vadd.f32 0.0, %v825
      %827 = vmatmul.f32.gmra.mxu0 %v616
      %v828 = vpop.f32.mrf.mxu0
      %v829 = vadd.f32 0.0, %v828
      %830 = vmatmul.f32.gmra.mxu0 %v619
      %v831 = vpop.f32.mrf.mxu0
      %v832 = vadd.f32 0.0, %v831
      %833 = vmatmul.f32.gmra.mxu0 %v622
      %v834 = vpop.f32.mrf.mxu0
      %v835 = vadd.f32 0.0, %v834
      %836 = vmatmul.f32.gmra.mxu0 %v625
      %v837 = vpop.f32.mrf.mxu0
      %v838 = vadd.f32 0.0, %v837
      %839 = vmatmul.f32.gmra.mxu0 %v628
      %v840 = vpop.f32.mrf.mxu0
      %v841 = vadd.f32 0.0, %v840
      %842 = vmatmul.f32.gmra.mxu0 %v631
      %v843 = vpop.f32.mrf.mxu0
      %v844 = vadd.f32 0.0, %v843
      %845 = vmatmul.f32.gmra.mxu0 %v634
      %v846 = vpop.f32.mrf.mxu0
      %v847 = vadd.f32 0.0, %v846
      %848 = vmatmul.f32.gmra.mxu0 %v637
      %v849 = vpop.f32.mrf.mxu0
      %v850 = vadd.f32 0.0, %v849
      %851 = vmatmul.f32.gmra.mxu0 %v640
      %v852 = vpop.f32.mrf.mxu0
      %v853 = vadd.f32 0.0, %v852
      %854 = vmatmul.f32.gmra.mxu0 %v643
      %v855 = vpop.f32.mrf.mxu0
      %v856 = vadd.f32 0.0, %v855
      %857 = vmatmul.f32.gmra.mxu0 %v646
      %v858 = vpop.f32.mrf.mxu0
      %v859 = vadd.f32 0.0, %v858
      %860 = vmatmul.f32.gmra.mxu0 %v649
      %v861 = vpop.f32.mrf.mxu0
      %v862 = vadd.f32 0.0, %v861
      %863 = vmatmul.f32.gmra.mxu0 %v652
      %v864 = vpop.f32.mrf.mxu0
      %v865 = vadd.f32 0.0, %v864
      %866 = vmatmul.f32.gmra.mxu0 %v655
      %v867 = vpop.f32.mrf.mxu0
      %v868 = vadd.f32 0.0, %v867
      %869 = vmatmul.f32.gmra.mxu0 %v658
      %v870 = vpop.f32.mrf.mxu0
      %v871 = vadd.f32 0.0, %v870
      %872 = vmatmul.f32.gmra.mxu0 %v661
      %v873 = vpop.f32.mrf.mxu0
      %v874 = vadd.f32 0.0, %v873
      %875 = vmatmul.f32.gmra.mxu0 %v664
      %v876 = vpop.f32.mrf.mxu0
      %v877 = vadd.f32 0.0, %v876
      %878 = vmatmul.f32.gmra.mxu0 %v667
      %v879 = vpop.f32.mrf.mxu0
      %v880 = vadd.f32 0.0, %v879
      %881 = vmatmul.f32.gmra.mxu0 %v670
      %v882 = vpop.f32.mrf.mxu0
      %v883 = vadd.f32 0.0, %v882
      %884 = vmatmul.f32.gmra.mxu0 %v673
      %v885 = vpop.f32.mrf.mxu0
      %v886 = vadd.f32 0.0, %v885
      %887 = vmatmul.f32.gmra.mxu0 %v676
      %v888 = vpop.f32.mrf.mxu0
      %v889 = vadd.f32 0.0, %v888
      %890 = vmatmul.f32.gmra.mxu0 %v679
      %v891 = vpop.f32.mrf.mxu0
      %v892 = vadd.f32 0.0, %v891
      %893 = vmatmul.f32.gmra.mxu0 %v682
      %v894 = vpop.f32.mrf.mxu0
      %v895 = vadd.f32 0.0, %v894
      %896 = vmatmul.f32.gmra.mxu0 %v685
      %v897 = vpop.f32.mrf.mxu0
      %v898 = vadd.f32 0.0, %v897
      %899 = vdwg.mxu0
      %v901 = vsel %vm494, %v363, 0
      %v904 = vsel %vm494, %v364, 0
      %v907 = vsel %vm494, %v365, 0
      %v910 = vsel %vm494, %v366, 0
      %v913 = vsel %vm494, %v367, 0
      %v916 = vsel %vm494, %v368, 0
      %v919 = vsel %vm494, %v369, 0
      %v922 = vsel %vm494, %v370, 0
      %v925 = vsel %vm494, %v371, 0
      %v928 = vsel %vm494, %v372, 0
      %v931 = vsel %vm494, %v373, 0
      %v934 = vsel %vm494, %v374, 0
      %v937 = vsel %vm494, %v375, 0
      %v940 = vsel %vm494, %v376, 0
      %v943 = vsel %vm494, %v377, 0
      %v946 = vsel %vm494, %v378, 0
      %v949 = vsel %vm494, %v379, 0
      %v952 = vsel %vm494, %v380, 0
      %v955 = vsel %vm494, %v381, 0
      %v958 = vsel %vm494, %v382, 0
      %v961 = vsel %vm494, %v383, 0
      %v964 = vsel %vm494, %v384, 0
      %v967 = vsel %vm494, %v385, 0
      %v970 = vsel %vm494, %v386, 0
      %v973 = vsel %vm494, %v387, 0
      %v976 = vsel %vm494, %v388, 0
      %v979 = vsel %vm494, %v389, 0
      %v982 = vsel %vm494, %v390, 0
      %v985 = vsel %vm494, %v391, 0
      %v988 = vsel %vm494, %v392, 0
      %v991 = vsel %vm494, %v393, 0
      %v994 = vsel %vm494, %v394, 0
      %v997 = vsel %vm494, %v395, 0
      %v1000 = vsel %vm494, %v396, 0
      %v1003 = vsel %vm494, %v397, 0
      %v1006 = vsel %vm494, %v398, 0
      %v1009 = vsel %vm494, %v399, 0
      %v1012 = vsel %vm494, %v400, 0
      %v1015 = vsel %vm494, %v401, 0
      %v1018 = vsel %vm494, %v402, 0
      %v1021 = vsel %vm494, %v403, 0
      %v1024 = vsel %vm494, %v404, 0
      %v1027 = vsel %vm494, %v405, 0
      %v1030 = vsel %vm494, %v406, 0
      %v1033 = vsel %vm494, %v407, 0
      %v1036 = vsel %vm494, %v408, 0
      %v1039 = vsel %vm494, %v409, 0
      %v1042 = vsel %vm494, %v410, 0
      %v1045 = vsel %vm494, %v411, 0
      %v1048 = vsel %vm494, %v412, 0
      %v1051 = vsel %vm494, %v413, 0
      %v1054 = vsel %vm494, %v414, 0
      %v1057 = vsel %vm494, %v415, 0
      %v1060 = vsel %vm494, %v416, 0
      %v1063 = vsel %vm494, %v417, 0
      %v1066 = vsel %vm494, %v418, 0
      %v1069 = vsel %vm494, %v419, 0
      %v1072 = vsel %vm494, %v420, 0
      %v1075 = vsel %vm494, %v421, 0
      %v1078 = vsel %vm494, %v422, 0
      %v1081 = vsel %vm494, %v423, 0
      %v1084 = vsel %vm494, %v424, 0
      %v1087 = vsel %vm494, %v425, 0
      %v1090 = vsel %vm494, %v426, 0
      %v1093 = vsel %vm687, %v427, 0
      %1095 = vmatpush.msra.mxu0 0.0
      %1096 = vmatpush.msra.mxu0 0.0
      %1097 = vmatpush.msra.mxu0 0.0
      %1098 = vmatpush.msra.mxu0 0.0
      %1099 = vmatpush.msra.mxu0 0.0
      %1100 = vmatpush.msra.mxu0 0.0
      %1101 = vmatpush.msra.mxu0 0.0
      %1102 = vmatpush.msra.mxu0 0.0
      %1103 = vmatpush.msra.mxu0 0.0
      %1104 = vmatpush.msra.mxu0 0.0
      %1105 = vmatpush.msra.mxu0 0.0
      %1106 = vmatpush.msra.mxu0 0.0
      %1107 = vmatpush.msra.mxu0 0.0
      %1108 = vmatpush.msra.mxu0 0.0
      %1109 = vmatpush.msra.mxu0 0.0
      %1110 = vmatpush.msra.mxu0 %v1093
      %1111 = vmatmul.f32.gmra.mxu0 %v901
      %v1112 = vpop.f32.mrf.mxu0
      %v1113 = vadd.f32 %v709, %v1112
      %1114 = vmatmul.f32.gmra.mxu0 %v904
      %v1115 = vpop.f32.mrf.mxu0
      %v1116 = vadd.f32 %v712, %v1115
      %1117 = vmatmul.f32.gmra.mxu0 %v907
      %v1118 = vpop.f32.mrf.mxu0
      %v1119 = vadd.f32 %v715, %v1118
      %1120 = vmatmul.f32.gmra.mxu0 %v910
      %v1121 = vpop.f32.mrf.mxu0
      %v1122 = vadd.f32 %v718, %v1121
      %1123 = vmatmul.f32.gmra.mxu0 %v913
      %v1124 = vpop.f32.mrf.mxu0
      %v1125 = vadd.f32 %v721, %v1124
      %1126 = vmatmul.f32.gmra.mxu0 %v916
      %v1127 = vpop.f32.mrf.mxu0
      %v1128 = vadd.f32 %v724, %v1127
      %1129 = vmatmul.f32.gmra.mxu0 %v919
      %v1130 = vpop.f32.mrf.mxu0
      %v1131 = vadd.f32 %v727, %v1130
      %1132 = vmatmul.f32.gmra.mxu0 %v922
      %v1133 = vpop.f32.mrf.mxu0
      %v1134 = vadd.f32 %v730, %v1133
      %1135 = vmatmul.f32.gmra.mxu0 %v925
      %v1136 = vpop.f32.mrf.mxu0
      %v1137 = vadd.f32 %v733, %v1136
      %1138 = vmatmul.f32.gmra.mxu0 %v928
      %v1139 = vpop.f32.mrf.mxu0
      %v1140 = vadd.f32 %v736, %v1139
      %1141 = vmatmul.f32.gmra.mxu0 %v931
      %v1142 = vpop.f32.mrf.mxu0
      %v1143 = vadd.f32 %v739, %v1142
      %1144 = vmatmul.f32.gmra.mxu0 %v934
      %v1145 = vpop.f32.mrf.mxu0
      %v1146 = vadd.f32 %v742, %v1145
      %1147 = vmatmul.f32.gmra.mxu0 %v937
      %v1148 = vpop.f32.mrf.mxu0
      %v1149 = vadd.f32 %v745, %v1148
      %1150 = vmatmul.f32.gmra.mxu0 %v940
      %v1151 = vpop.f32.mrf.mxu0
      %v1152 = vadd.f32 %v748, %v1151
      %1153 = vmatmul.f32.gmra.mxu0 %v943
      %v1154 = vpop.f32.mrf.mxu0
      %v1155 = vadd.f32 %v751, %v1154
      %1156 = vmatmul.f32.gmra.mxu0 %v946
      %v1157 = vpop.f32.mrf.mxu0
      %v1158 = vadd.f32 %v754, %v1157
      %1159 = vmatmul.f32.gmra.mxu0 %v949
      %v1160 = vpop.f32.mrf.mxu0
      %v1161 = vadd.f32 %v757, %v1160
      %1162 = vmatmul.f32.gmra.mxu0 %v952
      %v1163 = vpop.f32.mrf.mxu0
      %v1164 = vadd.f32 %v760, %v1163
      %1165 = vmatmul.f32.gmra.mxu0 %v955
      %v1166 = vpop.f32.mrf.mxu0
      %v1167 = vadd.f32 %v763, %v1166
      %1168 = vmatmul.f32.gmra.mxu0 %v958
      %v1169 = vpop.f32.mrf.mxu0
      %v1170 = vadd.f32 %v766, %v1169
      %1171 = vmatmul.f32.gmra.mxu0 %v961
      %v1172 = vpop.f32.mrf.mxu0
      %v1173 = vadd.f32 %v769, %v1172
      %1174 = vmatmul.f32.gmra.mxu0 %v964
      %v1175 = vpop.f32.mrf.mxu0
      %v1176 = vadd.f32 %v772, %v1175
      %1177 = vmatmul.f32.gmra.mxu0 %v967
      %v1178 = vpop.f32.mrf.mxu0
      %v1179 = vadd.f32 %v775, %v1178
      %1180 = vmatmul.f32.gmra.mxu0 %v970
      %v1181 = vpop.f32.mrf.mxu0
      %v1182 = vadd.f32 %v778, %v1181
      %1183 = vmatmul.f32.gmra.mxu0 %v973
      %v1184 = vpop.f32.mrf.mxu0
      %v1185 = vadd.f32 %v781, %v1184
      %1186 = vmatmul.f32.gmra.mxu0 %v976
      %v1187 = vpop.f32.mrf.mxu0
      %v1188 = vadd.f32 %v784, %v1187
      %1189 = vmatmul.f32.gmra.mxu0 %v979
      %v1190 = vpop.f32.mrf.mxu0
      %v1191 = vadd.f32 %v787, %v1190
      %1192 = vmatmul.f32.gmra.mxu0 %v982
      %v1193 = vpop.f32.mrf.mxu0
      %v1194 = vadd.f32 %v790, %v1193
      %1195 = vmatmul.f32.gmra.mxu0 %v985
      %v1196 = vpop.f32.mrf.mxu0
      %v1197 = vadd.f32 %v793, %v1196
      %1198 = vmatmul.f32.gmra.mxu0 %v988
      %v1199 = vpop.f32.mrf.mxu0
      %v1200 = vadd.f32 %v796, %v1199
      %1201 = vmatmul.f32.gmra.mxu0 %v991
      %v1202 = vpop.f32.mrf.mxu0
      %v1203 = vadd.f32 %v799, %v1202
      %1204 = vmatmul.f32.gmra.mxu0 %v994
      %v1205 = vpop.f32.mrf.mxu0
      %v1206 = vadd.f32 %v802, %v1205
      %1207 = vmatmul.f32.gmra.mxu0 %v997
      %v1208 = vpop.f32.mrf.mxu0
      %v1209 = vadd.f32 %v805, %v1208
      %1210 = vmatmul.f32.gmra.mxu0 %v1000
      %v1211 = vpop.f32.mrf.mxu0
      %v1212 = vadd.f32 %v808, %v1211
      %1213 = vmatmul.f32.gmra.mxu0 %v1003
      %v1214 = vpop.f32.mrf.mxu0
      %v1215 = vadd.f32 %v811, %v1214
      %1216 = vmatmul.f32.gmra.mxu0 %v1006
      %v1217 = vpop.f32.mrf.mxu0
      %v1218 = vadd.f32 %v814, %v1217
      %1219 = vmatmul.f32.gmra.mxu0 %v1009
      %v1220 = vpop.f32.mrf.mxu0
      %v1221 = vadd.f32 %v817, %v1220
      %1222 = vmatmul.f32.gmra.mxu0 %v1012
      %v1223 = vpop.f32.mrf.mxu0
      %v1224 = vadd.f32 %v820, %v1223
      %1225 = vmatmul.f32.gmra.mxu0 %v1015
      %v1226 = vpop.f32.mrf.mxu0
      %v1227 = vadd.f32 %v823, %v1226
      %1228 = vmatmul.f32.gmra.mxu0 %v1018
      %v1229 = vpop.f32.mrf.mxu0
      %v1230 = vadd.f32 %v826, %v1229
      %1231 = vmatmul.f32.gmra.mxu0 %v1021
      %v1232 = vpop.f32.mrf.mxu0
      %v1233 = vadd.f32 %v829, %v1232
      %1234 = vmatmul.f32.gmra.mxu0 %v1024
      %v1235 = vpop.f32.mrf.mxu0
      %v1236 = vadd.f32 %v832, %v1235
      %1237 = vmatmul.f32.gmra.mxu0 %v1027
      %v1238 = vpop.f32.mrf.mxu0
      %v1239 = vadd.f32 %v835, %v1238
      %1240 = vmatmul.f32.gmra.mxu0 %v1030
      %v1241 = vpop.f32.mrf.mxu0
      %v1242 = vadd.f32 %v838, %v1241
      %1243 = vmatmul.f32.gmra.mxu0 %v1033
      %v1244 = vpop.f32.mrf.mxu0
      %v1245 = vadd.f32 %v841, %v1244
      %1246 = vmatmul.f32.gmra.mxu0 %v1036
      %v1247 = vpop.f32.mrf.mxu0
      %v1248 = vadd.f32 %v844, %v1247
      %1249 = vmatmul.f32.gmra.mxu0 %v1039
      %v1250 = vpop.f32.mrf.mxu0
      %v1251 = vadd.f32 %v847, %v1250
      %1252 = vmatmul.f32.gmra.mxu0 %v1042
      %v1253 = vpop.f32.mrf.mxu0
      %v1254 = vadd.f32 %v850, %v1253
      %1255 = vmatmul.f32.gmra.mxu0 %v1045
      %v1256 = vpop.f32.mrf.mxu0
      %v1257 = vadd.f32 %v853, %v1256
      %1258 = vmatmul.f32.gmra.mxu0 %v1048
      %v1259 = vpop.f32.mrf.mxu0
      %v1260 = vadd.f32 %v856, %v1259
      %1261 = vmatmul.f32.gmra.mxu0 %v1051
      %v1262 = vpop.f32.mrf.mxu0
      %v1263 = vadd.f32 %v859, %v1262
      %1264 = vmatmul.f32.gmra.mxu0 %v1054
      %v1265 = vpop.f32.mrf.mxu0
      %v1266 = vadd.f32 %v862, %v1265
      %1267 = vmatmul.f32.gmra.mxu0 %v1057
      %v1268 = vpop.f32.mrf.mxu0
      %v1269 = vadd.f32 %v865, %v1268
      %1270 = vmatmul.f32.gmra.mxu0 %v1060
      %v1271 = vpop.f32.mrf.mxu0
      %v1272 = vadd.f32 %v868, %v1271
      %1273 = vmatmul.f32.gmra.mxu0 %v1063
      %v1274 = vpop.f32.mrf.mxu0
      %v1275 = vadd.f32 %v871, %v1274
      %1276 = vmatmul.f32.gmra.mxu0 %v1066
      %v1277 = vpop.f32.mrf.mxu0
      %v1278 = vadd.f32 %v874, %v1277
      %1279 = vmatmul.f32.gmra.mxu0 %v1069
      %v1280 = vpop.f32.mrf.mxu0
      %v1281 = vadd.f32 %v877, %v1280
      %1282 = vmatmul.f32.gmra.mxu0 %v1072
      %v1283 = vpop.f32.mrf.mxu0
      %v1284 = vadd.f32 %v880, %v1283
      %1285 = vmatmul.f32.gmra.mxu0 %v1075
      %v1286 = vpop.f32.mrf.mxu0
      %v1287 = vadd.f32 %v883, %v1286
      %1288 = vmatmul.f32.gmra.mxu0 %v1078
      %v1289 = vpop.f32.mrf.mxu0
      %v1290 = vadd.f32 %v886, %v1289
      %1291 = vmatmul.f32.gmra.mxu0 %v1081
      %v1292 = vpop.f32.mrf.mxu0
      %v1293 = vadd.f32 %v889, %v1292
      %1294 = vmatmul.f32.gmra.mxu0 %v1084
      %v1295 = vpop.f32.mrf.mxu0
      %v1296 = vadd.f32 %v892, %v1295
      %1297 = vmatmul.f32.gmra.mxu0 %v1087
      %v1298 = vpop.f32.mrf.mxu0
      %v1299 = vadd.f32 %v895, %v1298
      %1300 = vmatmul.f32.gmra.mxu0 %v1090
      %v1301 = vpop.f32.mrf.mxu0
      %v1302 = vadd.f32 %v898, %v1301
      %1303 = vdwg.mxu0
      %v1304 = vld [vmem:[%s334 + $0x2] sm:$0xff]
      %v1305 = vld [vmem:[%s334 + $0xa] sm:$0xff]
      %v1306 = vld [vmem:[%s334 + $0x1a] sm:$0xff]
      %v1307 = vld [vmem:[%s334 + $0x22] sm:$0xff]
      %v1308 = vld [vmem:[%s334 + $0x32] sm:$0xff]
      %v1309 = vld [vmem:[%s334 + $0x3a] sm:$0xff]
      %v1310 = vld [vmem:[%s334 + $0x4a] sm:$0xff]
      %v1311 = vld [vmem:[%s334 + $0x52] sm:$0xff]
      %v1312 = vld [vmem:[%s334 + $0x62] sm:$0xff]
      %v1313 = vld [vmem:[%s334 + $0x6a] sm:$0xff]
      %v1314 = vld [vmem:[%s334 + $0x7a] sm:$0xff]
      %v1315 = vld [vmem:[%s334 + $0x82] sm:$0xff]
      %v1316 = vld [vmem:[%s334 + $0x92] sm:$0xff]
      %v1317 = vld [vmem:[%s334 + $0x9a] sm:$0xff]
      %v1318 = vld [vmem:[%s334 + $0xaa] sm:$0xff]
      %v1319 = vld [vmem:[%s334 + $0xb2] sm:$0xff]
      %v1320 = vld [vmem:[%s334 + $0xc2] sm:$0xff]
      %v1321 = vld [vmem:[%s334 + $0xca] sm:$0xff]
      %v1322 = vld [vmem:[%s334 + $0xda] sm:$0xff]
      %v1323 = vld [vmem:[%s334 + $0xe2] sm:$0xff]
      %v1324 = vld [vmem:[%s334 + $0xf2] sm:$0xff]
      %v1325 = vld [vmem:[%s334 + $0xfa] sm:$0xff]
      %v1326 = vld [vmem:[%s334 + $0x10a] sm:$0xff]
      %v1327 = vld [vmem:[%s334 + $0x112] sm:$0xff]
      %v1328 = vld [vmem:[%s334 + $0x122] sm:$0xff]
      %v1329 = vld [vmem:[%s334 + $0x12a] sm:$0xff]
      %v1330 = vld [vmem:[%s334 + $0x13a] sm:$0xff]
      %v1331 = vld [vmem:[%s334 + $0x142] sm:$0xff]
      %v1332 = vld [vmem:[%s334 + $0x152] sm:$0xff]
      %v1333 = vld [vmem:[%s334 + $0x15a] sm:$0xff]
      %v1334 = vld [vmem:[%s334 + $0x16a] sm:$0xff]
      %v1335 = vld [vmem:[%s334 + $0x172] sm:$0xff]
      %v1336 = vld [vmem:[%s334 + $0x1b2] sm:$0xff]
      %v1337 = vld [vmem:[%s334 + $0x1ba] sm:$0xff]
      %v1338 = vld [vmem:[%s334 + $0x1ca] sm:$0xff]
      %v1339 = vld [vmem:[%s334 + $0x1d2] sm:$0xff]
      %v1340 = vld [vmem:[%s334 + $0x1e2] sm:$0xff]
      %v1341 = vld [vmem:[%s334 + $0x1ea] sm:$0xff]
      %v1342 = vld [vmem:[%s334 + $0x1fa] sm:$0xff]
      %v1343 = vld [vmem:[%s334 + $0x202] sm:$0xff]
      %v1344 = vld [vmem:[%s334 + $0x212] sm:$0xff]
      %v1345 = vld [vmem:[%s334 + $0x21a] sm:$0xff]
      %v1346 = vld [vmem:[%s334 + $0x22a] sm:$0xff]
      %v1347 = vld [vmem:[%s334 + $0x232] sm:$0xff]
      %v1348 = vld [vmem:[%s334 + $0x242] sm:$0xff]
      %v1349 = vld [vmem:[%s334 + $0x24a] sm:$0xff]
      %v1350 = vld [vmem:[%s334 + $0x25a] sm:$0xff]
      %v1351 = vld [vmem:[%s334 + $0x262] sm:$0xff]
      %v1352 = vld [vmem:[%s334 + $0x272] sm:$0xff]
      %v1353 = vld [vmem:[%s334 + $0x27a] sm:$0xff]
      %v1354 = vld [vmem:[%s334 + $0x28a] sm:$0xff]
      %v1355 = vld [vmem:[%s334 + $0x292] sm:$0xff]
      %v1356 = vld [vmem:[%s334 + $0x2a2] sm:$0xff]
      %v1357 = vld [vmem:[%s334 + $0x2aa] sm:$0xff]
      %v1358 = vld [vmem:[%s334 + $0x2ba] sm:$0xff]
      %v1359 = vld [vmem:[%s334 + $0x2c2] sm:$0xff]
      %v1360 = vld [vmem:[%s334 + $0x2d2] sm:$0xff]
      %v1361 = vld [vmem:[%s334 + $0x2da] sm:$0xff]
      %v1362 = vld [vmem:[%s334 + $0x2ea] sm:$0xff]
      %v1363 = vld [vmem:[%s334 + $0x2f2] sm:$0xff]
      %v1364 = vld [vmem:[%s334 + $0x302] sm:$0xff]
      %v1365 = vld [vmem:[%s334 + $0x30a] sm:$0xff]
      %v1366 = vld [vmem:[%s334 + $0x31a] sm:$0xff]
      %v1367 = vld [vmem:[%s334 + $0x322] sm:$0xff]
      %s1368 = scalar_lea.vmem %s1, 8
      %v1369 = vld [vmem:[%s1368] sm:$0xf]
      %v1371 = vsel %vm494, %v1304, 0
      %v1374 = vsel %vm494, %v1305, 0
      %v1377 = vsel %vm494, %v1306, 0
      %v1380 = vsel %vm494, %v1307, 0
      %v1383 = vsel %vm494, %v1308, 0
      %v1386 = vsel %vm494, %v1309, 0
      %v1389 = vsel %vm494, %v1310, 0
      %v1392 = vsel %vm494, %v1311, 0
      %v1395 = vsel %vm494, %v1312, 0
      %v1398 = vsel %vm494, %v1313, 0
      %v1401 = vsel %vm494, %v1314, 0
      %v1404 = vsel %vm494, %v1315, 0
      %v1407 = vsel %vm494, %v1316, 0
      %v1410 = vsel %vm494, %v1317, 0
      %v1413 = vsel %vm494, %v1318, 0
      %v1416 = vsel %vm494, %v1319, 0
      %v1419 = vsel %vm494, %v1320, 0
      %v1422 = vsel %vm494, %v1321, 0
      %v1425 = vsel %vm494, %v1322, 0
      %v1428 = vsel %vm494, %v1323, 0
      %v1431 = vsel %vm494, %v1324, 0
      %v1434 = vsel %vm494, %v1325, 0
      %v1437 = vsel %vm494, %v1326, 0
      %v1440 = vsel %vm494, %v1327, 0
      %v1443 = vsel %vm494, %v1328, 0
      %v1446 = vsel %vm494, %v1329, 0
      %v1449 = vsel %vm494, %v1330, 0
      %v1452 = vsel %vm494, %v1331, 0
      %v1455 = vsel %vm494, %v1332, 0
      %v1458 = vsel %vm494, %v1333, 0
      %v1461 = vsel %vm494, %v1334, 0
      %v1464 = vsel %vm494, %v1335, 0
      %v1467 = vsel %vm494, %v1336, 0
      %v1470 = vsel %vm494, %v1337, 0
      %v1473 = vsel %vm494, %v1338, 0
      %v1476 = vsel %vm494, %v1339, 0
      %v1479 = vsel %vm494, %v1340, 0
      %v1482 = vsel %vm494, %v1341, 0
      %v1485 = vsel %vm494, %v1342, 0
      %v1488 = vsel %vm494, %v1343, 0
      %v1491 = vsel %vm494, %v1344, 0
      %v1494 = vsel %vm494, %v1345, 0
      %v1497 = vsel %vm494, %v1346, 0
      %v1500 = vsel %vm494, %v1347, 0
      %v1503 = vsel %vm494, %v1348, 0
      %v1506 = vsel %vm494, %v1349, 0
      %v1509 = vsel %vm494, %v1350, 0
      %v1512 = vsel %vm494, %v1351, 0
      %v1515 = vsel %vm494, %v1352, 0
      %v1518 = vsel %vm494, %v1353, 0
      %v1521 = vsel %vm494, %v1354, 0
      %v1524 = vsel %vm494, %v1355, 0
      %v1527 = vsel %vm494, %v1356, 0
      %v1530 = vsel %vm494, %v1357, 0
      %v1533 = vsel %vm494, %v1358, 0
      %v1536 = vsel %vm494, %v1359, 0
      %v1539 = vsel %vm494, %v1360, 0
      %v1542 = vsel %vm494, %v1361, 0
      %v1545 = vsel %vm494, %v1362, 0
      %v1548 = vsel %vm494, %v1363, 0
      %v1551 = vsel %vm494, %v1364, 0
      %v1554 = vsel %vm494, %v1365, 0
      %v1557 = vsel %vm494, %v1366, 0
      %v1560 = vsel %vm494, %v1367, 0
      %v1563 = vsel %vm687, %v1369, 0
      %1565 = vmatpush.msra.mxu0 0.0
      %1566 = vmatpush.msra.mxu0 0.0
      %1567 = vmatpush.msra.mxu0 0.0
      %1568 = vmatpush.msra.mxu0 0.0
      %1569 = vmatpush.msra.mxu0 0.0
      %1570 = vmatpush.msra.mxu0 0.0
      %1571 = vmatpush.msra.mxu0 0.0
      %1572 = vmatpush.msra.mxu0 0.0
      %1573 = vmatpush.msra.mxu0 0.0
      %1574 = vmatpush.msra.mxu0 0.0
      %1575 = vmatpush.msra.mxu0 0.0
      %1576 = vmatpush.msra.mxu0 0.0
      %1577 = vmatpush.msra.mxu0 0.0
      %1578 = vmatpush.msra.mxu0 0.0
      %1579 = vmatpush.msra.mxu0 0.0
      %1580 = vmatpush.msra.mxu0 %v1563
      %1581 = vmatmul.f32.gmra.mxu0 %v1371
      %v1582 = vpop.f32.mrf.mxu0
      %v1583 = vadd.f32 0.0, %v1582
      %1584 = vmatmul.f32.gmra.mxu0 %v1374
      %v1585 = vpop.f32.mrf.mxu0
      %v1586 = vadd.f32 0.0, %v1585
      %1587 = vmatmul.f32.gmra.mxu0 %v1377
      %v1588 = vpop.f32.mrf.mxu0
      %v1589 = vadd.f32 0.0, %v1588
      %1590 = vmatmul.f32.gmra.mxu0 %v1380
      %v1591 = vpop.f32.mrf.mxu0
      %v1592 = vadd.f32 0.0, %v1591
      %1593 = vmatmul.f32.gmra.mxu0 %v1383
      %v1594 = vpop.f32.mrf.mxu0
      %v1595 = vadd.f32 0.0, %v1594
      %1596 = vmatmul.f32.gmra.mxu0 %v1386
      %v1597 = vpop.f32.mrf.mxu0
      %v1598 = vadd.f32 0.0, %v1597
      %1599 = vmatmul.f32.gmra.mxu0 %v1389
      %v1600 = vpop.f32.mrf.mxu0
      %v1601 = vadd.f32 0.0, %v1600
      %1602 = vmatmul.f32.gmra.mxu0 %v1392
      %v1603 = vpop.f32.mrf.mxu0
      %v1604 = vadd.f32 0.0, %v1603
      %1605 = vmatmul.f32.gmra.mxu0 %v1395
      %v1606 = vpop.f32.mrf.mxu0
      %v1607 = vadd.f32 0.0, %v1606
      %1608 = vmatmul.f32.gmra.mxu0 %v1398
      %v1609 = vpop.f32.mrf.mxu0
      %v1610 = vadd.f32 0.0, %v1609
      %1611 = vmatmul.f32.gmra.mxu0 %v1401
      %v1612 = vpop.f32.mrf.mxu0
      %v1613 = vadd.f32 0.0, %v1612
      %1614 = vmatmul.f32.gmra.mxu0 %v1404
      %v1615 = vpop.f32.mrf.mxu0
      %v1616 = vadd.f32 0.0, %v1615
      %1617 = vmatmul.f32.gmra.mxu0 %v1407
      %v1618 = vpop.f32.mrf.mxu0
      %v1619 = vadd.f32 0.0, %v1618
      %1620 = vmatmul.f32.gmra.mxu0 %v1410
      %v1621 = vpop.f32.mrf.mxu0
      %v1622 = vadd.f32 0.0, %v1621
      %1623 = vmatmul.f32.gmra.mxu0 %v1413
      %v1624 = vpop.f32.mrf.mxu0
      %v1625 = vadd.f32 0.0, %v1624
      %1626 = vmatmul.f32.gmra.mxu0 %v1416
      %v1627 = vpop.f32.mrf.mxu0
      %v1628 = vadd.f32 0.0, %v1627
      %1629 = vmatmul.f32.gmra.mxu0 %v1419
      %v1630 = vpop.f32.mrf.mxu0
      %v1631 = vadd.f32 0.0, %v1630
      %1632 = vmatmul.f32.gmra.mxu0 %v1422
      %v1633 = vpop.f32.mrf.mxu0
      %v1634 = vadd.f32 0.0, %v1633
      %1635 = vmatmul.f32.gmra.mxu0 %v1425
      %v1636 = vpop.f32.mrf.mxu0
      %v1637 = vadd.f32 0.0, %v1636
      %1638 = vmatmul.f32.gmra.mxu0 %v1428
      %v1639 = vpop.f32.mrf.mxu0
      %v1640 = vadd.f32 0.0, %v1639
      %1641 = vmatmul.f32.gmra.mxu0 %v1431
      %v1642 = vpop.f32.mrf.mxu0
      %v1643 = vadd.f32 0.0, %v1642
      %1644 = vmatmul.f32.gmra.mxu0 %v1434
      %v1645 = vpop.f32.mrf.mxu0
      %v1646 = vadd.f32 0.0, %v1645
      %1647 = vmatmul.f32.gmra.mxu0 %v1437
      %v1648 = vpop.f32.mrf.mxu0
      %v1649 = vadd.f32 0.0, %v1648
      %1650 = vmatmul.f32.gmra.mxu0 %v1440
      %v1651 = vpop.f32.mrf.mxu0
      %v1652 = vadd.f32 0.0, %v1651
      %1653 = vmatmul.f32.gmra.mxu0 %v1443
      %v1654 = vpop.f32.mrf.mxu0
      %v1655 = vadd.f32 0.0, %v1654
      %1656 = vmatmul.f32.gmra.mxu0 %v1446
      %v1657 = vpop.f32.mrf.mxu0
      %v1658 = vadd.f32 0.0, %v1657
      %1659 = vmatmul.f32.gmra.mxu0 %v1449
      %v1660 = vpop.f32.mrf.mxu0
      %v1661 = vadd.f32 0.0, %v1660
      %1662 = vmatmul.f32.gmra.mxu0 %v1452
      %v1663 = vpop.f32.mrf.mxu0
      %v1664 = vadd.f32 0.0, %v1663
      %1665 = vmatmul.f32.gmra.mxu0 %v1455
      %v1666 = vpop.f32.mrf.mxu0
      %v1667 = vadd.f32 0.0, %v1666
      %1668 = vmatmul.f32.gmra.mxu0 %v1458
      %v1669 = vpop.f32.mrf.mxu0
      %v1670 = vadd.f32 0.0, %v1669
      %1671 = vmatmul.f32.gmra.mxu0 %v1461
      %v1672 = vpop.f32.mrf.mxu0
      %v1673 = vadd.f32 0.0, %v1672
      %1674 = vmatmul.f32.gmra.mxu0 %v1464
      %v1675 = vpop.f32.mrf.mxu0
      %v1676 = vadd.f32 0.0, %v1675
      %1677 = vmatmul.f32.gmra.mxu0 %v1467
      %v1678 = vpop.f32.mrf.mxu0
      %v1679 = vadd.f32 0.0, %v1678
      %1680 = vmatmul.f32.gmra.mxu0 %v1470
      %v1681 = vpop.f32.mrf.mxu0
      %v1682 = vadd.f32 0.0, %v1681
      %1683 = vmatmul.f32.gmra.mxu0 %v1473
      %v1684 = vpop.f32.mrf.mxu0
      %v1685 = vadd.f32 0.0, %v1684
      %1686 = vmatmul.f32.gmra.mxu0 %v1476
      %v1687 = vpop.f32.mrf.mxu0
      %v1688 = vadd.f32 0.0, %v1687
      %1689 = vmatmul.f32.gmra.mxu0 %v1479
      %v1690 = vpop.f32.mrf.mxu0
      %v1691 = vadd.f32 0.0, %v1690
      %1692 = vmatmul.f32.gmra.mxu0 %v1482
      %v1693 = vpop.f32.mrf.mxu0
      %v1694 = vadd.f32 0.0, %v1693
      %1695 = vmatmul.f32.gmra.mxu0 %v1485
      %v1696 = vpop.f32.mrf.mxu0
      %v1697 = vadd.f32 0.0, %v1696
      %1698 = vmatmul.f32.gmra.mxu0 %v1488
      %v1699 = vpop.f32.mrf.mxu0
      %v1700 = vadd.f32 0.0, %v1699
      %1701 = vmatmul.f32.gmra.mxu0 %v1491
      %v1702 = vpop.f32.mrf.mxu0
      %v1703 = vadd.f32 0.0, %v1702
      %1704 = vmatmul.f32.gmra.mxu0 %v1494
      %v1705 = vpop.f32.mrf.mxu0
      %v1706 = vadd.f32 0.0, %v1705
      %1707 = vmatmul.f32.gmra.mxu0 %v1497
      %v1708 = vpop.f32.mrf.mxu0
      %v1709 = vadd.f32 0.0, %v1708
      %1710 = vmatmul.f32.gmra.mxu0 %v1500
      %v1711 = vpop.f32.mrf.mxu0
      %v1712 = vadd.f32 0.0, %v1711
      %1713 = vmatmul.f32.gmra.mxu0 %v1503
      %v1714 = vpop.f32.mrf.mxu0
      %v1715 = vadd.f32 0.0, %v1714
      %1716 = vmatmul.f32.gmra.mxu0 %v1506
      %v1717 = vpop.f32.mrf.mxu0
      %v1718 = vadd.f32 0.0, %v1717
      %1719 = vmatmul.f32.gmra.mxu0 %v1509
      %v1720 = vpop.f32.mrf.mxu0
      %v1721 = vadd.f32 0.0, %v1720
      %1722 = vmatmul.f32.gmra.mxu0 %v1512
      %v1723 = vpop.f32.mrf.mxu0
      %v1724 = vadd.f32 0.0, %v1723
      %1725 = vmatmul.f32.gmra.mxu0 %v1515
      %v1726 = vpop.f32.mrf.mxu0
      %v1727 = vadd.f32 0.0, %v1726
      %1728 = vmatmul.f32.gmra.mxu0 %v1518
      %v1729 = vpop.f32.mrf.mxu0
      %v1730 = vadd.f32 0.0, %v1729
      %1731 = vmatmul.f32.gmra.mxu0 %v1521
      %v1732 = vpop.f32.mrf.mxu0
      %v1733 = vadd.f32 0.0, %v1732
      %1734 = vmatmul.f32.gmra.mxu0 %v1524
      %v1735 = vpop.f32.mrf.mxu0
      %v1736 = vadd.f32 0.0, %v1735
      %1737 = vmatmul.f32.gmra.mxu0 %v1527
      %v1738 = vpop.f32.mrf.mxu0
      %v1739 = vadd.f32 0.0, %v1738
      %1740 = vmatmul.f32.gmra.mxu0 %v1530
      %v1741 = vpop.f32.mrf.mxu0
      %v1742 = vadd.f32 0.0, %v1741
      %1743 = vmatmul.f32.gmra.mxu0 %v1533
      %v1744 = vpop.f32.mrf.mxu0
      %v1745 = vadd.f32 0.0, %v1744
      %1746 = vmatmul.f32.gmra.mxu0 %v1536
      %v1747 = vpop.f32.mrf.mxu0
      %v1748 = vadd.f32 0.0, %v1747
      %1749 = vmatmul.f32.gmra.mxu0 %v1539
      %v1750 = vpop.f32.mrf.mxu0
      %v1751 = vadd.f32 0.0, %v1750
      %1752 = vmatmul.f32.gmra.mxu0 %v1542
      %v1753 = vpop.f32.mrf.mxu0
      %v1754 = vadd.f32 0.0, %v1753
      %1755 = vmatmul.f32.gmra.mxu0 %v1545
      %v1756 = vpop.f32.mrf.mxu0
      %v1757 = vadd.f32 0.0, %v1756
      %1758 = vmatmul.f32.gmra.mxu0 %v1548
      %v1759 = vpop.f32.mrf.mxu0
      %v1760 = vadd.f32 0.0, %v1759
      %1761 = vmatmul.f32.gmra.mxu0 %v1551
      %v1762 = vpop.f32.mrf.mxu0
      %v1763 = vadd.f32 0.0, %v1762
      %1764 = vmatmul.f32.gmra.mxu0 %v1554
      %v1765 = vpop.f32.mrf.mxu0
      %v1766 = vadd.f32 0.0, %v1765
      %1767 = vmatmul.f32.gmra.mxu0 %v1557
      %v1768 = vpop.f32.mrf.mxu0
      %v1769 = vadd.f32 0.0, %v1768
      %1770 = vmatmul.f32.gmra.mxu0 %v1560
      %v1771 = vpop.f32.mrf.mxu0
      %v1772 = vadd.f32 0.0, %v1771
      %1773 = vdwg.mxu0
      %v1774 = vadd.f32 %v1113, %v1583
      %v1775 = vadd.f32 %v1116, %v1586
      %v1776 = vadd.f32 %v1119, %v1589
      %v1777 = vadd.f32 %v1122, %v1592
      %v1778 = vadd.f32 %v1125, %v1595
      %v1779 = vadd.f32 %v1128, %v1598
      %v1780 = vadd.f32 %v1131, %v1601
      %v1781 = vadd.f32 %v1134, %v1604
      %v1782 = vadd.f32 %v1137, %v1607
      %v1783 = vadd.f32 %v1140, %v1610
      %v1784 = vadd.f32 %v1143, %v1613
      %v1785 = vadd.f32 %v1146, %v1616
      %v1786 = vadd.f32 %v1149, %v1619
      %v1787 = vadd.f32 %v1152, %v1622
      %v1788 = vadd.f32 %v1155, %v1625
      %v1789 = vadd.f32 %v1158, %v1628
      %v1790 = vadd.f32 %v1161, %v1631
      %v1791 = vadd.f32 %v1164, %v1634
      %v1792 = vadd.f32 %v1167, %v1637
      %v1793 = vadd.f32 %v1170, %v1640
      %v1794 = vadd.f32 %v1173, %v1643
      %v1795 = vadd.f32 %v1176, %v1646
      %v1796 = vadd.f32 %v1179, %v1649
      %v1797 = vadd.f32 %v1182, %v1652
      %v1798 = vadd.f32 %v1185, %v1655
      %v1799 = vadd.f32 %v1188, %v1658
      %v1800 = vadd.f32 %v1191, %v1661
      %v1801 = vadd.f32 %v1194, %v1664
      %v1802 = vadd.f32 %v1197, %v1667
      %v1803 = vadd.f32 %v1200, %v1670
      %v1804 = vadd.f32 %v1203, %v1673
      %v1805 = vadd.f32 %v1206, %v1676
      %v1806 = vadd.f32 %v1209, %v1679
      %v1807 = vadd.f32 %v1212, %v1682
      %v1808 = vadd.f32 %v1215, %v1685
      %v1809 = vadd.f32 %v1218, %v1688
      %v1810 = vadd.f32 %v1221, %v1691
      %v1811 = vadd.f32 %v1224, %v1694
      %v1812 = vadd.f32 %v1227, %v1697
      %v1813 = vadd.f32 %v1230, %v1700
      %v1814 = vadd.f32 %v1233, %v1703
      %v1815 = vadd.f32 %v1236, %v1706
      %v1816 = vadd.f32 %v1239, %v1709
      %v1817 = vadd.f32 %v1242, %v1712
      %v1818 = vadd.f32 %v1245, %v1715
      %v1819 = vadd.f32 %v1248, %v1718
      %v1820 = vadd.f32 %v1251, %v1721
      %v1821 = vadd.f32 %v1254, %v1724
      %v1822 = vadd.f32 %v1257, %v1727
      %v1823 = vadd.f32 %v1260, %v1730
      %v1824 = vadd.f32 %v1263, %v1733
      %v1825 = vadd.f32 %v1266, %v1736
      %v1826 = vadd.f32 %v1269, %v1739
      %v1827 = vadd.f32 %v1272, %v1742
      %v1828 = vadd.f32 %v1275, %v1745
      %v1829 = vadd.f32 %v1278, %v1748
      %v1830 = vadd.f32 %v1281, %v1751
      %v1831 = vadd.f32 %v1284, %v1754
      %v1832 = vadd.f32 %v1287, %v1757
      %v1833 = vadd.f32 %v1290, %v1760
      %v1834 = vadd.f32 %v1293, %v1763
      %v1835 = vadd.f32 %v1296, %v1766
      %v1836 = vadd.f32 %v1299, %v1769
      %v1837 = vadd.f32 %v1302, %v1772
      %s1838 = scalar_lea.vmem %s334, 24
      %v1839 = vld [vmem:[%s1838] sm:$0xff]
      %v1840 = vld [vmem:[%s1838 + $0x8] sm:$0xff]
      %v1841 = vld [vmem:[%s1838 + $0x18] sm:$0xff]
      %v1842 = vld [vmem:[%s1838 + $0x20] sm:$0xff]
      %v1843 = vld [vmem:[%s1838 + $0x30] sm:$0xff]
      %v1844 = vld [vmem:[%s1838 + $0x38] sm:$0xff]
      %v1845 = vld [vmem:[%s1838 + $0x48] sm:$0xff]
      %v1846 = vld [vmem:[%s1838 + $0x50] sm:$0xff]
      %v1847 = vld [vmem:[%s1838 + $0x60] sm:$0xff]
      %v1848 = vld [vmem:[%s1838 + $0x68] sm:$0xff]
      %v1849 = vld [vmem:[%s1838 + $0x78] sm:$0xff]
      %v1850 = vld [vmem:[%s1838 + $0x80] sm:$0xff]
      %v1851 = vld [vmem:[%s1838 + $0x90] sm:$0xff]
      %v1852 = vld [vmem:[%s1838 + $0x98] sm:$0xff]
      %v1853 = vld [vmem:[%s1838 + $0xa8] sm:$0xff]
      %v1854 = vld [vmem:[%s1838 + $0xb0] sm:$0xff]
      %v1855 = vld [vmem:[%s1838 + $0xc0] sm:$0xff]
      %v1856 = vld [vmem:[%s1838 + $0xc8] sm:$0xff]
      %v1857 = vld [vmem:[%s1838 + $0xd8] sm:$0xff]
      %v1858 = vld [vmem:[%s1838 + $0xe0] sm:$0xff]
      %v1859 = vld [vmem:[%s1838 + $0xf0] sm:$0xff]
      %v1860 = vld [vmem:[%s1838 + $0xf8] sm:$0xff]
      %v1861 = vld [vmem:[%s1838 + $0x108] sm:$0xff]
      %v1862 = vld [vmem:[%s1838 + $0x110] sm:$0xff]
      %v1863 = vld [vmem:[%s1838 + $0x120] sm:$0xff]
      %v1864 = vld [vmem:[%s1838 + $0x128] sm:$0xff]
      %v1865 = vld [vmem:[%s1838 + $0x138] sm:$0xff]
      %v1866 = vld [vmem:[%s1838 + $0x140] sm:$0xff]
      %v1867 = vld [vmem:[%s1838 + $0x150] sm:$0xff]
      %v1868 = vld [vmem:[%s1838 + $0x158] sm:$0xff]
      %v1869 = vld [vmem:[%s1838 + $0x168] sm:$0xff]
      %v1870 = vld [vmem:[%s1838 + $0x170] sm:$0xff]
      %v1871 = vld [vmem:[%s1838 + $0x1b0] sm:$0xff]
      %v1872 = vld [vmem:[%s1838 + $0x1b8] sm:$0xff]
      %v1873 = vld [vmem:[%s1838 + $0x1c8] sm:$0xff]
      %v1874 = vld [vmem:[%s1838 + $0x1d0] sm:$0xff]
      %v1875 = vld [vmem:[%s1838 + $0x1e0] sm:$0xff]
      %v1876 = vld [vmem:[%s1838 + $0x1e8] sm:$0xff]
      %v1877 = vld [vmem:[%s1838 + $0x1f8] sm:$0xff]
      %v1878 = vld [vmem:[%s1838 + $0x200] sm:$0xff]
      %v1879 = vld [vmem:[%s1838 + $0x210] sm:$0xff]
      %v1880 = vld [vmem:[%s1838 + $0x218] sm:$0xff]
      %v1881 = vld [vmem:[%s1838 + $0x228] sm:$0xff]
      %v1882 = vld [vmem:[%s1838 + $0x230] sm:$0xff]
      %v1883 = vld [vmem:[%s1838 + $0x240] sm:$0xff]
      %v1884 = vld [vmem:[%s1838 + $0x248] sm:$0xff]
      %v1885 = vld [vmem:[%s1838 + $0x258] sm:$0xff]
      %v1886 = vld [vmem:[%s1838 + $0x260] sm:$0xff]
      %v1887 = vld [vmem:[%s1838 + $0x270] sm:$0xff]
      %v1888 = vld [vmem:[%s1838 + $0x278] sm:$0xff]
      %v1889 = vld [vmem:[%s1838 + $0x288] sm:$0xff]
      %v1890 = vld [vmem:[%s1838 + $0x290] sm:$0xff]
      %v1891 = vld [vmem:[%s1838 + $0x2a0] sm:$0xff]
      %v1892 = vld [vmem:[%s1838 + $0x2a8] sm:$0xff]
      %v1893 = vld [vmem:[%s1838 + $0x2b8] sm:$0xff]
      %v1894 = vld [vmem:[%s1838 + $0x2c0] sm:$0xff]
      %v1895 = vld [vmem:[%s1838 + $0x2d0] sm:$0xff]
      %v1896 = vld [vmem:[%s1838 + $0x2d8] sm:$0xff]
      %v1897 = vld [vmem:[%s1838 + $0x2e8] sm:$0xff]
      %v1898 = vld [vmem:[%s1838 + $0x2f0] sm:$0xff]
      %v1899 = vld [vmem:[%s1838 + $0x300] sm:$0xff]
      %v1900 = vld [vmem:[%s1838 + $0x308] sm:$0xff]
      %v1901 = vld [vmem:[%s1838 + $0x318] sm:$0xff]
      %v1902 = vld [vmem:[%s1838 + $0x320] sm:$0xff]
      %s1903 = scalar_lea.vmem %s1, 12
      %v1904 = vld [vmem:[%s1903] sm:$0xf]
      %v1906 = vsel %vm494, %v1839, 0
      %v1909 = vsel %vm494, %v1840, 0
      %v1912 = vsel %vm494, %v1841, 0
      %v1915 = vsel %vm494, %v1842, 0
      %v1918 = vsel %vm494, %v1843, 0
      %v1921 = vsel %vm494, %v1844, 0
      %v1924 = vsel %vm494, %v1845, 0
      %v1927 = vsel %vm494, %v1846, 0
      %v1930 = vsel %vm494, %v1847, 0
      %v1933 = vsel %vm494, %v1848, 0
      %v1936 = vsel %vm494, %v1849, 0
      %v1939 = vsel %vm494, %v1850, 0
      %v1942 = vsel %vm494, %v1851, 0
      %v1945 = vsel %vm494, %v1852, 0
      %v1948 = vsel %vm494, %v1853, 0
      %v1951 = vsel %vm494, %v1854, 0
      %v1954 = vsel %vm494, %v1855, 0
      %v1957 = vsel %vm494, %v1856, 0
      %v1960 = vsel %vm494, %v1857, 0
      %v1963 = vsel %vm494, %v1858, 0
      %v1966 = vsel %vm494, %v1859, 0
      %v1969 = vsel %vm494, %v1860, 0
      %v1972 = vsel %vm494, %v1861, 0
      %v1975 = vsel %vm494, %v1862, 0
      %v1978 = vsel %vm494, %v1863, 0
      %v1981 = vsel %vm494, %v1864, 0
      %v1984 = vsel %vm494, %v1865, 0
      %v1987 = vsel %vm494, %v1866, 0
      %v1990 = vsel %vm494, %v1867, 0
      %v1993 = vsel %vm494, %v1868, 0
      %v1996 = vsel %vm494, %v1869, 0
      %v1999 = vsel %vm494, %v1870, 0
      %v2002 = vsel %vm494, %v1871, 0
      %v2005 = vsel %vm494, %v1872, 0
      %v2008 = vsel %vm494, %v1873, 0
      %v2011 = vsel %vm494, %v1874, 0
      %v2014 = vsel %vm494, %v1875, 0
      %v2017 = vsel %vm494, %v1876, 0
      %v2020 = vsel %vm494, %v1877, 0
      %v2023 = vsel %vm494, %v1878, 0
      %v2026 = vsel %vm494, %v1879, 0
      %v2029 = vsel %vm494, %v1880, 0
      %v2032 = vsel %vm494, %v1881, 0
      %v2035 = vsel %vm494, %v1882, 0
      %v2038 = vsel %vm494, %v1883, 0
      %v2041 = vsel %vm494, %v1884, 0
      %v2044 = vsel %vm494, %v1885, 0
      %v2047 = vsel %vm494, %v1886, 0
      %v2050 = vsel %vm494, %v1887, 0
      %v2053 = vsel %vm494, %v1888, 0
      %v2056 = vsel %vm494, %v1889, 0
      %v2059 = vsel %vm494, %v1890, 0
      %v2062 = vsel %vm494, %v1891, 0
      %v2065 = vsel %vm494, %v1892, 0
      %v2068 = vsel %vm494, %v1893, 0
      %v2071 = vsel %vm494, %v1894, 0
      %v2074 = vsel %vm494, %v1895, 0
      %v2077 = vsel %vm494, %v1896, 0
      %v2080 = vsel %vm494, %v1897, 0
      %v2083 = vsel %vm494, %v1898, 0
      %v2086 = vsel %vm494, %v1899, 0
      %v2089 = vsel %vm494, %v1900, 0
      %v2092 = vsel %vm494, %v1901, 0
      %v2095 = vsel %vm494, %v1902, 0
      %v2098 = vsel %vm687, %v1904, 0
      %2100 = vmatpush.msra.mxu0 0.0
      %2101 = vmatpush.msra.mxu0 0.0
      %2102 = vmatpush.msra.mxu0 0.0
      %2103 = vmatpush.msra.mxu0 0.0
      %2104 = vmatpush.msra.mxu0 0.0
      %2105 = vmatpush.msra.mxu0 0.0
      %2106 = vmatpush.msra.mxu0 0.0
      %2107 = vmatpush.msra.mxu0 0.0
      %2108 = vmatpush.msra.mxu0 0.0
      %2109 = vmatpush.msra.mxu0 0.0
      %2110 = vmatpush.msra.mxu0 0.0
      %2111 = vmatpush.msra.mxu0 0.0
      %2112 = vmatpush.msra.mxu0 0.0
      %2113 = vmatpush.msra.mxu0 0.0
      %2114 = vmatpush.msra.mxu0 0.0
      %2115 = vmatpush.msra.mxu0 %v2098
      %2116 = vmatmul.f32.gmra.mxu0 %v1906
      %v2117 = vpop.f32.mrf.mxu0
      %v2118 = vadd.f32 0.0, %v2117
      %2119 = vmatmul.f32.gmra.mxu0 %v1909
      %v2120 = vpop.f32.mrf.mxu0
      %v2121 = vadd.f32 0.0, %v2120
      %2122 = vmatmul.f32.gmra.mxu0 %v1912
      %v2123 = vpop.f32.mrf.mxu0
      %v2124 = vadd.f32 0.0, %v2123
      %2125 = vmatmul.f32.gmra.mxu0 %v1915
      %v2126 = vpop.f32.mrf.mxu0
      %v2127 = vadd.f32 0.0, %v2126
      %2128 = vmatmul.f32.gmra.mxu0 %v1918
      %v2129 = vpop.f32.mrf.mxu0
      %v2130 = vadd.f32 0.0, %v2129
      %2131 = vmatmul.f32.gmra.mxu0 %v1921
      %v2132 = vpop.f32.mrf.mxu0
      %v2133 = vadd.f32 0.0, %v2132
      %2134 = vmatmul.f32.gmra.mxu0 %v1924
      %v2135 = vpop.f32.mrf.mxu0
      %v2136 = vadd.f32 0.0, %v2135
      %2137 = vmatmul.f32.gmra.mxu0 %v1927
      %v2138 = vpop.f32.mrf.mxu0
      %v2139 = vadd.f32 0.0, %v2138
      %2140 = vmatmul.f32.gmra.mxu0 %v1930
      %v2141 = vpop.f32.mrf.mxu0
      %v2142 = vadd.f32 0.0, %v2141
      %2143 = vmatmul.f32.gmra.mxu0 %v1933
      %v2144 = vpop.f32.mrf.mxu0
      %v2145 = vadd.f32 0.0, %v2144
      %2146 = vmatmul.f32.gmra.mxu0 %v1936
      %v2147 = vpop.f32.mrf.mxu0
      %v2148 = vadd.f32 0.0, %v2147
      %2149 = vmatmul.f32.gmra.mxu0 %v1939
      %v2150 = vpop.f32.mrf.mxu0
      %v2151 = vadd.f32 0.0, %v2150
      %2152 = vmatmul.f32.gmra.mxu0 %v1942
      %v2153 = vpop.f32.mrf.mxu0
      %v2154 = vadd.f32 0.0, %v2153
      %2155 = vmatmul.f32.gmra.mxu0 %v1945
      %v2156 = vpop.f32.mrf.mxu0
      %v2157 = vadd.f32 0.0, %v2156
      %2158 = vmatmul.f32.gmra.mxu0 %v1948
      %v2159 = vpop.f32.mrf.mxu0
      %v2160 = vadd.f32 0.0, %v2159
      %2161 = vmatmul.f32.gmra.mxu0 %v1951
      %v2162 = vpop.f32.mrf.mxu0
      %v2163 = vadd.f32 0.0, %v2162
      %2164 = vmatmul.f32.gmra.mxu0 %v1954
      %v2165 = vpop.f32.mrf.mxu0
      %v2166 = vadd.f32 0.0, %v2165
      %2167 = vmatmul.f32.gmra.mxu0 %v1957
      %v2168 = vpop.f32.mrf.mxu0
      %v2169 = vadd.f32 0.0, %v2168
      %2170 = vmatmul.f32.gmra.mxu0 %v1960
      %v2171 = vpop.f32.mrf.mxu0
      %v2172 = vadd.f32 0.0, %v2171
      %2173 = vmatmul.f32.gmra.mxu0 %v1963
      %v2174 = vpop.f32.mrf.mxu0
      %v2175 = vadd.f32 0.0, %v2174
      %2176 = vmatmul.f32.gmra.mxu0 %v1966
      %v2177 = vpop.f32.mrf.mxu0
      %v2178 = vadd.f32 0.0, %v2177
      %2179 = vmatmul.f32.gmra.mxu0 %v1969
      %v2180 = vpop.f32.mrf.mxu0
      %v2181 = vadd.f32 0.0, %v2180
      %2182 = vmatmul.f32.gmra.mxu0 %v1972
      %v2183 = vpop.f32.mrf.mxu0
      %v2184 = vadd.f32 0.0, %v2183
      %2185 = vmatmul.f32.gmra.mxu0 %v1975
      %v2186 = vpop.f32.mrf.mxu0
      %v2187 = vadd.f32 0.0, %v2186
      %2188 = vmatmul.f32.gmra.mxu0 %v1978
      %v2189 = vpop.f32.mrf.mxu0
      %v2190 = vadd.f32 0.0, %v2189
      %2191 = vmatmul.f32.gmra.mxu0 %v1981
      %v2192 = vpop.f32.mrf.mxu0
      %v2193 = vadd.f32 0.0, %v2192
      %2194 = vmatmul.f32.gmra.mxu0 %v1984
      %v2195 = vpop.f32.mrf.mxu0
      %v2196 = vadd.f32 0.0, %v2195
      %2197 = vmatmul.f32.gmra.mxu0 %v1987
      %v2198 = vpop.f32.mrf.mxu0
      %v2199 = vadd.f32 0.0, %v2198
      %2200 = vmatmul.f32.gmra.mxu0 %v1990
      %v2201 = vpop.f32.mrf.mxu0
      %v2202 = vadd.f32 0.0, %v2201
      %2203 = vmatmul.f32.gmra.mxu0 %v1993
      %v2204 = vpop.f32.mrf.mxu0
      %v2205 = vadd.f32 0.0, %v2204
      %2206 = vmatmul.f32.gmra.mxu0 %v1996
      %v2207 = vpop.f32.mrf.mxu0
      %v2208 = vadd.f32 0.0, %v2207
      %2209 = vmatmul.f32.gmra.mxu0 %v1999
      %v2210 = vpop.f32.mrf.mxu0
      %v2211 = vadd.f32 0.0, %v2210
      %2212 = vmatmul.f32.gmra.mxu0 %v2002
      %v2213 = vpop.f32.mrf.mxu0
      %v2214 = vadd.f32 0.0, %v2213
      %2215 = vmatmul.f32.gmra.mxu0 %v2005
      %v2216 = vpop.f32.mrf.mxu0
      %v2217 = vadd.f32 0.0, %v2216
      %2218 = vmatmul.f32.gmra.mxu0 %v2008
      %v2219 = vpop.f32.mrf.mxu0
      %v2220 = vadd.f32 0.0, %v2219
      %2221 = vmatmul.f32.gmra.mxu0 %v2011
      %v2222 = vpop.f32.mrf.mxu0
      %v2223 = vadd.f32 0.0, %v2222
      %2224 = vmatmul.f32.gmra.mxu0 %v2014
      %v2225 = vpop.f32.mrf.mxu0
      %v2226 = vadd.f32 0.0, %v2225
      %2227 = vmatmul.f32.gmra.mxu0 %v2017
      %v2228 = vpop.f32.mrf.mxu0
      %v2229 = vadd.f32 0.0, %v2228
      %2230 = vmatmul.f32.gmra.mxu0 %v2020
      %v2231 = vpop.f32.mrf.mxu0
      %v2232 = vadd.f32 0.0, %v2231
      %2233 = vmatmul.f32.gmra.mxu0 %v2023
      %v2234 = vpop.f32.mrf.mxu0
      %v2235 = vadd.f32 0.0, %v2234
      %2236 = vmatmul.f32.gmra.mxu0 %v2026
      %v2237 = vpop.f32.mrf.mxu0
      %v2238 = vadd.f32 0.0, %v2237
      %2239 = vmatmul.f32.gmra.mxu0 %v2029
      %v2240 = vpop.f32.mrf.mxu0
      %v2241 = vadd.f32 0.0, %v2240
      %2242 = vmatmul.f32.gmra.mxu0 %v2032
      %v2243 = vpop.f32.mrf.mxu0
      %v2244 = vadd.f32 0.0, %v2243
      %2245 = vmatmul.f32.gmra.mxu0 %v2035
      %v2246 = vpop.f32.mrf.mxu0
      %v2247 = vadd.f32 0.0, %v2246
      %2248 = vmatmul.f32.gmra.mxu0 %v2038
      %v2249 = vpop.f32.mrf.mxu0
      %v2250 = vadd.f32 0.0, %v2249
      %2251 = vmatmul.f32.gmra.mxu0 %v2041
      %v2252 = vpop.f32.mrf.mxu0
      %v2253 = vadd.f32 0.0, %v2252
      %2254 = vmatmul.f32.gmra.mxu0 %v2044
      %v2255 = vpop.f32.mrf.mxu0
      %v2256 = vadd.f32 0.0, %v2255
      %2257 = vmatmul.f32.gmra.mxu0 %v2047
      %v2258 = vpop.f32.mrf.mxu0
      %v2259 = vadd.f32 0.0, %v2258
      %2260 = vmatmul.f32.gmra.mxu0 %v2050
      %v2261 = vpop.f32.mrf.mxu0
      %v2262 = vadd.f32 0.0, %v2261
      %2263 = vmatmul.f32.gmra.mxu0 %v2053
      %v2264 = vpop.f32.mrf.mxu0
      %v2265 = vadd.f32 0.0, %v2264
      %2266 = vmatmul.f32.gmra.mxu0 %v2056
      %v2267 = vpop.f32.mrf.mxu0
      %v2268 = vadd.f32 0.0, %v2267
      %2269 = vmatmul.f32.gmra.mxu0 %v2059
      %v2270 = vpop.f32.mrf.mxu0
      %v2271 = vadd.f32 0.0, %v2270
      %2272 = vmatmul.f32.gmra.mxu0 %v2062
      %v2273 = vpop.f32.mrf.mxu0
      %v2274 = vadd.f32 0.0, %v2273
      %2275 = vmatmul.f32.gmra.mxu0 %v2065
      %v2276 = vpop.f32.mrf.mxu0
      %v2277 = vadd.f32 0.0, %v2276
      %2278 = vmatmul.f32.gmra.mxu0 %v2068
      %v2279 = vpop.f32.mrf.mxu0
      %v2280 = vadd.f32 0.0, %v2279
      %2281 = vmatmul.f32.gmra.mxu0 %v2071
      %v2282 = vpop.f32.mrf.mxu0
      %v2283 = vadd.f32 0.0, %v2282
      %2284 = vmatmul.f32.gmra.mxu0 %v2074
      %v2285 = vpop.f32.mrf.mxu0
      %v2286 = vadd.f32 0.0, %v2285
      %2287 = vmatmul.f32.gmra.mxu0 %v2077
      %v2288 = vpop.f32.mrf.mxu0
      %v2289 = vadd.f32 0.0, %v2288
      %2290 = vmatmul.f32.gmra.mxu0 %v2080
      %v2291 = vpop.f32.mrf.mxu0
      %v2292 = vadd.f32 0.0, %v2291
      %2293 = vmatmul.f32.gmra.mxu0 %v2083
      %v2294 = vpop.f32.mrf.mxu0
      %v2295 = vadd.f32 0.0, %v2294
      %2296 = vmatmul.f32.gmra.mxu0 %v2086
      %v2297 = vpop.f32.mrf.mxu0
      %v2298 = vadd.f32 0.0, %v2297
      %2299 = vmatmul.f32.gmra.mxu0 %v2089
      %v2300 = vpop.f32.mrf.mxu0
      %v2301 = vadd.f32 0.0, %v2300
      %2302 = vmatmul.f32.gmra.mxu0 %v2092
      %v2303 = vpop.f32.mrf.mxu0
      %v2304 = vadd.f32 0.0, %v2303
      %2305 = vmatmul.f32.gmra.mxu0 %v2095
      %v2306 = vpop.f32.mrf.mxu0
      %v2307 = vadd.f32 0.0, %v2306
      %2308 = vdwg.mxu0
      %v2309 = vadd.f32 %v1774, %v2118
      %v2310 = vadd.f32 %v1775, %v2121
      %v2311 = vadd.f32 %v1776, %v2124
      %v2312 = vadd.f32 %v1777, %v2127
      %v2313 = vadd.f32 %v1778, %v2130
      %v2314 = vadd.f32 %v1779, %v2133
      %v2315 = vadd.f32 %v1780, %v2136
      %v2316 = vadd.f32 %v1781, %v2139
      %v2317 = vadd.f32 %v1782, %v2142
      %v2318 = vadd.f32 %v1783, %v2145
      %v2319 = vadd.f32 %v1784, %v2148
      %v2320 = vadd.f32 %v1785, %v2151
      %v2321 = vadd.f32 %v1786, %v2154
      %v2322 = vadd.f32 %v1787, %v2157
      %v2323 = vadd.f32 %v1788, %v2160
      %v2324 = vadd.f32 %v1789, %v2163
      %v2325 = vadd.f32 %v1790, %v2166
      %v2326 = vadd.f32 %v1791, %v2169
      %v2327 = vadd.f32 %v1792, %v2172
      %v2328 = vadd.f32 %v1793, %v2175
      %v2329 = vadd.f32 %v1794, %v2178
      %v2330 = vadd.f32 %v1795, %v2181
      %v2331 = vadd.f32 %v1796, %v2184
      %v2332 = vadd.f32 %v1797, %v2187
      %v2333 = vadd.f32 %v1798, %v2190
      %v2334 = vadd.f32 %v1799, %v2193
      %v2335 = vadd.f32 %v1800, %v2196
      %v2336 = vadd.f32 %v1801, %v2199
      %v2337 = vadd.f32 %v1802, %v2202
      %v2338 = vadd.f32 %v1803, %v2205
      %v2339 = vadd.f32 %v1804, %v2208
      %v2340 = vadd.f32 %v1805, %v2211
      %v2341 = vadd.f32 %v1806, %v2214
      %v2342 = vadd.f32 %v1807, %v2217
      %v2343 = vadd.f32 %v1808, %v2220
      %v2344 = vadd.f32 %v1809, %v2223
      %v2345 = vadd.f32 %v1810, %v2226
      %v2346 = vadd.f32 %v1811, %v2229
      %v2347 = vadd.f32 %v1812, %v2232
      %v2348 = vadd.f32 %v1813, %v2235
      %v2349 = vadd.f32 %v1814, %v2238
      %v2350 = vadd.f32 %v1815, %v2241
      %v2351 = vadd.f32 %v1816, %v2244
      %v2352 = vadd.f32 %v1817, %v2247
      %v2353 = vadd.f32 %v1818, %v2250
      %v2354 = vadd.f32 %v1819, %v2253
      %v2355 = vadd.f32 %v1820, %v2256
      %v2356 = vadd.f32 %v1821, %v2259
      %v2357 = vadd.f32 %v1822, %v2262
      %v2358 = vadd.f32 %v1823, %v2265
      %v2359 = vadd.f32 %v1824, %v2268
      %v2360 = vadd.f32 %v1825, %v2271
      %v2361 = vadd.f32 %v1826, %v2274
      %v2362 = vadd.f32 %v1827, %v2277
      %v2363 = vadd.f32 %v1828, %v2280
      %v2364 = vadd.f32 %v1829, %v2283
      %v2365 = vadd.f32 %v1830, %v2286
      %v2366 = vadd.f32 %v1831, %v2289
      %v2367 = vadd.f32 %v1832, %v2292
      %v2368 = vadd.f32 %v1833, %v2295
      %v2369 = vadd.f32 %v1834, %v2298
      %v2370 = vadd.f32 %v1835, %v2301
      %v2371 = vadd.f32 %v1836, %v2304
      %v2372 = vadd.f32 %v1837, %v2307
      %v2373 = vld [vmem:[%s1838 + $0x1] sm:$0xff]
      %v2374 = vld [vmem:[%s1838 + $0x9] sm:$0xff]
      %v2375 = vld [vmem:[%s1838 + $0x19] sm:$0xff]
      %v2376 = vld [vmem:[%s1838 + $0x21] sm:$0xff]
      %v2377 = vld [vmem:[%s1838 + $0x31] sm:$0xff]
      %v2378 = vld [vmem:[%s1838 + $0x39] sm:$0xff]
      %v2379 = vld [vmem:[%s1838 + $0x49] sm:$0xff]
      %v2380 = vld [vmem:[%s1838 + $0x51] sm:$0xff]
      %v2381 = vld [vmem:[%s1838 + $0x61] sm:$0xff]
      %v2382 = vld [vmem:[%s1838 + $0x69] sm:$0xff]
      %v2383 = vld [vmem:[%s1838 + $0x79] sm:$0xff]
      %v2384 = vld [vmem:[%s1838 + $0x81] sm:$0xff]
      %v2385 = vld [vmem:[%s1838 + $0x91] sm:$0xff]
      %v2386 = vld [vmem:[%s1838 + $0x99] sm:$0xff]
      %v2387 = vld [vmem:[%s1838 + $0xa9] sm:$0xff]
      %v2388 = vld [vmem:[%s1838 + $0xb1] sm:$0xff]
      %v2389 = vld [vmem:[%s1838 + $0xc1] sm:$0xff]
      %v2390 = vld [vmem:[%s1838 + $0xc9] sm:$0xff]
      %v2391 = vld [vmem:[%s1838 + $0xd9] sm:$0xff]
      %v2392 = vld [vmem:[%s1838 + $0xe1] sm:$0xff]
      %v2393 = vld [vmem:[%s1838 + $0xf1] sm:$0xff]
      %v2394 = vld [vmem:[%s1838 + $0xf9] sm:$0xff]
      %v2395 = vld [vmem:[%s1838 + $0x109] sm:$0xff]
      %v2396 = vld [vmem:[%s1838 + $0x111] sm:$0xff]
      %v2397 = vld [vmem:[%s1838 + $0x121] sm:$0xff]
      %v2398 = vld [vmem:[%s1838 + $0x129] sm:$0xff]
      %v2399 = vld [vmem:[%s1838 + $0x139] sm:$0xff]
      %v2400 = vld [vmem:[%s1838 + $0x141] sm:$0xff]
      %v2401 = vld [vmem:[%s1838 + $0x151] sm:$0xff]
      %v2402 = vld [vmem:[%s1838 + $0x159] sm:$0xff]
      %v2403 = vld [vmem:[%s1838 + $0x169] sm:$0xff]
      %v2404 = vld [vmem:[%s1838 + $0x171] sm:$0xff]
      %v2405 = vld [vmem:[%s1838 + $0x1b1] sm:$0xff]
      %v2406 = vld [vmem:[%s1838 + $0x1b9] sm:$0xff]
      %v2407 = vld [vmem:[%s1838 + $0x1c9] sm:$0xff]
      %v2408 = vld [vmem:[%s1838 + $0x1d1] sm:$0xff]
      %v2409 = vld [vmem:[%s1838 + $0x1e1] sm:$0xff]
      %v2410 = vld [vmem:[%s1838 + $0x1e9] sm:$0xff]
      %v2411 = vld [vmem:[%s1838 + $0x1f9] sm:$0xff]
      %v2412 = vld [vmem:[%s1838 + $0x201] sm:$0xff]
      %v2413 = vld [vmem:[%s1838 + $0x211] sm:$0xff]
      %v2414 = vld [vmem:[%s1838 + $0x219] sm:$0xff]
      %v2415 = vld [vmem:[%s1838 + $0x229] sm:$0xff]
      %v2416 = vld [vmem:[%s1838 + $0x231] sm:$0xff]
      %v2417 = vld [vmem:[%s1838 + $0x241] sm:$0xff]
      %v2418 = vld [vmem:[%s1838 + $0x249] sm:$0xff]
      %v2419 = vld [vmem:[%s1838 + $0x259] sm:$0xff]
      %v2420 = vld [vmem:[%s1838 + $0x261] sm:$0xff]
      %v2421 = vld [vmem:[%s1838 + $0x271] sm:$0xff]
      %v2422 = vld [vmem:[%s1838 + $0x279] sm:$0xff]
      %v2423 = vld [vmem:[%s1838 + $0x289] sm:$0xff]
      %v2424 = vld [vmem:[%s1838 + $0x291] sm:$0xff]
      %v2425 = vld [vmem:[%s1838 + $0x2a1] sm:$0xff]
      %v2426 = vld [vmem:[%s1838 + $0x2a9] sm:$0xff]
      %v2427 = vld [vmem:[%s1838 + $0x2b9] sm:$0xff]
      %v2428 = vld [vmem:[%s1838 + $0x2c1] sm:$0xff]
      %v2429 = vld [vmem:[%s1838 + $0x2d1] sm:$0xff]
      %v2430 = vld [vmem:[%s1838 + $0x2d9] sm:$0xff]
      %v2431 = vld [vmem:[%s1838 + $0x2e9] sm:$0xff]
      %v2432 = vld [vmem:[%s1838 + $0x2f1] sm:$0xff]
      %v2433 = vld [vmem:[%s1838 + $0x301] sm:$0xff]
      %v2434 = vld [vmem:[%s1838 + $0x309] sm:$0xff]
      %v2435 = vld [vmem:[%s1838 + $0x319] sm:$0xff]
      %v2436 = vld [vmem:[%s1838 + $0x321] sm:$0xff]
      %s2437 = scalar_lea.vmem %s1, 16
      %v2438 = vld [vmem:[%s2437] sm:$0xf]
      %v2440 = vsel %vm494, %v2373, 0
      %v2443 = vsel %vm494, %v2374, 0
      %v2446 = vsel %vm494, %v2375, 0
      %v2449 = vsel %vm494, %v2376, 0
      %v2452 = vsel %vm494, %v2377, 0
      %v2455 = vsel %vm494, %v2378, 0
      %v2458 = vsel %vm494, %v2379, 0
      %v2461 = vsel %vm494, %v2380, 0
      %v2464 = vsel %vm494, %v2381, 0
      %v2467 = vsel %vm494, %v2382, 0
      %v2470 = vsel %vm494, %v2383, 0
      %v2473 = vsel %vm494, %v2384, 0
      %v2476 = vsel %vm494, %v2385, 0
      %v2479 = vsel %vm494, %v2386, 0
      %v2482 = vsel %vm494, %v2387, 0
      %v2485 = vsel %vm494, %v2388, 0
      %v2488 = vsel %vm494, %v2389, 0
      %v2491 = vsel %vm494, %v2390, 0
      %v2494 = vsel %vm494, %v2391, 0
      %v2497 = vsel %vm494, %v2392, 0
      %v2500 = vsel %vm494, %v2393, 0
      %v2503 = vsel %vm494, %v2394, 0
      %v2506 = vsel %vm494, %v2395, 0
      %v2509 = vsel %vm494, %v2396, 0
      %v2512 = vsel %vm494, %v2397, 0
      %v2515 = vsel %vm494, %v2398, 0
      %v2518 = vsel %vm494, %v2399, 0
      %v2521 = vsel %vm494, %v2400, 0
      %v2524 = vsel %vm494, %v2401, 0
      %v2527 = vsel %vm494, %v2402, 0
      %v2530 = vsel %vm494, %v2403, 0
      %v2533 = vsel %vm494, %v2404, 0
      %v2536 = vsel %vm494, %v2405, 0
      %v2539 = vsel %vm494, %v2406, 0
      %v2542 = vsel %vm494, %v2407, 0
      %v2545 = vsel %vm494, %v2408, 0
      %v2548 = vsel %vm494, %v2409, 0
      %v2551 = vsel %vm494, %v2410, 0
      %v2554 = vsel %vm494, %v2411, 0
      %v2557 = vsel %vm494, %v2412, 0
      %v2560 = vsel %vm494, %v2413, 0
      %v2563 = vsel %vm494, %v2414, 0
      %v2566 = vsel %vm494, %v2415, 0
      %v2569 = vsel %vm494, %v2416, 0
      %v2572 = vsel %vm494, %v2417, 0
      %v2575 = vsel %vm494, %v2418, 0
      %v2578 = vsel %vm494, %v2419, 0
      %v2581 = vsel %vm494, %v2420, 0
      %v2584 = vsel %vm494, %v2421, 0
      %v2587 = vsel %vm494, %v2422, 0
      %v2590 = vsel %vm494, %v2423, 0
      %v2593 = vsel %vm494, %v2424, 0
      %v2596 = vsel %vm494, %v2425, 0
      %v2599 = vsel %vm494, %v2426, 0
      %v2602 = vsel %vm494, %v2427, 0
      %v2605 = vsel %vm494, %v2428, 0
      %v2608 = vsel %vm494, %v2429, 0
      %v2611 = vsel %vm494, %v2430, 0
      %v2614 = vsel %vm494, %v2431, 0
      %v2617 = vsel %vm494, %v2432, 0
      %v2620 = vsel %vm494, %v2433, 0
      %v2623 = vsel %vm494, %v2434, 0
      %v2626 = vsel %vm494, %v2435, 0
      %v2629 = vsel %vm494, %v2436, 0
      %v2632 = vsel %vm687, %v2438, 0
      %2634 = vmatpush.msra.mxu0 0.0
      %2635 = vmatpush.msra.mxu0 0.0
      %2636 = vmatpush.msra.mxu0 0.0
      %2637 = vmatpush.msra.mxu0 0.0
      %2638 = vmatpush.msra.mxu0 0.0
      %2639 = vmatpush.msra.mxu0 0.0
      %2640 = vmatpush.msra.mxu0 0.0
      %2641 = vmatpush.msra.mxu0 0.0
      %2642 = vmatpush.msra.mxu0 0.0
      %2643 = vmatpush.msra.mxu0 0.0
      %2644 = vmatpush.msra.mxu0 0.0
      %2645 = vmatpush.msra.mxu0 0.0
      %2646 = vmatpush.msra.mxu0 0.0
      %2647 = vmatpush.msra.mxu0 0.0
      %2648 = vmatpush.msra.mxu0 0.0
      %2649 = vmatpush.msra.mxu0 %v2632
      %2650 = vmatmul.f32.gmra.mxu0 %v2440
      %v2651 = vpop.f32.mrf.mxu0
      %v2652 = vadd.f32 0.0, %v2651
      %2653 = vmatmul.f32.gmra.mxu0 %v2443
      %v2654 = vpop.f32.mrf.mxu0
      %v2655 = vadd.f32 0.0, %v2654
      %2656 = vmatmul.f32.gmra.mxu0 %v2446
      %v2657 = vpop.f32.mrf.mxu0
      %v2658 = vadd.f32 0.0, %v2657
      %2659 = vmatmul.f32.gmra.mxu0 %v2449
      %v2660 = vpop.f32.mrf.mxu0
      %v2661 = vadd.f32 0.0, %v2660
      %2662 = vmatmul.f32.gmra.mxu0 %v2452
      %v2663 = vpop.f32.mrf.mxu0
      %v2664 = vadd.f32 0.0, %v2663
      %2665 = vmatmul.f32.gmra.mxu0 %v2455
      %v2666 = vpop.f32.mrf.mxu0
      %v2667 = vadd.f32 0.0, %v2666
      %2668 = vmatmul.f32.gmra.mxu0 %v2458
      %v2669 = vpop.f32.mrf.mxu0
      %v2670 = vadd.f32 0.0, %v2669
      %2671 = vmatmul.f32.gmra.mxu0 %v2461
      %v2672 = vpop.f32.mrf.mxu0
      %v2673 = vadd.f32 0.0, %v2672
      %2674 = vmatmul.f32.gmra.mxu0 %v2464
      %v2675 = vpop.f32.mrf.mxu0
      %v2676 = vadd.f32 0.0, %v2675
      %2677 = vmatmul.f32.gmra.mxu0 %v2467
      %v2678 = vpop.f32.mrf.mxu0
      %v2679 = vadd.f32 0.0, %v2678
      %2680 = vmatmul.f32.gmra.mxu0 %v2470
      %v2681 = vpop.f32.mrf.mxu0
      %v2682 = vadd.f32 0.0, %v2681
      %2683 = vmatmul.f32.gmra.mxu0 %v2473
      %v2684 = vpop.f32.mrf.mxu0
      %v2685 = vadd.f32 0.0, %v2684
      %2686 = vmatmul.f32.gmra.mxu0 %v2476
      %v2687 = vpop.f32.mrf.mxu0
      %v2688 = vadd.f32 0.0, %v2687
      %2689 = vmatmul.f32.gmra.mxu0 %v2479
      %v2690 = vpop.f32.mrf.mxu0
      %v2691 = vadd.f32 0.0, %v2690
      %2692 = vmatmul.f32.gmra.mxu0 %v2482
      %v2693 = vpop.f32.mrf.mxu0
      %v2694 = vadd.f32 0.0, %v2693
      %2695 = vmatmul.f32.gmra.mxu0 %v2485
      %v2696 = vpop.f32.mrf.mxu0
      %v2697 = vadd.f32 0.0, %v2696
      %2698 = vmatmul.f32.gmra.mxu0 %v2488
      %v2699 = vpop.f32.mrf.mxu0
      %v2700 = vadd.f32 0.0, %v2699
      %2701 = vmatmul.f32.gmra.mxu0 %v2491
      %v2702 = vpop.f32.mrf.mxu0
      %v2703 = vadd.f32 0.0, %v2702
      %2704 = vmatmul.f32.gmra.mxu0 %v2494
      %v2705 = vpop.f32.mrf.mxu0
      %v2706 = vadd.f32 0.0, %v2705
      %2707 = vmatmul.f32.gmra.mxu0 %v2497
      %v2708 = vpop.f32.mrf.mxu0
      %v2709 = vadd.f32 0.0, %v2708
      %2710 = vmatmul.f32.gmra.mxu0 %v2500
      %v2711 = vpop.f32.mrf.mxu0
      %v2712 = vadd.f32 0.0, %v2711
      %2713 = vmatmul.f32.gmra.mxu0 %v2503
      %v2714 = vpop.f32.mrf.mxu0
      %v2715 = vadd.f32 0.0, %v2714
      %2716 = vmatmul.f32.gmra.mxu0 %v2506
      %v2717 = vpop.f32.mrf.mxu0
      %v2718 = vadd.f32 0.0, %v2717
      %2719 = vmatmul.f32.gmra.mxu0 %v2509
      %v2720 = vpop.f32.mrf.mxu0
      %v2721 = vadd.f32 0.0, %v2720
      %2722 = vmatmul.f32.gmra.mxu0 %v2512
      %v2723 = vpop.f32.mrf.mxu0
      %v2724 = vadd.f32 0.0, %v2723
      %2725 = vmatmul.f32.gmra.mxu0 %v2515
      %v2726 = vpop.f32.mrf.mxu0
      %v2727 = vadd.f32 0.0, %v2726
      %2728 = vmatmul.f32.gmra.mxu0 %v2518
      %v2729 = vpop.f32.mrf.mxu0
      %v2730 = vadd.f32 0.0, %v2729
      %2731 = vmatmul.f32.gmra.mxu0 %v2521
      %v2732 = vpop.f32.mrf.mxu0
      %v2733 = vadd.f32 0.0, %v2732
      %2734 = vmatmul.f32.gmra.mxu0 %v2524
      %v2735 = vpop.f32.mrf.mxu0
      %v2736 = vadd.f32 0.0, %v2735
      %2737 = vmatmul.f32.gmra.mxu0 %v2527
      %v2738 = vpop.f32.mrf.mxu0
      %v2739 = vadd.f32 0.0, %v2738
      %2740 = vmatmul.f32.gmra.mxu0 %v2530
      %v2741 = vpop.f32.mrf.mxu0
      %v2742 = vadd.f32 0.0, %v2741
      %2743 = vmatmul.f32.gmra.mxu0 %v2533
      %v2744 = vpop.f32.mrf.mxu0
      %v2745 = vadd.f32 0.0, %v2744
      %2746 = vmatmul.f32.gmra.mxu0 %v2536
      %v2747 = vpop.f32.mrf.mxu0
      %v2748 = vadd.f32 0.0, %v2747
      %2749 = vmatmul.f32.gmra.mxu0 %v2539
      %v2750 = vpop.f32.mrf.mxu0
      %v2751 = vadd.f32 0.0, %v2750
      %2752 = vmatmul.f32.gmra.mxu0 %v2542
      %v2753 = vpop.f32.mrf.mxu0
      %v2754 = vadd.f32 0.0, %v2753
      %2755 = vmatmul.f32.gmra.mxu0 %v2545
      %v2756 = vpop.f32.mrf.mxu0
      %v2757 = vadd.f32 0.0, %v2756
      %2758 = vmatmul.f32.gmra.mxu0 %v2548
      %v2759 = vpop.f32.mrf.mxu0
      %v2760 = vadd.f32 0.0, %v2759
      %2761 = vmatmul.f32.gmra.mxu0 %v2551
      %v2762 = vpop.f32.mrf.mxu0
      %v2763 = vadd.f32 0.0, %v2762
      %2764 = vmatmul.f32.gmra.mxu0 %v2554
      %v2765 = vpop.f32.mrf.mxu0
      %v2766 = vadd.f32 0.0, %v2765
      %2767 = vmatmul.f32.gmra.mxu0 %v2557
      %v2768 = vpop.f32.mrf.mxu0
      %v2769 = vadd.f32 0.0, %v2768
      %2770 = vmatmul.f32.gmra.mxu0 %v2560
      %v2771 = vpop.f32.mrf.mxu0
      %v2772 = vadd.f32 0.0, %v2771
      %2773 = vmatmul.f32.gmra.mxu0 %v2563
      %v2774 = vpop.f32.mrf.mxu0
      %v2775 = vadd.f32 0.0, %v2774
      %2776 = vmatmul.f32.gmra.mxu0 %v2566
      %v2777 = vpop.f32.mrf.mxu0
      %v2778 = vadd.f32 0.0, %v2777
      %2779 = vmatmul.f32.gmra.mxu0 %v2569
      %v2780 = vpop.f32.mrf.mxu0
      %v2781 = vadd.f32 0.0, %v2780
      %2782 = vmatmul.f32.gmra.mxu0 %v2572
      %v2783 = vpop.f32.mrf.mxu0
      %v2784 = vadd.f32 0.0, %v2783
      %2785 = vmatmul.f32.gmra.mxu0 %v2575
      %v2786 = vpop.f32.mrf.mxu0
      %v2787 = vadd.f32 0.0, %v2786
      %2788 = vmatmul.f32.gmra.mxu0 %v2578
      %v2789 = vpop.f32.mrf.mxu0
      %v2790 = vadd.f32 0.0, %v2789
      %2791 = vmatmul.f32.gmra.mxu0 %v2581
      %v2792 = vpop.f32.mrf.mxu0
      %v2793 = vadd.f32 0.0, %v2792
      %2794 = vmatmul.f32.gmra.mxu0 %v2584
      %v2795 = vpop.f32.mrf.mxu0
      %v2796 = vadd.f32 0.0, %v2795
      %2797 = vmatmul.f32.gmra.mxu0 %v2587
      %v2798 = vpop.f32.mrf.mxu0
      %v2799 = vadd.f32 0.0, %v2798
      %2800 = vmatmul.f32.gmra.mxu0 %v2590
      %v2801 = vpop.f32.mrf.mxu0
      %v2802 = vadd.f32 0.0, %v2801
      %2803 = vmatmul.f32.gmra.mxu0 %v2593
      %v2804 = vpop.f32.mrf.mxu0
      %v2805 = vadd.f32 0.0, %v2804
      %2806 = vmatmul.f32.gmra.mxu0 %v2596
      %v2807 = vpop.f32.mrf.mxu0
      %v2808 = vadd.f32 0.0, %v2807
      %2809 = vmatmul.f32.gmra.mxu0 %v2599
      %v2810 = vpop.f32.mrf.mxu0
      %v2811 = vadd.f32 0.0, %v2810
      %2812 = vmatmul.f32.gmra.mxu0 %v2602
      %v2813 = vpop.f32.mrf.mxu0
      %v2814 = vadd.f32 0.0, %v2813
      %2815 = vmatmul.f32.gmra.mxu0 %v2605
      %v2816 = vpop.f32.mrf.mxu0
      %v2817 = vadd.f32 0.0, %v2816
      %2818 = vmatmul.f32.gmra.mxu0 %v2608
      %v2819 = vpop.f32.mrf.mxu0
      %v2820 = vadd.f32 0.0, %v2819
      %2821 = vmatmul.f32.gmra.mxu0 %v2611
      %v2822 = vpop.f32.mrf.mxu0
      %v2823 = vadd.f32 0.0, %v2822
      %2824 = vmatmul.f32.gmra.mxu0 %v2614
      %v2825 = vpop.f32.mrf.mxu0
      %v2826 = vadd.f32 0.0, %v2825
      %2827 = vmatmul.f32.gmra.mxu0 %v2617
      %v2828 = vpop.f32.mrf.mxu0
      %v2829 = vadd.f32 0.0, %v2828
      %2830 = vmatmul.f32.gmra.mxu0 %v2620
      %v2831 = vpop.f32.mrf.mxu0
      %v2832 = vadd.f32 0.0, %v2831
      %2833 = vmatmul.f32.gmra.mxu0 %v2623
      %v2834 = vpop.f32.mrf.mxu0
      %v2835 = vadd.f32 0.0, %v2834
      %2836 = vmatmul.f32.gmra.mxu0 %v2626
      %v2837 = vpop.f32.mrf.mxu0
      %v2838 = vadd.f32 0.0, %v2837
      %2839 = vmatmul.f32.gmra.mxu0 %v2629
      %v2840 = vpop.f32.mrf.mxu0
      %v2841 = vadd.f32 0.0, %v2840
      %2842 = vdwg.mxu0
      %v2843 = vadd.f32 %v2309, %v2652
      %v2844 = vadd.f32 %v2310, %v2655
      %v2845 = vadd.f32 %v2311, %v2658
      %v2846 = vadd.f32 %v2312, %v2661
      %v2847 = vadd.f32 %v2313, %v2664
      %v2848 = vadd.f32 %v2314, %v2667
      %v2849 = vadd.f32 %v2315, %v2670
      %v2850 = vadd.f32 %v2316, %v2673
      %v2851 = vadd.f32 %v2317, %v2676
      %v2852 = vadd.f32 %v2318, %v2679
      %v2853 = vadd.f32 %v2319, %v2682
      %v2854 = vadd.f32 %v2320, %v2685
      %v2855 = vadd.f32 %v2321, %v2688
      %v2856 = vadd.f32 %v2322, %v2691
      %v2857 = vadd.f32 %v2323, %v2694
      %v2858 = vadd.f32 %v2324, %v2697
      %v2859 = vadd.f32 %v2325, %v2700
      %v2860 = vadd.f32 %v2326, %v2703
      %v2861 = vadd.f32 %v2327, %v2706
      %v2862 = vadd.f32 %v2328, %v2709
      %v2863 = vadd.f32 %v2329, %v2712
      %v2864 = vadd.f32 %v2330, %v2715
      %v2865 = vadd.f32 %v2331, %v2718
      %v2866 = vadd.f32 %v2332, %v2721
      %v2867 = vadd.f32 %v2333, %v2724
      %v2868 = vadd.f32 %v2334, %v2727
      %v2869 = vadd.f32 %v2335, %v2730
      %v2870 = vadd.f32 %v2336, %v2733
      %v2871 = vadd.f32 %v2337, %v2736
      %v2872 = vadd.f32 %v2338, %v2739
      %v2873 = vadd.f32 %v2339, %v2742
      %v2874 = vadd.f32 %v2340, %v2745
      %v2875 = vadd.f32 %v2341, %v2748
      %v2876 = vadd.f32 %v2342, %v2751
      %v2877 = vadd.f32 %v2343, %v2754
      %v2878 = vadd.f32 %v2344, %v2757
      %v2879 = vadd.f32 %v2345, %v2760
      %v2880 = vadd.f32 %v2346, %v2763
      %v2881 = vadd.f32 %v2347, %v2766
      %v2882 = vadd.f32 %v2348, %v2769
      %v2883 = vadd.f32 %v2349, %v2772
      %v2884 = vadd.f32 %v2350, %v2775
      %v2885 = vadd.f32 %v2351, %v2778
      %v2886 = vadd.f32 %v2352, %v2781
      %v2887 = vadd.f32 %v2353, %v2784
      %v2888 = vadd.f32 %v2354, %v2787
      %v2889 = vadd.f32 %v2355, %v2790
      %v2890 = vadd.f32 %v2356, %v2793
      %v2891 = vadd.f32 %v2357, %v2796
      %v2892 = vadd.f32 %v2358, %v2799
      %v2893 = vadd.f32 %v2359, %v2802
      %v2894 = vadd.f32 %v2360, %v2805
      %v2895 = vadd.f32 %v2361, %v2808
      %v2896 = vadd.f32 %v2362, %v2811
      %v2897 = vadd.f32 %v2363, %v2814
      %v2898 = vadd.f32 %v2364, %v2817
      %v2899 = vadd.f32 %v2365, %v2820
      %v2900 = vadd.f32 %v2366, %v2823
      %v2901 = vadd.f32 %v2367, %v2826
      %v2902 = vadd.f32 %v2368, %v2829
      %v2903 = vadd.f32 %v2369, %v2832
      %v2904 = vadd.f32 %v2370, %v2835
      %v2905 = vadd.f32 %v2371, %v2838
      %v2906 = vadd.f32 %v2372, %v2841
      %v2907 = vld [vmem:[%s1838 + $0x2] sm:$0xff]
      %v2908 = vld [vmem:[%s1838 + $0xa] sm:$0xff]
      %v2909 = vld [vmem:[%s1838 + $0x1a] sm:$0xff]
      %v2910 = vld [vmem:[%s1838 + $0x22] sm:$0xff]
      %v2911 = vld [vmem:[%s1838 + $0x32] sm:$0xff]
      %v2912 = vld [vmem:[%s1838 + $0x3a] sm:$0xff]
      %v2913 = vld [vmem:[%s1838 + $0x4a] sm:$0xff]
      %v2914 = vld [vmem:[%s1838 + $0x52] sm:$0xff]
      %v2915 = vld [vmem:[%s1838 + $0x62] sm:$0xff]
      %v2916 = vld [vmem:[%s1838 + $0x6a] sm:$0xff]
      %v2917 = vld [vmem:[%s1838 + $0x7a] sm:$0xff]
      %v2918 = vld [vmem:[%s1838 + $0x82] sm:$0xff]
      %v2919 = vld [vmem:[%s1838 + $0x92] sm:$0xff]
      %v2920 = vld [vmem:[%s1838 + $0x9a] sm:$0xff]
      %v2921 = vld [vmem:[%s1838 + $0xaa] sm:$0xff]
      %v2922 = vld [vmem:[%s1838 + $0xb2] sm:$0xff]
      %v2923 = vld [vmem:[%s1838 + $0xc2] sm:$0xff]
      %v2924 = vld [vmem:[%s1838 + $0xca] sm:$0xff]
      %v2925 = vld [vmem:[%s1838 + $0xda] sm:$0xff]
      %v2926 = vld [vmem:[%s1838 + $0xe2] sm:$0xff]
      %v2927 = vld [vmem:[%s1838 + $0xf2] sm:$0xff]
      %v2928 = vld [vmem:[%s1838 + $0xfa] sm:$0xff]
      %v2929 = vld [vmem:[%s1838 + $0x10a] sm:$0xff]
      %v2930 = vld [vmem:[%s1838 + $0x112] sm:$0xff]
      %v2931 = vld [vmem:[%s1838 + $0x122] sm:$0xff]
      %v2932 = vld [vmem:[%s1838 + $0x12a] sm:$0xff]
      %v2933 = vld [vmem:[%s1838 + $0x13a] sm:$0xff]
      %v2934 = vld [vmem:[%s1838 + $0x142] sm:$0xff]
      %v2935 = vld [vmem:[%s1838 + $0x152] sm:$0xff]
      %v2936 = vld [vmem:[%s1838 + $0x15a] sm:$0xff]
      %v2937 = vld [vmem:[%s1838 + $0x16a] sm:$0xff]
      %v2938 = vld [vmem:[%s1838 + $0x172] sm:$0xff]
      %v2939 = vld [vmem:[%s1838 + $0x1b2] sm:$0xff]
      %v2940 = vld [vmem:[%s1838 + $0x1ba] sm:$0xff]
      %v2941 = vld [vmem:[%s1838 + $0x1ca] sm:$0xff]
      %v2942 = vld [vmem:[%s1838 + $0x1d2] sm:$0xff]
      %v2943 = vld [vmem:[%s1838 + $0x1e2] sm:$0xff]
      %v2944 = vld [vmem:[%s1838 + $0x1ea] sm:$0xff]
      %v2945 = vld [vmem:[%s1838 + $0x1fa] sm:$0xff]
      %v2946 = vld [vmem:[%s1838 + $0x202] sm:$0xff]
      %v2947 = vld [vmem:[%s1838 + $0x212] sm:$0xff]
      %v2948 = vld [vmem:[%s1838 + $0x21a] sm:$0xff]
      %v2949 = vld [vmem:[%s1838 + $0x22a] sm:$0xff]
      %v2950 = vld [vmem:[%s1838 + $0x232] sm:$0xff]
      %v2951 = vld [vmem:[%s1838 + $0x242] sm:$0xff]
      %v2952 = vld [vmem:[%s1838 + $0x24a] sm:$0xff]
      %v2953 = vld [vmem:[%s1838 + $0x25a] sm:$0xff]
      %v2954 = vld [vmem:[%s1838 + $0x262] sm:$0xff]
      %v2955 = vld [vmem:[%s1838 + $0x272] sm:$0xff]
      %v2956 = vld [vmem:[%s1838 + $0x27a] sm:$0xff]
      %v2957 = vld [vmem:[%s1838 + $0x28a] sm:$0xff]
      %v2958 = vld [vmem:[%s1838 + $0x292] sm:$0xff]
      %v2959 = vld [vmem:[%s1838 + $0x2a2] sm:$0xff]
      %v2960 = vld [vmem:[%s1838 + $0x2aa] sm:$0xff]
      %v2961 = vld [vmem:[%s1838 + $0x2ba] sm:$0xff]
      %v2962 = vld [vmem:[%s1838 + $0x2c2] sm:$0xff]
      %v2963 = vld [vmem:[%s1838 + $0x2d2] sm:$0xff]
      %v2964 = vld [vmem:[%s1838 + $0x2da] sm:$0xff]
      %v2965 = vld [vmem:[%s1838 + $0x2ea] sm:$0xff]
      %v2966 = vld [vmem:[%s1838 + $0x2f2] sm:$0xff]
      %v2967 = vld [vmem:[%s1838 + $0x302] sm:$0xff]
      %v2968 = vld [vmem:[%s1838 + $0x30a] sm:$0xff]
      %v2969 = vld [vmem:[%s1838 + $0x31a] sm:$0xff]
      %v2970 = vld [vmem:[%s1838 + $0x322] sm:$0xff]
      %s2971 = scalar_lea.vmem %s1, 20
      %v2972 = vld [vmem:[%s2971] sm:$0xf]
      %v2974 = vsel %vm494, %v2907, 0
      %v2977 = vsel %vm494, %v2908, 0
      %v2980 = vsel %vm494, %v2909, 0
      %v2983 = vsel %vm494, %v2910, 0
      %v2986 = vsel %vm494, %v2911, 0
      %v2989 = vsel %vm494, %v2912, 0
      %v2992 = vsel %vm494, %v2913, 0
      %v2995 = vsel %vm494, %v2914, 0
      %v2998 = vsel %vm494, %v2915, 0
      %v3001 = vsel %vm494, %v2916, 0
      %v3004 = vsel %vm494, %v2917, 0
      %v3007 = vsel %vm494, %v2918, 0
      %v3010 = vsel %vm494, %v2919, 0
      %v3013 = vsel %vm494, %v2920, 0
      %v3016 = vsel %vm494, %v2921, 0
      %v3019 = vsel %vm494, %v2922, 0
      %v3022 = vsel %vm494, %v2923, 0
      %v3025 = vsel %vm494, %v2924, 0
      %v3028 = vsel %vm494, %v2925, 0
      %v3031 = vsel %vm494, %v2926, 0
      %v3034 = vsel %vm494, %v2927, 0
      %v3037 = vsel %vm494, %v2928, 0
      %v3040 = vsel %vm494, %v2929, 0
      %v3043 = vsel %vm494, %v2930, 0
      %v3046 = vsel %vm494, %v2931, 0
      %v3049 = vsel %vm494, %v2932, 0
      %v3052 = vsel %vm494, %v2933, 0
      %v3055 = vsel %vm494, %v2934, 0
      %v3058 = vsel %vm494, %v2935, 0
      %v3061 = vsel %vm494, %v2936, 0
      %v3064 = vsel %vm494, %v2937, 0
      %v3067 = vsel %vm494, %v2938, 0
      %v3070 = vsel %vm494, %v2939, 0
      %v3073 = vsel %vm494, %v2940, 0
      %v3076 = vsel %vm494, %v2941, 0
      %v3079 = vsel %vm494, %v2942, 0
      %v3082 = vsel %vm494, %v2943, 0
      %v3085 = vsel %vm494, %v2944, 0
      %v3088 = vsel %vm494, %v2945, 0
      %v3091 = vsel %vm494, %v2946, 0
      %v3094 = vsel %vm494, %v2947, 0
      %v3097 = vsel %vm494, %v2948, 0
      %v3100 = vsel %vm494, %v2949, 0
      %v3103 = vsel %vm494, %v2950, 0
      %v3106 = vsel %vm494, %v2951, 0
      %v3109 = vsel %vm494, %v2952, 0
      %v3112 = vsel %vm494, %v2953, 0
      %v3115 = vsel %vm494, %v2954, 0
      %v3118 = vsel %vm494, %v2955, 0
      %v3121 = vsel %vm494, %v2956, 0
      %v3124 = vsel %vm494, %v2957, 0
      %v3127 = vsel %vm494, %v2958, 0
      %v3130 = vsel %vm494, %v2959, 0
      %v3133 = vsel %vm494, %v2960, 0
      %v3136 = vsel %vm494, %v2961, 0
      %v3139 = vsel %vm494, %v2962, 0
      %v3142 = vsel %vm494, %v2963, 0
      %v3145 = vsel %vm494, %v2964, 0
      %v3148 = vsel %vm494, %v2965, 0
      %v3151 = vsel %vm494, %v2966, 0
      %v3154 = vsel %vm494, %v2967, 0
      %v3157 = vsel %vm494, %v2968, 0
      %v3160 = vsel %vm494, %v2969, 0
      %v3163 = vsel %vm494, %v2970, 0
      %v3166 = vsel %vm687, %v2972, 0
      %3168 = vmatpush.msra.mxu0 0.0
      %3169 = vmatpush.msra.mxu0 0.0
      %3170 = vmatpush.msra.mxu0 0.0
      %3171 = vmatpush.msra.mxu0 0.0
      %3172 = vmatpush.msra.mxu0 0.0
      %3173 = vmatpush.msra.mxu0 0.0
      %3174 = vmatpush.msra.mxu0 0.0
      %3175 = vmatpush.msra.mxu0 0.0
      %3176 = vmatpush.msra.mxu0 0.0
      %3177 = vmatpush.msra.mxu0 0.0
      %3178 = vmatpush.msra.mxu0 0.0
      %3179 = vmatpush.msra.mxu0 0.0
      %3180 = vmatpush.msra.mxu0 0.0
      %3181 = vmatpush.msra.mxu0 0.0
      %3182 = vmatpush.msra.mxu0 0.0
      %3183 = vmatpush.msra.mxu0 %v3166
      %3184 = vmatmul.f32.gmra.mxu0 %v2974
      %v3185 = vpop.f32.mrf.mxu0
      %v3186 = vadd.f32 0.0, %v3185
      %3187 = vmatmul.f32.gmra.mxu0 %v2977
      %v3188 = vpop.f32.mrf.mxu0
      %v3189 = vadd.f32 0.0, %v3188
      %3190 = vmatmul.f32.gmra.mxu0 %v2980
      %v3191 = vpop.f32.mrf.mxu0
      %v3192 = vadd.f32 0.0, %v3191
      %3193 = vmatmul.f32.gmra.mxu0 %v2983
      %v3194 = vpop.f32.mrf.mxu0
      %v3195 = vadd.f32 0.0, %v3194
      %3196 = vmatmul.f32.gmra.mxu0 %v2986
      %v3197 = vpop.f32.mrf.mxu0
      %v3198 = vadd.f32 0.0, %v3197
      %3199 = vmatmul.f32.gmra.mxu0 %v2989
      %v3200 = vpop.f32.mrf.mxu0
      %v3201 = vadd.f32 0.0, %v3200
      %3202 = vmatmul.f32.gmra.mxu0 %v2992
      %v3203 = vpop.f32.mrf.mxu0
      %v3204 = vadd.f32 0.0, %v3203
      %3205 = vmatmul.f32.gmra.mxu0 %v2995
      %v3206 = vpop.f32.mrf.mxu0
      %v3207 = vadd.f32 0.0, %v3206
      %3208 = vmatmul.f32.gmra.mxu0 %v2998
      %v3209 = vpop.f32.mrf.mxu0
      %v3210 = vadd.f32 0.0, %v3209
      %3211 = vmatmul.f32.gmra.mxu0 %v3001
      %v3212 = vpop.f32.mrf.mxu0
      %v3213 = vadd.f32 0.0, %v3212
      %3214 = vmatmul.f32.gmra.mxu0 %v3004
      %v3215 = vpop.f32.mrf.mxu0
      %v3216 = vadd.f32 0.0, %v3215
      %3217 = vmatmul.f32.gmra.mxu0 %v3007
      %v3218 = vpop.f32.mrf.mxu0
      %v3219 = vadd.f32 0.0, %v3218
      %3220 = vmatmul.f32.gmra.mxu0 %v3010
      %v3221 = vpop.f32.mrf.mxu0
      %v3222 = vadd.f32 0.0, %v3221
      %3223 = vmatmul.f32.gmra.mxu0 %v3013
      %v3224 = vpop.f32.mrf.mxu0
      %v3225 = vadd.f32 0.0, %v3224
      %3226 = vmatmul.f32.gmra.mxu0 %v3016
      %v3227 = vpop.f32.mrf.mxu0
      %v3228 = vadd.f32 0.0, %v3227
      %3229 = vmatmul.f32.gmra.mxu0 %v3019
      %v3230 = vpop.f32.mrf.mxu0
      %v3231 = vadd.f32 0.0, %v3230
      %3232 = vmatmul.f32.gmra.mxu0 %v3022
      %v3233 = vpop.f32.mrf.mxu0
      %v3234 = vadd.f32 0.0, %v3233
      %3235 = vmatmul.f32.gmra.mxu0 %v3025
      %v3236 = vpop.f32.mrf.mxu0
      %v3237 = vadd.f32 0.0, %v3236
      %3238 = vmatmul.f32.gmra.mxu0 %v3028
      %v3239 = vpop.f32.mrf.mxu0
      %v3240 = vadd.f32 0.0, %v3239
      %3241 = vmatmul.f32.gmra.mxu0 %v3031
      %v3242 = vpop.f32.mrf.mxu0
      %v3243 = vadd.f32 0.0, %v3242
      %3244 = vmatmul.f32.gmra.mxu0 %v3034
      %v3245 = vpop.f32.mrf.mxu0
      %v3246 = vadd.f32 0.0, %v3245
      %3247 = vmatmul.f32.gmra.mxu0 %v3037
      %v3248 = vpop.f32.mrf.mxu0
      %v3249 = vadd.f32 0.0, %v3248
      %3250 = vmatmul.f32.gmra.mxu0 %v3040
      %v3251 = vpop.f32.mrf.mxu0
      %v3252 = vadd.f32 0.0, %v3251
      %3253 = vmatmul.f32.gmra.mxu0 %v3043
      %v3254 = vpop.f32.mrf.mxu0
      %v3255 = vadd.f32 0.0, %v3254
      %3256 = vmatmul.f32.gmra.mxu0 %v3046
      %v3257 = vpop.f32.mrf.mxu0
      %v3258 = vadd.f32 0.0, %v3257
      %3259 = vmatmul.f32.gmra.mxu0 %v3049
      %v3260 = vpop.f32.mrf.mxu0
      %v3261 = vadd.f32 0.0, %v3260
      %3262 = vmatmul.f32.gmra.mxu0 %v3052
      %v3263 = vpop.f32.mrf.mxu0
      %v3264 = vadd.f32 0.0, %v3263
      %3265 = vmatmul.f32.gmra.mxu0 %v3055
      %v3266 = vpop.f32.mrf.mxu0
      %v3267 = vadd.f32 0.0, %v3266
      %3268 = vmatmul.f32.gmra.mxu0 %v3058
      %v3269 = vpop.f32.mrf.mxu0
      %v3270 = vadd.f32 0.0, %v3269
      %3271 = vmatmul.f32.gmra.mxu0 %v3061
      %v3272 = vpop.f32.mrf.mxu0
      %v3273 = vadd.f32 0.0, %v3272
      %3274 = vmatmul.f32.gmra.mxu0 %v3064
      %v3275 = vpop.f32.mrf.mxu0
      %v3276 = vadd.f32 0.0, %v3275
      %3277 = vmatmul.f32.gmra.mxu0 %v3067
      %v3278 = vpop.f32.mrf.mxu0
      %v3279 = vadd.f32 0.0, %v3278
      %3280 = vmatmul.f32.gmra.mxu0 %v3070
      %v3281 = vpop.f32.mrf.mxu0
      %v3282 = vadd.f32 0.0, %v3281
      %3283 = vmatmul.f32.gmra.mxu0 %v3073
      %v3284 = vpop.f32.mrf.mxu0
      %v3285 = vadd.f32 0.0, %v3284
      %3286 = vmatmul.f32.gmra.mxu0 %v3076
      %v3287 = vpop.f32.mrf.mxu0
      %v3288 = vadd.f32 0.0, %v3287
      %3289 = vmatmul.f32.gmra.mxu0 %v3079
      %v3290 = vpop.f32.mrf.mxu0
      %v3291 = vadd.f32 0.0, %v3290
      %3292 = vmatmul.f32.gmra.mxu0 %v3082
      %v3293 = vpop.f32.mrf.mxu0
      %v3294 = vadd.f32 0.0, %v3293
      %3295 = vmatmul.f32.gmra.mxu0 %v3085
      %v3296 = vpop.f32.mrf.mxu0
      %v3297 = vadd.f32 0.0, %v3296
      %3298 = vmatmul.f32.gmra.mxu0 %v3088
      %v3299 = vpop.f32.mrf.mxu0
      %v3300 = vadd.f32 0.0, %v3299
      %3301 = vmatmul.f32.gmra.mxu0 %v3091
      %v3302 = vpop.f32.mrf.mxu0
      %v3303 = vadd.f32 0.0, %v3302
      %3304 = vmatmul.f32.gmra.mxu0 %v3094
      %v3305 = vpop.f32.mrf.mxu0
      %v3306 = vadd.f32 0.0, %v3305
      %3307 = vmatmul.f32.gmra.mxu0 %v3097
      %v3308 = vpop.f32.mrf.mxu0
      %v3309 = vadd.f32 0.0, %v3308
      %3310 = vmatmul.f32.gmra.mxu0 %v3100
      %v3311 = vpop.f32.mrf.mxu0
      %v3312 = vadd.f32 0.0, %v3311
      %3313 = vmatmul.f32.gmra.mxu0 %v3103
      %v3314 = vpop.f32.mrf.mxu0
      %v3315 = vadd.f32 0.0, %v3314
      %3316 = vmatmul.f32.gmra.mxu0 %v3106
      %v3317 = vpop.f32.mrf.mxu0
      %v3318 = vadd.f32 0.0, %v3317
      %3319 = vmatmul.f32.gmra.mxu0 %v3109
      %v3320 = vpop.f32.mrf.mxu0
      %v3321 = vadd.f32 0.0, %v3320
      %3322 = vmatmul.f32.gmra.mxu0 %v3112
      %v3323 = vpop.f32.mrf.mxu0
      %v3324 = vadd.f32 0.0, %v3323
      %3325 = vmatmul.f32.gmra.mxu0 %v3115
      %v3326 = vpop.f32.mrf.mxu0
      %v3327 = vadd.f32 0.0, %v3326
      %3328 = vmatmul.f32.gmra.mxu0 %v3118
      %v3329 = vpop.f32.mrf.mxu0
      %v3330 = vadd.f32 0.0, %v3329
      %3331 = vmatmul.f32.gmra.mxu0 %v3121
      %v3332 = vpop.f32.mrf.mxu0
      %v3333 = vadd.f32 0.0, %v3332
      %3334 = vmatmul.f32.gmra.mxu0 %v3124
      %v3335 = vpop.f32.mrf.mxu0
      %v3336 = vadd.f32 0.0, %v3335
      %3337 = vmatmul.f32.gmra.mxu0 %v3127
      %v3338 = vpop.f32.mrf.mxu0
      %v3339 = vadd.f32 0.0, %v3338
      %3340 = vmatmul.f32.gmra.mxu0 %v3130
      %v3341 = vpop.f32.mrf.mxu0
      %v3342 = vadd.f32 0.0, %v3341
      %3343 = vmatmul.f32.gmra.mxu0 %v3133
      %v3344 = vpop.f32.mrf.mxu0
      %v3345 = vadd.f32 0.0, %v3344
      %3346 = vmatmul.f32.gmra.mxu0 %v3136
      %v3347 = vpop.f32.mrf.mxu0
      %v3348 = vadd.f32 0.0, %v3347
      %3349 = vmatmul.f32.gmra.mxu0 %v3139
      %v3350 = vpop.f32.mrf.mxu0
      %v3351 = vadd.f32 0.0, %v3350
      %3352 = vmatmul.f32.gmra.mxu0 %v3142
      %v3353 = vpop.f32.mrf.mxu0
      %v3354 = vadd.f32 0.0, %v3353
      %3355 = vmatmul.f32.gmra.mxu0 %v3145
      %v3356 = vpop.f32.mrf.mxu0
      %v3357 = vadd.f32 0.0, %v3356
      %3358 = vmatmul.f32.gmra.mxu0 %v3148
      %v3359 = vpop.f32.mrf.mxu0
      %v3360 = vadd.f32 0.0, %v3359
      %3361 = vmatmul.f32.gmra.mxu0 %v3151
      %v3362 = vpop.f32.mrf.mxu0
      %v3363 = vadd.f32 0.0, %v3362
      %3364 = vmatmul.f32.gmra.mxu0 %v3154
      %v3365 = vpop.f32.mrf.mxu0
      %v3366 = vadd.f32 0.0, %v3365
      %3367 = vmatmul.f32.gmra.mxu0 %v3157
      %v3368 = vpop.f32.mrf.mxu0
      %v3369 = vadd.f32 0.0, %v3368
      %3370 = vmatmul.f32.gmra.mxu0 %v3160
      %v3371 = vpop.f32.mrf.mxu0
      %v3372 = vadd.f32 0.0, %v3371
      %3373 = vmatmul.f32.gmra.mxu0 %v3163
      %v3374 = vpop.f32.mrf.mxu0
      %v3375 = vadd.f32 0.0, %v3374
      %3376 = vdwg.mxu0
      %v3377 = vadd.f32 %v2843, %v3186
      %v3378 = vadd.f32 %v2844, %v3189
      %v3379 = vadd.f32 %v2845, %v3192
      %v3380 = vadd.f32 %v2846, %v3195
      %v3381 = vadd.f32 %v2847, %v3198
      %v3382 = vadd.f32 %v2848, %v3201
      %v3383 = vadd.f32 %v2849, %v3204
      %v3384 = vadd.f32 %v2850, %v3207
      %v3385 = vadd.f32 %v2851, %v3210
      %v3386 = vadd.f32 %v2852, %v3213
      %v3387 = vadd.f32 %v2853, %v3216
      %v3388 = vadd.f32 %v2854, %v3219
      %v3389 = vadd.f32 %v2855, %v3222
      %v3390 = vadd.f32 %v2856, %v3225
      %v3391 = vadd.f32 %v2857, %v3228
      %v3392 = vadd.f32 %v2858, %v3231
      %v3393 = vadd.f32 %v2859, %v3234
      %v3394 = vadd.f32 %v2860, %v3237
      %v3395 = vadd.f32 %v2861, %v3240
      %v3396 = vadd.f32 %v2862, %v3243
      %v3397 = vadd.f32 %v2863, %v3246
      %v3398 = vadd.f32 %v2864, %v3249
      %v3399 = vadd.f32 %v2865, %v3252
      %v3400 = vadd.f32 %v2866, %v3255
      %v3401 = vadd.f32 %v2867, %v3258
      %v3402 = vadd.f32 %v2868, %v3261
      %v3403 = vadd.f32 %v2869, %v3264
      %v3404 = vadd.f32 %v2870, %v3267
      %v3405 = vadd.f32 %v2871, %v3270
      %v3406 = vadd.f32 %v2872, %v3273
      %v3407 = vadd.f32 %v2873, %v3276
      %v3408 = vadd.f32 %v2874, %v3279
      %v3409 = vadd.f32 %v2875, %v3282
      %v3410 = vadd.f32 %v2876, %v3285
      %v3411 = vadd.f32 %v2877, %v3288
      %v3412 = vadd.f32 %v2878, %v3291
      %v3413 = vadd.f32 %v2879, %v3294
      %v3414 = vadd.f32 %v2880, %v3297
      %v3415 = vadd.f32 %v2881, %v3300
      %v3416 = vadd.f32 %v2882, %v3303
      %v3417 = vadd.f32 %v2883, %v3306
      %v3418 = vadd.f32 %v2884, %v3309
      %v3419 = vadd.f32 %v2885, %v3312
      %v3420 = vadd.f32 %v2886, %v3315
      %v3421 = vadd.f32 %v2887, %v3318
      %v3422 = vadd.f32 %v2888, %v3321
      %v3423 = vadd.f32 %v2889, %v3324
      %v3424 = vadd.f32 %v2890, %v3327
      %v3425 = vadd.f32 %v2891, %v3330
      %v3426 = vadd.f32 %v2892, %v3333
      %v3427 = vadd.f32 %v2893, %v3336
      %v3428 = vadd.f32 %v2894, %v3339
      %v3429 = vadd.f32 %v2895, %v3342
      %v3430 = vadd.f32 %v2896, %v3345
      %v3431 = vadd.f32 %v2897, %v3348
      %v3432 = vadd.f32 %v2898, %v3351
      %v3433 = vadd.f32 %v2899, %v3354
      %v3434 = vadd.f32 %v2900, %v3357
      %v3435 = vadd.f32 %v2901, %v3360
      %v3436 = vadd.f32 %v2902, %v3363
      %v3437 = vadd.f32 %v2903, %v3366
      %v3438 = vadd.f32 %v2904, %v3369
      %v3439 = vadd.f32 %v2905, %v3372
      %v3440 = vadd.f32 %v2906, %v3375
      %s3441 = scalar_lea.vmem %s334, 48
      %v3442 = vld [vmem:[%s3441] sm:$0xff]
      %v3443 = vld [vmem:[%s3441 + $0x8] sm:$0xff]
      %v3444 = vld [vmem:[%s3441 + $0x18] sm:$0xff]
      %v3445 = vld [vmem:[%s3441 + $0x20] sm:$0xff]
      %v3446 = vld [vmem:[%s3441 + $0x30] sm:$0xff]
      %v3447 = vld [vmem:[%s3441 + $0x38] sm:$0xff]
      %v3448 = vld [vmem:[%s3441 + $0x48] sm:$0xff]
      %v3449 = vld [vmem:[%s3441 + $0x50] sm:$0xff]
      %v3450 = vld [vmem:[%s3441 + $0x60] sm:$0xff]
      %v3451 = vld [vmem:[%s3441 + $0x68] sm:$0xff]
      %v3452 = vld [vmem:[%s3441 + $0x78] sm:$0xff]
      %v3453 = vld [vmem:[%s3441 + $0x80] sm:$0xff]
      %v3454 = vld [vmem:[%s3441 + $0x90] sm:$0xff]
      %v3455 = vld [vmem:[%s3441 + $0x98] sm:$0xff]
      %v3456 = vld [vmem:[%s3441 + $0xa8] sm:$0xff]
      %v3457 = vld [vmem:[%s3441 + $0xb0] sm:$0xff]
      %v3458 = vld [vmem:[%s3441 + $0xc0] sm:$0xff]
      %v3459 = vld [vmem:[%s3441 + $0xc8] sm:$0xff]
      %v3460 = vld [vmem:[%s3441 + $0xd8] sm:$0xff]
      %v3461 = vld [vmem:[%s3441 + $0xe0] sm:$0xff]
      %v3462 = vld [vmem:[%s3441 + $0xf0] sm:$0xff]
      %v3463 = vld [vmem:[%s3441 + $0xf8] sm:$0xff]
      %v3464 = vld [vmem:[%s3441 + $0x108] sm:$0xff]
      %v3465 = vld [vmem:[%s3441 + $0x110] sm:$0xff]
      %v3466 = vld [vmem:[%s3441 + $0x120] sm:$0xff]
      %v3467 = vld [vmem:[%s3441 + $0x128] sm:$0xff]
      %v3468 = vld [vmem:[%s3441 + $0x138] sm:$0xff]
      %v3469 = vld [vmem:[%s3441 + $0x140] sm:$0xff]
      %v3470 = vld [vmem:[%s3441 + $0x150] sm:$0xff]
      %v3471 = vld [vmem:[%s3441 + $0x158] sm:$0xff]
      %v3472 = vld [vmem:[%s3441 + $0x168] sm:$0xff]
      %v3473 = vld [vmem:[%s3441 + $0x170] sm:$0xff]
      %v3474 = vld [vmem:[%s3441 + $0x1b0] sm:$0xff]
      %v3475 = vld [vmem:[%s3441 + $0x1b8] sm:$0xff]
      %v3476 = vld [vmem:[%s3441 + $0x1c8] sm:$0xff]
      %v3477 = vld [vmem:[%s3441 + $0x1d0] sm:$0xff]
      %v3478 = vld [vmem:[%s3441 + $0x1e0] sm:$0xff]
      %v3479 = vld [vmem:[%s3441 + $0x1e8] sm:$0xff]
      %v3480 = vld [vmem:[%s3441 + $0x1f8] sm:$0xff]
      %v3481 = vld [vmem:[%s3441 + $0x200] sm:$0xff]
      %v3482 = vld [vmem:[%s3441 + $0x210] sm:$0xff]
      %v3483 = vld [vmem:[%s3441 + $0x218] sm:$0xff]
      %v3484 = vld [vmem:[%s3441 + $0x228] sm:$0xff]
      %v3485 = vld [vmem:[%s3441 + $0x230] sm:$0xff]
      %v3486 = vld [vmem:[%s3441 + $0x240] sm:$0xff]
      %v3487 = vld [vmem:[%s3441 + $0x248] sm:$0xff]
      %v3488 = vld [vmem:[%s3441 + $0x258] sm:$0xff]
      %v3489 = vld [vmem:[%s3441 + $0x260] sm:$0xff]
      %v3490 = vld [vmem:[%s3441 + $0x270] sm:$0xff]
      %v3491 = vld [vmem:[%s3441 + $0x278] sm:$0xff]
      %v3492 = vld [vmem:[%s3441 + $0x288] sm:$0xff]
      %v3493 = vld [vmem:[%s3441 + $0x290] sm:$0xff]
      %v3494 = vld [vmem:[%s3441 + $0x2a0] sm:$0xff]
      %v3495 = vld [vmem:[%s3441 + $0x2a8] sm:$0xff]
      %v3496 = vld [vmem:[%s3441 + $0x2b8] sm:$0xff]
      %v3497 = vld [vmem:[%s3441 + $0x2c0] sm:$0xff]
      %v3498 = vld [vmem:[%s3441 + $0x2d0] sm:$0xff]
      %v3499 = vld [vmem:[%s3441 + $0x2d8] sm:$0xff]
      %v3500 = vld [vmem:[%s3441 + $0x2e8] sm:$0xff]
      %v3501 = vld [vmem:[%s3441 + $0x2f0] sm:$0xff]
      %v3502 = vld [vmem:[%s3441 + $0x300] sm:$0xff]
      %v3503 = vld [vmem:[%s3441 + $0x308] sm:$0xff]
      %v3504 = vld [vmem:[%s3441 + $0x318] sm:$0xff]
      %v3505 = vld [vmem:[%s3441 + $0x320] sm:$0xff]
      %s3506 = scalar_lea.vmem %s1, 24
      %v3507 = vld [vmem:[%s3506] sm:$0xf]
      %v3509 = vsel %vm494, %v3442, 0
      %v3512 = vsel %vm494, %v3443, 0
      %v3515 = vsel %vm494, %v3444, 0
      %v3518 = vsel %vm494, %v3445, 0
      %v3521 = vsel %vm494, %v3446, 0
      %v3524 = vsel %vm494, %v3447, 0
      %v3527 = vsel %vm494, %v3448, 0
      %v3530 = vsel %vm494, %v3449, 0
      %v3533 = vsel %vm494, %v3450, 0
      %v3536 = vsel %vm494, %v3451, 0
      %v3539 = vsel %vm494, %v3452, 0
      %v3542 = vsel %vm494, %v3453, 0
      %v3545 = vsel %vm494, %v3454, 0
      %v3548 = vsel %vm494, %v3455, 0
      %v3551 = vsel %vm494, %v3456, 0
      %v3554 = vsel %vm494, %v3457, 0
      %v3557 = vsel %vm494, %v3458, 0
      %v3560 = vsel %vm494, %v3459, 0
      %v3563 = vsel %vm494, %v3460, 0
      %v3566 = vsel %vm494, %v3461, 0
      %v3569 = vsel %vm494, %v3462, 0
      %v3572 = vsel %vm494, %v3463, 0
      %v3575 = vsel %vm494, %v3464, 0
      %v3578 = vsel %vm494, %v3465, 0
      %v3581 = vsel %vm494, %v3466, 0
      %v3584 = vsel %vm494, %v3467, 0
      %v3587 = vsel %vm494, %v3468, 0
      %v3590 = vsel %vm494, %v3469, 0
      %v3593 = vsel %vm494, %v3470, 0
      %v3596 = vsel %vm494, %v3471, 0
      %v3599 = vsel %vm494, %v3472, 0
      %v3602 = vsel %vm494, %v3473, 0
      %v3605 = vsel %vm494, %v3474, 0
      %v3608 = vsel %vm494, %v3475, 0
      %v3611 = vsel %vm494, %v3476, 0
      %v3614 = vsel %vm494, %v3477, 0
      %v3617 = vsel %vm494, %v3478, 0
      %v3620 = vsel %vm494, %v3479, 0
      %v3623 = vsel %vm494, %v3480, 0
      %v3626 = vsel %vm494, %v3481, 0
      %v3629 = vsel %vm494, %v3482, 0
      %v3632 = vsel %vm494, %v3483, 0
      %v3635 = vsel %vm494, %v3484, 0
      %v3638 = vsel %vm494, %v3485, 0
      %v3641 = vsel %vm494, %v3486, 0
      %v3644 = vsel %vm494, %v3487, 0
      %v3647 = vsel %vm494, %v3488, 0
      %v3650 = vsel %vm494, %v3489, 0
      %v3653 = vsel %vm494, %v3490, 0
      %v3656 = vsel %vm494, %v3491, 0
      %v3659 = vsel %vm494, %v3492, 0
      %v3662 = vsel %vm494, %v3493, 0
      %v3665 = vsel %vm494, %v3494, 0
      %v3668 = vsel %vm494, %v3495, 0
      %v3671 = vsel %vm494, %v3496, 0
      %v3674 = vsel %vm494, %v3497, 0
      %v3677 = vsel %vm494, %v3498, 0
      %v3680 = vsel %vm494, %v3499, 0
      %v3683 = vsel %vm494, %v3500, 0
      %v3686 = vsel %vm494, %v3501, 0
      %v3689 = vsel %vm494, %v3502, 0
      %v3692 = vsel %vm494, %v3503, 0
      %v3695 = vsel %vm494, %v3504, 0
      %v3698 = vsel %vm494, %v3505, 0
      %v3701 = vsel %vm687, %v3507, 0
      %3703 = vmatpush.msra.mxu0 0.0
      %3704 = vmatpush.msra.mxu0 0.0
      %3705 = vmatpush.msra.mxu0 0.0
      %3706 = vmatpush.msra.mxu0 0.0
      %3707 = vmatpush.msra.mxu0 0.0
      %3708 = vmatpush.msra.mxu0 0.0
      %3709 = vmatpush.msra.mxu0 0.0
      %3710 = vmatpush.msra.mxu0 0.0
      %3711 = vmatpush.msra.mxu0 0.0
      %3712 = vmatpush.msra.mxu0 0.0
      %3713 = vmatpush.msra.mxu0 0.0
      %3714 = vmatpush.msra.mxu0 0.0
      %3715 = vmatpush.msra.mxu0 0.0
      %3716 = vmatpush.msra.mxu0 0.0
      %3717 = vmatpush.msra.mxu0 0.0
      %3718 = vmatpush.msra.mxu0 %v3701
      %3719 = vmatmul.f32.gmra.mxu0 %v3509
      %v3720 = vpop.f32.mrf.mxu0
      %v3721 = vadd.f32 0.0, %v3720
      %3722 = vmatmul.f32.gmra.mxu0 %v3512
      %v3723 = vpop.f32.mrf.mxu0
      %v3724 = vadd.f32 0.0, %v3723
      %3725 = vmatmul.f32.gmra.mxu0 %v3515
      %v3726 = vpop.f32.mrf.mxu0
      %v3727 = vadd.f32 0.0, %v3726
      %3728 = vmatmul.f32.gmra.mxu0 %v3518
      %v3729 = vpop.f32.mrf.mxu0
      %v3730 = vadd.f32 0.0, %v3729
      %3731 = vmatmul.f32.gmra.mxu0 %v3521
      %v3732 = vpop.f32.mrf.mxu0
      %v3733 = vadd.f32 0.0, %v3732
      %3734 = vmatmul.f32.gmra.mxu0 %v3524
      %v3735 = vpop.f32.mrf.mxu0
      %v3736 = vadd.f32 0.0, %v3735
      %3737 = vmatmul.f32.gmra.mxu0 %v3527
      %v3738 = vpop.f32.mrf.mxu0
      %v3739 = vadd.f32 0.0, %v3738
      %3740 = vmatmul.f32.gmra.mxu0 %v3530
      %v3741 = vpop.f32.mrf.mxu0
      %v3742 = vadd.f32 0.0, %v3741
      %3743 = vmatmul.f32.gmra.mxu0 %v3533
      %v3744 = vpop.f32.mrf.mxu0
      %v3745 = vadd.f32 0.0, %v3744
      %3746 = vmatmul.f32.gmra.mxu0 %v3536
      %v3747 = vpop.f32.mrf.mxu0
      %v3748 = vadd.f32 0.0, %v3747
      %3749 = vmatmul.f32.gmra.mxu0 %v3539
      %v3750 = vpop.f32.mrf.mxu0
      %v3751 = vadd.f32 0.0, %v3750
      %3752 = vmatmul.f32.gmra.mxu0 %v3542
      %v3753 = vpop.f32.mrf.mxu0
      %v3754 = vadd.f32 0.0, %v3753
      %3755 = vmatmul.f32.gmra.mxu0 %v3545
      %v3756 = vpop.f32.mrf.mxu0
      %v3757 = vadd.f32 0.0, %v3756
      %3758 = vmatmul.f32.gmra.mxu0 %v3548
      %v3759 = vpop.f32.mrf.mxu0
      %v3760 = vadd.f32 0.0, %v3759
      %3761 = vmatmul.f32.gmra.mxu0 %v3551
      %v3762 = vpop.f32.mrf.mxu0
      %v3763 = vadd.f32 0.0, %v3762
      %3764 = vmatmul.f32.gmra.mxu0 %v3554
      %v3765 = vpop.f32.mrf.mxu0
      %v3766 = vadd.f32 0.0, %v3765
      %3767 = vmatmul.f32.gmra.mxu0 %v3557
      %v3768 = vpop.f32.mrf.mxu0
      %v3769 = vadd.f32 0.0, %v3768
      %3770 = vmatmul.f32.gmra.mxu0 %v3560
      %v3771 = vpop.f32.mrf.mxu0
      %v3772 = vadd.f32 0.0, %v3771
      %3773 = vmatmul.f32.gmra.mxu0 %v3563
      %v3774 = vpop.f32.mrf.mxu0
      %v3775 = vadd.f32 0.0, %v3774
      %3776 = vmatmul.f32.gmra.mxu0 %v3566
      %v3777 = vpop.f32.mrf.mxu0
      %v3778 = vadd.f32 0.0, %v3777
      %3779 = vmatmul.f32.gmra.mxu0 %v3569
      %v3780 = vpop.f32.mrf.mxu0
      %v3781 = vadd.f32 0.0, %v3780
      %3782 = vmatmul.f32.gmra.mxu0 %v3572
      %v3783 = vpop.f32.mrf.mxu0
      %v3784 = vadd.f32 0.0, %v3783
      %3785 = vmatmul.f32.gmra.mxu0 %v3575
      %v3786 = vpop.f32.mrf.mxu0
      %v3787 = vadd.f32 0.0, %v3786
      %3788 = vmatmul.f32.gmra.mxu0 %v3578
      %v3789 = vpop.f32.mrf.mxu0
      %v3790 = vadd.f32 0.0, %v3789
      %3791 = vmatmul.f32.gmra.mxu0 %v3581
      %v3792 = vpop.f32.mrf.mxu0
      %v3793 = vadd.f32 0.0, %v3792
      %3794 = vmatmul.f32.gmra.mxu0 %v3584
      %v3795 = vpop.f32.mrf.mxu0
      %v3796 = vadd.f32 0.0, %v3795
      %3797 = vmatmul.f32.gmra.mxu0 %v3587
      %v3798 = vpop.f32.mrf.mxu0
      %v3799 = vadd.f32 0.0, %v3798
      %3800 = vmatmul.f32.gmra.mxu0 %v3590
      %v3801 = vpop.f32.mrf.mxu0
      %v3802 = vadd.f32 0.0, %v3801
      %3803 = vmatmul.f32.gmra.mxu0 %v3593
      %v3804 = vpop.f32.mrf.mxu0
      %v3805 = vadd.f32 0.0, %v3804
      %3806 = vmatmul.f32.gmra.mxu0 %v3596
      %v3807 = vpop.f32.mrf.mxu0
      %v3808 = vadd.f32 0.0, %v3807
      %3809 = vmatmul.f32.gmra.mxu0 %v3599
      %v3810 = vpop.f32.mrf.mxu0
      %v3811 = vadd.f32 0.0, %v3810
      %3812 = vmatmul.f32.gmra.mxu0 %v3602
      %v3813 = vpop.f32.mrf.mxu0
      %v3814 = vadd.f32 0.0, %v3813
      %3815 = vmatmul.f32.gmra.mxu0 %v3605
      %v3816 = vpop.f32.mrf.mxu0
      %v3817 = vadd.f32 0.0, %v3816
      %3818 = vmatmul.f32.gmra.mxu0 %v3608
      %v3819 = vpop.f32.mrf.mxu0
      %v3820 = vadd.f32 0.0, %v3819
      %3821 = vmatmul.f32.gmra.mxu0 %v3611
      %v3822 = vpop.f32.mrf.mxu0
      %v3823 = vadd.f32 0.0, %v3822
      %3824 = vmatmul.f32.gmra.mxu0 %v3614
      %v3825 = vpop.f32.mrf.mxu0
      %v3826 = vadd.f32 0.0, %v3825
      %3827 = vmatmul.f32.gmra.mxu0 %v3617
      %v3828 = vpop.f32.mrf.mxu0
      %v3829 = vadd.f32 0.0, %v3828
      %3830 = vmatmul.f32.gmra.mxu0 %v3620
      %v3831 = vpop.f32.mrf.mxu0
      %v3832 = vadd.f32 0.0, %v3831
      %3833 = vmatmul.f32.gmra.mxu0 %v3623
      %v3834 = vpop.f32.mrf.mxu0
      %v3835 = vadd.f32 0.0, %v3834
      %3836 = vmatmul.f32.gmra.mxu0 %v3626
      %v3837 = vpop.f32.mrf.mxu0
      %v3838 = vadd.f32 0.0, %v3837
      %3839 = vmatmul.f32.gmra.mxu0 %v3629
      %v3840 = vpop.f32.mrf.mxu0
      %v3841 = vadd.f32 0.0, %v3840
      %3842 = vmatmul.f32.gmra.mxu0 %v3632
      %v3843 = vpop.f32.mrf.mxu0
      %v3844 = vadd.f32 0.0, %v3843
      %3845 = vmatmul.f32.gmra.mxu0 %v3635
      %v3846 = vpop.f32.mrf.mxu0
      %v3847 = vadd.f32 0.0, %v3846
      %3848 = vmatmul.f32.gmra.mxu0 %v3638
      %v3849 = vpop.f32.mrf.mxu0
      %v3850 = vadd.f32 0.0, %v3849
      %3851 = vmatmul.f32.gmra.mxu0 %v3641
      %v3852 = vpop.f32.mrf.mxu0
      %v3853 = vadd.f32 0.0, %v3852
      %3854 = vmatmul.f32.gmra.mxu0 %v3644
      %v3855 = vpop.f32.mrf.mxu0
      %v3856 = vadd.f32 0.0, %v3855
      %3857 = vmatmul.f32.gmra.mxu0 %v3647
      %v3858 = vpop.f32.mrf.mxu0
      %v3859 = vadd.f32 0.0, %v3858
      %3860 = vmatmul.f32.gmra.mxu0 %v3650
      %v3861 = vpop.f32.mrf.mxu0
      %v3862 = vadd.f32 0.0, %v3861
      %3863 = vmatmul.f32.gmra.mxu0 %v3653
      %v3864 = vpop.f32.mrf.mxu0
      %v3865 = vadd.f32 0.0, %v3864
      %3866 = vmatmul.f32.gmra.mxu0 %v3656
      %v3867 = vpop.f32.mrf.mxu0
      %v3868 = vadd.f32 0.0, %v3867
      %3869 = vmatmul.f32.gmra.mxu0 %v3659
      %v3870 = vpop.f32.mrf.mxu0
      %v3871 = vadd.f32 0.0, %v3870
      %3872 = vmatmul.f32.gmra.mxu0 %v3662
      %v3873 = vpop.f32.mrf.mxu0
      %v3874 = vadd.f32 0.0, %v3873
      %3875 = vmatmul.f32.gmra.mxu0 %v3665
      %v3876 = vpop.f32.mrf.mxu0
      %v3877 = vadd.f32 0.0, %v3876
      %3878 = vmatmul.f32.gmra.mxu0 %v3668
      %v3879 = vpop.f32.mrf.mxu0
      %v3880 = vadd.f32 0.0, %v3879
      %3881 = vmatmul.f32.gmra.mxu0 %v3671
      %v3882 = vpop.f32.mrf.mxu0
      %v3883 = vadd.f32 0.0, %v3882
      %3884 = vmatmul.f32.gmra.mxu0 %v3674
      %v3885 = vpop.f32.mrf.mxu0
      %v3886 = vadd.f32 0.0, %v3885
      %3887 = vmatmul.f32.gmra.mxu0 %v3677
      %v3888 = vpop.f32.mrf.mxu0
      %v3889 = vadd.f32 0.0, %v3888
      %3890 = vmatmul.f32.gmra.mxu0 %v3680
      %v3891 = vpop.f32.mrf.mxu0
      %v3892 = vadd.f32 0.0, %v3891
      %3893 = vmatmul.f32.gmra.mxu0 %v3683
      %v3894 = vpop.f32.mrf.mxu0
      %v3895 = vadd.f32 0.0, %v3894
      %3896 = vmatmul.f32.gmra.mxu0 %v3686
      %v3897 = vpop.f32.mrf.mxu0
      %v3898 = vadd.f32 0.0, %v3897
      %3899 = vmatmul.f32.gmra.mxu0 %v3689
      %v3900 = vpop.f32.mrf.mxu0
      %v3901 = vadd.f32 0.0, %v3900
      %3902 = vmatmul.f32.gmra.mxu0 %v3692
      %v3903 = vpop.f32.mrf.mxu0
      %v3904 = vadd.f32 0.0, %v3903
      %3905 = vmatmul.f32.gmra.mxu0 %v3695
      %v3906 = vpop.f32.mrf.mxu0
      %v3907 = vadd.f32 0.0, %v3906
      %3908 = vmatmul.f32.gmra.mxu0 %v3698
      %v3909 = vpop.f32.mrf.mxu0
      %v3910 = vadd.f32 0.0, %v3909
      %3911 = vdwg.mxu0
      %v3912 = vadd.f32 %v3377, %v3721
      %v3913 = vadd.f32 %v3378, %v3724
      %v3914 = vadd.f32 %v3379, %v3727
      %v3915 = vadd.f32 %v3380, %v3730
      %v3916 = vadd.f32 %v3381, %v3733
      %v3917 = vadd.f32 %v3382, %v3736
      %v3918 = vadd.f32 %v3383, %v3739
      %v3919 = vadd.f32 %v3384, %v3742
      %v3920 = vadd.f32 %v3385, %v3745
      %v3921 = vadd.f32 %v3386, %v3748
      %v3922 = vadd.f32 %v3387, %v3751
      %v3923 = vadd.f32 %v3388, %v3754
      %v3924 = vadd.f32 %v3389, %v3757
      %v3925 = vadd.f32 %v3390, %v3760
      %v3926 = vadd.f32 %v3391, %v3763
      %v3927 = vadd.f32 %v3392, %v3766
      %v3928 = vadd.f32 %v3393, %v3769
      %v3929 = vadd.f32 %v3394, %v3772
      %v3930 = vadd.f32 %v3395, %v3775
      %v3931 = vadd.f32 %v3396, %v3778
      %v3932 = vadd.f32 %v3397, %v3781
      %v3933 = vadd.f32 %v3398, %v3784
      %v3934 = vadd.f32 %v3399, %v3787
      %v3935 = vadd.f32 %v3400, %v3790
      %v3936 = vadd.f32 %v3401, %v3793
      %v3937 = vadd.f32 %v3402, %v3796
      %v3938 = vadd.f32 %v3403, %v3799
      %v3939 = vadd.f32 %v3404, %v3802
      %v3940 = vadd.f32 %v3405, %v3805
      %v3941 = vadd.f32 %v3406, %v3808
      %v3942 = vadd.f32 %v3407, %v3811
      %v3943 = vadd.f32 %v3408, %v3814
      %v3944 = vadd.f32 %v3409, %v3817
      %v3945 = vadd.f32 %v3410, %v3820
      %v3946 = vadd.f32 %v3411, %v3823
      %v3947 = vadd.f32 %v3412, %v3826
      %v3948 = vadd.f32 %v3413, %v3829
      %v3949 = vadd.f32 %v3414, %v3832
      %v3950 = vadd.f32 %v3415, %v3835
      %v3951 = vadd.f32 %v3416, %v3838
      %v3952 = vadd.f32 %v3417, %v3841
      %v3953 = vadd.f32 %v3418, %v3844
      %v3954 = vadd.f32 %v3419, %v3847
      %v3955 = vadd.f32 %v3420, %v3850
      %v3956 = vadd.f32 %v3421, %v3853
      %v3957 = vadd.f32 %v3422, %v3856
      %v3958 = vadd.f32 %v3423, %v3859
      %v3959 = vadd.f32 %v3424, %v3862
      %v3960 = vadd.f32 %v3425, %v3865
      %v3961 = vadd.f32 %v3426, %v3868
      %v3962 = vadd.f32 %v3427, %v3871
      %v3963 = vadd.f32 %v3428, %v3874
      %v3964 = vadd.f32 %v3429, %v3877
      %v3965 = vadd.f32 %v3430, %v3880
      %v3966 = vadd.f32 %v3431, %v3883
      %v3967 = vadd.f32 %v3432, %v3886
      %v3968 = vadd.f32 %v3433, %v3889
      %v3969 = vadd.f32 %v3434, %v3892
      %v3970 = vadd.f32 %v3435, %v3895
      %v3971 = vadd.f32 %v3436, %v3898
      %v3972 = vadd.f32 %v3437, %v3901
      %v3973 = vadd.f32 %v3438, %v3904
      %v3974 = vadd.f32 %v3439, %v3907
      %v3975 = vadd.f32 %v3440, %v3910
      %v3976 = vld [vmem:[%s3441 + $0x1] sm:$0xff]
      %v3977 = vld [vmem:[%s3441 + $0x9] sm:$0xff]
      %v3978 = vld [vmem:[%s3441 + $0x19] sm:$0xff]
      %v3979 = vld [vmem:[%s3441 + $0x21] sm:$0xff]
      %v3980 = vld [vmem:[%s3441 + $0x31] sm:$0xff]
      %v3981 = vld [vmem:[%s3441 + $0x39] sm:$0xff]
      %v3982 = vld [vmem:[%s3441 + $0x49] sm:$0xff]
      %v3983 = vld [vmem:[%s3441 + $0x51] sm:$0xff]
      %v3984 = vld [vmem:[%s3441 + $0x61] sm:$0xff]
      %v3985 = vld [vmem:[%s3441 + $0x69] sm:$0xff]
      %v3986 = vld [vmem:[%s3441 + $0x79] sm:$0xff]
      %v3987 = vld [vmem:[%s3441 + $0x81] sm:$0xff]
      %v3988 = vld [vmem:[%s3441 + $0x91] sm:$0xff]
      %v3989 = vld [vmem:[%s3441 + $0x99] sm:$0xff]
      %v3990 = vld [vmem:[%s3441 + $0xa9] sm:$0xff]
      %v3991 = vld [vmem:[%s3441 + $0xb1] sm:$0xff]
      %v3992 = vld [vmem:[%s3441 + $0xc1] sm:$0xff]
      %v3993 = vld [vmem:[%s3441 + $0xc9] sm:$0xff]
      %v3994 = vld [vmem:[%s3441 + $0xd9] sm:$0xff]
      %v3995 = vld [vmem:[%s3441 + $0xe1] sm:$0xff]
      %v3996 = vld [vmem:[%s3441 + $0xf1] sm:$0xff]
      %v3997 = vld [vmem:[%s3441 + $0xf9] sm:$0xff]
      %v3998 = vld [vmem:[%s3441 + $0x109] sm:$0xff]
      %v3999 = vld [vmem:[%s3441 + $0x111] sm:$0xff]
      %v4000 = vld [vmem:[%s3441 + $0x121] sm:$0xff]
      %v4001 = vld [vmem:[%s3441 + $0x129] sm:$0xff]
      %v4002 = vld [vmem:[%s3441 + $0x139] sm:$0xff]
      %v4003 = vld [vmem:[%s3441 + $0x141] sm:$0xff]
      %v4004 = vld [vmem:[%s3441 + $0x151] sm:$0xff]
      %v4005 = vld [vmem:[%s3441 + $0x159] sm:$0xff]
      %v4006 = vld [vmem:[%s3441 + $0x169] sm:$0xff]
      %v4007 = vld [vmem:[%s3441 + $0x171] sm:$0xff]
      %v4008 = vld [vmem:[%s3441 + $0x1b1] sm:$0xff]
      %v4009 = vld [vmem:[%s3441 + $0x1b9] sm:$0xff]
      %v4010 = vld [vmem:[%s3441 + $0x1c9] sm:$0xff]
      %v4011 = vld [vmem:[%s3441 + $0x1d1] sm:$0xff]
      %v4012 = vld [vmem:[%s3441 + $0x1e1] sm:$0xff]
      %v4013 = vld [vmem:[%s3441 + $0x1e9] sm:$0xff]
      %v4014 = vld [vmem:[%s3441 + $0x1f9] sm:$0xff]
      %v4015 = vld [vmem:[%s3441 + $0x201] sm:$0xff]
      %v4016 = vld [vmem:[%s3441 + $0x211] sm:$0xff]
      %v4017 = vld [vmem:[%s3441 + $0x219] sm:$0xff]
      %v4018 = vld [vmem:[%s3441 + $0x229] sm:$0xff]
      %v4019 = vld [vmem:[%s3441 + $0x231] sm:$0xff]
      %v4020 = vld [vmem:[%s3441 + $0x241] sm:$0xff]
      %v4021 = vld [vmem:[%s3441 + $0x249] sm:$0xff]
      %v4022 = vld [vmem:[%s3441 + $0x259] sm:$0xff]
      %v4023 = vld [vmem:[%s3441 + $0x261] sm:$0xff]
      %v4024 = vld [vmem:[%s3441 + $0x271] sm:$0xff]
      %v4025 = vld [vmem:[%s3441 + $0x279] sm:$0xff]
      %v4026 = vld [vmem:[%s3441 + $0x289] sm:$0xff]
      %v4027 = vld [vmem:[%s3441 + $0x291] sm:$0xff]
      %v4028 = vld [vmem:[%s3441 + $0x2a1] sm:$0xff]
      %v4029 = vld [vmem:[%s3441 + $0x2a9] sm:$0xff]
      %v4030 = vld [vmem:[%s3441 + $0x2b9] sm:$0xff]
      %v4031 = vld [vmem:[%s3441 + $0x2c1] sm:$0xff]
      %v4032 = vld [vmem:[%s3441 + $0x2d1] sm:$0xff]
      %v4033 = vld [vmem:[%s3441 + $0x2d9] sm:$0xff]
      %v4034 = vld [vmem:[%s3441 + $0x2e9] sm:$0xff]
      %v4035 = vld [vmem:[%s3441 + $0x2f1] sm:$0xff]
      %v4036 = vld [vmem:[%s3441 + $0x301] sm:$0xff]
      %v4037 = vld [vmem:[%s3441 + $0x309] sm:$0xff]
      %v4038 = vld [vmem:[%s3441 + $0x319] sm:$0xff]
      %v4039 = vld [vmem:[%s3441 + $0x321] sm:$0xff]
      %s4040 = scalar_lea.vmem %s1, 28
      %v4041 = vld [vmem:[%s4040] sm:$0xf]
      %v4043 = vsel %vm494, %v3976, 0
      %v4046 = vsel %vm494, %v3977, 0
      %v4049 = vsel %vm494, %v3978, 0
      %v4052 = vsel %vm494, %v3979, 0
      %v4055 = vsel %vm494, %v3980, 0
      %v4058 = vsel %vm494, %v3981, 0
      %v4061 = vsel %vm494, %v3982, 0
      %v4064 = vsel %vm494, %v3983, 0
      %v4067 = vsel %vm494, %v3984, 0
      %v4070 = vsel %vm494, %v3985, 0
      %v4073 = vsel %vm494, %v3986, 0
      %v4076 = vsel %vm494, %v3987, 0
      %v4079 = vsel %vm494, %v3988, 0
      %v4082 = vsel %vm494, %v3989, 0
      %v4085 = vsel %vm494, %v3990, 0
      %v4088 = vsel %vm494, %v3991, 0
      %v4091 = vsel %vm494, %v3992, 0
      %v4094 = vsel %vm494, %v3993, 0
      %v4097 = vsel %vm494, %v3994, 0
      %v4100 = vsel %vm494, %v3995, 0
      %v4103 = vsel %vm494, %v3996, 0
      %v4106 = vsel %vm494, %v3997, 0
      %v4109 = vsel %vm494, %v3998, 0
      %v4112 = vsel %vm494, %v3999, 0
      %v4115 = vsel %vm494, %v4000, 0
      %v4118 = vsel %vm494, %v4001, 0
      %v4121 = vsel %vm494, %v4002, 0
      %v4124 = vsel %vm494, %v4003, 0
      %v4127 = vsel %vm494, %v4004, 0
      %v4130 = vsel %vm494, %v4005, 0
      %v4133 = vsel %vm494, %v4006, 0
      %v4136 = vsel %vm494, %v4007, 0
      %v4139 = vsel %vm494, %v4008, 0
      %v4142 = vsel %vm494, %v4009, 0
      %v4145 = vsel %vm494, %v4010, 0
      %v4148 = vsel %vm494, %v4011, 0
      %v4151 = vsel %vm494, %v4012, 0
      %v4154 = vsel %vm494, %v4013, 0
      %v4157 = vsel %vm494, %v4014, 0
      %v4160 = vsel %vm494, %v4015, 0
      %v4163 = vsel %vm494, %v4016, 0
      %v4166 = vsel %vm494, %v4017, 0
      %v4169 = vsel %vm494, %v4018, 0
      %v4172 = vsel %vm494, %v4019, 0
      %v4175 = vsel %vm494, %v4020, 0
      %v4178 = vsel %vm494, %v4021, 0
      %v4181 = vsel %vm494, %v4022, 0
      %v4184 = vsel %vm494, %v4023, 0
      %v4187 = vsel %vm494, %v4024, 0
      %v4190 = vsel %vm494, %v4025, 0
      %v4193 = vsel %vm494, %v4026, 0
      %v4196 = vsel %vm494, %v4027, 0
      %v4199 = vsel %vm494, %v4028, 0
      %v4202 = vsel %vm494, %v4029, 0
      %v4205 = vsel %vm494, %v4030, 0
      %v4208 = vsel %vm494, %v4031, 0
      %v4211 = vsel %vm494, %v4032, 0
      %v4214 = vsel %vm494, %v4033, 0
      %v4217 = vsel %vm494, %v4034, 0
      %v4220 = vsel %vm494, %v4035, 0
      %v4223 = vsel %vm494, %v4036, 0
      %v4226 = vsel %vm494, %v4037, 0
      %v4229 = vsel %vm494, %v4038, 0
      %v4232 = vsel %vm494, %v4039, 0
      %v4235 = vsel %vm687, %v4041, 0
      %4237 = vmatpush.msra.mxu0 0.0
      %4238 = vmatpush.msra.mxu0 0.0
      %4239 = vmatpush.msra.mxu0 0.0
      %4240 = vmatpush.msra.mxu0 0.0
      %4241 = vmatpush.msra.mxu0 0.0
      %4242 = vmatpush.msra.mxu0 0.0
      %4243 = vmatpush.msra.mxu0 0.0
      %4244 = vmatpush.msra.mxu0 0.0
      %4245 = vmatpush.msra.mxu0 0.0
      %4246 = vmatpush.msra.mxu0 0.0
      %4247 = vmatpush.msra.mxu0 0.0
      %4248 = vmatpush.msra.mxu0 0.0
      %4249 = vmatpush.msra.mxu0 0.0
      %4250 = vmatpush.msra.mxu0 0.0
      %4251 = vmatpush.msra.mxu0 0.0
      %4252 = vmatpush.msra.mxu0 %v4235
      %4253 = vmatmul.f32.gmra.mxu0 %v4043
      %v4254 = vpop.f32.mrf.mxu0
      %v4255 = vadd.f32 0.0, %v4254
      %4256 = vmatmul.f32.gmra.mxu0 %v4046
      %v4257 = vpop.f32.mrf.mxu0
      %v4258 = vadd.f32 0.0, %v4257
      %4259 = vmatmul.f32.gmra.mxu0 %v4049
      %v4260 = vpop.f32.mrf.mxu0
      %v4261 = vadd.f32 0.0, %v4260
      %4262 = vmatmul.f32.gmra.mxu0 %v4052
      %v4263 = vpop.f32.mrf.mxu0
      %v4264 = vadd.f32 0.0, %v4263
      %4265 = vmatmul.f32.gmra.mxu0 %v4055
      %v4266 = vpop.f32.mrf.mxu0
      %v4267 = vadd.f32 0.0, %v4266
      %4268 = vmatmul.f32.gmra.mxu0 %v4058
      %v4269 = vpop.f32.mrf.mxu0
      %v4270 = vadd.f32 0.0, %v4269
      %4271 = vmatmul.f32.gmra.mxu0 %v4061
      %v4272 = vpop.f32.mrf.mxu0
      %v4273 = vadd.f32 0.0, %v4272
      %4274 = vmatmul.f32.gmra.mxu0 %v4064
      %v4275 = vpop.f32.mrf.mxu0
      %v4276 = vadd.f32 0.0, %v4275
      %4277 = vmatmul.f32.gmra.mxu0 %v4067
      %v4278 = vpop.f32.mrf.mxu0
      %v4279 = vadd.f32 0.0, %v4278
      %4280 = vmatmul.f32.gmra.mxu0 %v4070
      %v4281 = vpop.f32.mrf.mxu0
      %v4282 = vadd.f32 0.0, %v4281
      %4283 = vmatmul.f32.gmra.mxu0 %v4073
      %v4284 = vpop.f32.mrf.mxu0
      %v4285 = vadd.f32 0.0, %v4284
      %4286 = vmatmul.f32.gmra.mxu0 %v4076
      %v4287 = vpop.f32.mrf.mxu0
      %v4288 = vadd.f32 0.0, %v4287
      %4289 = vmatmul.f32.gmra.mxu0 %v4079
      %v4290 = vpop.f32.mrf.mxu0
      %v4291 = vadd.f32 0.0, %v4290
      %4292 = vmatmul.f32.gmra.mxu0 %v4082
      %v4293 = vpop.f32.mrf.mxu0
      %v4294 = vadd.f32 0.0, %v4293
      %4295 = vmatmul.f32.gmra.mxu0 %v4085
      %v4296 = vpop.f32.mrf.mxu0
      %v4297 = vadd.f32 0.0, %v4296
      %4298 = vmatmul.f32.gmra.mxu0 %v4088
      %v4299 = vpop.f32.mrf.mxu0
      %v4300 = vadd.f32 0.0, %v4299
      %4301 = vmatmul.f32.gmra.mxu0 %v4091
      %v4302 = vpop.f32.mrf.mxu0
      %v4303 = vadd.f32 0.0, %v4302
      %4304 = vmatmul.f32.gmra.mxu0 %v4094
      %v4305 = vpop.f32.mrf.mxu0
      %v4306 = vadd.f32 0.0, %v4305
      %4307 = vmatmul.f32.gmra.mxu0 %v4097
      %v4308 = vpop.f32.mrf.mxu0
      %v4309 = vadd.f32 0.0, %v4308
      %4310 = vmatmul.f32.gmra.mxu0 %v4100
      %v4311 = vpop.f32.mrf.mxu0
      %v4312 = vadd.f32 0.0, %v4311
      %4313 = vmatmul.f32.gmra.mxu0 %v4103
      %v4314 = vpop.f32.mrf.mxu0
      %v4315 = vadd.f32 0.0, %v4314
      %4316 = vmatmul.f32.gmra.mxu0 %v4106
      %v4317 = vpop.f32.mrf.mxu0
      %v4318 = vadd.f32 0.0, %v4317
      %4319 = vmatmul.f32.gmra.mxu0 %v4109
      %v4320 = vpop.f32.mrf.mxu0
      %v4321 = vadd.f32 0.0, %v4320
      %4322 = vmatmul.f32.gmra.mxu0 %v4112
      %v4323 = vpop.f32.mrf.mxu0
      %v4324 = vadd.f32 0.0, %v4323
      %4325 = vmatmul.f32.gmra.mxu0 %v4115
      %v4326 = vpop.f32.mrf.mxu0
      %v4327 = vadd.f32 0.0, %v4326
      %4328 = vmatmul.f32.gmra.mxu0 %v4118
      %v4329 = vpop.f32.mrf.mxu0
      %v4330 = vadd.f32 0.0, %v4329
      %4331 = vmatmul.f32.gmra.mxu0 %v4121
      %v4332 = vpop.f32.mrf.mxu0
      %v4333 = vadd.f32 0.0, %v4332
      %4334 = vmatmul.f32.gmra.mxu0 %v4124
      %v4335 = vpop.f32.mrf.mxu0
      %v4336 = vadd.f32 0.0, %v4335
      %4337 = vmatmul.f32.gmra.mxu0 %v4127
      %v4338 = vpop.f32.mrf.mxu0
      %v4339 = vadd.f32 0.0, %v4338
      %4340 = vmatmul.f32.gmra.mxu0 %v4130
      %v4341 = vpop.f32.mrf.mxu0
      %v4342 = vadd.f32 0.0, %v4341
      %4343 = vmatmul.f32.gmra.mxu0 %v4133
      %v4344 = vpop.f32.mrf.mxu0
      %v4345 = vadd.f32 0.0, %v4344
      %4346 = vmatmul.f32.gmra.mxu0 %v4136
      %v4347 = vpop.f32.mrf.mxu0
      %v4348 = vadd.f32 0.0, %v4347
      %4349 = vmatmul.f32.gmra.mxu0 %v4139
      %v4350 = vpop.f32.mrf.mxu0
      %v4351 = vadd.f32 0.0, %v4350
      %4352 = vmatmul.f32.gmra.mxu0 %v4142
      %v4353 = vpop.f32.mrf.mxu0
      %v4354 = vadd.f32 0.0, %v4353
      %4355 = vmatmul.f32.gmra.mxu0 %v4145
      %v4356 = vpop.f32.mrf.mxu0
      %v4357 = vadd.f32 0.0, %v4356
      %4358 = vmatmul.f32.gmra.mxu0 %v4148
      %v4359 = vpop.f32.mrf.mxu0
      %v4360 = vadd.f32 0.0, %v4359
      %4361 = vmatmul.f32.gmra.mxu0 %v4151
      %v4362 = vpop.f32.mrf.mxu0
      %v4363 = vadd.f32 0.0, %v4362
      %4364 = vmatmul.f32.gmra.mxu0 %v4154
      %v4365 = vpop.f32.mrf.mxu0
      %v4366 = vadd.f32 0.0, %v4365
      %4367 = vmatmul.f32.gmra.mxu0 %v4157
      %v4368 = vpop.f32.mrf.mxu0
      %v4369 = vadd.f32 0.0, %v4368
      %4370 = vmatmul.f32.gmra.mxu0 %v4160
      %v4371 = vpop.f32.mrf.mxu0
      %v4372 = vadd.f32 0.0, %v4371
      %4373 = vmatmul.f32.gmra.mxu0 %v4163
      %v4374 = vpop.f32.mrf.mxu0
      %v4375 = vadd.f32 0.0, %v4374
      %4376 = vmatmul.f32.gmra.mxu0 %v4166
      %v4377 = vpop.f32.mrf.mxu0
      %v4378 = vadd.f32 0.0, %v4377
      %4379 = vmatmul.f32.gmra.mxu0 %v4169
      %v4380 = vpop.f32.mrf.mxu0
      %v4381 = vadd.f32 0.0, %v4380
      %4382 = vmatmul.f32.gmra.mxu0 %v4172
      %v4383 = vpop.f32.mrf.mxu0
      %v4384 = vadd.f32 0.0, %v4383
      %4385 = vmatmul.f32.gmra.mxu0 %v4175
      %v4386 = vpop.f32.mrf.mxu0
      %v4387 = vadd.f32 0.0, %v4386
      %4388 = vmatmul.f32.gmra.mxu0 %v4178
      %v4389 = vpop.f32.mrf.mxu0
      %v4390 = vadd.f32 0.0, %v4389
      %4391 = vmatmul.f32.gmra.mxu0 %v4181
      %v4392 = vpop.f32.mrf.mxu0
      %v4393 = vadd.f32 0.0, %v4392
      %4394 = vmatmul.f32.gmra.mxu0 %v4184
      %v4395 = vpop.f32.mrf.mxu0
      %v4396 = vadd.f32 0.0, %v4395
      %4397 = vmatmul.f32.gmra.mxu0 %v4187
      %v4398 = vpop.f32.mrf.mxu0
      %v4399 = vadd.f32 0.0, %v4398
      %4400 = vmatmul.f32.gmra.mxu0 %v4190
      %v4401 = vpop.f32.mrf.mxu0
      %v4402 = vadd.f32 0.0, %v4401
      %4403 = vmatmul.f32.gmra.mxu0 %v4193
      %v4404 = vpop.f32.mrf.mxu0
      %v4405 = vadd.f32 0.0, %v4404
      %4406 = vmatmul.f32.gmra.mxu0 %v4196
      %v4407 = vpop.f32.mrf.mxu0
      %v4408 = vadd.f32 0.0, %v4407
      %4409 = vmatmul.f32.gmra.mxu0 %v4199
      %v4410 = vpop.f32.mrf.mxu0
      %v4411 = vadd.f32 0.0, %v4410
      %4412 = vmatmul.f32.gmra.mxu0 %v4202
      %v4413 = vpop.f32.mrf.mxu0
      %v4414 = vadd.f32 0.0, %v4413
      %4415 = vmatmul.f32.gmra.mxu0 %v4205
      %v4416 = vpop.f32.mrf.mxu0
      %v4417 = vadd.f32 0.0, %v4416
      %4418 = vmatmul.f32.gmra.mxu0 %v4208
      %v4419 = vpop.f32.mrf.mxu0
      %v4420 = vadd.f32 0.0, %v4419
      %4421 = vmatmul.f32.gmra.mxu0 %v4211
      %v4422 = vpop.f32.mrf.mxu0
      %v4423 = vadd.f32 0.0, %v4422
      %4424 = vmatmul.f32.gmra.mxu0 %v4214
      %v4425 = vpop.f32.mrf.mxu0
      %v4426 = vadd.f32 0.0, %v4425
      %4427 = vmatmul.f32.gmra.mxu0 %v4217
      %v4428 = vpop.f32.mrf.mxu0
      %v4429 = vadd.f32 0.0, %v4428
      %4430 = vmatmul.f32.gmra.mxu0 %v4220
      %v4431 = vpop.f32.mrf.mxu0
      %v4432 = vadd.f32 0.0, %v4431
      %4433 = vmatmul.f32.gmra.mxu0 %v4223
      %v4434 = vpop.f32.mrf.mxu0
      %v4435 = vadd.f32 0.0, %v4434
      %4436 = vmatmul.f32.gmra.mxu0 %v4226
      %v4437 = vpop.f32.mrf.mxu0
      %v4438 = vadd.f32 0.0, %v4437
      %4439 = vmatmul.f32.gmra.mxu0 %v4229
      %v4440 = vpop.f32.mrf.mxu0
      %v4441 = vadd.f32 0.0, %v4440
      %4442 = vmatmul.f32.gmra.mxu0 %v4232
      %v4443 = vpop.f32.mrf.mxu0
      %v4444 = vadd.f32 0.0, %v4443
      %4445 = vdwg.mxu0
      %v4446 = vadd.f32 %v3912, %v4255
      %v4447 = vadd.f32 %v3913, %v4258
      %v4448 = vadd.f32 %v3914, %v4261
      %v4449 = vadd.f32 %v3915, %v4264
      %v4450 = vadd.f32 %v3916, %v4267
      %v4451 = vadd.f32 %v3917, %v4270
      %v4452 = vadd.f32 %v3918, %v4273
      %v4453 = vadd.f32 %v3919, %v4276
      %v4454 = vadd.f32 %v3920, %v4279
      %v4455 = vadd.f32 %v3921, %v4282
      %v4456 = vadd.f32 %v3922, %v4285
      %v4457 = vadd.f32 %v3923, %v4288
      %v4458 = vadd.f32 %v3924, %v4291
      %v4459 = vadd.f32 %v3925, %v4294
      %v4460 = vadd.f32 %v3926, %v4297
      %v4461 = vadd.f32 %v3927, %v4300
      %v4462 = vadd.f32 %v3928, %v4303
      %v4463 = vadd.f32 %v3929, %v4306
      %v4464 = vadd.f32 %v3930, %v4309
      %v4465 = vadd.f32 %v3931, %v4312
      %v4466 = vadd.f32 %v3932, %v4315
      %v4467 = vadd.f32 %v3933, %v4318
      %v4468 = vadd.f32 %v3934, %v4321
      %v4469 = vadd.f32 %v3935, %v4324
      %v4470 = vadd.f32 %v3936, %v4327
      %v4471 = vadd.f32 %v3937, %v4330
      %v4472 = vadd.f32 %v3938, %v4333
      %v4473 = vadd.f32 %v3939, %v4336
      %v4474 = vadd.f32 %v3940, %v4339
      %v4475 = vadd.f32 %v3941, %v4342
      %v4476 = vadd.f32 %v3942, %v4345
      %v4477 = vadd.f32 %v3943, %v4348
      %v4478 = vadd.f32 %v3944, %v4351
      %v4479 = vadd.f32 %v3945, %v4354
      %v4480 = vadd.f32 %v3946, %v4357
      %v4481 = vadd.f32 %v3947, %v4360
      %v4482 = vadd.f32 %v3948, %v4363
      %v4483 = vadd.f32 %v3949, %v4366
      %v4484 = vadd.f32 %v3950, %v4369
      %v4485 = vadd.f32 %v3951, %v4372
      %v4486 = vadd.f32 %v3952, %v4375
      %v4487 = vadd.f32 %v3953, %v4378
      %v4488 = vadd.f32 %v3954, %v4381
      %v4489 = vadd.f32 %v3955, %v4384
      %v4490 = vadd.f32 %v3956, %v4387
      %v4491 = vadd.f32 %v3957, %v4390
      %v4492 = vadd.f32 %v3958, %v4393
      %v4493 = vadd.f32 %v3959, %v4396
      %v4494 = vadd.f32 %v3960, %v4399
      %v4495 = vadd.f32 %v3961, %v4402
      %v4496 = vadd.f32 %v3962, %v4405
      %v4497 = vadd.f32 %v3963, %v4408
      %v4498 = vadd.f32 %v3964, %v4411
      %v4499 = vadd.f32 %v3965, %v4414
      %v4500 = vadd.f32 %v3966, %v4417
      %v4501 = vadd.f32 %v3967, %v4420
      %v4502 = vadd.f32 %v3968, %v4423
      %v4503 = vadd.f32 %v3969, %v4426
      %v4504 = vadd.f32 %v3970, %v4429
      %v4505 = vadd.f32 %v3971, %v4432
      %v4506 = vadd.f32 %v3972, %v4435
      %v4507 = vadd.f32 %v3973, %v4438
      %v4508 = vadd.f32 %v3974, %v4441
      %v4509 = vadd.f32 %v3975, %v4444
      %v4510 = vld [vmem:[%s3441 + $0x2] sm:$0xff]
      %v4511 = vld [vmem:[%s3441 + $0xa] sm:$0xff]
      %v4512 = vld [vmem:[%s3441 + $0x1a] sm:$0xff]
      %v4513 = vld [vmem:[%s3441 + $0x22] sm:$0xff]
      %v4514 = vld [vmem:[%s3441 + $0x32] sm:$0xff]
      %v4515 = vld [vmem:[%s3441 + $0x3a] sm:$0xff]
      %v4516 = vld [vmem:[%s3441 + $0x4a] sm:$0xff]
      %v4517 = vld [vmem:[%s3441 + $0x52] sm:$0xff]
      %v4518 = vld [vmem:[%s3441 + $0x62] sm:$0xff]
      %v4519 = vld [vmem:[%s3441 + $0x6a] sm:$0xff]
      %v4520 = vld [vmem:[%s3441 + $0x7a] sm:$0xff]
      %v4521 = vld [vmem:[%s3441 + $0x82] sm:$0xff]
      %v4522 = vld [vmem:[%s3441 + $0x92] sm:$0xff]
      %v4523 = vld [vmem:[%s3441 + $0x9a] sm:$0xff]
      %v4524 = vld [vmem:[%s3441 + $0xaa] sm:$0xff]
      %v4525 = vld [vmem:[%s3441 + $0xb2] sm:$0xff]
      %v4526 = vld [vmem:[%s3441 + $0xc2] sm:$0xff]
      %v4527 = vld [vmem:[%s3441 + $0xca] sm:$0xff]
      %v4528 = vld [vmem:[%s3441 + $0xda] sm:$0xff]
      %v4529 = vld [vmem:[%s3441 + $0xe2] sm:$0xff]
      %v4530 = vld [vmem:[%s3441 + $0xf2] sm:$0xff]
      %v4531 = vld [vmem:[%s3441 + $0xfa] sm:$0xff]
      %v4532 = vld [vmem:[%s3441 + $0x10a] sm:$0xff]
      %v4533 = vld [vmem:[%s3441 + $0x112] sm:$0xff]
      %v4534 = vld [vmem:[%s3441 + $0x122] sm:$0xff]
      %v4535 = vld [vmem:[%s3441 + $0x12a] sm:$0xff]
      %v4536 = vld [vmem:[%s3441 + $0x13a] sm:$0xff]
      %v4537 = vld [vmem:[%s3441 + $0x142] sm:$0xff]
      %v4538 = vld [vmem:[%s3441 + $0x152] sm:$0xff]
      %v4539 = vld [vmem:[%s3441 + $0x15a] sm:$0xff]
      %v4540 = vld [vmem:[%s3441 + $0x16a] sm:$0xff]
      %v4541 = vld [vmem:[%s3441 + $0x172] sm:$0xff]
      %v4542 = vld [vmem:[%s3441 + $0x1b2] sm:$0xff]
      %v4543 = vld [vmem:[%s3441 + $0x1ba] sm:$0xff]
      %v4544 = vld [vmem:[%s3441 + $0x1ca] sm:$0xff]
      %v4545 = vld [vmem:[%s3441 + $0x1d2] sm:$0xff]
      %v4546 = vld [vmem:[%s3441 + $0x1e2] sm:$0xff]
      %v4547 = vld [vmem:[%s3441 + $0x1ea] sm:$0xff]
      %v4548 = vld [vmem:[%s3441 + $0x1fa] sm:$0xff]
      %v4549 = vld [vmem:[%s3441 + $0x202] sm:$0xff]
      %v4550 = vld [vmem:[%s3441 + $0x212] sm:$0xff]
      %v4551 = vld [vmem:[%s3441 + $0x21a] sm:$0xff]
      %v4552 = vld [vmem:[%s3441 + $0x22a] sm:$0xff]
      %v4553 = vld [vmem:[%s3441 + $0x232] sm:$0xff]
      %v4554 = vld [vmem:[%s3441 + $0x242] sm:$0xff]
      %v4555 = vld [vmem:[%s3441 + $0x24a] sm:$0xff]
      %v4556 = vld [vmem:[%s3441 + $0x25a] sm:$0xff]
      %v4557 = vld [vmem:[%s3441 + $0x262] sm:$0xff]
      %v4558 = vld [vmem:[%s3441 + $0x272] sm:$0xff]
      %v4559 = vld [vmem:[%s3441 + $0x27a] sm:$0xff]
      %v4560 = vld [vmem:[%s3441 + $0x28a] sm:$0xff]
      %v4561 = vld [vmem:[%s3441 + $0x292] sm:$0xff]
      %v4562 = vld [vmem:[%s3441 + $0x2a2] sm:$0xff]
      %v4563 = vld [vmem:[%s3441 + $0x2aa] sm:$0xff]
      %v4564 = vld [vmem:[%s3441 + $0x2ba] sm:$0xff]
      %v4565 = vld [vmem:[%s3441 + $0x2c2] sm:$0xff]
      %v4566 = vld [vmem:[%s3441 + $0x2d2] sm:$0xff]
      %v4567 = vld [vmem:[%s3441 + $0x2da] sm:$0xff]
      %v4568 = vld [vmem:[%s3441 + $0x2ea] sm:$0xff]
      %v4569 = vld [vmem:[%s3441 + $0x2f2] sm:$0xff]
      %v4570 = vld [vmem:[%s3441 + $0x302] sm:$0xff]
      %v4571 = vld [vmem:[%s3441 + $0x30a] sm:$0xff]
      %v4572 = vld [vmem:[%s3441 + $0x31a] sm:$0xff]
      %v4573 = vld [vmem:[%s3441 + $0x322] sm:$0xff]
      %s4574 = scalar_lea.vmem %s1, 32
      %v4575 = vld [vmem:[%s4574] sm:$0xf]
      %v4577 = vsel %vm494, %v4510, 0
      %v4580 = vsel %vm494, %v4511, 0
      %v4583 = vsel %vm494, %v4512, 0
      %v4586 = vsel %vm494, %v4513, 0
      %v4589 = vsel %vm494, %v4514, 0
      %v4592 = vsel %vm494, %v4515, 0
      %v4595 = vsel %vm494, %v4516, 0
      %v4598 = vsel %vm494, %v4517, 0
      %v4601 = vsel %vm494, %v4518, 0
      %v4604 = vsel %vm494, %v4519, 0
      %v4607 = vsel %vm494, %v4520, 0
      %v4610 = vsel %vm494, %v4521, 0
      %v4613 = vsel %vm494, %v4522, 0
      %v4616 = vsel %vm494, %v4523, 0
      %v4619 = vsel %vm494, %v4524, 0
      %v4622 = vsel %vm494, %v4525, 0
      %v4625 = vsel %vm494, %v4526, 0
      %v4628 = vsel %vm494, %v4527, 0
      %v4631 = vsel %vm494, %v4528, 0
      %v4634 = vsel %vm494, %v4529, 0
      %v4637 = vsel %vm494, %v4530, 0
      %v4640 = vsel %vm494, %v4531, 0
      %v4643 = vsel %vm494, %v4532, 0
      %v4646 = vsel %vm494, %v4533, 0
      %v4649 = vsel %vm494, %v4534, 0
      %v4652 = vsel %vm494, %v4535, 0
      %v4655 = vsel %vm494, %v4536, 0
      %v4658 = vsel %vm494, %v4537, 0
      %v4661 = vsel %vm494, %v4538, 0
      %v4664 = vsel %vm494, %v4539, 0
      %v4667 = vsel %vm494, %v4540, 0
      %v4670 = vsel %vm494, %v4541, 0
      %v4673 = vsel %vm494, %v4542, 0
      %v4676 = vsel %vm494, %v4543, 0
      %v4679 = vsel %vm494, %v4544, 0
      %v4682 = vsel %vm494, %v4545, 0
      %v4685 = vsel %vm494, %v4546, 0
      %v4688 = vsel %vm494, %v4547, 0
      %v4691 = vsel %vm494, %v4548, 0
      %v4694 = vsel %vm494, %v4549, 0
      %v4697 = vsel %vm494, %v4550, 0
      %v4700 = vsel %vm494, %v4551, 0
      %v4703 = vsel %vm494, %v4552, 0
      %v4706 = vsel %vm494, %v4553, 0
      %v4709 = vsel %vm494, %v4554, 0
      %v4712 = vsel %vm494, %v4555, 0
      %v4715 = vsel %vm494, %v4556, 0
      %v4718 = vsel %vm494, %v4557, 0
      %v4721 = vsel %vm494, %v4558, 0
      %v4724 = vsel %vm494, %v4559, 0
      %v4727 = vsel %vm494, %v4560, 0
      %v4730 = vsel %vm494, %v4561, 0
      %v4733 = vsel %vm494, %v4562, 0
      %v4736 = vsel %vm494, %v4563, 0
      %v4739 = vsel %vm494, %v4564, 0
      %v4742 = vsel %vm494, %v4565, 0
      %v4745 = vsel %vm494, %v4566, 0
      %v4748 = vsel %vm494, %v4567, 0
      %v4751 = vsel %vm494, %v4568, 0
      %v4754 = vsel %vm494, %v4569, 0
      %v4757 = vsel %vm494, %v4570, 0
      %v4760 = vsel %vm494, %v4571, 0
      %v4763 = vsel %vm494, %v4572, 0
      %v4766 = vsel %vm494, %v4573, 0
      %v4769 = vsel %vm687, %v4575, 0
      %4771 = vmatpush.msra.mxu0 0.0
      %4772 = vmatpush.msra.mxu0 0.0
      %4773 = vmatpush.msra.mxu0 0.0
      %4774 = vmatpush.msra.mxu0 0.0
      %4775 = vmatpush.msra.mxu0 0.0
      %4776 = vmatpush.msra.mxu0 0.0
      %4777 = vmatpush.msra.mxu0 0.0
      %4778 = vmatpush.msra.mxu0 0.0
      %4779 = vmatpush.msra.mxu0 0.0
      %4780 = vmatpush.msra.mxu0 0.0
      %4781 = vmatpush.msra.mxu0 0.0
      %4782 = vmatpush.msra.mxu0 0.0
      %4783 = vmatpush.msra.mxu0 0.0
      %4784 = vmatpush.msra.mxu0 0.0
      %4785 = vmatpush.msra.mxu0 0.0
      %4786 = vmatpush.msra.mxu0 %v4769
      %4787 = vmatmul.f32.gmra.mxu0 %v4577
      %v4788 = vpop.f32.mrf.mxu0
      %v4789 = vadd.f32 0.0, %v4788
      %4790 = vmatmul.f32.gmra.mxu0 %v4580
      %v4791 = vpop.f32.mrf.mxu0
      %v4792 = vadd.f32 0.0, %v4791
      %4793 = vmatmul.f32.gmra.mxu0 %v4583
      %v4794 = vpop.f32.mrf.mxu0
      %v4795 = vadd.f32 0.0, %v4794
      %4796 = vmatmul.f32.gmra.mxu0 %v4586
      %v4797 = vpop.f32.mrf.mxu0
      %v4798 = vadd.f32 0.0, %v4797
      %4799 = vmatmul.f32.gmra.mxu0 %v4589
      %v4800 = vpop.f32.mrf.mxu0
      %v4801 = vadd.f32 0.0, %v4800
      %4802 = vmatmul.f32.gmra.mxu0 %v4592
      %v4803 = vpop.f32.mrf.mxu0
      %v4804 = vadd.f32 0.0, %v4803
      %4805 = vmatmul.f32.gmra.mxu0 %v4595
      %v4806 = vpop.f32.mrf.mxu0
      %v4807 = vadd.f32 0.0, %v4806
      %4808 = vmatmul.f32.gmra.mxu0 %v4598
      %v4809 = vpop.f32.mrf.mxu0
      %v4810 = vadd.f32 0.0, %v4809
      %4811 = vmatmul.f32.gmra.mxu0 %v4601
      %v4812 = vpop.f32.mrf.mxu0
      %v4813 = vadd.f32 0.0, %v4812
      %4814 = vmatmul.f32.gmra.mxu0 %v4604
      %v4815 = vpop.f32.mrf.mxu0
      %v4816 = vadd.f32 0.0, %v4815
      %4817 = vmatmul.f32.gmra.mxu0 %v4607
      %v4818 = vpop.f32.mrf.mxu0
      %v4819 = vadd.f32 0.0, %v4818
      %4820 = vmatmul.f32.gmra.mxu0 %v4610
      %v4821 = vpop.f32.mrf.mxu0
      %v4822 = vadd.f32 0.0, %v4821
      %4823 = vmatmul.f32.gmra.mxu0 %v4613
      %v4824 = vpop.f32.mrf.mxu0
      %v4825 = vadd.f32 0.0, %v4824
      %4826 = vmatmul.f32.gmra.mxu0 %v4616
      %v4827 = vpop.f32.mrf.mxu0
      %v4828 = vadd.f32 0.0, %v4827
      %4829 = vmatmul.f32.gmra.mxu0 %v4619
      %v4830 = vpop.f32.mrf.mxu0
      %v4831 = vadd.f32 0.0, %v4830
      %4832 = vmatmul.f32.gmra.mxu0 %v4622
      %v4833 = vpop.f32.mrf.mxu0
      %v4834 = vadd.f32 0.0, %v4833
      %4835 = vmatmul.f32.gmra.mxu0 %v4625
      %v4836 = vpop.f32.mrf.mxu0
      %v4837 = vadd.f32 0.0, %v4836
      %4838 = vmatmul.f32.gmra.mxu0 %v4628
      %v4839 = vpop.f32.mrf.mxu0
      %v4840 = vadd.f32 0.0, %v4839
      %4841 = vmatmul.f32.gmra.mxu0 %v4631
      %v4842 = vpop.f32.mrf.mxu0
      %v4843 = vadd.f32 0.0, %v4842
      %4844 = vmatmul.f32.gmra.mxu0 %v4634
      %v4845 = vpop.f32.mrf.mxu0
      %v4846 = vadd.f32 0.0, %v4845
      %4847 = vmatmul.f32.gmra.mxu0 %v4637
      %v4848 = vpop.f32.mrf.mxu0
      %v4849 = vadd.f32 0.0, %v4848
      %4850 = vmatmul.f32.gmra.mxu0 %v4640
      %v4851 = vpop.f32.mrf.mxu0
      %v4852 = vadd.f32 0.0, %v4851
      %4853 = vmatmul.f32.gmra.mxu0 %v4643
      %v4854 = vpop.f32.mrf.mxu0
      %v4855 = vadd.f32 0.0, %v4854
      %4856 = vmatmul.f32.gmra.mxu0 %v4646
      %v4857 = vpop.f32.mrf.mxu0
      %v4858 = vadd.f32 0.0, %v4857
      %4859 = vmatmul.f32.gmra.mxu0 %v4649
      %v4860 = vpop.f32.mrf.mxu0
      %v4861 = vadd.f32 0.0, %v4860
      %4862 = vmatmul.f32.gmra.mxu0 %v4652
      %v4863 = vpop.f32.mrf.mxu0
      %v4864 = vadd.f32 0.0, %v4863
      %4865 = vmatmul.f32.gmra.mxu0 %v4655
      %v4866 = vpop.f32.mrf.mxu0
      %v4867 = vadd.f32 0.0, %v4866
      %4868 = vmatmul.f32.gmra.mxu0 %v4658
      %v4869 = vpop.f32.mrf.mxu0
      %v4870 = vadd.f32 0.0, %v4869
      %4871 = vmatmul.f32.gmra.mxu0 %v4661
      %v4872 = vpop.f32.mrf.mxu0
      %v4873 = vadd.f32 0.0, %v4872
      %4874 = vmatmul.f32.gmra.mxu0 %v4664
      %v4875 = vpop.f32.mrf.mxu0
      %v4876 = vadd.f32 0.0, %v4875
      %4877 = vmatmul.f32.gmra.mxu0 %v4667
      %v4878 = vpop.f32.mrf.mxu0
      %v4879 = vadd.f32 0.0, %v4878
      %4880 = vmatmul.f32.gmra.mxu0 %v4670
      %v4881 = vpop.f32.mrf.mxu0
      %v4882 = vadd.f32 0.0, %v4881
      %4883 = vmatmul.f32.gmra.mxu0 %v4673
      %v4884 = vpop.f32.mrf.mxu0
      %v4885 = vadd.f32 0.0, %v4884
      %4886 = vmatmul.f32.gmra.mxu0 %v4676
      %v4887 = vpop.f32.mrf.mxu0
      %v4888 = vadd.f32 0.0, %v4887
      %4889 = vmatmul.f32.gmra.mxu0 %v4679
      %v4890 = vpop.f32.mrf.mxu0
      %v4891 = vadd.f32 0.0, %v4890
      %4892 = vmatmul.f32.gmra.mxu0 %v4682
      %v4893 = vpop.f32.mrf.mxu0
      %v4894 = vadd.f32 0.0, %v4893
      %4895 = vmatmul.f32.gmra.mxu0 %v4685
      %v4896 = vpop.f32.mrf.mxu0
      %v4897 = vadd.f32 0.0, %v4896
      %4898 = vmatmul.f32.gmra.mxu0 %v4688
      %v4899 = vpop.f32.mrf.mxu0
      %v4900 = vadd.f32 0.0, %v4899
      %4901 = vmatmul.f32.gmra.mxu0 %v4691
      %v4902 = vpop.f32.mrf.mxu0
      %v4903 = vadd.f32 0.0, %v4902
      %4904 = vmatmul.f32.gmra.mxu0 %v4694
      %v4905 = vpop.f32.mrf.mxu0
      %v4906 = vadd.f32 0.0, %v4905
      %4907 = vmatmul.f32.gmra.mxu0 %v4697
      %v4908 = vpop.f32.mrf.mxu0
      %v4909 = vadd.f32 0.0, %v4908
      %4910 = vmatmul.f32.gmra.mxu0 %v4700
      %v4911 = vpop.f32.mrf.mxu0
      %v4912 = vadd.f32 0.0, %v4911
      %4913 = vmatmul.f32.gmra.mxu0 %v4703
      %v4914 = vpop.f32.mrf.mxu0
      %v4915 = vadd.f32 0.0, %v4914
      %4916 = vmatmul.f32.gmra.mxu0 %v4706
      %v4917 = vpop.f32.mrf.mxu0
      %v4918 = vadd.f32 0.0, %v4917
      %4919 = vmatmul.f32.gmra.mxu0 %v4709
      %v4920 = vpop.f32.mrf.mxu0
      %v4921 = vadd.f32 0.0, %v4920
      %4922 = vmatmul.f32.gmra.mxu0 %v4712
      %v4923 = vpop.f32.mrf.mxu0
      %v4924 = vadd.f32 0.0, %v4923
      %4925 = vmatmul.f32.gmra.mxu0 %v4715
      %v4926 = vpop.f32.mrf.mxu0
      %v4927 = vadd.f32 0.0, %v4926
      %4928 = vmatmul.f32.gmra.mxu0 %v4718
      %v4929 = vpop.f32.mrf.mxu0
      %v4930 = vadd.f32 0.0, %v4929
      %4931 = vmatmul.f32.gmra.mxu0 %v4721
      %v4932 = vpop.f32.mrf.mxu0
      %v4933 = vadd.f32 0.0, %v4932
      %4934 = vmatmul.f32.gmra.mxu0 %v4724
      %v4935 = vpop.f32.mrf.mxu0
      %v4936 = vadd.f32 0.0, %v4935
      %4937 = vmatmul.f32.gmra.mxu0 %v4727
      %v4938 = vpop.f32.mrf.mxu0
      %v4939 = vadd.f32 0.0, %v4938
      %4940 = vmatmul.f32.gmra.mxu0 %v4730
      %v4941 = vpop.f32.mrf.mxu0
      %v4942 = vadd.f32 0.0, %v4941
      %4943 = vmatmul.f32.gmra.mxu0 %v4733
      %v4944 = vpop.f32.mrf.mxu0
      %v4945 = vadd.f32 0.0, %v4944
      %4946 = vmatmul.f32.gmra.mxu0 %v4736
      %v4947 = vpop.f32.mrf.mxu0
      %v4948 = vadd.f32 0.0, %v4947
      %4949 = vmatmul.f32.gmra.mxu0 %v4739
      %v4950 = vpop.f32.mrf.mxu0
      %v4951 = vadd.f32 0.0, %v4950
      %4952 = vmatmul.f32.gmra.mxu0 %v4742
      %v4953 = vpop.f32.mrf.mxu0
      %v4954 = vadd.f32 0.0, %v4953
      %4955 = vmatmul.f32.gmra.mxu0 %v4745
      %v4956 = vpop.f32.mrf.mxu0
      %v4957 = vadd.f32 0.0, %v4956
      %4958 = vmatmul.f32.gmra.mxu0 %v4748
      %v4959 = vpop.f32.mrf.mxu0
      %v4960 = vadd.f32 0.0, %v4959
      %4961 = vmatmul.f32.gmra.mxu0 %v4751
      %v4962 = vpop.f32.mrf.mxu0
      %v4963 = vadd.f32 0.0, %v4962
      %4964 = vmatmul.f32.gmra.mxu0 %v4754
      %v4965 = vpop.f32.mrf.mxu0
      %v4966 = vadd.f32 0.0, %v4965
      %4967 = vmatmul.f32.gmra.mxu0 %v4757
      %v4968 = vpop.f32.mrf.mxu0
      %v4969 = vadd.f32 0.0, %v4968
      %4970 = vmatmul.f32.gmra.mxu0 %v4760
      %v4971 = vpop.f32.mrf.mxu0
      %v4972 = vadd.f32 0.0, %v4971
      %4973 = vmatmul.f32.gmra.mxu0 %v4763
      %v4974 = vpop.f32.mrf.mxu0
      %v4975 = vadd.f32 0.0, %v4974
      %4976 = vmatmul.f32.gmra.mxu0 %v4766
      %v4977 = vpop.f32.mrf.mxu0
      %v4978 = vadd.f32 0.0, %v4977
      %4979 = vdwg.mxu0
      %v4980 = vadd.f32 %v4446, %v4789
      %v4981 = vadd.f32 %v4447, %v4792
      %v4982 = vadd.f32 %v4448, %v4795
      %v4983 = vadd.f32 %v4449, %v4798
      %v4984 = vadd.f32 %v4450, %v4801
      %v4985 = vadd.f32 %v4451, %v4804
      %v4986 = vadd.f32 %v4452, %v4807
      %v4987 = vadd.f32 %v4453, %v4810
      %v4988 = vadd.f32 %v4454, %v4813
      %v4989 = vadd.f32 %v4455, %v4816
      %v4990 = vadd.f32 %v4456, %v4819
      %v4991 = vadd.f32 %v4457, %v4822
      %v4992 = vadd.f32 %v4458, %v4825
      %v4993 = vadd.f32 %v4459, %v4828
      %v4994 = vadd.f32 %v4460, %v4831
      %v4995 = vadd.f32 %v4461, %v4834
      %v4996 = vadd.f32 %v4462, %v4837
      %v4997 = vadd.f32 %v4463, %v4840
      %v4998 = vadd.f32 %v4464, %v4843
      %v4999 = vadd.f32 %v4465, %v4846
      %v5000 = vadd.f32 %v4466, %v4849
      %v5001 = vadd.f32 %v4467, %v4852
      %v5002 = vadd.f32 %v4468, %v4855
      %v5003 = vadd.f32 %v4469, %v4858
      %v5004 = vadd.f32 %v4470, %v4861
      %v5005 = vadd.f32 %v4471, %v4864
      %v5006 = vadd.f32 %v4472, %v4867
      %v5007 = vadd.f32 %v4473, %v4870
      %v5008 = vadd.f32 %v4474, %v4873
      %v5009 = vadd.f32 %v4475, %v4876
      %v5010 = vadd.f32 %v4476, %v4879
      %v5011 = vadd.f32 %v4477, %v4882
      %v5012 = vadd.f32 %v4478, %v4885
      %v5013 = vadd.f32 %v4479, %v4888
      %v5014 = vadd.f32 %v4480, %v4891
      %v5015 = vadd.f32 %v4481, %v4894
      %v5016 = vadd.f32 %v4482, %v4897
      %v5017 = vadd.f32 %v4483, %v4900
      %v5018 = vadd.f32 %v4484, %v4903
      %v5019 = vadd.f32 %v4485, %v4906
      %v5020 = vadd.f32 %v4486, %v4909
      %v5021 = vadd.f32 %v4487, %v4912
      %v5022 = vadd.f32 %v4488, %v4915
      %v5023 = vadd.f32 %v4489, %v4918
      %v5024 = vadd.f32 %v4490, %v4921
      %v5025 = vadd.f32 %v4491, %v4924
      %v5026 = vadd.f32 %v4492, %v4927
      %v5027 = vadd.f32 %v4493, %v4930
      %v5028 = vadd.f32 %v4494, %v4933
      %v5029 = vadd.f32 %v4495, %v4936
      %v5030 = vadd.f32 %v4496, %v4939
      %v5031 = vadd.f32 %v4497, %v4942
      %v5032 = vadd.f32 %v4498, %v4945
      %v5033 = vadd.f32 %v4499, %v4948
      %v5034 = vadd.f32 %v4500, %v4951
      %v5035 = vadd.f32 %v4501, %v4954
      %v5036 = vadd.f32 %v4502, %v4957
      %v5037 = vadd.f32 %v4503, %v4960
      %v5038 = vadd.f32 %v4504, %v4963
      %v5039 = vadd.f32 %v4505, %v4966
      %v5040 = vadd.f32 %v4506, %v4969
      %v5041 = vadd.f32 %v4507, %v4972
      %v5042 = vadd.f32 %v4508, %v4975
      %v5043 = vadd.f32 %v4509, %v4978
      %v5044 = vld [vmem:[%s339] sm:$0x1]
      %v5045 = vld [vmem:[%s339 + $0x1] sm:$0x1]
      %v5048 = vperm.slane %v5044, 0
      %v5049 = vperm.slane %v5045, 0
      %v5052 = vmul.f32 %v4980, %v5048
      %v5053 = vmul.f32 %v4981, %v5048
      %v5054 = vmul.f32 %v4982, %v5048
      %v5055 = vmul.f32 %v4983, %v5048
      %v5056 = vmul.f32 %v4984, %v5048
      %v5057 = vmul.f32 %v4985, %v5048
      %v5058 = vmul.f32 %v4986, %v5048
      %v5059 = vmul.f32 %v4987, %v5048
      %v5060 = vmul.f32 %v4988, %v5048
      %v5061 = vmul.f32 %v4989, %v5048
      %v5062 = vmul.f32 %v4990, %v5048
      %v5063 = vmul.f32 %v4991, %v5048
      %v5064 = vmul.f32 %v4992, %v5048
      %v5065 = vmul.f32 %v4993, %v5048
      %v5066 = vmul.f32 %v4994, %v5048
      %v5067 = vmul.f32 %v4995, %v5048
      %v5068 = vmul.f32 %v4996, %v5048
      %v5069 = vmul.f32 %v4997, %v5048
      %v5070 = vmul.f32 %v4998, %v5048
      %v5071 = vmul.f32 %v4999, %v5048
      %v5072 = vmul.f32 %v5000, %v5048
      %v5073 = vmul.f32 %v5001, %v5048
      %v5074 = vmul.f32 %v5002, %v5048
      %v5075 = vmul.f32 %v5003, %v5048
      %v5076 = vmul.f32 %v5004, %v5048
      %v5077 = vmul.f32 %v5005, %v5048
      %v5078 = vmul.f32 %v5006, %v5048
      %v5079 = vmul.f32 %v5007, %v5048
      %v5080 = vmul.f32 %v5008, %v5048
      %v5081 = vmul.f32 %v5009, %v5048
      %v5082 = vmul.f32 %v5010, %v5048
      %v5083 = vmul.f32 %v5011, %v5048
      %v5084 = vmul.f32 %v5012, %v5049
      %v5085 = vmul.f32 %v5013, %v5049
      %v5086 = vmul.f32 %v5014, %v5049
      %v5087 = vmul.f32 %v5015, %v5049
      %v5088 = vmul.f32 %v5016, %v5049
      %v5089 = vmul.f32 %v5017, %v5049
      %v5090 = vmul.f32 %v5018, %v5049
      %v5091 = vmul.f32 %v5019, %v5049
      %v5092 = vmul.f32 %v5020, %v5049
      %v5093 = vmul.f32 %v5021, %v5049
      %v5094 = vmul.f32 %v5022, %v5049
      %v5095 = vmul.f32 %v5023, %v5049
      %v5096 = vmul.f32 %v5024, %v5049
      %v5097 = vmul.f32 %v5025, %v5049
      %v5098 = vmul.f32 %v5026, %v5049
      %v5099 = vmul.f32 %v5027, %v5049
      %v5100 = vmul.f32 %v5028, %v5049
      %v5101 = vmul.f32 %v5029, %v5049
      %v5102 = vmul.f32 %v5030, %v5049
      %v5103 = vmul.f32 %v5031, %v5049
      %v5104 = vmul.f32 %v5032, %v5049
      %v5105 = vmul.f32 %v5033, %v5049
      %v5106 = vmul.f32 %v5034, %v5049
      %v5107 = vmul.f32 %v5035, %v5049
      %v5108 = vmul.f32 %v5036, %v5049
      %v5109 = vmul.f32 %v5037, %v5049
      %v5110 = vmul.f32 %v5038, %v5049
      %v5111 = vmul.f32 %v5039, %v5049
      %v5112 = vmul.f32 %v5040, %v5049
      %v5113 = vmul.f32 %v5041, %v5049
      %v5114 = vmul.f32 %v5042, %v5049
      %v5115 = vmul.f32 %v5043, %v5049
      %v5116 = vld [vmem:[%s344] sm:$0x1]
      %v5117 = vld [vmem:[%s344 + $0x1] sm:$0x1]
      %v5120 = vperm.slane %v5116, 0
      %v5121 = vperm.slane %v5117, 0
      %v5124 = vadd.f32 %v5052, %v5120
      %v5125 = vadd.f32 %v5053, %v5120
      %v5126 = vadd.f32 %v5054, %v5120
      %v5127 = vadd.f32 %v5055, %v5120
      %v5128 = vadd.f32 %v5056, %v5120
      %v5129 = vadd.f32 %v5057, %v5120
      %v5130 = vadd.f32 %v5058, %v5120
      %v5131 = vadd.f32 %v5059, %v5120
      %v5132 = vadd.f32 %v5060, %v5120
      %v5133 = vadd.f32 %v5061, %v5120
      %v5134 = vadd.f32 %v5062, %v5120
      %v5135 = vadd.f32 %v5063, %v5120
      %v5136 = vadd.f32 %v5064, %v5120
      %v5137 = vadd.f32 %v5065, %v5120
      %v5138 = vadd.f32 %v5066, %v5120
      %v5139 = vadd.f32 %v5067, %v5120
      %v5140 = vadd.f32 %v5068, %v5120
      %v5141 = vadd.f32 %v5069, %v5120
      %v5142 = vadd.f32 %v5070, %v5120
      %v5143 = vadd.f32 %v5071, %v5120
      %v5144 = vadd.f32 %v5072, %v5120
      %v5145 = vadd.f32 %v5073, %v5120
      %v5146 = vadd.f32 %v5074, %v5120
      %v5147 = vadd.f32 %v5075, %v5120
      %v5148 = vadd.f32 %v5076, %v5120
      %v5149 = vadd.f32 %v5077, %v5120
      %v5150 = vadd.f32 %v5078, %v5120
      %v5151 = vadd.f32 %v5079, %v5120
      %v5152 = vadd.f32 %v5080, %v5120
      %v5153 = vadd.f32 %v5081, %v5120
      %v5154 = vadd.f32 %v5082, %v5120
      %v5155 = vadd.f32 %v5083, %v5120
      %v5156 = vadd.f32 %v5084, %v5121
      %v5157 = vadd.f32 %v5085, %v5121
      %v5158 = vadd.f32 %v5086, %v5121
      %v5159 = vadd.f32 %v5087, %v5121
      %v5160 = vadd.f32 %v5088, %v5121
      %v5161 = vadd.f32 %v5089, %v5121
      %v5162 = vadd.f32 %v5090, %v5121
      %v5163 = vadd.f32 %v5091, %v5121
      %v5164 = vadd.f32 %v5092, %v5121
      %v5165 = vadd.f32 %v5093, %v5121
      %v5166 = vadd.f32 %v5094, %v5121
      %v5167 = vadd.f32 %v5095, %v5121
      %v5168 = vadd.f32 %v5096, %v5121
      %v5169 = vadd.f32 %v5097, %v5121
      %v5170 = vadd.f32 %v5098, %v5121
      %v5171 = vadd.f32 %v5099, %v5121
      %v5172 = vadd.f32 %v5100, %v5121
      %v5173 = vadd.f32 %v5101, %v5121
      %v5174 = vadd.f32 %v5102, %v5121
      %v5175 = vadd.f32 %v5103, %v5121
      %v5176 = vadd.f32 %v5104, %v5121
      %v5177 = vadd.f32 %v5105, %v5121
      %v5178 = vadd.f32 %v5106, %v5121
      %v5179 = vadd.f32 %v5107, %v5121
      %v5180 = vadd.f32 %v5108, %v5121
      %v5181 = vadd.f32 %v5109, %v5121
      %v5182 = vadd.f32 %v5110, %v5121
      %v5183 = vadd.f32 %v5111, %v5121
      %v5184 = vadd.f32 %v5112, %v5121
      %v5185 = vadd.f32 %v5113, %v5121
      %v5186 = vadd.f32 %v5114, %v5121
      %v5187 = vadd.f32 %v5115, %v5121
      %v5188 = vmax.f32 %v5124, 0.0
      %v5189 = vmax.f32 %v5125, 0.0
      %v5190 = vmax.f32 %v5126, 0.0
      %v5191 = vmax.f32 %v5127, 0.0
      %v5192 = vmax.f32 %v5128, 0.0
      %v5193 = vmax.f32 %v5129, 0.0
      %v5194 = vmax.f32 %v5130, 0.0
      %v5195 = vmax.f32 %v5131, 0.0
      %v5196 = vmax.f32 %v5132, 0.0
      %v5197 = vmax.f32 %v5133, 0.0
      %v5198 = vmax.f32 %v5134, 0.0
      %v5199 = vmax.f32 %v5135, 0.0
      %v5200 = vmax.f32 %v5136, 0.0
      %v5201 = vmax.f32 %v5137, 0.0
      %v5202 = vmax.f32 %v5138, 0.0
      %v5203 = vmax.f32 %v5139, 0.0
      %v5204 = vmax.f32 %v5140, 0.0
      %v5205 = vmax.f32 %v5141, 0.0
      %v5206 = vmax.f32 %v5142, 0.0
      %v5207 = vmax.f32 %v5143, 0.0
      %v5208 = vmax.f32 %v5144, 0.0
      %v5209 = vmax.f32 %v5145, 0.0
      %v5210 = vmax.f32 %v5146, 0.0
      %v5211 = vmax.f32 %v5147, 0.0
      %v5212 = vmax.f32 %v5148, 0.0
      %v5213 = vmax.f32 %v5149, 0.0
      %v5214 = vmax.f32 %v5150, 0.0
      %v5215 = vmax.f32 %v5151, 0.0
      %v5216 = vmax.f32 %v5152, 0.0
      %v5217 = vmax.f32 %v5153, 0.0
      %v5218 = vmax.f32 %v5154, 0.0
      %v5219 = vmax.f32 %v5155, 0.0
      %v5220 = vmax.f32 %v5156, 0.0
      %v5221 = vmax.f32 %v5157, 0.0
      %v5222 = vmax.f32 %v5158, 0.0
      %v5223 = vmax.f32 %v5159, 0.0
      %v5224 = vmax.f32 %v5160, 0.0
      %v5225 = vmax.f32 %v5161, 0.0
      %v5226 = vmax.f32 %v5162, 0.0
      %v5227 = vmax.f32 %v5163, 0.0
      %v5228 = vmax.f32 %v5164, 0.0
      %v5229 = vmax.f32 %v5165, 0.0
      %v5230 = vmax.f32 %v5166, 0.0
      %v5231 = vmax.f32 %v5167, 0.0
      %v5232 = vmax.f32 %v5168, 0.0
      %v5233 = vmax.f32 %v5169, 0.0
      %v5234 = vmax.f32 %v5170, 0.0
      %v5235 = vmax.f32 %v5171, 0.0
      %v5236 = vmax.f32 %v5172, 0.0
      %v5237 = vmax.f32 %v5173, 0.0
      %v5238 = vmax.f32 %v5174, 0.0
      %v5239 = vmax.f32 %v5175, 0.0
      %v5240 = vmax.f32 %v5176, 0.0
      %v5241 = vmax.f32 %v5177, 0.0
      %v5242 = vmax.f32 %v5178, 0.0
      %v5243 = vmax.f32 %v5179, 0.0
      %v5244 = vmax.f32 %v5180, 0.0
      %v5245 = vmax.f32 %v5181, 0.0
      %v5246 = vmax.f32 %v5182, 0.0
      %v5247 = vmax.f32 %v5183, 0.0
      %v5248 = vmax.f32 %v5184, 0.0
      %v5249 = vmax.f32 %v5185, 0.0
      %v5250 = vmax.f32 %v5186, 0.0
      %v5251 = vmax.f32 %v5187, 0.0
      %5252 = vst.msk [vmem:[#allocation2] sm:$0xff] %vm494, 0.0
      %5253 = vst.msk [vmem:[#allocation2 + $0x8] sm:$0xff] %vm494, 0.0
      %vm5254 = vcmask 25600
      %5255 = vst.msk [vmem:[#allocation2 + $0x10] sm:$0x3] %vm5254, 0.0
      %5256 = vst.msk [vmem:[#allocation2 + $0x1b0] sm:$0xff] %vm494, 0.0
      %5257 = vst.msk [vmem:[#allocation2 + $0x1b8] sm:$0xff] %vm494, 0.0
      %5258 = vst.msk [vmem:[#allocation2 + $0x1c0] sm:$0x3] %vm5254, 0.0
      %s5259 = scalar_lea.vmem [#allocation2], 408
      %5260 = vst.msk [vmem:[%s5259] sm:$0xff] %vm494, 0.0
      %5261 = vst.msk [vmem:[%s5259 + $0x8] sm:$0xff] %vm494, 0.0
      %5262 = vst.msk [vmem:[%s5259 + $0x10] sm:$0x3] %vm5254, 0.0
      %5263 = vst.msk [vmem:[%s5259 + $0x1b0] sm:$0xff] %vm494, 0.0
      %5264 = vst.msk [vmem:[%s5259 + $0x1b8] sm:$0xff] %vm494, 0.0
      %5265 = vst.msk [vmem:[%s5259 + $0x1c0] sm:$0x3] %vm5254, 0.0
      %vm5266 = vcmask 24576
      %5267 = vst.msk [vmem:[#allocation2] sm:$0x1] %vm5266, 0.0
      %5268 = vst.msk [vmem:[#allocation2 + $0x18] sm:$0x1] %vm5266, 0.0
      %5269 = vst.msk [vmem:[#allocation2 + $0x30] sm:$0x1] %vm5266, 0.0
      %5270 = vst.msk [vmem:[#allocation2 + $0x48] sm:$0x1] %vm5266, 0.0
      %5271 = vst.msk [vmem:[#allocation2 + $0x60] sm:$0x1] %vm5266, 0.0
      %5272 = vst.msk [vmem:[#allocation2 + $0x78] sm:$0x1] %vm5266, 0.0
      %5273 = vst.msk [vmem:[#allocation2 + $0x90] sm:$0x1] %vm5266, 0.0
      %5274 = vst.msk [vmem:[#allocation2 + $0xa8] sm:$0x1] %vm5266, 0.0
      %5275 = vst.msk [vmem:[#allocation2 + $0xc0] sm:$0x1] %vm5266, 0.0
      %5276 = vst.msk [vmem:[#allocation2 + $0xd8] sm:$0x1] %vm5266, 0.0
      %5277 = vst.msk [vmem:[#allocation2 + $0xf0] sm:$0x1] %vm5266, 0.0
      %5278 = vst.msk [vmem:[#allocation2 + $0x108] sm:$0x1] %vm5266, 0.0
      %5279 = vst.msk [vmem:[#allocation2 + $0x120] sm:$0x1] %vm5266, 0.0
      %5280 = vst.msk [vmem:[#allocation2 + $0x138] sm:$0x1] %vm5266, 0.0
      %5281 = vst.msk [vmem:[#allocation2 + $0x150] sm:$0x1] %vm5266, 0.0
      %5282 = vst.msk [vmem:[#allocation2 + $0x168] sm:$0x1] %vm5266, 0.0
      %5283 = vst.msk [vmem:[#allocation2 + $0x180] sm:$0x1] %vm5266, 0.0
      %5284 = vst.msk [vmem:[#allocation2 + $0x198] sm:$0x1] %vm5266, 0.0
      %5285 = vst.msk [vmem:[#allocation2 + $0x1b0] sm:$0x1] %vm5266, 0.0
      %5286 = vst.msk [vmem:[#allocation2 + $0x1c8] sm:$0x1] %vm5266, 0.0
      %5287 = vst.msk [vmem:[#allocation2 + $0x1e0] sm:$0x1] %vm5266, 0.0
      %5288 = vst.msk [vmem:[#allocation2 + $0x1f8] sm:$0x1] %vm5266, 0.0
      %5289 = vst.msk [vmem:[#allocation2 + $0x210] sm:$0x1] %vm5266, 0.0
      %5290 = vst.msk [vmem:[#allocation2 + $0x228] sm:$0x1] %vm5266, 0.0
      %5291 = vst.msk [vmem:[#allocation2 + $0x240] sm:$0x1] %vm5266, 0.0
      %5292 = vst.msk [vmem:[#allocation2 + $0x258] sm:$0x1] %vm5266, 0.0
      %5293 = vst.msk [vmem:[#allocation2 + $0x270] sm:$0x1] %vm5266, 0.0
      %5294 = vst.msk [vmem:[#allocation2 + $0x288] sm:$0x1] %vm5266, 0.0
      %5295 = vst.msk [vmem:[#allocation2 + $0x2a0] sm:$0x1] %vm5266, 0.0
      %5296 = vst.msk [vmem:[#allocation2 + $0x2b8] sm:$0x1] %vm5266, 0.0
      %5297 = vst.msk [vmem:[#allocation2 + $0x2d0] sm:$0x1] %vm5266, 0.0
      %5298 = vst.msk [vmem:[#allocation2 + $0x2e8] sm:$0x1] %vm5266, 0.0
      %5299 = vst.msk [vmem:[#allocation2 + $0x300] sm:$0x1] %vm5266, 0.0
      %5300 = vst.msk [vmem:[#allocation2 + $0x318] sm:$0x1] %vm5266, 0.0
      %5301 = vst.msk [vmem:[#allocation2 + $0x330] sm:$0x1] %vm5266, 0.0
      %5302 = vst.msk [vmem:[#allocation2 + $0x348] sm:$0x1] %vm5266, 0.0
      %5303 = vst.msk [vmem:[#allocation2 + $0x11] sm:$0x1] %vm5266, 0.0
      %5304 = vst.msk [vmem:[#allocation2 + $0x29] sm:$0x1] %vm5266, 0.0
      %5305 = vst.msk [vmem:[#allocation2 + $0x41] sm:$0x1] %vm5266, 0.0
      %5306 = vst.msk [vmem:[#allocation2 + $0x59] sm:$0x1] %vm5266, 0.0
      %5307 = vst.msk [vmem:[#allocation2 + $0x71] sm:$0x1] %vm5266, 0.0
      %5308 = vst.msk [vmem:[#allocation2 + $0x89] sm:$0x1] %vm5266, 0.0
      %5309 = vst.msk [vmem:[#allocation2 + $0xa1] sm:$0x1] %vm5266, 0.0
      %5310 = vst.msk [vmem:[#allocation2 + $0xb9] sm:$0x1] %vm5266, 0.0
      %5311 = vst.msk [vmem:[#allocation2 + $0xd1] sm:$0x1] %vm5266, 0.0
      %5312 = vst.msk [vmem:[#allocation2 + $0xe9] sm:$0x1] %vm5266, 0.0
      %5313 = vst.msk [vmem:[#allocation2 + $0x101] sm:$0x1] %vm5266, 0.0
      %5314 = vst.msk [vmem:[#allocation2 + $0x119] sm:$0x1] %vm5266, 0.0
      %5315 = vst.msk [vmem:[#allocation2 + $0x131] sm:$0x1] %vm5266, 0.0
      %5316 = vst.msk [vmem:[#allocation2 + $0x149] sm:$0x1] %vm5266, 0.0
      %5317 = vst.msk [vmem:[#allocation2 + $0x161] sm:$0x1] %vm5266, 0.0
      %5318 = vst.msk [vmem:[#allocation2 + $0x179] sm:$0x1] %vm5266, 0.0
      %5319 = vst.msk [vmem:[#allocation2 + $0x191] sm:$0x1] %vm5266, 0.0
      %5320 = vst.msk [vmem:[#allocation2 + $0x1a9] sm:$0x1] %vm5266, 0.0
      %5321 = vst.msk [vmem:[#allocation2 + $0x1c1] sm:$0x1] %vm5266, 0.0
      %5322 = vst.msk [vmem:[#allocation2 + $0x1d9] sm:$0x1] %vm5266, 0.0
      %5323 = vst.msk [vmem:[#allocation2 + $0x1f1] sm:$0x1] %vm5266, 0.0
      %5324 = vst.msk [vmem:[#allocation2 + $0x209] sm:$0x1] %vm5266, 0.0
      %5325 = vst.msk [vmem:[#allocation2 + $0x221] sm:$0x1] %vm5266, 0.0
      %5326 = vst.msk [vmem:[#allocation2 + $0x239] sm:$0x1] %vm5266, 0.0
      %5327 = vst.msk [vmem:[#allocation2 + $0x251] sm:$0x1] %vm5266, 0.0
      %5328 = vst.msk [vmem:[#allocation2 + $0x269] sm:$0x1] %vm5266, 0.0
      %5329 = vst.msk [vmem:[#allocation2 + $0x281] sm:$0x1] %vm5266, 0.0
      %5330 = vst.msk [vmem:[#allocation2 + $0x299] sm:$0x1] %vm5266, 0.0
      %5331 = vst.msk [vmem:[#allocation2 + $0x2b1] sm:$0x1] %vm5266, 0.0
      %5332 = vst.msk [vmem:[#allocation2 + $0x2c9] sm:$0x1] %vm5266, 0.0
      %5333 = vst.msk [vmem:[#allocation2 + $0x2e1] sm:$0x1] %vm5266, 0.0
      %5334 = vst.msk [vmem:[#allocation2 + $0x2f9] sm:$0x1] %vm5266, 0.0
      %5335 = vst.msk [vmem:[#allocation2 + $0x311] sm:$0x1] %vm5266, 0.0
      %5336 = vst.msk [vmem:[#allocation2 + $0x329] sm:$0x1] %vm5266, 0.0
      %5337 = vst.msk [vmem:[#allocation2 + $0x341] sm:$0x1] %vm5266, 0.0
      %5338 = vst.msk [vmem:[#allocation2 + $0x359] sm:$0x1] %vm5266, 0.0
      %s5339 = scalar_lea.vmem [#allocation2], 24
      %5340 = vst.msk [vmem:[%s5339 + $0x1] sm:$0xff] %vm494, %v5188
      %5341 = vst.msk [vmem:[%s5339 + $0x9] sm:$0xff] %vm494, %v5189
      %5342 = vst.msk [vmem:[%s5339 + $0x19] sm:$0xff] %vm494, %v5190
      %5343 = vst.msk [vmem:[%s5339 + $0x21] sm:$0xff] %vm494, %v5191
      %5344 = vst.msk [vmem:[%s5339 + $0x31] sm:$0xff] %vm494, %v5192
      %5345 = vst.msk [vmem:[%s5339 + $0x39] sm:$0xff] %vm494, %v5193
      %5346 = vst.msk [vmem:[%s5339 + $0x49] sm:$0xff] %vm494, %v5194
      %5347 = vst.msk [vmem:[%s5339 + $0x51] sm:$0xff] %vm494, %v5195
      %5348 = vst.msk [vmem:[%s5339 + $0x61] sm:$0xff] %vm494, %v5196
      %5349 = vst.msk [vmem:[%s5339 + $0x69] sm:$0xff] %vm494, %v5197
      %5350 = vst.msk [vmem:[%s5339 + $0x79] sm:$0xff] %vm494, %v5198
      %5351 = vst.msk [vmem:[%s5339 + $0x81] sm:$0xff] %vm494, %v5199
      %5352 = vst.msk [vmem:[%s5339 + $0x91] sm:$0xff] %vm494, %v5200
      %5353 = vst.msk [vmem:[%s5339 + $0x99] sm:$0xff] %vm494, %v5201
      %5354 = vst.msk [vmem:[%s5339 + $0xa9] sm:$0xff] %vm494, %v5202
      %5355 = vst.msk [vmem:[%s5339 + $0xb1] sm:$0xff] %vm494, %v5203
      %5356 = vst.msk [vmem:[%s5339 + $0xc1] sm:$0xff] %vm494, %v5204
      %5357 = vst.msk [vmem:[%s5339 + $0xc9] sm:$0xff] %vm494, %v5205
      %5358 = vst.msk [vmem:[%s5339 + $0xd9] sm:$0xff] %vm494, %v5206
      %5359 = vst.msk [vmem:[%s5339 + $0xe1] sm:$0xff] %vm494, %v5207
      %5360 = vst.msk [vmem:[%s5339 + $0xf1] sm:$0xff] %vm494, %v5208
      %5361 = vst.msk [vmem:[%s5339 + $0xf9] sm:$0xff] %vm494, %v5209
      %5362 = vst.msk [vmem:[%s5339 + $0x109] sm:$0xff] %vm494, %v5210
      %5363 = vst.msk [vmem:[%s5339 + $0x111] sm:$0xff] %vm494, %v5211
      %5364 = vst.msk [vmem:[%s5339 + $0x121] sm:$0xff] %vm494, %v5212
      %5365 = vst.msk [vmem:[%s5339 + $0x129] sm:$0xff] %vm494, %v5213
      %5366 = vst.msk [vmem:[%s5339 + $0x139] sm:$0xff] %vm494, %v5214
      %5367 = vst.msk [vmem:[%s5339 + $0x141] sm:$0xff] %vm494, %v5215
      %5368 = vst.msk [vmem:[%s5339 + $0x151] sm:$0xff] %vm494, %v5216
      %5369 = vst.msk [vmem:[%s5339 + $0x159] sm:$0xff] %vm494, %v5217
      %5370 = vst.msk [vmem:[%s5339 + $0x169] sm:$0xff] %vm494, %v5218
      %5371 = vst.msk [vmem:[%s5339 + $0x171] sm:$0xff] %vm494, %v5219
      %5372 = vst.msk [vmem:[%s5339 + $0x1b1] sm:$0xff] %vm494, %v5220
      %5373 = vst.msk [vmem:[%s5339 + $0x1b9] sm:$0xff] %vm494, %v5221
      %5374 = vst.msk [vmem:[%s5339 + $0x1c9] sm:$0xff] %vm494, %v5222
      %5375 = vst.msk [vmem:[%s5339 + $0x1d1] sm:$0xff] %vm494, %v5223
      %5376 = vst.msk [vmem:[%s5339 + $0x1e1] sm:$0xff] %vm494, %v5224
      %5377 = vst.msk [vmem:[%s5339 + $0x1e9] sm:$0xff] %vm494, %v5225
      %5378 = vst.msk [vmem:[%s5339 + $0x1f9] sm:$0xff] %vm494, %v5226
      %5379 = vst.msk [vmem:[%s5339 + $0x201] sm:$0xff] %vm494, %v5227
      %5380 = vst.msk [vmem:[%s5339 + $0x211] sm:$0xff] %vm494, %v5228
      %5381 = vst.msk [vmem:[%s5339 + $0x219] sm:$0xff] %vm494, %v5229
      %5382 = vst.msk [vmem:[%s5339 + $0x229] sm:$0xff] %vm494, %v5230
      %5383 = vst.msk [vmem:[%s5339 + $0x231] sm:$0xff] %vm494, %v5231
      %5384 = vst.msk [vmem:[%s5339 + $0x241] sm:$0xff] %vm494, %v5232
      %5385 = vst.msk [vmem:[%s5339 + $0x249] sm:$0xff] %vm494, %v5233
      %5386 = vst.msk [vmem:[%s5339 + $0x259] sm:$0xff] %vm494, %v5234
      %5387 = vst.msk [vmem:[%s5339 + $0x261] sm:$0xff] %vm494, %v5235
      %5388 = vst.msk [vmem:[%s5339 + $0x271] sm:$0xff] %vm494, %v5236
      %5389 = vst.msk [vmem:[%s5339 + $0x279] sm:$0xff] %vm494, %v5237
      %5390 = vst.msk [vmem:[%s5339 + $0x289] sm:$0xff] %vm494, %v5238
      %5391 = vst.msk [vmem:[%s5339 + $0x291] sm:$0xff] %vm494, %v5239
      %5392 = vst.msk [vmem:[%s5339 + $0x2a1] sm:$0xff] %vm494, %v5240
      %5393 = vst.msk [vmem:[%s5339 + $0x2a9] sm:$0xff] %vm494, %v5241
      %5394 = vst.msk [vmem:[%s5339 + $0x2b9] sm:$0xff] %vm494, %v5242
      %5395 = vst.msk [vmem:[%s5339 + $0x2c1] sm:$0xff] %vm494, %v5243
      %5396 = vst.msk [vmem:[%s5339 + $0x2d1] sm:$0xff] %vm494, %v5244
      %5397 = vst.msk [vmem:[%s5339 + $0x2d9] sm:$0xff] %vm494, %v5245
      %5398 = vst.msk [vmem:[%s5339 + $0x2e9] sm:$0xff] %vm494, %v5246
      %5399 = vst.msk [vmem:[%s5339 + $0x2f1] sm:$0xff] %vm494, %v5247
      %5400 = vst.msk [vmem:[%s5339 + $0x301] sm:$0xff] %vm494, %v5248
      %5401 = vst.msk [vmem:[%s5339 + $0x309] sm:$0xff] %vm494, %v5249
      %5402 = vst.msk [vmem:[%s5339 + $0x319] sm:$0xff] %vm494, %v5250
      %5403 = vst.msk [vmem:[%s5339 + $0x321] sm:$0xff] %vm494, %v5251
      %v5404 = vld [vmem:[#allocation2] sm:$0xff]
      %v5405 = vld [vmem:[#allocation2 + $0x8] sm:$0xff]
      %v5406 = vld [vmem:[#allocation2 + $0x18] sm:$0xff]
      %v5407 = vld [vmem:[#allocation2 + $0x20] sm:$0xff]
      %v5408 = vld [vmem:[#allocation2 + $0x30] sm:$0xff]
      %v5409 = vld [vmem:[#allocation2 + $0x38] sm:$0xff]
      %v5410 = vld [vmem:[#allocation2 + $0x48] sm:$0xff]
      %v5411 = vld [vmem:[#allocation2 + $0x50] sm:$0xff]
      %v5412 = vld [vmem:[#allocation2 + $0x60] sm:$0xff]
      %v5413 = vld [vmem:[#allocation2 + $0x68] sm:$0xff]
      %v5414 = vld [vmem:[#allocation2 + $0x78] sm:$0xff]
      %v5415 = vld [vmem:[#allocation2 + $0x80] sm:$0xff]
      %v5416 = vld [vmem:[#allocation2 + $0x90] sm:$0xff]
      %v5417 = vld [vmem:[#allocation2 + $0x98] sm:$0xff]
      %v5418 = vld [vmem:[#allocation2 + $0xa8] sm:$0xff]
      %v5419 = vld [vmem:[#allocation2 + $0xb0] sm:$0xff]
      %v5420 = vld [vmem:[#allocation2 + $0xc0] sm:$0xff]
      %v5421 = vld [vmem:[#allocation2 + $0xc8] sm:$0xff]
      %v5422 = vld [vmem:[#allocation2 + $0xd8] sm:$0xff]
      %v5423 = vld [vmem:[#allocation2 + $0xe0] sm:$0xff]
      %v5424 = vld [vmem:[#allocation2 + $0xf0] sm:$0xff]
      %v5425 = vld [vmem:[#allocation2 + $0xf8] sm:$0xff]
      %v5426 = vld [vmem:[#allocation2 + $0x108] sm:$0xff]
      %v5427 = vld [vmem:[#allocation2 + $0x110] sm:$0xff]
      %v5428 = vld [vmem:[#allocation2 + $0x120] sm:$0xff]
      %v5429 = vld [vmem:[#allocation2 + $0x128] sm:$0xff]
      %v5430 = vld [vmem:[#allocation2 + $0x138] sm:$0xff]
      %v5431 = vld [vmem:[#allocation2 + $0x140] sm:$0xff]
      %v5432 = vld [vmem:[#allocation2 + $0x150] sm:$0xff]
      %v5433 = vld [vmem:[#allocation2 + $0x158] sm:$0xff]
      %v5434 = vld [vmem:[#allocation2 + $0x168] sm:$0xff]
      %v5435 = vld [vmem:[#allocation2 + $0x170] sm:$0xff]
      %v5436 = vld [vmem:[#allocation2 + $0x1b0] sm:$0xff]
      %v5437 = vld [vmem:[#allocation2 + $0x1b8] sm:$0xff]
      %v5438 = vld [vmem:[#allocation2 + $0x1c8] sm:$0xff]
      %v5439 = vld [vmem:[#allocation2 + $0x1d0] sm:$0xff]
      %v5440 = vld [vmem:[#allocation2 + $0x1e0] sm:$0xff]
      %v5441 = vld [vmem:[#allocation2 + $0x1e8] sm:$0xff]
      %v5442 = vld [vmem:[#allocation2 + $0x1f8] sm:$0xff]
      %v5443 = vld [vmem:[#allocation2 + $0x200] sm:$0xff]
      %v5444 = vld [vmem:[#allocation2 + $0x210] sm:$0xff]
      %v5445 = vld [vmem:[#allocation2 + $0x218] sm:$0xff]
      %v5446 = vld [vmem:[#allocation2 + $0x228] sm:$0xff]
      %v5447 = vld [vmem:[#allocation2 + $0x230] sm:$0xff]
      %v5448 = vld [vmem:[#allocation2 + $0x240] sm:$0xff]
      %v5449 = vld [vmem:[#allocation2 + $0x248] sm:$0xff]
      %v5450 = vld [vmem:[#allocation2 + $0x258] sm:$0xff]
      %v5451 = vld [vmem:[#allocation2 + $0x260] sm:$0xff]
      %v5452 = vld [vmem:[#allocation2 + $0x270] sm:$0xff]
      %v5453 = vld [vmem:[#allocation2 + $0x278] sm:$0xff]
      %v5454 = vld [vmem:[#allocation2 + $0x288] sm:$0xff]
      %v5455 = vld [vmem:[#allocation2 + $0x290] sm:$0xff]
      %v5456 = vld [vmem:[#allocation2 + $0x2a0] sm:$0xff]
      %v5457 = vld [vmem:[#allocation2 + $0x2a8] sm:$0xff]
      %v5458 = vld [vmem:[#allocation2 + $0x2b8] sm:$0xff]
      %v5459 = vld [vmem:[#allocation2 + $0x2c0] sm:$0xff]
      %v5460 = vld [vmem:[#allocation2 + $0x2d0] sm:$0xff]
      %v5461 = vld [vmem:[#allocation2 + $0x2d8] sm:$0xff]
      %v5462 = vld [vmem:[#allocation2 + $0x2e8] sm:$0xff]
      %v5463 = vld [vmem:[#allocation2 + $0x2f0] sm:$0xff]
      %v5464 = vld [vmem:[#allocation2 + $0x300] sm:$0xff]
      %v5465 = vld [vmem:[#allocation2 + $0x308] sm:$0xff]
      %v5466 = vld [vmem:[#allocation2 + $0x318] sm:$0xff]
      %v5467 = vld [vmem:[#allocation2 + $0x320] sm:$0xff]
      %v5468 = vld [vmem:[%s2] sm:$0xf]
      %v5469 = vld [vmem:[#allocation2 + $0x1] sm:$0xff]
      %v5470 = vld [vmem:[#allocation2 + $0x9] sm:$0xff]
      %v5471 = vld [vmem:[#allocation2 + $0x19] sm:$0xff]
      %v5472 = vld [vmem:[#allocation2 + $0x21] sm:$0xff]
      %v5473 = vld [vmem:[#allocation2 + $0x31] sm:$0xff]
      %v5474 = vld [vmem:[#allocation2 + $0x39] sm:$0xff]
      %v5475 = vld [vmem:[#allocation2 + $0x49] sm:$0xff]
      %v5476 = vld [vmem:[#allocation2 + $0x51] sm:$0xff]
      %v5477 = vld [vmem:[#allocation2 + $0x61] sm:$0xff]
      %v5478 = vld [vmem:[#allocation2 + $0x69] sm:$0xff]
      %v5479 = vld [vmem:[#allocation2 + $0x79] sm:$0xff]
      %v5480 = vld [vmem:[#allocation2 + $0x81] sm:$0xff]
      %v5481 = vld [vmem:[#allocation2 + $0x91] sm:$0xff]
      %v5482 = vld [vmem:[#allocation2 + $0x99] sm:$0xff]
      %v5483 = vld [vmem:[#allocation2 + $0xa9] sm:$0xff]
      %v5484 = vld [vmem:[#allocation2 + $0xb1] sm:$0xff]
      %v5485 = vld [vmem:[#allocation2 + $0xc1] sm:$0xff]
      %v5486 = vld [vmem:[#allocation2 + $0xc9] sm:$0xff]
      %v5487 = vld [vmem:[#allocation2 + $0xd9] sm:$0xff]
      %v5488 = vld [vmem:[#allocation2 + $0xe1] sm:$0xff]
      %v5489 = vld [vmem:[#allocation2 + $0xf1] sm:$0xff]
      %v5490 = vld [vmem:[#allocation2 + $0xf9] sm:$0xff]
      %v5491 = vld [vmem:[#allocation2 + $0x109] sm:$0xff]
      %v5492 = vld [vmem:[#allocation2 + $0x111] sm:$0xff]
      %v5493 = vld [vmem:[#allocation2 + $0x121] sm:$0xff]
      %v5494 = vld [vmem:[#allocation2 + $0x129] sm:$0xff]
      %v5495 = vld [vmem:[#allocation2 + $0x139] sm:$0xff]
      %v5496 = vld [vmem:[#allocation2 + $0x141] sm:$0xff]
      %v5497 = vld [vmem:[#allocation2 + $0x151] sm:$0xff]
      %v5498 = vld [vmem:[#allocation2 + $0x159] sm:$0xff]
      %v5499 = vld [vmem:[#allocation2 + $0x169] sm:$0xff]
      %v5500 = vld [vmem:[#allocation2 + $0x171] sm:$0xff]
      %v5501 = vld [vmem:[#allocation2 + $0x1b1] sm:$0xff]
      %v5502 = vld [vmem:[#allocation2 + $0x1b9] sm:$0xff]
      %v5503 = vld [vmem:[#allocation2 + $0x1c9] sm:$0xff]
      %v5504 = vld [vmem:[#allocation2 + $0x1d1] sm:$0xff]
      %v5505 = vld [vmem:[#allocation2 + $0x1e1] sm:$0xff]
      %v5506 = vld [vmem:[#allocation2 + $0x1e9] sm:$0xff]
      %v5507 = vld [vmem:[#allocation2 + $0x1f9] sm:$0xff]
      %v5508 = vld [vmem:[#allocation2 + $0x201] sm:$0xff]
      %v5509 = vld [vmem:[#allocation2 + $0x211] sm:$0xff]
      %v5510 = vld [vmem:[#allocation2 + $0x219] sm:$0xff]
      %v5511 = vld [vmem:[#allocation2 + $0x229] sm:$0xff]
      %v5512 = vld [vmem:[#allocation2 + $0x231] sm:$0xff]
      %v5513 = vld [vmem:[#allocation2 + $0x241] sm:$0xff]
      %v5514 = vld [vmem:[#allocation2 + $0x249] sm:$0xff]
      %v5515 = vld [vmem:[#allocation2 + $0x259] sm:$0xff]
      %v5516 = vld [vmem:[#allocation2 + $0x261] sm:$0xff]
      %v5517 = vld [vmem:[#allocation2 + $0x271] sm:$0xff]
      %v5518 = vld [vmem:[#allocation2 + $0x279] sm:$0xff]
      %v5519 = vld [vmem:[#allocation2 + $0x289] sm:$0xff]
      %v5520 = vld [vmem:[#allocation2 + $0x291] sm:$0xff]
      %v5521 = vld [vmem:[#allocation2 + $0x2a1] sm:$0xff]
      %v5522 = vld [vmem:[#allocation2 + $0x2a9] sm:$0xff]
      %v5523 = vld [vmem:[#allocation2 + $0x2b9] sm:$0xff]
      %v5524 = vld [vmem:[#allocation2 + $0x2c1] sm:$0xff]
      %v5525 = vld [vmem:[#allocation2 + $0x2d1] sm:$0xff]
      %v5526 = vld [vmem:[#allocation2 + $0x2d9] sm:$0xff]
      %v5527 = vld [vmem:[#allocation2 + $0x2e9] sm:$0xff]
      %v5528 = vld [vmem:[#allocation2 + $0x2f1] sm:$0xff]
      %v5529 = vld [vmem:[#allocation2 + $0x301] sm:$0xff]
      %v5530 = vld [vmem:[#allocation2 + $0x309] sm:$0xff]
      %v5531 = vld [vmem:[#allocation2 + $0x319] sm:$0xff]
      %v5532 = vld [vmem:[#allocation2 + $0x321] sm:$0xff]
      %s5533 = scalar_lea.vmem %s2, 4
      %v5534 = vld [vmem:[%s5533] sm:$0xf]
      %v5536 = vsel %vm494, %v5469, 0
      %v5539 = vsel %vm494, %v5470, 0
      %v5542 = vsel %vm494, %v5471, 0
      %v5545 = vsel %vm494, %v5472, 0
      %v5548 = vsel %vm494, %v5473, 0
      %v5551 = vsel %vm494, %v5474, 0
      %v5554 = vsel %vm494, %v5475, 0
      %v5557 = vsel %vm494, %v5476, 0
      %v5560 = vsel %vm494, %v5477, 0
      %v5563 = vsel %vm494, %v5478, 0
      %v5566 = vsel %vm494, %v5479, 0
      %v5569 = vsel %vm494, %v5480, 0
      %v5572 = vsel %vm494, %v5481, 0
      %v5575 = vsel %vm494, %v5482, 0
      %v5578 = vsel %vm494, %v5483, 0
      %v5581 = vsel %vm494, %v5484, 0
      %v5584 = vsel %vm494, %v5485, 0
      %v5587 = vsel %vm494, %v5486, 0
      %v5590 = vsel %vm494, %v5487, 0
      %v5593 = vsel %vm494, %v5488, 0
      %v5596 = vsel %vm494, %v5489, 0
      %v5599 = vsel %vm494, %v5490, 0
      %v5602 = vsel %vm494, %v5491, 0
      %v5605 = vsel %vm494, %v5492, 0
      %v5608 = vsel %vm494, %v5493, 0
      %v5611 = vsel %vm494, %v5494, 0
      %v5614 = vsel %vm494, %v5495, 0
      %v5617 = vsel %vm494, %v5496, 0
      %v5620 = vsel %vm494, %v5497, 0
      %v5623 = vsel %vm494, %v5498, 0
      %v5626 = vsel %vm494, %v5499, 0
      %v5629 = vsel %vm494, %v5500, 0
      %v5632 = vsel %vm494, %v5501, 0
      %v5635 = vsel %vm494, %v5502, 0
      %v5638 = vsel %vm494, %v5503, 0
      %v5641 = vsel %vm494, %v5504, 0
      %v5644 = vsel %vm494, %v5505, 0
      %v5647 = vsel %vm494, %v5506, 0
      %v5650 = vsel %vm494, %v5507, 0
      %v5653 = vsel %vm494, %v5508, 0
      %v5656 = vsel %vm494, %v5509, 0
      %v5659 = vsel %vm494, %v5510, 0
      %v5662 = vsel %vm494, %v5511, 0
      %v5665 = vsel %vm494, %v5512, 0
      %v5668 = vsel %vm494, %v5513, 0
      %v5671 = vsel %vm494, %v5514, 0
      %v5674 = vsel %vm494, %v5515, 0
      %v5677 = vsel %vm494, %v5516, 0
      %v5680 = vsel %vm494, %v5517, 0
      %v5683 = vsel %vm494, %v5518, 0
      %v5686 = vsel %vm494, %v5519, 0
      %v5689 = vsel %vm494, %v5520, 0
      %v5692 = vsel %vm494, %v5521, 0
      %v5695 = vsel %vm494, %v5522, 0
      %v5698 = vsel %vm494, %v5523, 0
      %v5701 = vsel %vm494, %v5524, 0
      %v5704 = vsel %vm494, %v5525, 0
      %v5707 = vsel %vm494, %v5526, 0
      %v5710 = vsel %vm494, %v5527, 0
      %v5713 = vsel %vm494, %v5528, 0
      %v5716 = vsel %vm494, %v5529, 0
      %v5719 = vsel %vm494, %v5530, 0
      %v5722 = vsel %vm494, %v5531, 0
      %v5725 = vsel %vm494, %v5532, 0
      %v5728 = vsel %vm687, %v5534, 0
      %5730 = vmatpush.msra.mxu0 0.0
      %5731 = vmatpush.msra.mxu0 0.0
      %5732 = vmatpush.msra.mxu0 0.0
      %5733 = vmatpush.msra.mxu0 0.0
      %5734 = vmatpush.msra.mxu0 0.0
      %5735 = vmatpush.msra.mxu0 0.0
      %5736 = vmatpush.msra.mxu0 0.0
      %5737 = vmatpush.msra.mxu0 0.0
      %5738 = vmatpush.msra.mxu0 0.0
      %5739 = vmatpush.msra.mxu0 0.0
      %5740 = vmatpush.msra.mxu0 0.0
      %5741 = vmatpush.msra.mxu0 0.0
      %5742 = vmatpush.msra.mxu0 0.0
      %5743 = vmatpush.msra.mxu0 0.0
      %5744 = vmatpush.msra.mxu0 0.0
      %5745 = vmatpush.msra.mxu0 %v5728
      %5746 = vmatmul.f32.gmra.mxu0 %v5536
      %v5747 = vpop.f32.mrf.mxu0
      %v5748 = vadd.f32 0.0, %v5747
      %5749 = vmatmul.f32.gmra.mxu0 %v5539
      %v5750 = vpop.f32.mrf.mxu0
      %v5751 = vadd.f32 0.0, %v5750
      %5752 = vmatmul.f32.gmra.mxu0 %v5542
      %v5753 = vpop.f32.mrf.mxu0
      %v5754 = vadd.f32 0.0, %v5753
      %5755 = vmatmul.f32.gmra.mxu0 %v5545
      %v5756 = vpop.f32.mrf.mxu0
      %v5757 = vadd.f32 0.0, %v5756
      %5758 = vmatmul.f32.gmra.mxu0 %v5548
      %v5759 = vpop.f32.mrf.mxu0
      %v5760 = vadd.f32 0.0, %v5759
      %5761 = vmatmul.f32.gmra.mxu0 %v5551
      %v5762 = vpop.f32.mrf.mxu0
      %v5763 = vadd.f32 0.0, %v5762
      %5764 = vmatmul.f32.gmra.mxu0 %v5554
      %v5765 = vpop.f32.mrf.mxu0
      %v5766 = vadd.f32 0.0, %v5765
      %5767 = vmatmul.f32.gmra.mxu0 %v5557
      %v5768 = vpop.f32.mrf.mxu0
      %v5769 = vadd.f32 0.0, %v5768
      %5770 = vmatmul.f32.gmra.mxu0 %v5560
      %v5771 = vpop.f32.mrf.mxu0
      %v5772 = vadd.f32 0.0, %v5771
      %5773 = vmatmul.f32.gmra.mxu0 %v5563
      %v5774 = vpop.f32.mrf.mxu0
      %v5775 = vadd.f32 0.0, %v5774
      %5776 = vmatmul.f32.gmra.mxu0 %v5566
      %v5777 = vpop.f32.mrf.mxu0
      %v5778 = vadd.f32 0.0, %v5777
      %5779 = vmatmul.f32.gmra.mxu0 %v5569
      %v5780 = vpop.f32.mrf.mxu0
      %v5781 = vadd.f32 0.0, %v5780
      %5782 = vmatmul.f32.gmra.mxu0 %v5572
      %v5783 = vpop.f32.mrf.mxu0
      %v5784 = vadd.f32 0.0, %v5783
      %5785 = vmatmul.f32.gmra.mxu0 %v5575
      %v5786 = vpop.f32.mrf.mxu0
      %v5787 = vadd.f32 0.0, %v5786
      %5788 = vmatmul.f32.gmra.mxu0 %v5578
      %v5789 = vpop.f32.mrf.mxu0
      %v5790 = vadd.f32 0.0, %v5789
      %5791 = vmatmul.f32.gmra.mxu0 %v5581
      %v5792 = vpop.f32.mrf.mxu0
      %v5793 = vadd.f32 0.0, %v5792
      %5794 = vmatmul.f32.gmra.mxu0 %v5584
      %v5795 = vpop.f32.mrf.mxu0
      %v5796 = vadd.f32 0.0, %v5795
      %5797 = vmatmul.f32.gmra.mxu0 %v5587
      %v5798 = vpop.f32.mrf.mxu0
      %v5799 = vadd.f32 0.0, %v5798
      %5800 = vmatmul.f32.gmra.mxu0 %v5590
      %v5801 = vpop.f32.mrf.mxu0
      %v5802 = vadd.f32 0.0, %v5801
      %5803 = vmatmul.f32.gmra.mxu0 %v5593
      %v5804 = vpop.f32.mrf.mxu0
      %v5805 = vadd.f32 0.0, %v5804
      %5806 = vmatmul.f32.gmra.mxu0 %v5596
      %v5807 = vpop.f32.mrf.mxu0
      %v5808 = vadd.f32 0.0, %v5807
      %5809 = vmatmul.f32.gmra.mxu0 %v5599
      %v5810 = vpop.f32.mrf.mxu0
      %v5811 = vadd.f32 0.0, %v5810
      %5812 = vmatmul.f32.gmra.mxu0 %v5602
      %v5813 = vpop.f32.mrf.mxu0
      %v5814 = vadd.f32 0.0, %v5813
      %5815 = vmatmul.f32.gmra.mxu0 %v5605
      %v5816 = vpop.f32.mrf.mxu0
      %v5817 = vadd.f32 0.0, %v5816
      %5818 = vmatmul.f32.gmra.mxu0 %v5608
      %v5819 = vpop.f32.mrf.mxu0
      %v5820 = vadd.f32 0.0, %v5819
      %5821 = vmatmul.f32.gmra.mxu0 %v5611
      %v5822 = vpop.f32.mrf.mxu0
      %v5823 = vadd.f32 0.0, %v5822
      %5824 = vmatmul.f32.gmra.mxu0 %v5614
      %v5825 = vpop.f32.mrf.mxu0
      %v5826 = vadd.f32 0.0, %v5825
      %5827 = vmatmul.f32.gmra.mxu0 %v5617
      %v5828 = vpop.f32.mrf.mxu0
      %v5829 = vadd.f32 0.0, %v5828
      %5830 = vmatmul.f32.gmra.mxu0 %v5620
      %v5831 = vpop.f32.mrf.mxu0
      %v5832 = vadd.f32 0.0, %v5831
      %5833 = vmatmul.f32.gmra.mxu0 %v5623
      %v5834 = vpop.f32.mrf.mxu0
      %v5835 = vadd.f32 0.0, %v5834
      %5836 = vmatmul.f32.gmra.mxu0 %v5626
      %v5837 = vpop.f32.mrf.mxu0
      %v5838 = vadd.f32 0.0, %v5837
      %5839 = vmatmul.f32.gmra.mxu0 %v5629
      %v5840 = vpop.f32.mrf.mxu0
      %v5841 = vadd.f32 0.0, %v5840
      %5842 = vmatmul.f32.gmra.mxu0 %v5632
      %v5843 = vpop.f32.mrf.mxu0
      %v5844 = vadd.f32 0.0, %v5843
      %5845 = vmatmul.f32.gmra.mxu0 %v5635
      %v5846 = vpop.f32.mrf.mxu0
      %v5847 = vadd.f32 0.0, %v5846
      %5848 = vmatmul.f32.gmra.mxu0 %v5638
      %v5849 = vpop.f32.mrf.mxu0
      %v5850 = vadd.f32 0.0, %v5849
      %5851 = vmatmul.f32.gmra.mxu0 %v5641
      %v5852 = vpop.f32.mrf.mxu0
      %v5853 = vadd.f32 0.0, %v5852
      %5854 = vmatmul.f32.gmra.mxu0 %v5644
      %v5855 = vpop.f32.mrf.mxu0
      %v5856 = vadd.f32 0.0, %v5855
      %5857 = vmatmul.f32.gmra.mxu0 %v5647
      %v5858 = vpop.f32.mrf.mxu0
      %v5859 = vadd.f32 0.0, %v5858
      %5860 = vmatmul.f32.gmra.mxu0 %v5650
      %v5861 = vpop.f32.mrf.mxu0
      %v5862 = vadd.f32 0.0, %v5861
      %5863 = vmatmul.f32.gmra.mxu0 %v5653
      %v5864 = vpop.f32.mrf.mxu0
      %v5865 = vadd.f32 0.0, %v5864
      %5866 = vmatmul.f32.gmra.mxu0 %v5656
      %v5867 = vpop.f32.mrf.mxu0
      %v5868 = vadd.f32 0.0, %v5867
      %5869 = vmatmul.f32.gmra.mxu0 %v5659
      %v5870 = vpop.f32.mrf.mxu0
      %v5871 = vadd.f32 0.0, %v5870
      %5872 = vmatmul.f32.gmra.mxu0 %v5662
      %v5873 = vpop.f32.mrf.mxu0
      %v5874 = vadd.f32 0.0, %v5873
      %5875 = vmatmul.f32.gmra.mxu0 %v5665
      %v5876 = vpop.f32.mrf.mxu0
      %v5877 = vadd.f32 0.0, %v5876
      %5878 = vmatmul.f32.gmra.mxu0 %v5668
      %v5879 = vpop.f32.mrf.mxu0
      %v5880 = vadd.f32 0.0, %v5879
      %5881 = vmatmul.f32.gmra.mxu0 %v5671
      %v5882 = vpop.f32.mrf.mxu0
      %v5883 = vadd.f32 0.0, %v5882
      %5884 = vmatmul.f32.gmra.mxu0 %v5674
      %v5885 = vpop.f32.mrf.mxu0
      %v5886 = vadd.f32 0.0, %v5885
      %5887 = vmatmul.f32.gmra.mxu0 %v5677
      %v5888 = vpop.f32.mrf.mxu0
      %v5889 = vadd.f32 0.0, %v5888
      %5890 = vmatmul.f32.gmra.mxu0 %v5680
      %v5891 = vpop.f32.mrf.mxu0
      %v5892 = vadd.f32 0.0, %v5891
      %5893 = vmatmul.f32.gmra.mxu0 %v5683
      %v5894 = vpop.f32.mrf.mxu0
      %v5895 = vadd.f32 0.0, %v5894
      %5896 = vmatmul.f32.gmra.mxu0 %v5686
      %v5897 = vpop.f32.mrf.mxu0
      %v5898 = vadd.f32 0.0, %v5897
      %5899 = vmatmul.f32.gmra.mxu0 %v5689
      %v5900 = vpop.f32.mrf.mxu0
      %v5901 = vadd.f32 0.0, %v5900
      %5902 = vmatmul.f32.gmra.mxu0 %v5692
      %v5903 = vpop.f32.mrf.mxu0
      %v5904 = vadd.f32 0.0, %v5903
      %5905 = vmatmul.f32.gmra.mxu0 %v5695
      %v5906 = vpop.f32.mrf.mxu0
      %v5907 = vadd.f32 0.0, %v5906
      %5908 = vmatmul.f32.gmra.mxu0 %v5698
      %v5909 = vpop.f32.mrf.mxu0
      %v5910 = vadd.f32 0.0, %v5909
      %5911 = vmatmul.f32.gmra.mxu0 %v5701
      %v5912 = vpop.f32.mrf.mxu0
      %v5913 = vadd.f32 0.0, %v5912
      %5914 = vmatmul.f32.gmra.mxu0 %v5704
      %v5915 = vpop.f32.mrf.mxu0
      %v5916 = vadd.f32 0.0, %v5915
      %5917 = vmatmul.f32.gmra.mxu0 %v5707
      %v5918 = vpop.f32.mrf.mxu0
      %v5919 = vadd.f32 0.0, %v5918
      %5920 = vmatmul.f32.gmra.mxu0 %v5710
      %v5921 = vpop.f32.mrf.mxu0
      %v5922 = vadd.f32 0.0, %v5921
      %5923 = vmatmul.f32.gmra.mxu0 %v5713
      %v5924 = vpop.f32.mrf.mxu0
      %v5925 = vadd.f32 0.0, %v5924
      %5926 = vmatmul.f32.gmra.mxu0 %v5716
      %v5927 = vpop.f32.mrf.mxu0
      %v5928 = vadd.f32 0.0, %v5927
      %5929 = vmatmul.f32.gmra.mxu0 %v5719
      %v5930 = vpop.f32.mrf.mxu0
      %v5931 = vadd.f32 0.0, %v5930
      %5932 = vmatmul.f32.gmra.mxu0 %v5722
      %v5933 = vpop.f32.mrf.mxu0
      %v5934 = vadd.f32 0.0, %v5933
      %5935 = vmatmul.f32.gmra.mxu0 %v5725
      %v5936 = vpop.f32.mrf.mxu0
      %v5937 = vadd.f32 0.0, %v5936
      %5938 = vdwg.mxu0
      %v5940 = vsel %vm494, %v5404, 0
      %v5943 = vsel %vm494, %v5405, 0
      %v5946 = vsel %vm494, %v5406, 0
      %v5949 = vsel %vm494, %v5407, 0
      %v5952 = vsel %vm494, %v5408, 0
      %v5955 = vsel %vm494, %v5409, 0
      %v5958 = vsel %vm494, %v5410, 0
      %v5961 = vsel %vm494, %v5411, 0
      %v5964 = vsel %vm494, %v5412, 0
      %v5967 = vsel %vm494, %v5413, 0
      %v5970 = vsel %vm494, %v5414, 0
      %v5973 = vsel %vm494, %v5415, 0
      %v5976 = vsel %vm494, %v5416, 0
      %v5979 = vsel %vm494, %v5417, 0
      %v5982 = vsel %vm494, %v5418, 0
      %v5985 = vsel %vm494, %v5419, 0
      %v5988 = vsel %vm494, %v5420, 0
      %v5991 = vsel %vm494, %v5421, 0
      %v5994 = vsel %vm494, %v5422, 0
      %v5997 = vsel %vm494, %v5423, 0
      %v6000 = vsel %vm494, %v5424, 0
      %v6003 = vsel %vm494, %v5425, 0
      %v6006 = vsel %vm494, %v5426, 0
      %v6009 = vsel %vm494, %v5427, 0
      %v6012 = vsel %vm494, %v5428, 0
      %v6015 = vsel %vm494, %v5429, 0
      %v6018 = vsel %vm494, %v5430, 0
      %v6021 = vsel %vm494, %v5431, 0
      %v6024 = vsel %vm494, %v5432, 0
      %v6027 = vsel %vm494, %v5433, 0
      %v6030 = vsel %vm494, %v5434, 0
      %v6033 = vsel %vm494, %v5435, 0
      %v6036 = vsel %vm494, %v5436, 0
      %v6039 = vsel %vm494, %v5437, 0
      %v6042 = vsel %vm494, %v5438, 0
      %v6045 = vsel %vm494, %v5439, 0
      %v6048 = vsel %vm494, %v5440, 0
      %v6051 = vsel %vm494, %v5441, 0
      %v6054 = vsel %vm494, %v5442, 0
      %v6057 = vsel %vm494, %v5443, 0
      %v6060 = vsel %vm494, %v5444, 0
      %v6063 = vsel %vm494, %v5445, 0
      %v6066 = vsel %vm494, %v5446, 0
      %v6069 = vsel %vm494, %v5447, 0
      %v6072 = vsel %vm494, %v5448, 0
      %v6075 = vsel %vm494, %v5449, 0
      %v6078 = vsel %vm494, %v5450, 0
      %v6081 = vsel %vm494, %v5451, 0
      %v6084 = vsel %vm494, %v5452, 0
      %v6087 = vsel %vm494, %v5453, 0
      %v6090 = vsel %vm494, %v5454, 0
      %v6093 = vsel %vm494, %v5455, 0
      %v6096 = vsel %vm494, %v5456, 0
      %v6099 = vsel %vm494, %v5457, 0
      %v6102 = vsel %vm494, %v5458, 0
      %v6105 = vsel %vm494, %v5459, 0
      %v6108 = vsel %vm494, %v5460, 0
      %v6111 = vsel %vm494, %v5461, 0
      %v6114 = vsel %vm494, %v5462, 0
      %v6117 = vsel %vm494, %v5463, 0
      %v6120 = vsel %vm494, %v5464, 0
      %v6123 = vsel %vm494, %v5465, 0
      %v6126 = vsel %vm494, %v5466, 0
      %v6129 = vsel %vm494, %v5467, 0
      %v6132 = vsel %vm687, %v5468, 0
      %6134 = vmatpush.msra.mxu0 0.0
      %6135 = vmatpush.msra.mxu0 0.0
      %6136 = vmatpush.msra.mxu0 0.0
      %6137 = vmatpush.msra.mxu0 0.0
      %6138 = vmatpush.msra.mxu0 0.0
      %6139 = vmatpush.msra.mxu0 0.0
      %6140 = vmatpush.msra.mxu0 0.0
      %6141 = vmatpush.msra.mxu0 0.0
      %6142 = vmatpush.msra.mxu0 0.0
      %6143 = vmatpush.msra.mxu0 0.0
      %6144 = vmatpush.msra.mxu0 0.0
      %6145 = vmatpush.msra.mxu0 0.0
      %6146 = vmatpush.msra.mxu0 0.0
      %6147 = vmatpush.msra.mxu0 0.0
      %6148 = vmatpush.msra.mxu0 0.0
      %6149 = vmatpush.msra.mxu0 %v6132
      %6150 = vmatmul.f32.gmra.mxu0 %v5940
      %v6151 = vpop.f32.mrf.mxu0
      %v6152 = vadd.f32 %v5748, %v6151
      %6153 = vmatmul.f32.gmra.mxu0 %v5943
      %v6154 = vpop.f32.mrf.mxu0
      %v6155 = vadd.f32 %v5751, %v6154
      %6156 = vmatmul.f32.gmra.mxu0 %v5946
      %v6157 = vpop.f32.mrf.mxu0
      %v6158 = vadd.f32 %v5754, %v6157
      %6159 = vmatmul.f32.gmra.mxu0 %v5949
      %v6160 = vpop.f32.mrf.mxu0
      %v6161 = vadd.f32 %v5757, %v6160
      %6162 = vmatmul.f32.gmra.mxu0 %v5952
      %v6163 = vpop.f32.mrf.mxu0
      %v6164 = vadd.f32 %v5760, %v6163
      %6165 = vmatmul.f32.gmra.mxu0 %v5955
      %v6166 = vpop.f32.mrf.mxu0
      %v6167 = vadd.f32 %v5763, %v6166
      %6168 = vmatmul.f32.gmra.mxu0 %v5958
      %v6169 = vpop.f32.mrf.mxu0
      %v6170 = vadd.f32 %v5766, %v6169
      %6171 = vmatmul.f32.gmra.mxu0 %v5961
      %v6172 = vpop.f32.mrf.mxu0
      %v6173 = vadd.f32 %v5769, %v6172
      %6174 = vmatmul.f32.gmra.mxu0 %v5964
      %v6175 = vpop.f32.mrf.mxu0
      %v6176 = vadd.f32 %v5772, %v6175
      %6177 = vmatmul.f32.gmra.mxu0 %v5967
      %v6178 = vpop.f32.mrf.mxu0
      %v6179 = vadd.f32 %v5775, %v6178
      %6180 = vmatmul.f32.gmra.mxu0 %v5970
      %v6181 = vpop.f32.mrf.mxu0
      %v6182 = vadd.f32 %v5778, %v6181
      %6183 = vmatmul.f32.gmra.mxu0 %v5973
      %v6184 = vpop.f32.mrf.mxu0
      %v6185 = vadd.f32 %v5781, %v6184
      %6186 = vmatmul.f32.gmra.mxu0 %v5976
      %v6187 = vpop.f32.mrf.mxu0
      %v6188 = vadd.f32 %v5784, %v6187
      %6189 = vmatmul.f32.gmra.mxu0 %v5979
      %v6190 = vpop.f32.mrf.mxu0
      %v6191 = vadd.f32 %v5787, %v6190
      %6192 = vmatmul.f32.gmra.mxu0 %v5982
      %v6193 = vpop.f32.mrf.mxu0
      %v6194 = vadd.f32 %v5790, %v6193
      %6195 = vmatmul.f32.gmra.mxu0 %v5985
      %v6196 = vpop.f32.mrf.mxu0
      %v6197 = vadd.f32 %v5793, %v6196
      %6198 = vmatmul.f32.gmra.mxu0 %v5988
      %v6199 = vpop.f32.mrf.mxu0
      %v6200 = vadd.f32 %v5796, %v6199
      %6201 = vmatmul.f32.gmra.mxu0 %v5991
      %v6202 = vpop.f32.mrf.mxu0
      %v6203 = vadd.f32 %v5799, %v6202
      %6204 = vmatmul.f32.gmra.mxu0 %v5994
      %v6205 = vpop.f32.mrf.mxu0
      %v6206 = vadd.f32 %v5802, %v6205
      %6207 = vmatmul.f32.gmra.mxu0 %v5997
      %v6208 = vpop.f32.mrf.mxu0
      %v6209 = vadd.f32 %v5805, %v6208
      %6210 = vmatmul.f32.gmra.mxu0 %v6000
      %v6211 = vpop.f32.mrf.mxu0
      %v6212 = vadd.f32 %v5808, %v6211
      %6213 = vmatmul.f32.gmra.mxu0 %v6003
      %v6214 = vpop.f32.mrf.mxu0
      %v6215 = vadd.f32 %v5811, %v6214
      %6216 = vmatmul.f32.gmra.mxu0 %v6006
      %v6217 = vpop.f32.mrf.mxu0
      %v6218 = vadd.f32 %v5814, %v6217
      %6219 = vmatmul.f32.gmra.mxu0 %v6009
      %v6220 = vpop.f32.mrf.mxu0
      %v6221 = vadd.f32 %v5817, %v6220
      %6222 = vmatmul.f32.gmra.mxu0 %v6012
      %v6223 = vpop.f32.mrf.mxu0
      %v6224 = vadd.f32 %v5820, %v6223
      %6225 = vmatmul.f32.gmra.mxu0 %v6015
      %v6226 = vpop.f32.mrf.mxu0
      %v6227 = vadd.f32 %v5823, %v6226
      %6228 = vmatmul.f32.gmra.mxu0 %v6018
      %v6229 = vpop.f32.mrf.mxu0
      %v6230 = vadd.f32 %v5826, %v6229
      %6231 = vmatmul.f32.gmra.mxu0 %v6021
      %v6232 = vpop.f32.mrf.mxu0
      %v6233 = vadd.f32 %v5829, %v6232
      %6234 = vmatmul.f32.gmra.mxu0 %v6024
      %v6235 = vpop.f32.mrf.mxu0
      %v6236 = vadd.f32 %v5832, %v6235
      %6237 = vmatmul.f32.gmra.mxu0 %v6027
      %v6238 = vpop.f32.mrf.mxu0
      %v6239 = vadd.f32 %v5835, %v6238
      %6240 = vmatmul.f32.gmra.mxu0 %v6030
      %v6241 = vpop.f32.mrf.mxu0
      %v6242 = vadd.f32 %v5838, %v6241
      %6243 = vmatmul.f32.gmra.mxu0 %v6033
      %v6244 = vpop.f32.mrf.mxu0
      %v6245 = vadd.f32 %v5841, %v6244
      %6246 = vmatmul.f32.gmra.mxu0 %v6036
      %v6247 = vpop.f32.mrf.mxu0
      %v6248 = vadd.f32 %v5844, %v6247
      %6249 = vmatmul.f32.gmra.mxu0 %v6039
      %v6250 = vpop.f32.mrf.mxu0
      %v6251 = vadd.f32 %v5847, %v6250
      %6252 = vmatmul.f32.gmra.mxu0 %v6042
      %v6253 = vpop.f32.mrf.mxu0
      %v6254 = vadd.f32 %v5850, %v6253
      %6255 = vmatmul.f32.gmra.mxu0 %v6045
      %v6256 = vpop.f32.mrf.mxu0
      %v6257 = vadd.f32 %v5853, %v6256
      %6258 = vmatmul.f32.gmra.mxu0 %v6048
      %v6259 = vpop.f32.mrf.mxu0
      %v6260 = vadd.f32 %v5856, %v6259
      %6261 = vmatmul.f32.gmra.mxu0 %v6051
      %v6262 = vpop.f32.mrf.mxu0
      %v6263 = vadd.f32 %v5859, %v6262
      %6264 = vmatmul.f32.gmra.mxu0 %v6054
      %v6265 = vpop.f32.mrf.mxu0
      %v6266 = vadd.f32 %v5862, %v6265
      %6267 = vmatmul.f32.gmra.mxu0 %v6057
      %v6268 = vpop.f32.mrf.mxu0
      %v6269 = vadd.f32 %v5865, %v6268
      %6270 = vmatmul.f32.gmra.mxu0 %v6060
      %v6271 = vpop.f32.mrf.mxu0
      %v6272 = vadd.f32 %v5868, %v6271
      %6273 = vmatmul.f32.gmra.mxu0 %v6063
      %v6274 = vpop.f32.mrf.mxu0
      %v6275 = vadd.f32 %v5871, %v6274
      %6276 = vmatmul.f32.gmra.mxu0 %v6066
      %v6277 = vpop.f32.mrf.mxu0
      %v6278 = vadd.f32 %v5874, %v6277
      %6279 = vmatmul.f32.gmra.mxu0 %v6069
      %v6280 = vpop.f32.mrf.mxu0
      %v6281 = vadd.f32 %v5877, %v6280
      %6282 = vmatmul.f32.gmra.mxu0 %v6072
      %v6283 = vpop.f32.mrf.mxu0
      %v6284 = vadd.f32 %v5880, %v6283
      %6285 = vmatmul.f32.gmra.mxu0 %v6075
      %v6286 = vpop.f32.mrf.mxu0
      %v6287 = vadd.f32 %v5883, %v6286
      %6288 = vmatmul.f32.gmra.mxu0 %v6078
      %v6289 = vpop.f32.mrf.mxu0
      %v6290 = vadd.f32 %v5886, %v6289
      %6291 = vmatmul.f32.gmra.mxu0 %v6081
      %v6292 = vpop.f32.mrf.mxu0
      %v6293 = vadd.f32 %v5889, %v6292
      %6294 = vmatmul.f32.gmra.mxu0 %v6084
      %v6295 = vpop.f32.mrf.mxu0
      %v6296 = vadd.f32 %v5892, %v6295
      %6297 = vmatmul.f32.gmra.mxu0 %v6087
      %v6298 = vpop.f32.mrf.mxu0
      %v6299 = vadd.f32 %v5895, %v6298
      %6300 = vmatmul.f32.gmra.mxu0 %v6090
      %v6301 = vpop.f32.mrf.mxu0
      %v6302 = vadd.f32 %v5898, %v6301
      %6303 = vmatmul.f32.gmra.mxu0 %v6093
      %v6304 = vpop.f32.mrf.mxu0
      %v6305 = vadd.f32 %v5901, %v6304
      %6306 = vmatmul.f32.gmra.mxu0 %v6096
      %v6307 = vpop.f32.mrf.mxu0
      %v6308 = vadd.f32 %v5904, %v6307
      %6309 = vmatmul.f32.gmra.mxu0 %v6099
      %v6310 = vpop.f32.mrf.mxu0
      %v6311 = vadd.f32 %v5907, %v6310
      %6312 = vmatmul.f32.gmra.mxu0 %v6102
      %v6313 = vpop.f32.mrf.mxu0
      %v6314 = vadd.f32 %v5910, %v6313
      %6315 = vmatmul.f32.gmra.mxu0 %v6105
      %v6316 = vpop.f32.mrf.mxu0
      %v6317 = vadd.f32 %v5913, %v6316
      %6318 = vmatmul.f32.gmra.mxu0 %v6108
      %v6319 = vpop.f32.mrf.mxu0
      %v6320 = vadd.f32 %v5916, %v6319
      %6321 = vmatmul.f32.gmra.mxu0 %v6111
      %v6322 = vpop.f32.mrf.mxu0
      %v6323 = vadd.f32 %v5919, %v6322
      %6324 = vmatmul.f32.gmra.mxu0 %v6114
      %v6325 = vpop.f32.mrf.mxu0
      %v6326 = vadd.f32 %v5922, %v6325
      %6327 = vmatmul.f32.gmra.mxu0 %v6117
      %v6328 = vpop.f32.mrf.mxu0
      %v6329 = vadd.f32 %v5925, %v6328
      %6330 = vmatmul.f32.gmra.mxu0 %v6120
      %v6331 = vpop.f32.mrf.mxu0
      %v6332 = vadd.f32 %v5928, %v6331
      %6333 = vmatmul.f32.gmra.mxu0 %v6123
      %v6334 = vpop.f32.mrf.mxu0
      %v6335 = vadd.f32 %v5931, %v6334
      %6336 = vmatmul.f32.gmra.mxu0 %v6126
      %v6337 = vpop.f32.mrf.mxu0
      %v6338 = vadd.f32 %v5934, %v6337
      %6339 = vmatmul.f32.gmra.mxu0 %v6129
      %v6340 = vpop.f32.mrf.mxu0
      %v6341 = vadd.f32 %v5937, %v6340
      %6342 = vdwg.mxu0
      %v6343 = vld [vmem:[#allocation2 + $0x2] sm:$0xff]
      %v6344 = vld [vmem:[#allocation2 + $0xa] sm:$0xff]
      %v6345 = vld [vmem:[#allocation2 + $0x1a] sm:$0xff]
      %v6346 = vld [vmem:[#allocation2 + $0x22] sm:$0xff]
      %v6347 = vld [vmem:[#allocation2 + $0x32] sm:$0xff]
      %v6348 = vld [vmem:[#allocation2 + $0x3a] sm:$0xff]
      %v6349 = vld [vmem:[#allocation2 + $0x4a] sm:$0xff]
      %v6350 = vld [vmem:[#allocation2 + $0x52] sm:$0xff]
      %v6351 = vld [vmem:[#allocation2 + $0x62] sm:$0xff]
      %v6352 = vld [vmem:[#allocation2 + $0x6a] sm:$0xff]
      %v6353 = vld [vmem:[#allocation2 + $0x7a] sm:$0xff]
      %v6354 = vld [vmem:[#allocation2 + $0x82] sm:$0xff]
      %v6355 = vld [vmem:[#allocation2 + $0x92] sm:$0xff]
      %v6356 = vld [vmem:[#allocation2 + $0x9a] sm:$0xff]
      %v6357 = vld [vmem:[#allocation2 + $0xaa] sm:$0xff]
      %v6358 = vld [vmem:[#allocation2 + $0xb2] sm:$0xff]
      %v6359 = vld [vmem:[#allocation2 + $0xc2] sm:$0xff]
      %v6360 = vld [vmem:[#allocation2 + $0xca] sm:$0xff]
      %v6361 = vld [vmem:[#allocation2 + $0xda] sm:$0xff]
      %v6362 = vld [vmem:[#allocation2 + $0xe2] sm:$0xff]
      %v6363 = vld [vmem:[#allocation2 + $0xf2] sm:$0xff]
      %v6364 = vld [vmem:[#allocation2 + $0xfa] sm:$0xff]
      %v6365 = vld [vmem:[#allocation2 + $0x10a] sm:$0xff]
      %v6366 = vld [vmem:[#allocation2 + $0x112] sm:$0xff]
      %v6367 = vld [vmem:[#allocation2 + $0x122] sm:$0xff]
      %v6368 = vld [vmem:[#allocation2 + $0x12a] sm:$0xff]
      %v6369 = vld [vmem:[#allocation2 + $0x13a] sm:$0xff]
      %v6370 = vld [vmem:[#allocation2 + $0x142] sm:$0xff]
      %v6371 = vld [vmem:[#allocation2 + $0x152] sm:$0xff]
      %v6372 = vld [vmem:[#allocation2 + $0x15a] sm:$0xff]
      %v6373 = vld [vmem:[#allocation2 + $0x16a] sm:$0xff]
      %v6374 = vld [vmem:[#allocation2 + $0x172] sm:$0xff]
      %v6375 = vld [vmem:[#allocation2 + $0x1b2] sm:$0xff]
      %v6376 = vld [vmem:[#allocation2 + $0x1ba] sm:$0xff]
      %v6377 = vld [vmem:[#allocation2 + $0x1ca] sm:$0xff]
      %v6378 = vld [vmem:[#allocation2 + $0x1d2] sm:$0xff]
      %v6379 = vld [vmem:[#allocation2 + $0x1e2] sm:$0xff]
      %v6380 = vld [vmem:[#allocation2 + $0x1ea] sm:$0xff]
      %v6381 = vld [vmem:[#allocation2 + $0x1fa] sm:$0xff]
      %v6382 = vld [vmem:[#allocation2 + $0x202] sm:$0xff]
      %v6383 = vld [vmem:[#allocation2 + $0x212] sm:$0xff]
      %v6384 = vld [vmem:[#allocation2 + $0x21a] sm:$0xff]
      %v6385 = vld [vmem:[#allocation2 + $0x22a] sm:$0xff]
      %v6386 = vld [vmem:[#allocation2 + $0x232] sm:$0xff]
      %v6387 = vld [vmem:[#allocation2 + $0x242] sm:$0xff]
      %v6388 = vld [vmem:[#allocation2 + $0x24a] sm:$0xff]
      %v6389 = vld [vmem:[#allocation2 + $0x25a] sm:$0xff]
      %v6390 = vld [vmem:[#allocation2 + $0x262] sm:$0xff]
      %v6391 = vld [vmem:[#allocation2 + $0x272] sm:$0xff]
      %v6392 = vld [vmem:[#allocation2 + $0x27a] sm:$0xff]
      %v6393 = vld [vmem:[#allocation2 + $0x28a] sm:$0xff]
      %v6394 = vld [vmem:[#allocation2 + $0x292] sm:$0xff]
      %v6395 = vld [vmem:[#allocation2 + $0x2a2] sm:$0xff]
      %v6396 = vld [vmem:[#allocation2 + $0x2aa] sm:$0xff]
      %v6397 = vld [vmem:[#allocation2 + $0x2ba] sm:$0xff]
      %v6398 = vld [vmem:[#allocation2 + $0x2c2] sm:$0xff]
      %v6399 = vld [vmem:[#allocation2 + $0x2d2] sm:$0xff]
      %v6400 = vld [vmem:[#allocation2 + $0x2da] sm:$0xff]
      %v6401 = vld [vmem:[#allocation2 + $0x2ea] sm:$0xff]
      %v6402 = vld [vmem:[#allocation2 + $0x2f2] sm:$0xff]
      %v6403 = vld [vmem:[#allocation2 + $0x302] sm:$0xff]
      %v6404 = vld [vmem:[#allocation2 + $0x30a] sm:$0xff]
      %v6405 = vld [vmem:[#allocation2 + $0x31a] sm:$0xff]
      %v6406 = vld [vmem:[#allocation2 + $0x322] sm:$0xff]
      %s6407 = scalar_lea.vmem %s2, 8
      %v6408 = vld [vmem:[%s6407] sm:$0xf]
      %v6410 = vsel %vm494, %v6343, 0
      %v6413 = vsel %vm494, %v6344, 0
      %v6416 = vsel %vm494, %v6345, 0
      %v6419 = vsel %vm494, %v6346, 0
      %v6422 = vsel %vm494, %v6347, 0
      %v6425 = vsel %vm494, %v6348, 0
      %v6428 = vsel %vm494, %v6349, 0
      %v6431 = vsel %vm494, %v6350, 0
      %v6434 = vsel %vm494, %v6351, 0
      %v6437 = vsel %vm494, %v6352, 0
      %v6440 = vsel %vm494, %v6353, 0
      %v6443 = vsel %vm494, %v6354, 0
      %v6446 = vsel %vm494, %v6355, 0
      %v6449 = vsel %vm494, %v6356, 0
      %v6452 = vsel %vm494, %v6357, 0
      %v6455 = vsel %vm494, %v6358, 0
      %v6458 = vsel %vm494, %v6359, 0
      %v6461 = vsel %vm494, %v6360, 0
      %v6464 = vsel %vm494, %v6361, 0
      %v6467 = vsel %vm494, %v6362, 0
      %v6470 = vsel %vm494, %v6363, 0
      %v6473 = vsel %vm494, %v6364, 0
      %v6476 = vsel %vm494, %v6365, 0
      %v6479 = vsel %vm494, %v6366, 0
      %v6482 = vsel %vm494, %v6367, 0
      %v6485 = vsel %vm494, %v6368, 0
      %v6488 = vsel %vm494, %v6369, 0
      %v6491 = vsel %vm494, %v6370, 0
      %v6494 = vsel %vm494, %v6371, 0
      %v6497 = vsel %vm494, %v6372, 0
      %v6500 = vsel %vm494, %v6373, 0
      %v6503 = vsel %vm494, %v6374, 0
      %v6506 = vsel %vm494, %v6375, 0
      %v6509 = vsel %vm494, %v6376, 0
      %v6512 = vsel %vm494, %v6377, 0
      %v6515 = vsel %vm494, %v6378, 0
      %v6518 = vsel %vm494, %v6379, 0
      %v6521 = vsel %vm494, %v6380, 0
      %v6524 = vsel %vm494, %v6381, 0
      %v6527 = vsel %vm494, %v6382, 0
      %v6530 = vsel %vm494, %v6383, 0
      %v6533 = vsel %vm494, %v6384, 0
      %v6536 = vsel %vm494, %v6385, 0
      %v6539 = vsel %vm494, %v6386, 0
      %v6542 = vsel %vm494, %v6387, 0
      %v6545 = vsel %vm494, %v6388, 0
      %v6548 = vsel %vm494, %v6389, 0
      %v6551 = vsel %vm494, %v6390, 0
      %v6554 = vsel %vm494, %v6391, 0
      %v6557 = vsel %vm494, %v6392, 0
      %v6560 = vsel %vm494, %v6393, 0
      %v6563 = vsel %vm494, %v6394, 0
      %v6566 = vsel %vm494, %v6395, 0
      %v6569 = vsel %vm494, %v6396, 0
      %v6572 = vsel %vm494, %v6397, 0
      %v6575 = vsel %vm494, %v6398, 0
      %v6578 = vsel %vm494, %v6399, 0
      %v6581 = vsel %vm494, %v6400, 0
      %v6584 = vsel %vm494, %v6401, 0
      %v6587 = vsel %vm494, %v6402, 0
      %v6590 = vsel %vm494, %v6403, 0
      %v6593 = vsel %vm494, %v6404, 0
      %v6596 = vsel %vm494, %v6405, 0
      %v6599 = vsel %vm494, %v6406, 0
      %v6602 = vsel %vm687, %v6408, 0
      %6604 = vmatpush.msra.mxu0 0.0
      %6605 = vmatpush.msra.mxu0 0.0
      %6606 = vmatpush.msra.mxu0 0.0
      %6607 = vmatpush.msra.mxu0 0.0
      %6608 = vmatpush.msra.mxu0 0.0
      %6609 = vmatpush.msra.mxu0 0.0
      %6610 = vmatpush.msra.mxu0 0.0
      %6611 = vmatpush.msra.mxu0 0.0
      %6612 = vmatpush.msra.mxu0 0.0
      %6613 = vmatpush.msra.mxu0 0.0
      %6614 = vmatpush.msra.mxu0 0.0
      %6615 = vmatpush.msra.mxu0 0.0
      %6616 = vmatpush.msra.mxu0 0.0
      %6617 = vmatpush.msra.mxu0 0.0
      %6618 = vmatpush.msra.mxu0 0.0
      %6619 = vmatpush.msra.mxu0 %v6602
      %6620 = vmatmul.f32.gmra.mxu0 %v6410
      %v6621 = vpop.f32.mrf.mxu0
      %v6622 = vadd.f32 0.0, %v6621
      %6623 = vmatmul.f32.gmra.mxu0 %v6413
      %v6624 = vpop.f32.mrf.mxu0
      %v6625 = vadd.f32 0.0, %v6624
      %6626 = vmatmul.f32.gmra.mxu0 %v6416
      %v6627 = vpop.f32.mrf.mxu0
      %v6628 = vadd.f32 0.0, %v6627
      %6629 = vmatmul.f32.gmra.mxu0 %v6419
      %v6630 = vpop.f32.mrf.mxu0
      %v6631 = vadd.f32 0.0, %v6630
      %6632 = vmatmul.f32.gmra.mxu0 %v6422
      %v6633 = vpop.f32.mrf.mxu0
      %v6634 = vadd.f32 0.0, %v6633
      %6635 = vmatmul.f32.gmra.mxu0 %v6425
      %v6636 = vpop.f32.mrf.mxu0
      %v6637 = vadd.f32 0.0, %v6636
      %6638 = vmatmul.f32.gmra.mxu0 %v6428
      %v6639 = vpop.f32.mrf.mxu0
      %v6640 = vadd.f32 0.0, %v6639
      %6641 = vmatmul.f32.gmra.mxu0 %v6431
      %v6642 = vpop.f32.mrf.mxu0
      %v6643 = vadd.f32 0.0, %v6642
      %6644 = vmatmul.f32.gmra.mxu0 %v6434
      %v6645 = vpop.f32.mrf.mxu0
      %v6646 = vadd.f32 0.0, %v6645
      %6647 = vmatmul.f32.gmra.mxu0 %v6437
      %v6648 = vpop.f32.mrf.mxu0
      %v6649 = vadd.f32 0.0, %v6648
      %6650 = vmatmul.f32.gmra.mxu0 %v6440
      %v6651 = vpop.f32.mrf.mxu0
      %v6652 = vadd.f32 0.0, %v6651
      %6653 = vmatmul.f32.gmra.mxu0 %v6443
      %v6654 = vpop.f32.mrf.mxu0
      %v6655 = vadd.f32 0.0, %v6654
      %6656 = vmatmul.f32.gmra.mxu0 %v6446
      %v6657 = vpop.f32.mrf.mxu0
      %v6658 = vadd.f32 0.0, %v6657
      %6659 = vmatmul.f32.gmra.mxu0 %v6449
      %v6660 = vpop.f32.mrf.mxu0
      %v6661 = vadd.f32 0.0, %v6660
      %6662 = vmatmul.f32.gmra.mxu0 %v6452
      %v6663 = vpop.f32.mrf.mxu0
      %v6664 = vadd.f32 0.0, %v6663
      %6665 = vmatmul.f32.gmra.mxu0 %v6455
      %v6666 = vpop.f32.mrf.mxu0
      %v6667 = vadd.f32 0.0, %v6666
      %6668 = vmatmul.f32.gmra.mxu0 %v6458
      %v6669 = vpop.f32.mrf.mxu0
      %v6670 = vadd.f32 0.0, %v6669
      %6671 = vmatmul.f32.gmra.mxu0 %v6461
      %v6672 = vpop.f32.mrf.mxu0
      %v6673 = vadd.f32 0.0, %v6672
      %6674 = vmatmul.f32.gmra.mxu0 %v6464
      %v6675 = vpop.f32.mrf.mxu0
      %v6676 = vadd.f32 0.0, %v6675
      %6677 = vmatmul.f32.gmra.mxu0 %v6467
      %v6678 = vpop.f32.mrf.mxu0
      %v6679 = vadd.f32 0.0, %v6678
      %6680 = vmatmul.f32.gmra.mxu0 %v6470
      %v6681 = vpop.f32.mrf.mxu0
      %v6682 = vadd.f32 0.0, %v6681
      %6683 = vmatmul.f32.gmra.mxu0 %v6473
      %v6684 = vpop.f32.mrf.mxu0
      %v6685 = vadd.f32 0.0, %v6684
      %6686 = vmatmul.f32.gmra.mxu0 %v6476
      %v6687 = vpop.f32.mrf.mxu0
      %v6688 = vadd.f32 0.0, %v6687
      %6689 = vmatmul.f32.gmra.mxu0 %v6479
      %v6690 = vpop.f32.mrf.mxu0
      %v6691 = vadd.f32 0.0, %v6690
      %6692 = vmatmul.f32.gmra.mxu0 %v6482
      %v6693 = vpop.f32.mrf.mxu0
      %v6694 = vadd.f32 0.0, %v6693
      %6695 = vmatmul.f32.gmra.mxu0 %v6485
      %v6696 = vpop.f32.mrf.mxu0
      %v6697 = vadd.f32 0.0, %v6696
      %6698 = vmatmul.f32.gmra.mxu0 %v6488
      %v6699 = vpop.f32.mrf.mxu0
      %v6700 = vadd.f32 0.0, %v6699
      %6701 = vmatmul.f32.gmra.mxu0 %v6491
      %v6702 = vpop.f32.mrf.mxu0
      %v6703 = vadd.f32 0.0, %v6702
      %6704 = vmatmul.f32.gmra.mxu0 %v6494
      %v6705 = vpop.f32.mrf.mxu0
      %v6706 = vadd.f32 0.0, %v6705
      %6707 = vmatmul.f32.gmra.mxu0 %v6497
      %v6708 = vpop.f32.mrf.mxu0
      %v6709 = vadd.f32 0.0, %v6708
      %6710 = vmatmul.f32.gmra.mxu0 %v6500
      %v6711 = vpop.f32.mrf.mxu0
      %v6712 = vadd.f32 0.0, %v6711
      %6713 = vmatmul.f32.gmra.mxu0 %v6503
      %v6714 = vpop.f32.mrf.mxu0
      %v6715 = vadd.f32 0.0, %v6714
      %6716 = vmatmul.f32.gmra.mxu0 %v6506
      %v6717 = vpop.f32.mrf.mxu0
      %v6718 = vadd.f32 0.0, %v6717
      %6719 = vmatmul.f32.gmra.mxu0 %v6509
      %v6720 = vpop.f32.mrf.mxu0
      %v6721 = vadd.f32 0.0, %v6720
      %6722 = vmatmul.f32.gmra.mxu0 %v6512
      %v6723 = vpop.f32.mrf.mxu0
      %v6724 = vadd.f32 0.0, %v6723
      %6725 = vmatmul.f32.gmra.mxu0 %v6515
      %v6726 = vpop.f32.mrf.mxu0
      %v6727 = vadd.f32 0.0, %v6726
      %6728 = vmatmul.f32.gmra.mxu0 %v6518
      %v6729 = vpop.f32.mrf.mxu0
      %v6730 = vadd.f32 0.0, %v6729
      %6731 = vmatmul.f32.gmra.mxu0 %v6521
      %v6732 = vpop.f32.mrf.mxu0
      %v6733 = vadd.f32 0.0, %v6732
      %6734 = vmatmul.f32.gmra.mxu0 %v6524
      %v6735 = vpop.f32.mrf.mxu0
      %v6736 = vadd.f32 0.0, %v6735
      %6737 = vmatmul.f32.gmra.mxu0 %v6527
      %v6738 = vpop.f32.mrf.mxu0
      %v6739 = vadd.f32 0.0, %v6738
      %6740 = vmatmul.f32.gmra.mxu0 %v6530
      %v6741 = vpop.f32.mrf.mxu0
      %v6742 = vadd.f32 0.0, %v6741
      %6743 = vmatmul.f32.gmra.mxu0 %v6533
      %v6744 = vpop.f32.mrf.mxu0
      %v6745 = vadd.f32 0.0, %v6744
      %6746 = vmatmul.f32.gmra.mxu0 %v6536
      %v6747 = vpop.f32.mrf.mxu0
      %v6748 = vadd.f32 0.0, %v6747
      %6749 = vmatmul.f32.gmra.mxu0 %v6539
      %v6750 = vpop.f32.mrf.mxu0
      %v6751 = vadd.f32 0.0, %v6750
      %6752 = vmatmul.f32.gmra.mxu0 %v6542
      %v6753 = vpop.f32.mrf.mxu0
      %v6754 = vadd.f32 0.0, %v6753
      %6755 = vmatmul.f32.gmra.mxu0 %v6545
      %v6756 = vpop.f32.mrf.mxu0
      %v6757 = vadd.f32 0.0, %v6756
      %6758 = vmatmul.f32.gmra.mxu0 %v6548
      %v6759 = vpop.f32.mrf.mxu0
      %v6760 = vadd.f32 0.0, %v6759
      %6761 = vmatmul.f32.gmra.mxu0 %v6551
      %v6762 = vpop.f32.mrf.mxu0
      %v6763 = vadd.f32 0.0, %v6762
      %6764 = vmatmul.f32.gmra.mxu0 %v6554
      %v6765 = vpop.f32.mrf.mxu0
      %v6766 = vadd.f32 0.0, %v6765
      %6767 = vmatmul.f32.gmra.mxu0 %v6557
      %v6768 = vpop.f32.mrf.mxu0
      %v6769 = vadd.f32 0.0, %v6768
      %6770 = vmatmul.f32.gmra.mxu0 %v6560
      %v6771 = vpop.f32.mrf.mxu0
      %v6772 = vadd.f32 0.0, %v6771
      %6773 = vmatmul.f32.gmra.mxu0 %v6563
      %v6774 = vpop.f32.mrf.mxu0
      %v6775 = vadd.f32 0.0, %v6774
      %6776 = vmatmul.f32.gmra.mxu0 %v6566
      %v6777 = vpop.f32.mrf.mxu0
      %v6778 = vadd.f32 0.0, %v6777
      %6779 = vmatmul.f32.gmra.mxu0 %v6569
      %v6780 = vpop.f32.mrf.mxu0
      %v6781 = vadd.f32 0.0, %v6780
      %6782 = vmatmul.f32.gmra.mxu0 %v6572
      %v6783 = vpop.f32.mrf.mxu0
      %v6784 = vadd.f32 0.0, %v6783
      %6785 = vmatmul.f32.gmra.mxu0 %v6575
      %v6786 = vpop.f32.mrf.mxu0
      %v6787 = vadd.f32 0.0, %v6786
      %6788 = vmatmul.f32.gmra.mxu0 %v6578
      %v6789 = vpop.f32.mrf.mxu0
      %v6790 = vadd.f32 0.0, %v6789
      %6791 = vmatmul.f32.gmra.mxu0 %v6581
      %v6792 = vpop.f32.mrf.mxu0
      %v6793 = vadd.f32 0.0, %v6792
      %6794 = vmatmul.f32.gmra.mxu0 %v6584
      %v6795 = vpop.f32.mrf.mxu0
      %v6796 = vadd.f32 0.0, %v6795
      %6797 = vmatmul.f32.gmra.mxu0 %v6587
      %v6798 = vpop.f32.mrf.mxu0
      %v6799 = vadd.f32 0.0, %v6798
      %6800 = vmatmul.f32.gmra.mxu0 %v6590
      %v6801 = vpop.f32.mrf.mxu0
      %v6802 = vadd.f32 0.0, %v6801
      %6803 = vmatmul.f32.gmra.mxu0 %v6593
      %v6804 = vpop.f32.mrf.mxu0
      %v6805 = vadd.f32 0.0, %v6804
      %6806 = vmatmul.f32.gmra.mxu0 %v6596
      %v6807 = vpop.f32.mrf.mxu0
      %v6808 = vadd.f32 0.0, %v6807
      %6809 = vmatmul.f32.gmra.mxu0 %v6599
      %v6810 = vpop.f32.mrf.mxu0
      %v6811 = vadd.f32 0.0, %v6810
      %6812 = vdwg.mxu0
      %v6813 = vadd.f32 %v6152, %v6622
      %v6814 = vadd.f32 %v6155, %v6625
      %v6815 = vadd.f32 %v6158, %v6628
      %v6816 = vadd.f32 %v6161, %v6631
      %v6817 = vadd.f32 %v6164, %v6634
      %v6818 = vadd.f32 %v6167, %v6637
      %v6819 = vadd.f32 %v6170, %v6640
      %v6820 = vadd.f32 %v6173, %v6643
      %v6821 = vadd.f32 %v6176, %v6646
      %v6822 = vadd.f32 %v6179, %v6649
      %v6823 = vadd.f32 %v6182, %v6652
      %v6824 = vadd.f32 %v6185, %v6655
      %v6825 = vadd.f32 %v6188, %v6658
      %v6826 = vadd.f32 %v6191, %v6661
      %v6827 = vadd.f32 %v6194, %v6664
      %v6828 = vadd.f32 %v6197, %v6667
      %v6829 = vadd.f32 %v6200, %v6670
      %v6830 = vadd.f32 %v6203, %v6673
      %v6831 = vadd.f32 %v6206, %v6676
      %v6832 = vadd.f32 %v6209, %v6679
      %v6833 = vadd.f32 %v6212, %v6682
      %v6834 = vadd.f32 %v6215, %v6685
      %v6835 = vadd.f32 %v6218, %v6688
      %v6836 = vadd.f32 %v6221, %v6691
      %v6837 = vadd.f32 %v6224, %v6694
      %v6838 = vadd.f32 %v6227, %v6697
      %v6839 = vadd.f32 %v6230, %v6700
      %v6840 = vadd.f32 %v6233, %v6703
      %v6841 = vadd.f32 %v6236, %v6706
      %v6842 = vadd.f32 %v6239, %v6709
      %v6843 = vadd.f32 %v6242, %v6712
      %v6844 = vadd.f32 %v6245, %v6715
      %v6845 = vadd.f32 %v6248, %v6718
      %v6846 = vadd.f32 %v6251, %v6721
      %v6847 = vadd.f32 %v6254, %v6724
      %v6848 = vadd.f32 %v6257, %v6727
      %v6849 = vadd.f32 %v6260, %v6730
      %v6850 = vadd.f32 %v6263, %v6733
      %v6851 = vadd.f32 %v6266, %v6736
      %v6852 = vadd.f32 %v6269, %v6739
      %v6853 = vadd.f32 %v6272, %v6742
      %v6854 = vadd.f32 %v6275, %v6745
      %v6855 = vadd.f32 %v6278, %v6748
      %v6856 = vadd.f32 %v6281, %v6751
      %v6857 = vadd.f32 %v6284, %v6754
      %v6858 = vadd.f32 %v6287, %v6757
      %v6859 = vadd.f32 %v6290, %v6760
      %v6860 = vadd.f32 %v6293, %v6763
      %v6861 = vadd.f32 %v6296, %v6766
      %v6862 = vadd.f32 %v6299, %v6769
      %v6863 = vadd.f32 %v6302, %v6772
      %v6864 = vadd.f32 %v6305, %v6775
      %v6865 = vadd.f32 %v6308, %v6778
      %v6866 = vadd.f32 %v6311, %v6781
      %v6867 = vadd.f32 %v6314, %v6784
      %v6868 = vadd.f32 %v6317, %v6787
      %v6869 = vadd.f32 %v6320, %v6790
      %v6870 = vadd.f32 %v6323, %v6793
      %v6871 = vadd.f32 %v6326, %v6796
      %v6872 = vadd.f32 %v6329, %v6799
      %v6873 = vadd.f32 %v6332, %v6802
      %v6874 = vadd.f32 %v6335, %v6805
      %v6875 = vadd.f32 %v6338, %v6808
      %v6876 = vadd.f32 %v6341, %v6811
      %v6877 = vld [vmem:[%s5339] sm:$0xff]
      %v6878 = vld [vmem:[%s5339 + $0x8] sm:$0xff]
      %v6879 = vld [vmem:[%s5339 + $0x18] sm:$0xff]
      %v6880 = vld [vmem:[%s5339 + $0x20] sm:$0xff]
      %v6881 = vld [vmem:[%s5339 + $0x30] sm:$0xff]
      %v6882 = vld [vmem:[%s5339 + $0x38] sm:$0xff]
      %v6883 = vld [vmem:[%s5339 + $0x48] sm:$0xff]
      %v6884 = vld [vmem:[%s5339 + $0x50] sm:$0xff]
      %v6885 = vld [vmem:[%s5339 + $0x60] sm:$0xff]
      %v6886 = vld [vmem:[%s5339 + $0x68] sm:$0xff]
      %v6887 = vld [vmem:[%s5339 + $0x78] sm:$0xff]
      %v6888 = vld [vmem:[%s5339 + $0x80] sm:$0xff]
      %v6889 = vld [vmem:[%s5339 + $0x90] sm:$0xff]
      %v6890 = vld [vmem:[%s5339 + $0x98] sm:$0xff]
      %v6891 = vld [vmem:[%s5339 + $0xa8] sm:$0xff]
      %v6892 = vld [vmem:[%s5339 + $0xb0] sm:$0xff]
      %v6893 = vld [vmem:[%s5339 + $0xc0] sm:$0xff]
      %v6894 = vld [vmem:[%s5339 + $0xc8] sm:$0xff]
      %v6895 = vld [vmem:[%s5339 + $0xd8] sm:$0xff]
      %v6896 = vld [vmem:[%s5339 + $0xe0] sm:$0xff]
      %v6897 = vld [vmem:[%s5339 + $0xf0] sm:$0xff]
      %v6898 = vld [vmem:[%s5339 + $0xf8] sm:$0xff]
      %v6899 = vld [vmem:[%s5339 + $0x108] sm:$0xff]
      %v6900 = vld [vmem:[%s5339 + $0x110] sm:$0xff]
      %v6901 = vld [vmem:[%s5339 + $0x120] sm:$0xff]
      %v6902 = vld [vmem:[%s5339 + $0x128] sm:$0xff]
      %v6903 = vld [vmem:[%s5339 + $0x138] sm:$0xff]
      %v6904 = vld [vmem:[%s5339 + $0x140] sm:$0xff]
      %v6905 = vld [vmem:[%s5339 + $0x150] sm:$0xff]
      %v6906 = vld [vmem:[%s5339 + $0x158] sm:$0xff]
      %v6907 = vld [vmem:[%s5339 + $0x168] sm:$0xff]
      %v6908 = vld [vmem:[%s5339 + $0x170] sm:$0xff]
      %v6909 = vld [vmem:[%s5339 + $0x1b0] sm:$0xff]
      %v6910 = vld [vmem:[%s5339 + $0x1b8] sm:$0xff]
      %v6911 = vld [vmem:[%s5339 + $0x1c8] sm:$0xff]
      %v6912 = vld [vmem:[%s5339 + $0x1d0] sm:$0xff]
      %v6913 = vld [vmem:[%s5339 + $0x1e0] sm:$0xff]
      %v6914 = vld [vmem:[%s5339 + $0x1e8] sm:$0xff]
      %v6915 = vld [vmem:[%s5339 + $0x1f8] sm:$0xff]
      %v6916 = vld [vmem:[%s5339 + $0x200] sm:$0xff]
      %v6917 = vld [vmem:[%s5339 + $0x210] sm:$0xff]
      %v6918 = vld [vmem:[%s5339 + $0x218] sm:$0xff]
      %v6919 = vld [vmem:[%s5339 + $0x228] sm:$0xff]
      %v6920 = vld [vmem:[%s5339 + $0x230] sm:$0xff]
      %v6921 = vld [vmem:[%s5339 + $0x240] sm:$0xff]
      %v6922 = vld [vmem:[%s5339 + $0x248] sm:$0xff]
      %v6923 = vld [vmem:[%s5339 + $0x258] sm:$0xff]
      %v6924 = vld [vmem:[%s5339 + $0x260] sm:$0xff]
      %v6925 = vld [vmem:[%s5339 + $0x270] sm:$0xff]
      %v6926 = vld [vmem:[%s5339 + $0x278] sm:$0xff]
      %v6927 = vld [vmem:[%s5339 + $0x288] sm:$0xff]
      %v6928 = vld [vmem:[%s5339 + $0x290] sm:$0xff]
      %v6929 = vld [vmem:[%s5339 + $0x2a0] sm:$0xff]
      %v6930 = vld [vmem:[%s5339 + $0x2a8] sm:$0xff]
      %v6931 = vld [vmem:[%s5339 + $0x2b8] sm:$0xff]
      %v6932 = vld [vmem:[%s5339 + $0x2c0] sm:$0xff]
      %v6933 = vld [vmem:[%s5339 + $0x2d0] sm:$0xff]
      %v6934 = vld [vmem:[%s5339 + $0x2d8] sm:$0xff]
      %v6935 = vld [vmem:[%s5339 + $0x2e8] sm:$0xff]
      %v6936 = vld [vmem:[%s5339 + $0x2f0] sm:$0xff]
      %v6937 = vld [vmem:[%s5339 + $0x300] sm:$0xff]
      %v6938 = vld [vmem:[%s5339 + $0x308] sm:$0xff]
      %v6939 = vld [vmem:[%s5339 + $0x318] sm:$0xff]
      %v6940 = vld [vmem:[%s5339 + $0x320] sm:$0xff]
      %s6941 = scalar_lea.vmem %s2, 12
      %v6942 = vld [vmem:[%s6941] sm:$0xf]
      %v6944 = vsel %vm494, %v6877, 0
      %v6947 = vsel %vm494, %v6878, 0
      %v6950 = vsel %vm494, %v6879, 0
      %v6953 = vsel %vm494, %v6880, 0
      %v6956 = vsel %vm494, %v6881, 0
      %v6959 = vsel %vm494, %v6882, 0
      %v6962 = vsel %vm494, %v6883, 0
      %v6965 = vsel %vm494, %v6884, 0
      %v6968 = vsel %vm494, %v6885, 0
      %v6971 = vsel %vm494, %v6886, 0
      %v6974 = vsel %vm494, %v6887, 0
      %v6977 = vsel %vm494, %v6888, 0
      %v6980 = vsel %vm494, %v6889, 0
      %v6983 = vsel %vm494, %v6890, 0
      %v6986 = vsel %vm494, %v6891, 0
      %v6989 = vsel %vm494, %v6892, 0
      %v6992 = vsel %vm494, %v6893, 0
      %v6995 = vsel %vm494, %v6894, 0
      %v6998 = vsel %vm494, %v6895, 0
      %v7001 = vsel %vm494, %v6896, 0
      %v7004 = vsel %vm494, %v6897, 0
      %v7007 = vsel %vm494, %v6898, 0
      %v7010 = vsel %vm494, %v6899, 0
      %v7013 = vsel %vm494, %v6900, 0
      %v7016 = vsel %vm494, %v6901, 0
      %v7019 = vsel %vm494, %v6902, 0
      %v7022 = vsel %vm494, %v6903, 0
      %v7025 = vsel %vm494, %v6904, 0
      %v7028 = vsel %vm494, %v6905, 0
      %v7031 = vsel %vm494, %v6906, 0
      %v7034 = vsel %vm494, %v6907, 0
      %v7037 = vsel %vm494, %v6908, 0
      %v7040 = vsel %vm494, %v6909, 0
      %v7043 = vsel %vm494, %v6910, 0
      %v7046 = vsel %vm494, %v6911, 0
      %v7049 = vsel %vm494, %v6912, 0
      %v7052 = vsel %vm494, %v6913, 0
      %v7055 = vsel %vm494, %v6914, 0
      %v7058 = vsel %vm494, %v6915, 0
      %v7061 = vsel %vm494, %v6916, 0
      %v7064 = vsel %vm494, %v6917, 0
      %v7067 = vsel %vm494, %v6918, 0
      %v7070 = vsel %vm494, %v6919, 0
      %v7073 = vsel %vm494, %v6920, 0
      %v7076 = vsel %vm494, %v6921, 0
      %v7079 = vsel %vm494, %v6922, 0
      %v7082 = vsel %vm494, %v6923, 0
      %v7085 = vsel %vm494, %v6924, 0
      %v7088 = vsel %vm494, %v6925, 0
      %v7091 = vsel %vm494, %v6926, 0
      %v7094 = vsel %vm494, %v6927, 0
      %v7097 = vsel %vm494, %v6928, 0
      %v7100 = vsel %vm494, %v6929, 0
      %v7103 = vsel %vm494, %v6930, 0
      %v7106 = vsel %vm494, %v6931, 0
      %v7109 = vsel %vm494, %v6932, 0
      %v7112 = vsel %vm494, %v6933, 0
      %v7115 = vsel %vm494, %v6934, 0
      %v7118 = vsel %vm494, %v6935, 0
      %v7121 = vsel %vm494, %v6936, 0
      %v7124 = vsel %vm494, %v6937, 0
      %v7127 = vsel %vm494, %v6938, 0
      %v7130 = vsel %vm494, %v6939, 0
      %v7133 = vsel %vm494, %v6940, 0
      %v7136 = vsel %vm687, %v6942, 0
      %7138 = vmatpush.msra.mxu0 0.0
      %7139 = vmatpush.msra.mxu0 0.0
      %7140 = vmatpush.msra.mxu0 0.0
      %7141 = vmatpush.msra.mxu0 0.0
      %7142 = vmatpush.msra.mxu0 0.0
      %7143 = vmatpush.msra.mxu0 0.0
      %7144 = vmatpush.msra.mxu0 0.0
      %7145 = vmatpush.msra.mxu0 0.0
      %7146 = vmatpush.msra.mxu0 0.0
      %7147 = vmatpush.msra.mxu0 0.0
      %7148 = vmatpush.msra.mxu0 0.0
      %7149 = vmatpush.msra.mxu0 0.0
      %7150 = vmatpush.msra.mxu0 0.0
      %7151 = vmatpush.msra.mxu0 0.0
      %7152 = vmatpush.msra.mxu0 0.0
      %7153 = vmatpush.msra.mxu0 %v7136
      %7154 = vmatmul.f32.gmra.mxu0 %v6944
      %v7155 = vpop.f32.mrf.mxu0
      %v7156 = vadd.f32 0.0, %v7155
      %7157 = vmatmul.f32.gmra.mxu0 %v6947
      %v7158 = vpop.f32.mrf.mxu0
      %v7159 = vadd.f32 0.0, %v7158
      %7160 = vmatmul.f32.gmra.mxu0 %v6950
      %v7161 = vpop.f32.mrf.mxu0
      %v7162 = vadd.f32 0.0, %v7161
      %7163 = vmatmul.f32.gmra.mxu0 %v6953
      %v7164 = vpop.f32.mrf.mxu0
      %v7165 = vadd.f32 0.0, %v7164
      %7166 = vmatmul.f32.gmra.mxu0 %v6956
      %v7167 = vpop.f32.mrf.mxu0
      %v7168 = vadd.f32 0.0, %v7167
      %7169 = vmatmul.f32.gmra.mxu0 %v6959
      %v7170 = vpop.f32.mrf.mxu0
      %v7171 = vadd.f32 0.0, %v7170
      %7172 = vmatmul.f32.gmra.mxu0 %v6962
      %v7173 = vpop.f32.mrf.mxu0
      %v7174 = vadd.f32 0.0, %v7173
      %7175 = vmatmul.f32.gmra.mxu0 %v6965
      %v7176 = vpop.f32.mrf.mxu0
      %v7177 = vadd.f32 0.0, %v7176
      %7178 = vmatmul.f32.gmra.mxu0 %v6968
      %v7179 = vpop.f32.mrf.mxu0
      %v7180 = vadd.f32 0.0, %v7179
      %7181 = vmatmul.f32.gmra.mxu0 %v6971
      %v7182 = vpop.f32.mrf.mxu0
      %v7183 = vadd.f32 0.0, %v7182
      %7184 = vmatmul.f32.gmra.mxu0 %v6974
      %v7185 = vpop.f32.mrf.mxu0
      %v7186 = vadd.f32 0.0, %v7185
      %7187 = vmatmul.f32.gmra.mxu0 %v6977
      %v7188 = vpop.f32.mrf.mxu0
      %v7189 = vadd.f32 0.0, %v7188
      %7190 = vmatmul.f32.gmra.mxu0 %v6980
      %v7191 = vpop.f32.mrf.mxu0
      %v7192 = vadd.f32 0.0, %v7191
      %7193 = vmatmul.f32.gmra.mxu0 %v6983
      %v7194 = vpop.f32.mrf.mxu0
      %v7195 = vadd.f32 0.0, %v7194
      %7196 = vmatmul.f32.gmra.mxu0 %v6986
      %v7197 = vpop.f32.mrf.mxu0
      %v7198 = vadd.f32 0.0, %v7197
      %7199 = vmatmul.f32.gmra.mxu0 %v6989
      %v7200 = vpop.f32.mrf.mxu0
      %v7201 = vadd.f32 0.0, %v7200
      %7202 = vmatmul.f32.gmra.mxu0 %v6992
      %v7203 = vpop.f32.mrf.mxu0
      %v7204 = vadd.f32 0.0, %v7203
      %7205 = vmatmul.f32.gmra.mxu0 %v6995
      %v7206 = vpop.f32.mrf.mxu0
      %v7207 = vadd.f32 0.0, %v7206
      %7208 = vmatmul.f32.gmra.mxu0 %v6998
      %v7209 = vpop.f32.mrf.mxu0
      %v7210 = vadd.f32 0.0, %v7209
      %7211 = vmatmul.f32.gmra.mxu0 %v7001
      %v7212 = vpop.f32.mrf.mxu0
      %v7213 = vadd.f32 0.0, %v7212
      %7214 = vmatmul.f32.gmra.mxu0 %v7004
      %v7215 = vpop.f32.mrf.mxu0
      %v7216 = vadd.f32 0.0, %v7215
      %7217 = vmatmul.f32.gmra.mxu0 %v7007
      %v7218 = vpop.f32.mrf.mxu0
      %v7219 = vadd.f32 0.0, %v7218
      %7220 = vmatmul.f32.gmra.mxu0 %v7010
      %v7221 = vpop.f32.mrf.mxu0
      %v7222 = vadd.f32 0.0, %v7221
      %7223 = vmatmul.f32.gmra.mxu0 %v7013
      %v7224 = vpop.f32.mrf.mxu0
      %v7225 = vadd.f32 0.0, %v7224
      %7226 = vmatmul.f32.gmra.mxu0 %v7016
      %v7227 = vpop.f32.mrf.mxu0
      %v7228 = vadd.f32 0.0, %v7227
      %7229 = vmatmul.f32.gmra.mxu0 %v7019
      %v7230 = vpop.f32.mrf.mxu0
      %v7231 = vadd.f32 0.0, %v7230
      %7232 = vmatmul.f32.gmra.mxu0 %v7022
      %v7233 = vpop.f32.mrf.mxu0
      %v7234 = vadd.f32 0.0, %v7233
      %7235 = vmatmul.f32.gmra.mxu0 %v7025
      %v7236 = vpop.f32.mrf.mxu0
      %v7237 = vadd.f32 0.0, %v7236
      %7238 = vmatmul.f32.gmra.mxu0 %v7028
      %v7239 = vpop.f32.mrf.mxu0
      %v7240 = vadd.f32 0.0, %v7239
      %7241 = vmatmul.f32.gmra.mxu0 %v7031
      %v7242 = vpop.f32.mrf.mxu0
      %v7243 = vadd.f32 0.0, %v7242
      %7244 = vmatmul.f32.gmra.mxu0 %v7034
      %v7245 = vpop.f32.mrf.mxu0
      %v7246 = vadd.f32 0.0, %v7245
      %7247 = vmatmul.f32.gmra.mxu0 %v7037
      %v7248 = vpop.f32.mrf.mxu0
      %v7249 = vadd.f32 0.0, %v7248
      %7250 = vmatmul.f32.gmra.mxu0 %v7040
      %v7251 = vpop.f32.mrf.mxu0
      %v7252 = vadd.f32 0.0, %v7251
      %7253 = vmatmul.f32.gmra.mxu0 %v7043
      %v7254 = vpop.f32.mrf.mxu0
      %v7255 = vadd.f32 0.0, %v7254
      %7256 = vmatmul.f32.gmra.mxu0 %v7046
      %v7257 = vpop.f32.mrf.mxu0
      %v7258 = vadd.f32 0.0, %v7257
      %7259 = vmatmul.f32.gmra.mxu0 %v7049
      %v7260 = vpop.f32.mrf.mxu0
      %v7261 = vadd.f32 0.0, %v7260
      %7262 = vmatmul.f32.gmra.mxu0 %v7052
      %v7263 = vpop.f32.mrf.mxu0
      %v7264 = vadd.f32 0.0, %v7263
      %7265 = vmatmul.f32.gmra.mxu0 %v7055
      %v7266 = vpop.f32.mrf.mxu0
      %v7267 = vadd.f32 0.0, %v7266
      %7268 = vmatmul.f32.gmra.mxu0 %v7058
      %v7269 = vpop.f32.mrf.mxu0
      %v7270 = vadd.f32 0.0, %v7269
      %7271 = vmatmul.f32.gmra.mxu0 %v7061
      %v7272 = vpop.f32.mrf.mxu0
      %v7273 = vadd.f32 0.0, %v7272
      %7274 = vmatmul.f32.gmra.mxu0 %v7064
      %v7275 = vpop.f32.mrf.mxu0
      %v7276 = vadd.f32 0.0, %v7275
      %7277 = vmatmul.f32.gmra.mxu0 %v7067
      %v7278 = vpop.f32.mrf.mxu0
      %v7279 = vadd.f32 0.0, %v7278
      %7280 = vmatmul.f32.gmra.mxu0 %v7070
      %v7281 = vpop.f32.mrf.mxu0
      %v7282 = vadd.f32 0.0, %v7281
      %7283 = vmatmul.f32.gmra.mxu0 %v7073
      %v7284 = vpop.f32.mrf.mxu0
      %v7285 = vadd.f32 0.0, %v7284
      %7286 = vmatmul.f32.gmra.mxu0 %v7076
      %v7287 = vpop.f32.mrf.mxu0
      %v7288 = vadd.f32 0.0, %v7287
      %7289 = vmatmul.f32.gmra.mxu0 %v7079
      %v7290 = vpop.f32.mrf.mxu0
      %v7291 = vadd.f32 0.0, %v7290
      %7292 = vmatmul.f32.gmra.mxu0 %v7082
      %v7293 = vpop.f32.mrf.mxu0
      %v7294 = vadd.f32 0.0, %v7293
      %7295 = vmatmul.f32.gmra.mxu0 %v7085
      %v7296 = vpop.f32.mrf.mxu0
      %v7297 = vadd.f32 0.0, %v7296
      %7298 = vmatmul.f32.gmra.mxu0 %v7088
      %v7299 = vpop.f32.mrf.mxu0
      %v7300 = vadd.f32 0.0, %v7299
      %7301 = vmatmul.f32.gmra.mxu0 %v7091
      %v7302 = vpop.f32.mrf.mxu0
      %v7303 = vadd.f32 0.0, %v7302
      %7304 = vmatmul.f32.gmra.mxu0 %v7094
      %v7305 = vpop.f32.mrf.mxu0
      %v7306 = vadd.f32 0.0, %v7305
      %7307 = vmatmul.f32.gmra.mxu0 %v7097
      %v7308 = vpop.f32.mrf.mxu0
      %v7309 = vadd.f32 0.0, %v7308
      %7310 = vmatmul.f32.gmra.mxu0 %v7100
      %v7311 = vpop.f32.mrf.mxu0
      %v7312 = vadd.f32 0.0, %v7311
      %7313 = vmatmul.f32.gmra.mxu0 %v7103
      %v7314 = vpop.f32.mrf.mxu0
      %v7315 = vadd.f32 0.0, %v7314
      %7316 = vmatmul.f32.gmra.mxu0 %v7106
      %v7317 = vpop.f32.mrf.mxu0
      %v7318 = vadd.f32 0.0, %v7317
      %7319 = vmatmul.f32.gmra.mxu0 %v7109
      %v7320 = vpop.f32.mrf.mxu0
      %v7321 = vadd.f32 0.0, %v7320
      %7322 = vmatmul.f32.gmra.mxu0 %v7112
      %v7323 = vpop.f32.mrf.mxu0
      %v7324 = vadd.f32 0.0, %v7323
      %7325 = vmatmul.f32.gmra.mxu0 %v7115
      %v7326 = vpop.f32.mrf.mxu0
      %v7327 = vadd.f32 0.0, %v7326
      %7328 = vmatmul.f32.gmra.mxu0 %v7118
      %v7329 = vpop.f32.mrf.mxu0
      %v7330 = vadd.f32 0.0, %v7329
      %7331 = vmatmul.f32.gmra.mxu0 %v7121
      %v7332 = vpop.f32.mrf.mxu0
      %v7333 = vadd.f32 0.0, %v7332
      %7334 = vmatmul.f32.gmra.mxu0 %v7124
      %v7335 = vpop.f32.mrf.mxu0
      %v7336 = vadd.f32 0.0, %v7335
      %7337 = vmatmul.f32.gmra.mxu0 %v7127
      %v7338 = vpop.f32.mrf.mxu0
      %v7339 = vadd.f32 0.0, %v7338
      %7340 = vmatmul.f32.gmra.mxu0 %v7130
      %v7341 = vpop.f32.mrf.mxu0
      %v7342 = vadd.f32 0.0, %v7341
      %7343 = vmatmul.f32.gmra.mxu0 %v7133
      %v7344 = vpop.f32.mrf.mxu0
      %v7345 = vadd.f32 0.0, %v7344
      %7346 = vdwg.mxu0
      %v7347 = vadd.f32 %v6813, %v7156
      %v7348 = vadd.f32 %v6814, %v7159
      %v7349 = vadd.f32 %v6815, %v7162
      %v7350 = vadd.f32 %v6816, %v7165
      %v7351 = vadd.f32 %v6817, %v7168
      %v7352 = vadd.f32 %v6818, %v7171
      %v7353 = vadd.f32 %v6819, %v7174
      %v7354 = vadd.f32 %v6820, %v7177
      %v7355 = vadd.f32 %v6821, %v7180
      %v7356 = vadd.f32 %v6822, %v7183
      %v7357 = vadd.f32 %v6823, %v7186
      %v7358 = vadd.f32 %v6824, %v7189
      %v7359 = vadd.f32 %v6825, %v7192
      %v7360 = vadd.f32 %v6826, %v7195
      %v7361 = vadd.f32 %v6827, %v7198
      %v7362 = vadd.f32 %v6828, %v7201
      %v7363 = vadd.f32 %v6829, %v7204
      %v7364 = vadd.f32 %v6830, %v7207
      %v7365 = vadd.f32 %v6831, %v7210
      %v7366 = vadd.f32 %v6832, %v7213
      %v7367 = vadd.f32 %v6833, %v7216
      %v7368 = vadd.f32 %v6834, %v7219
      %v7369 = vadd.f32 %v6835, %v7222
      %v7370 = vadd.f32 %v6836, %v7225
      %v7371 = vadd.f32 %v6837, %v7228
      %v7372 = vadd.f32 %v6838, %v7231
      %v7373 = vadd.f32 %v6839, %v7234
      %v7374 = vadd.f32 %v6840, %v7237
      %v7375 = vadd.f32 %v6841, %v7240
      %v7376 = vadd.f32 %v6842, %v7243
      %v7377 = vadd.f32 %v6843, %v7246
      %v7378 = vadd.f32 %v6844, %v7249
      %v7379 = vadd.f32 %v6845, %v7252
      %v7380 = vadd.f32 %v6846, %v7255
      %v7381 = vadd.f32 %v6847, %v7258
      %v7382 = vadd.f32 %v6848, %v7261
      %v7383 = vadd.f32 %v6849, %v7264
      %v7384 = vadd.f32 %v6850, %v7267
      %v7385 = vadd.f32 %v6851, %v7270
      %v7386 = vadd.f32 %v6852, %v7273
      %v7387 = vadd.f32 %v6853, %v7276
      %v7388 = vadd.f32 %v6854, %v7279
      %v7389 = vadd.f32 %v6855, %v7282
      %v7390 = vadd.f32 %v6856, %v7285
      %v7391 = vadd.f32 %v6857, %v7288
      %v7392 = vadd.f32 %v6858, %v7291
      %v7393 = vadd.f32 %v6859, %v7294
      %v7394 = vadd.f32 %v6860, %v7297
      %v7395 = vadd.f32 %v6861, %v7300
      %v7396 = vadd.f32 %v6862, %v7303
      %v7397 = vadd.f32 %v6863, %v7306
      %v7398 = vadd.f32 %v6864, %v7309
      %v7399 = vadd.f32 %v6865, %v7312
      %v7400 = vadd.f32 %v6866, %v7315
      %v7401 = vadd.f32 %v6867, %v7318
      %v7402 = vadd.f32 %v6868, %v7321
      %v7403 = vadd.f32 %v6869, %v7324
      %v7404 = vadd.f32 %v6870, %v7327
      %v7405 = vadd.f32 %v6871, %v7330
      %v7406 = vadd.f32 %v6872, %v7333
      %v7407 = vadd.f32 %v6873, %v7336
      %v7408 = vadd.f32 %v6874, %v7339
      %v7409 = vadd.f32 %v6875, %v7342
      %v7410 = vadd.f32 %v6876, %v7345
      %v7411 = vld [vmem:[%s5339 + $0x1] sm:$0xff]
      %v7412 = vld [vmem:[%s5339 + $0x9] sm:$0xff]
      %v7413 = vld [vmem:[%s5339 + $0x19] sm:$0xff]
      %v7414 = vld [vmem:[%s5339 + $0x21] sm:$0xff]
      %v7415 = vld [vmem:[%s5339 + $0x31] sm:$0xff]
      %v7416 = vld [vmem:[%s5339 + $0x39] sm:$0xff]
      %v7417 = vld [vmem:[%s5339 + $0x49] sm:$0xff]
      %v7418 = vld [vmem:[%s5339 + $0x51] sm:$0xff]
      %v7419 = vld [vmem:[%s5339 + $0x61] sm:$0xff]
      %v7420 = vld [vmem:[%s5339 + $0x69] sm:$0xff]
      %v7421 = vld [vmem:[%s5339 + $0x79] sm:$0xff]
      %v7422 = vld [vmem:[%s5339 + $0x81] sm:$0xff]
      %v7423 = vld [vmem:[%s5339 + $0x91] sm:$0xff]
      %v7424 = vld [vmem:[%s5339 + $0x99] sm:$0xff]
      %v7425 = vld [vmem:[%s5339 + $0xa9] sm:$0xff]
      %v7426 = vld [vmem:[%s5339 + $0xb1] sm:$0xff]
      %v7427 = vld [vmem:[%s5339 + $0xc1] sm:$0xff]
      %v7428 = vld [vmem:[%s5339 + $0xc9] sm:$0xff]
      %v7429 = vld [vmem:[%s5339 + $0xd9] sm:$0xff]
      %v7430 = vld [vmem:[%s5339 + $0xe1] sm:$0xff]
      %v7431 = vld [vmem:[%s5339 + $0xf1] sm:$0xff]
      %v7432 = vld [vmem:[%s5339 + $0xf9] sm:$0xff]
      %v7433 = vld [vmem:[%s5339 + $0x109] sm:$0xff]
      %v7434 = vld [vmem:[%s5339 + $0x111] sm:$0xff]
      %v7435 = vld [vmem:[%s5339 + $0x121] sm:$0xff]
      %v7436 = vld [vmem:[%s5339 + $0x129] sm:$0xff]
      %v7437 = vld [vmem:[%s5339 + $0x139] sm:$0xff]
      %v7438 = vld [vmem:[%s5339 + $0x141] sm:$0xff]
      %v7439 = vld [vmem:[%s5339 + $0x151] sm:$0xff]
      %v7440 = vld [vmem:[%s5339 + $0x159] sm:$0xff]
      %v7441 = vld [vmem:[%s5339 + $0x169] sm:$0xff]
      %v7442 = vld [vmem:[%s5339 + $0x171] sm:$0xff]
      %v7443 = vld [vmem:[%s5339 + $0x1b1] sm:$0xff]
      %v7444 = vld [vmem:[%s5339 + $0x1b9] sm:$0xff]
      %v7445 = vld [vmem:[%s5339 + $0x1c9] sm:$0xff]
      %v7446 = vld [vmem:[%s5339 + $0x1d1] sm:$0xff]
      %v7447 = vld [vmem:[%s5339 + $0x1e1] sm:$0xff]
      %v7448 = vld [vmem:[%s5339 + $0x1e9] sm:$0xff]
      %v7449 = vld [vmem:[%s5339 + $0x1f9] sm:$0xff]
      %v7450 = vld [vmem:[%s5339 + $0x201] sm:$0xff]
      %v7451 = vld [vmem:[%s5339 + $0x211] sm:$0xff]
      %v7452 = vld [vmem:[%s5339 + $0x219] sm:$0xff]
      %v7453 = vld [vmem:[%s5339 + $0x229] sm:$0xff]
      %v7454 = vld [vmem:[%s5339 + $0x231] sm:$0xff]
      %v7455 = vld [vmem:[%s5339 + $0x241] sm:$0xff]
      %v7456 = vld [vmem:[%s5339 + $0x249] sm:$0xff]
      %v7457 = vld [vmem:[%s5339 + $0x259] sm:$0xff]
      %v7458 = vld [vmem:[%s5339 + $0x261] sm:$0xff]
      %v7459 = vld [vmem:[%s5339 + $0x271] sm:$0xff]
      %v7460 = vld [vmem:[%s5339 + $0x279] sm:$0xff]
      %v7461 = vld [vmem:[%s5339 + $0x289] sm:$0xff]
      %v7462 = vld [vmem:[%s5339 + $0x291] sm:$0xff]
      %v7463 = vld [vmem:[%s5339 + $0x2a1] sm:$0xff]
      %v7464 = vld [vmem:[%s5339 + $0x2a9] sm:$0xff]
      %v7465 = vld [vmem:[%s5339 + $0x2b9] sm:$0xff]
      %v7466 = vld [vmem:[%s5339 + $0x2c1] sm:$0xff]
      %v7467 = vld [vmem:[%s5339 + $0x2d1] sm:$0xff]
      %v7468 = vld [vmem:[%s5339 + $0x2d9] sm:$0xff]
      %v7469 = vld [vmem:[%s5339 + $0x2e9] sm:$0xff]
      %v7470 = vld [vmem:[%s5339 + $0x2f1] sm:$0xff]
      %v7471 = vld [vmem:[%s5339 + $0x301] sm:$0xff]
      %v7472 = vld [vmem:[%s5339 + $0x309] sm:$0xff]
      %v7473 = vld [vmem:[%s5339 + $0x319] sm:$0xff]
      %v7474 = vld [vmem:[%s5339 + $0x321] sm:$0xff]
      %s7475 = scalar_lea.vmem %s2, 16
      %v7476 = vld [vmem:[%s7475] sm:$0xf]
      %v7478 = vsel %vm494, %v7411, 0
      %v7481 = vsel %vm494, %v7412, 0
      %v7484 = vsel %vm494, %v7413, 0
      %v7487 = vsel %vm494, %v7414, 0
      %v7490 = vsel %vm494, %v7415, 0
      %v7493 = vsel %vm494, %v7416, 0
      %v7496 = vsel %vm494, %v7417, 0
      %v7499 = vsel %vm494, %v7418, 0
      %v7502 = vsel %vm494, %v7419, 0
      %v7505 = vsel %vm494, %v7420, 0
      %v7508 = vsel %vm494, %v7421, 0
      %v7511 = vsel %vm494, %v7422, 0
      %v7514 = vsel %vm494, %v7423, 0
      %v7517 = vsel %vm494, %v7424, 0
      %v7520 = vsel %vm494, %v7425, 0
      %v7523 = vsel %vm494, %v7426, 0
      %v7526 = vsel %vm494, %v7427, 0
      %v7529 = vsel %vm494, %v7428, 0
      %v7532 = vsel %vm494, %v7429, 0
      %v7535 = vsel %vm494, %v7430, 0
      %v7538 = vsel %vm494, %v7431, 0
      %v7541 = vsel %vm494, %v7432, 0
      %v7544 = vsel %vm494, %v7433, 0
      %v7547 = vsel %vm494, %v7434, 0
      %v7550 = vsel %vm494, %v7435, 0
      %v7553 = vsel %vm494, %v7436, 0
      %v7556 = vsel %vm494, %v7437, 0
      %v7559 = vsel %vm494, %v7438, 0
      %v7562 = vsel %vm494, %v7439, 0
      %v7565 = vsel %vm494, %v7440, 0
      %v7568 = vsel %vm494, %v7441, 0
      %v7571 = vsel %vm494, %v7442, 0
      %v7574 = vsel %vm494, %v7443, 0
      %v7577 = vsel %vm494, %v7444, 0
      %v7580 = vsel %vm494, %v7445, 0
      %v7583 = vsel %vm494, %v7446, 0
      %v7586 = vsel %vm494, %v7447, 0
      %v7589 = vsel %vm494, %v7448, 0
      %v7592 = vsel %vm494, %v7449, 0
      %v7595 = vsel %vm494, %v7450, 0
      %v7598 = vsel %vm494, %v7451, 0
      %v7601 = vsel %vm494, %v7452, 0
      %v7604 = vsel %vm494, %v7453, 0
      %v7607 = vsel %vm494, %v7454, 0
      %v7610 = vsel %vm494, %v7455, 0
      %v7613 = vsel %vm494, %v7456, 0
      %v7616 = vsel %vm494, %v7457, 0
      %v7619 = vsel %vm494, %v7458, 0
      %v7622 = vsel %vm494, %v7459, 0
      %v7625 = vsel %vm494, %v7460, 0
      %v7628 = vsel %vm494, %v7461, 0
      %v7631 = vsel %vm494, %v7462, 0
      %v7634 = vsel %vm494, %v7463, 0
      %v7637 = vsel %vm494, %v7464, 0
      %v7640 = vsel %vm494, %v7465, 0
      %v7643 = vsel %vm494, %v7466, 0
      %v7646 = vsel %vm494, %v7467, 0
      %v7649 = vsel %vm494, %v7468, 0
      %v7652 = vsel %vm494, %v7469, 0
      %v7655 = vsel %vm494, %v7470, 0
      %v7658 = vsel %vm494, %v7471, 0
      %v7661 = vsel %vm494, %v7472, 0
      %v7664 = vsel %vm494, %v7473, 0
      %v7667 = vsel %vm494, %v7474, 0
      %v7670 = vsel %vm687, %v7476, 0
      %7672 = vmatpush.msra.mxu0 0.0
      %7673 = vmatpush.msra.mxu0 0.0
      %7674 = vmatpush.msra.mxu0 0.0
      %7675 = vmatpush.msra.mxu0 0.0
      %7676 = vmatpush.msra.mxu0 0.0
      %7677 = vmatpush.msra.mxu0 0.0
      %7678 = vmatpush.msra.mxu0 0.0
      %7679 = vmatpush.msra.mxu0 0.0
      %7680 = vmatpush.msra.mxu0 0.0
      %7681 = vmatpush.msra.mxu0 0.0
      %7682 = vmatpush.msra.mxu0 0.0
      %7683 = vmatpush.msra.mxu0 0.0
      %7684 = vmatpush.msra.mxu0 0.0
      %7685 = vmatpush.msra.mxu0 0.0
      %7686 = vmatpush.msra.mxu0 0.0
      %7687 = vmatpush.msra.mxu0 %v7670
      %7688 = vmatmul.f32.gmra.mxu0 %v7478
      %v7689 = vpop.f32.mrf.mxu0
      %v7690 = vadd.f32 0.0, %v7689
      %7691 = vmatmul.f32.gmra.mxu0 %v7481
      %v7692 = vpop.f32.mrf.mxu0
      %v7693 = vadd.f32 0.0, %v7692
      %7694 = vmatmul.f32.gmra.mxu0 %v7484
      %v7695 = vpop.f32.mrf.mxu0
      %v7696 = vadd.f32 0.0, %v7695
      %7697 = vmatmul.f32.gmra.mxu0 %v7487
      %v7698 = vpop.f32.mrf.mxu0
      %v7699 = vadd.f32 0.0, %v7698
      %7700 = vmatmul.f32.gmra.mxu0 %v7490
      %v7701 = vpop.f32.mrf.mxu0
      %v7702 = vadd.f32 0.0, %v7701
      %7703 = vmatmul.f32.gmra.mxu0 %v7493
      %v7704 = vpop.f32.mrf.mxu0
      %v7705 = vadd.f32 0.0, %v7704
      %7706 = vmatmul.f32.gmra.mxu0 %v7496
      %v7707 = vpop.f32.mrf.mxu0
      %v7708 = vadd.f32 0.0, %v7707
      %7709 = vmatmul.f32.gmra.mxu0 %v7499
      %v7710 = vpop.f32.mrf.mxu0
      %v7711 = vadd.f32 0.0, %v7710
      %7712 = vmatmul.f32.gmra.mxu0 %v7502
      %v7713 = vpop.f32.mrf.mxu0
      %v7714 = vadd.f32 0.0, %v7713
      %7715 = vmatmul.f32.gmra.mxu0 %v7505
      %v7716 = vpop.f32.mrf.mxu0
      %v7717 = vadd.f32 0.0, %v7716
      %7718 = vmatmul.f32.gmra.mxu0 %v7508
      %v7719 = vpop.f32.mrf.mxu0
      %v7720 = vadd.f32 0.0, %v7719
      %7721 = vmatmul.f32.gmra.mxu0 %v7511
      %v7722 = vpop.f32.mrf.mxu0
      %v7723 = vadd.f32 0.0, %v7722
      %7724 = vmatmul.f32.gmra.mxu0 %v7514
      %v7725 = vpop.f32.mrf.mxu0
      %v7726 = vadd.f32 0.0, %v7725
      %7727 = vmatmul.f32.gmra.mxu0 %v7517
      %v7728 = vpop.f32.mrf.mxu0
      %v7729 = vadd.f32 0.0, %v7728
      %7730 = vmatmul.f32.gmra.mxu0 %v7520
      %v7731 = vpop.f32.mrf.mxu0
      %v7732 = vadd.f32 0.0, %v7731
      %7733 = vmatmul.f32.gmra.mxu0 %v7523
      %v7734 = vpop.f32.mrf.mxu0
      %v7735 = vadd.f32 0.0, %v7734
      %7736 = vmatmul.f32.gmra.mxu0 %v7526
      %v7737 = vpop.f32.mrf.mxu0
      %v7738 = vadd.f32 0.0, %v7737
      %7739 = vmatmul.f32.gmra.mxu0 %v7529
      %v7740 = vpop.f32.mrf.mxu0
      %v7741 = vadd.f32 0.0, %v7740
      %7742 = vmatmul.f32.gmra.mxu0 %v7532
      %v7743 = vpop.f32.mrf.mxu0
      %v7744 = vadd.f32 0.0, %v7743
      %7745 = vmatmul.f32.gmra.mxu0 %v7535
      %v7746 = vpop.f32.mrf.mxu0
      %v7747 = vadd.f32 0.0, %v7746
      %7748 = vmatmul.f32.gmra.mxu0 %v7538
      %v7749 = vpop.f32.mrf.mxu0
      %v7750 = vadd.f32 0.0, %v7749
      %7751 = vmatmul.f32.gmra.mxu0 %v7541
      %v7752 = vpop.f32.mrf.mxu0
      %v7753 = vadd.f32 0.0, %v7752
      %7754 = vmatmul.f32.gmra.mxu0 %v7544
      %v7755 = vpop.f32.mrf.mxu0
      %v7756 = vadd.f32 0.0, %v7755
      %7757 = vmatmul.f32.gmra.mxu0 %v7547
      %v7758 = vpop.f32.mrf.mxu0
      %v7759 = vadd.f32 0.0, %v7758
      %7760 = vmatmul.f32.gmra.mxu0 %v7550
      %v7761 = vpop.f32.mrf.mxu0
      %v7762 = vadd.f32 0.0, %v7761
      %7763 = vmatmul.f32.gmra.mxu0 %v7553
      %v7764 = vpop.f32.mrf.mxu0
      %v7765 = vadd.f32 0.0, %v7764
      %7766 = vmatmul.f32.gmra.mxu0 %v7556
      %v7767 = vpop.f32.mrf.mxu0
      %v7768 = vadd.f32 0.0, %v7767
      %7769 = vmatmul.f32.gmra.mxu0 %v7559
      %v7770 = vpop.f32.mrf.mxu0
      %v7771 = vadd.f32 0.0, %v7770
      %7772 = vmatmul.f32.gmra.mxu0 %v7562
      %v7773 = vpop.f32.mrf.mxu0
      %v7774 = vadd.f32 0.0, %v7773
      %7775 = vmatmul.f32.gmra.mxu0 %v7565
      %v7776 = vpop.f32.mrf.mxu0
      %v7777 = vadd.f32 0.0, %v7776
      %7778 = vmatmul.f32.gmra.mxu0 %v7568
      %v7779 = vpop.f32.mrf.mxu0
      %v7780 = vadd.f32 0.0, %v7779
      %7781 = vmatmul.f32.gmra.mxu0 %v7571
      %v7782 = vpop.f32.mrf.mxu0
      %v7783 = vadd.f32 0.0, %v7782
      %7784 = vmatmul.f32.gmra.mxu0 %v7574
      %v7785 = vpop.f32.mrf.mxu0
      %v7786 = vadd.f32 0.0, %v7785
      %7787 = vmatmul.f32.gmra.mxu0 %v7577
      %v7788 = vpop.f32.mrf.mxu0
      %v7789 = vadd.f32 0.0, %v7788
      %7790 = vmatmul.f32.gmra.mxu0 %v7580
      %v7791 = vpop.f32.mrf.mxu0
      %v7792 = vadd.f32 0.0, %v7791
      %7793 = vmatmul.f32.gmra.mxu0 %v7583
      %v7794 = vpop.f32.mrf.mxu0
      %v7795 = vadd.f32 0.0, %v7794
      %7796 = vmatmul.f32.gmra.mxu0 %v7586
      %v7797 = vpop.f32.mrf.mxu0
      %v7798 = vadd.f32 0.0, %v7797
      %7799 = vmatmul.f32.gmra.mxu0 %v7589
      %v7800 = vpop.f32.mrf.mxu0
      %v7801 = vadd.f32 0.0, %v7800
      %7802 = vmatmul.f32.gmra.mxu0 %v7592
      %v7803 = vpop.f32.mrf.mxu0
      %v7804 = vadd.f32 0.0, %v7803
      %7805 = vmatmul.f32.gmra.mxu0 %v7595
      %v7806 = vpop.f32.mrf.mxu0
      %v7807 = vadd.f32 0.0, %v7806
      %7808 = vmatmul.f32.gmra.mxu0 %v7598
      %v7809 = vpop.f32.mrf.mxu0
      %v7810 = vadd.f32 0.0, %v7809
      %7811 = vmatmul.f32.gmra.mxu0 %v7601
      %v7812 = vpop.f32.mrf.mxu0
      %v7813 = vadd.f32 0.0, %v7812
      %7814 = vmatmul.f32.gmra.mxu0 %v7604
      %v7815 = vpop.f32.mrf.mxu0
      %v7816 = vadd.f32 0.0, %v7815
      %7817 = vmatmul.f32.gmra.mxu0 %v7607
      %v7818 = vpop.f32.mrf.mxu0
      %v7819 = vadd.f32 0.0, %v7818
      %7820 = vmatmul.f32.gmra.mxu0 %v7610
      %v7821 = vpop.f32.mrf.mxu0
      %v7822 = vadd.f32 0.0, %v7821
      %7823 = vmatmul.f32.gmra.mxu0 %v7613
      %v7824 = vpop.f32.mrf.mxu0
      %v7825 = vadd.f32 0.0, %v7824
      %7826 = vmatmul.f32.gmra.mxu0 %v7616
      %v7827 = vpop.f32.mrf.mxu0
      %v7828 = vadd.f32 0.0, %v7827
      %7829 = vmatmul.f32.gmra.mxu0 %v7619
      %v7830 = vpop.f32.mrf.mxu0
      %v7831 = vadd.f32 0.0, %v7830
      %7832 = vmatmul.f32.gmra.mxu0 %v7622
      %v7833 = vpop.f32.mrf.mxu0
      %v7834 = vadd.f32 0.0, %v7833
      %7835 = vmatmul.f32.gmra.mxu0 %v7625
      %v7836 = vpop.f32.mrf.mxu0
      %v7837 = vadd.f32 0.0, %v7836
      %7838 = vmatmul.f32.gmra.mxu0 %v7628
      %v7839 = vpop.f32.mrf.mxu0
      %v7840 = vadd.f32 0.0, %v7839
      %7841 = vmatmul.f32.gmra.mxu0 %v7631
      %v7842 = vpop.f32.mrf.mxu0
      %v7843 = vadd.f32 0.0, %v7842
      %7844 = vmatmul.f32.gmra.mxu0 %v7634
      %v7845 = vpop.f32.mrf.mxu0
      %v7846 = vadd.f32 0.0, %v7845
      %7847 = vmatmul.f32.gmra.mxu0 %v7637
      %v7848 = vpop.f32.mrf.mxu0
      %v7849 = vadd.f32 0.0, %v7848
      %7850 = vmatmul.f32.gmra.mxu0 %v7640
      %v7851 = vpop.f32.mrf.mxu0
      %v7852 = vadd.f32 0.0, %v7851
      %7853 = vmatmul.f32.gmra.mxu0 %v7643
      %v7854 = vpop.f32.mrf.mxu0
      %v7855 = vadd.f32 0.0, %v7854
      %7856 = vmatmul.f32.gmra.mxu0 %v7646
      %v7857 = vpop.f32.mrf.mxu0
      %v7858 = vadd.f32 0.0, %v7857
      %7859 = vmatmul.f32.gmra.mxu0 %v7649
      %v7860 = vpop.f32.mrf.mxu0
      %v7861 = vadd.f32 0.0, %v7860
      %7862 = vmatmul.f32.gmra.mxu0 %v7652
      %v7863 = vpop.f32.mrf.mxu0
      %v7864 = vadd.f32 0.0, %v7863
      %7865 = vmatmul.f32.gmra.mxu0 %v7655
      %v7866 = vpop.f32.mrf.mxu0
      %v7867 = vadd.f32 0.0, %v7866
      %7868 = vmatmul.f32.gmra.mxu0 %v7658
      %v7869 = vpop.f32.mrf.mxu0
      %v7870 = vadd.f32 0.0, %v7869
      %7871 = vmatmul.f32.gmra.mxu0 %v7661
      %v7872 = vpop.f32.mrf.mxu0
      %v7873 = vadd.f32 0.0, %v7872
      %7874 = vmatmul.f32.gmra.mxu0 %v7664
      %v7875 = vpop.f32.mrf.mxu0
      %v7876 = vadd.f32 0.0, %v7875
      %7877 = vmatmul.f32.gmra.mxu0 %v7667
      %v7878 = vpop.f32.mrf.mxu0
      %v7879 = vadd.f32 0.0, %v7878
      %7880 = vdwg.mxu0
      %v7881 = vadd.f32 %v7347, %v7690
      %v7882 = vadd.f32 %v7348, %v7693
      %v7883 = vadd.f32 %v7349, %v7696
      %v7884 = vadd.f32 %v7350, %v7699
      %v7885 = vadd.f32 %v7351, %v7702
      %v7886 = vadd.f32 %v7352, %v7705
      %v7887 = vadd.f32 %v7353, %v7708
      %v7888 = vadd.f32 %v7354, %v7711
      %v7889 = vadd.f32 %v7355, %v7714
      %v7890 = vadd.f32 %v7356, %v7717
      %v7891 = vadd.f32 %v7357, %v7720
      %v7892 = vadd.f32 %v7358, %v7723
      %v7893 = vadd.f32 %v7359, %v7726
      %v7894 = vadd.f32 %v7360, %v7729
      %v7895 = vadd.f32 %v7361, %v7732
      %v7896 = vadd.f32 %v7362, %v7735
      %v7897 = vadd.f32 %v7363, %v7738
      %v7898 = vadd.f32 %v7364, %v7741
      %v7899 = vadd.f32 %v7365, %v7744
      %v7900 = vadd.f32 %v7366, %v7747
      %v7901 = vadd.f32 %v7367, %v7750
      %v7902 = vadd.f32 %v7368, %v7753
      %v7903 = vadd.f32 %v7369, %v7756
      %v7904 = vadd.f32 %v7370, %v7759
      %v7905 = vadd.f32 %v7371, %v7762
      %v7906 = vadd.f32 %v7372, %v7765
      %v7907 = vadd.f32 %v7373, %v7768
      %v7908 = vadd.f32 %v7374, %v7771
      %v7909 = vadd.f32 %v7375, %v7774
      %v7910 = vadd.f32 %v7376, %v7777
      %v7911 = vadd.f32 %v7377, %v7780
      %v7912 = vadd.f32 %v7378, %v7783
      %v7913 = vadd.f32 %v7379, %v7786
      %v7914 = vadd.f32 %v7380, %v7789
      %v7915 = vadd.f32 %v7381, %v7792
      %v7916 = vadd.f32 %v7382, %v7795
      %v7917 = vadd.f32 %v7383, %v7798
      %v7918 = vadd.f32 %v7384, %v7801
      %v7919 = vadd.f32 %v7385, %v7804
      %v7920 = vadd.f32 %v7386, %v7807
      %v7921 = vadd.f32 %v7387, %v7810
      %v7922 = vadd.f32 %v7388, %v7813
      %v7923 = vadd.f32 %v7389, %v7816
      %v7924 = vadd.f32 %v7390, %v7819
      %v7925 = vadd.f32 %v7391, %v7822
      %v7926 = vadd.f32 %v7392, %v7825
      %v7927 = vadd.f32 %v7393, %v7828
      %v7928 = vadd.f32 %v7394, %v7831
      %v7929 = vadd.f32 %v7395, %v7834
      %v7930 = vadd.f32 %v7396, %v7837
      %v7931 = vadd.f32 %v7397, %v7840
      %v7932 = vadd.f32 %v7398, %v7843
      %v7933 = vadd.f32 %v7399, %v7846
      %v7934 = vadd.f32 %v7400, %v7849
      %v7935 = vadd.f32 %v7401, %v7852
      %v7936 = vadd.f32 %v7402, %v7855
      %v7937 = vadd.f32 %v7403, %v7858
      %v7938 = vadd.f32 %v7404, %v7861
      %v7939 = vadd.f32 %v7405, %v7864
      %v7940 = vadd.f32 %v7406, %v7867
      %v7941 = vadd.f32 %v7407, %v7870
      %v7942 = vadd.f32 %v7408, %v7873
      %v7943 = vadd.f32 %v7409, %v7876
      %v7944 = vadd.f32 %v7410, %v7879
      %v7945 = vld [vmem:[%s5339 + $0x2] sm:$0xff]
      %v7946 = vld [vmem:[%s5339 + $0xa] sm:$0xff]
      %v7947 = vld [vmem:[%s5339 + $0x1a] sm:$0xff]
      %v7948 = vld [vmem:[%s5339 + $0x22] sm:$0xff]
      %v7949 = vld [vmem:[%s5339 + $0x32] sm:$0xff]
      %v7950 = vld [vmem:[%s5339 + $0x3a] sm:$0xff]
      %v7951 = vld [vmem:[%s5339 + $0x4a] sm:$0xff]
      %v7952 = vld [vmem:[%s5339 + $0x52] sm:$0xff]
      %v7953 = vld [vmem:[%s5339 + $0x62] sm:$0xff]
      %v7954 = vld [vmem:[%s5339 + $0x6a] sm:$0xff]
      %v7955 = vld [vmem:[%s5339 + $0x7a] sm:$0xff]
      %v7956 = vld [vmem:[%s5339 + $0x82] sm:$0xff]
      %v7957 = vld [vmem:[%s5339 + $0x92] sm:$0xff]
      %v7958 = vld [vmem:[%s5339 + $0x9a] sm:$0xff]
      %v7959 = vld [vmem:[%s5339 + $0xaa] sm:$0xff]
      %v7960 = vld [vmem:[%s5339 + $0xb2] sm:$0xff]
      %v7961 = vld [vmem:[%s5339 + $0xc2] sm:$0xff]
      %v7962 = vld [vmem:[%s5339 + $0xca] sm:$0xff]
      %v7963 = vld [vmem:[%s5339 + $0xda] sm:$0xff]
      %v7964 = vld [vmem:[%s5339 + $0xe2] sm:$0xff]
      %v7965 = vld [vmem:[%s5339 + $0xf2] sm:$0xff]
      %v7966 = vld [vmem:[%s5339 + $0xfa] sm:$0xff]
      %v7967 = vld [vmem:[%s5339 + $0x10a] sm:$0xff]
      %v7968 = vld [vmem:[%s5339 + $0x112] sm:$0xff]
      %v7969 = vld [vmem:[%s5339 + $0x122] sm:$0xff]
      %v7970 = vld [vmem:[%s5339 + $0x12a] sm:$0xff]
      %v7971 = vld [vmem:[%s5339 + $0x13a] sm:$0xff]
      %v7972 = vld [vmem:[%s5339 + $0x142] sm:$0xff]
      %v7973 = vld [vmem:[%s5339 + $0x152] sm:$0xff]
      %v7974 = vld [vmem:[%s5339 + $0x15a] sm:$0xff]
      %v7975 = vld [vmem:[%s5339 + $0x16a] sm:$0xff]
      %v7976 = vld [vmem:[%s5339 + $0x172] sm:$0xff]
      %v7977 = vld [vmem:[%s5339 + $0x1b2] sm:$0xff]
      %v7978 = vld [vmem:[%s5339 + $0x1ba] sm:$0xff]
      %v7979 = vld [vmem:[%s5339 + $0x1ca] sm:$0xff]
      %v7980 = vld [vmem:[%s5339 + $0x1d2] sm:$0xff]
      %v7981 = vld [vmem:[%s5339 + $0x1e2] sm:$0xff]
      %v7982 = vld [vmem:[%s5339 + $0x1ea] sm:$0xff]
      %v7983 = vld [vmem:[%s5339 + $0x1fa] sm:$0xff]
      %v7984 = vld [vmem:[%s5339 + $0x202] sm:$0xff]
      %v7985 = vld [vmem:[%s5339 + $0x212] sm:$0xff]
      %v7986 = vld [vmem:[%s5339 + $0x21a] sm:$0xff]
      %v7987 = vld [vmem:[%s5339 + $0x22a] sm:$0xff]
      %v7988 = vld [vmem:[%s5339 + $0x232] sm:$0xff]
      %v7989 = vld [vmem:[%s5339 + $0x242] sm:$0xff]
      %v7990 = vld [vmem:[%s5339 + $0x24a] sm:$0xff]
      %v7991 = vld [vmem:[%s5339 + $0x25a] sm:$0xff]
      %v7992 = vld [vmem:[%s5339 + $0x262] sm:$0xff]
      %v7993 = vld [vmem:[%s5339 + $0x272] sm:$0xff]
      %v7994 = vld [vmem:[%s5339 + $0x27a] sm:$0xff]
      %v7995 = vld [vmem:[%s5339 + $0x28a] sm:$0xff]
      %v7996 = vld [vmem:[%s5339 + $0x292] sm:$0xff]
      %v7997 = vld [vmem:[%s5339 + $0x2a2] sm:$0xff]
      %v7998 = vld [vmem:[%s5339 + $0x2aa] sm:$0xff]
      %v7999 = vld [vmem:[%s5339 + $0x2ba] sm:$0xff]
      %v8000 = vld [vmem:[%s5339 + $0x2c2] sm:$0xff]
      %v8001 = vld [vmem:[%s5339 + $0x2d2] sm:$0xff]
      %v8002 = vld [vmem:[%s5339 + $0x2da] sm:$0xff]
      %v8003 = vld [vmem:[%s5339 + $0x2ea] sm:$0xff]
      %v8004 = vld [vmem:[%s5339 + $0x2f2] sm:$0xff]
      %v8005 = vld [vmem:[%s5339 + $0x302] sm:$0xff]
      %v8006 = vld [vmem:[%s5339 + $0x30a] sm:$0xff]
      %v8007 = vld [vmem:[%s5339 + $0x31a] sm:$0xff]
      %v8008 = vld [vmem:[%s5339 + $0x322] sm:$0xff]
      %s8009 = scalar_lea.vmem %s2, 20
      %v8010 = vld [vmem:[%s8009] sm:$0xf]
      %v8012 = vsel %vm494, %v7945, 0
      %v8015 = vsel %vm494, %v7946, 0
      %v8018 = vsel %vm494, %v7947, 0
      %v8021 = vsel %vm494, %v7948, 0
      %v8024 = vsel %vm494, %v7949, 0
      %v8027 = vsel %vm494, %v7950, 0
      %v8030 = vsel %vm494, %v7951, 0
      %v8033 = vsel %vm494, %v7952, 0
      %v8036 = vsel %vm494, %v7953, 0
      %v8039 = vsel %vm494, %v7954, 0
      %v8042 = vsel %vm494, %v7955, 0
      %v8045 = vsel %vm494, %v7956, 0
      %v8048 = vsel %vm494, %v7957, 0
      %v8051 = vsel %vm494, %v7958, 0
      %v8054 = vsel %vm494, %v7959, 0
      %v8057 = vsel %vm494, %v7960, 0
      %v8060 = vsel %vm494, %v7961, 0
      %v8063 = vsel %vm494, %v7962, 0
      %v8066 = vsel %vm494, %v7963, 0
      %v8069 = vsel %vm494, %v7964, 0
      %v8072 = vsel %vm494, %v7965, 0
      %v8075 = vsel %vm494, %v7966, 0
      %v8078 = vsel %vm494, %v7967, 0
      %v8081 = vsel %vm494, %v7968, 0
      %v8084 = vsel %vm494, %v7969, 0
      %v8087 = vsel %vm494, %v7970, 0
      %v8090 = vsel %vm494, %v7971, 0
      %v8093 = vsel %vm494, %v7972, 0
      %v8096 = vsel %vm494, %v7973, 0
      %v8099 = vsel %vm494, %v7974, 0
      %v8102 = vsel %vm494, %v7975, 0
      %v8105 = vsel %vm494, %v7976, 0
      %v8108 = vsel %vm494, %v7977, 0
      %v8111 = vsel %vm494, %v7978, 0
      %v8114 = vsel %vm494, %v7979, 0
      %v8117 = vsel %vm494, %v7980, 0
      %v8120 = vsel %vm494, %v7981, 0
      %v8123 = vsel %vm494, %v7982, 0
      %v8126 = vsel %vm494, %v7983, 0
      %v8129 = vsel %vm494, %v7984, 0
      %v8132 = vsel %vm494, %v7985, 0
      %v8135 = vsel %vm494, %v7986, 0
      %v8138 = vsel %vm494, %v7987, 0
      %v8141 = vsel %vm494, %v7988, 0
      %v8144 = vsel %vm494, %v7989, 0
      %v8147 = vsel %vm494, %v7990, 0
      %v8150 = vsel %vm494, %v7991, 0
      %v8153 = vsel %vm494, %v7992, 0
      %v8156 = vsel %vm494, %v7993, 0
      %v8159 = vsel %vm494, %v7994, 0
      %v8162 = vsel %vm494, %v7995, 0
      %v8165 = vsel %vm494, %v7996, 0
      %v8168 = vsel %vm494, %v7997, 0
      %v8171 = vsel %vm494, %v7998, 0
      %v8174 = vsel %vm494, %v7999, 0
      %v8177 = vsel %vm494, %v8000, 0
      %v8180 = vsel %vm494, %v8001, 0
      %v8183 = vsel %vm494, %v8002, 0
      %v8186 = vsel %vm494, %v8003, 0
      %v8189 = vsel %vm494, %v8004, 0
      %v8192 = vsel %vm494, %v8005, 0
      %v8195 = vsel %vm494, %v8006, 0
      %v8198 = vsel %vm494, %v8007, 0
      %v8201 = vsel %vm494, %v8008, 0
      %v8204 = vsel %vm687, %v8010, 0
      %8206 = vmatpush.msra.mxu0 0.0
      %8207 = vmatpush.msra.mxu0 0.0
      %8208 = vmatpush.msra.mxu0 0.0
      %8209 = vmatpush.msra.mxu0 0.0
      %8210 = vmatpush.msra.mxu0 0.0
      %8211 = vmatpush.msra.mxu0 0.0
      %8212 = vmatpush.msra.mxu0 0.0
      %8213 = vmatpush.msra.mxu0 0.0
      %8214 = vmatpush.msra.mxu0 0.0
      %8215 = vmatpush.msra.mxu0 0.0
      %8216 = vmatpush.msra.mxu0 0.0
      %8217 = vmatpush.msra.mxu0 0.0
      %8218 = vmatpush.msra.mxu0 0.0
      %8219 = vmatpush.msra.mxu0 0.0
      %8220 = vmatpush.msra.mxu0 0.0
      %8221 = vmatpush.msra.mxu0 %v8204
      %8222 = vmatmul.f32.gmra.mxu0 %v8012
      %v8223 = vpop.f32.mrf.mxu0
      %v8224 = vadd.f32 0.0, %v8223
      %8225 = vmatmul.f32.gmra.mxu0 %v8015
      %v8226 = vpop.f32.mrf.mxu0
      %v8227 = vadd.f32 0.0, %v8226
      %8228 = vmatmul.f32.gmra.mxu0 %v8018
      %v8229 = vpop.f32.mrf.mxu0
      %v8230 = vadd.f32 0.0, %v8229
      %8231 = vmatmul.f32.gmra.mxu0 %v8021
      %v8232 = vpop.f32.mrf.mxu0
      %v8233 = vadd.f32 0.0, %v8232
      %8234 = vmatmul.f32.gmra.mxu0 %v8024
      %v8235 = vpop.f32.mrf.mxu0
      %v8236 = vadd.f32 0.0, %v8235
      %8237 = vmatmul.f32.gmra.mxu0 %v8027
      %v8238 = vpop.f32.mrf.mxu0
      %v8239 = vadd.f32 0.0, %v8238
      %8240 = vmatmul.f32.gmra.mxu0 %v8030
      %v8241 = vpop.f32.mrf.mxu0
      %v8242 = vadd.f32 0.0, %v8241
      %8243 = vmatmul.f32.gmra.mxu0 %v8033
      %v8244 = vpop.f32.mrf.mxu0
      %v8245 = vadd.f32 0.0, %v8244
      %8246 = vmatmul.f32.gmra.mxu0 %v8036
      %v8247 = vpop.f32.mrf.mxu0
      %v8248 = vadd.f32 0.0, %v8247
      %8249 = vmatmul.f32.gmra.mxu0 %v8039
      %v8250 = vpop.f32.mrf.mxu0
      %v8251 = vadd.f32 0.0, %v8250
      %8252 = vmatmul.f32.gmra.mxu0 %v8042
      %v8253 = vpop.f32.mrf.mxu0
      %v8254 = vadd.f32 0.0, %v8253
      %8255 = vmatmul.f32.gmra.mxu0 %v8045
      %v8256 = vpop.f32.mrf.mxu0
      %v8257 = vadd.f32 0.0, %v8256
      %8258 = vmatmul.f32.gmra.mxu0 %v8048
      %v8259 = vpop.f32.mrf.mxu0
      %v8260 = vadd.f32 0.0, %v8259
      %8261 = vmatmul.f32.gmra.mxu0 %v8051
      %v8262 = vpop.f32.mrf.mxu0
      %v8263 = vadd.f32 0.0, %v8262
      %8264 = vmatmul.f32.gmra.mxu0 %v8054
      %v8265 = vpop.f32.mrf.mxu0
      %v8266 = vadd.f32 0.0, %v8265
      %8267 = vmatmul.f32.gmra.mxu0 %v8057
      %v8268 = vpop.f32.mrf.mxu0
      %v8269 = vadd.f32 0.0, %v8268
      %8270 = vmatmul.f32.gmra.mxu0 %v8060
      %v8271 = vpop.f32.mrf.mxu0
      %v8272 = vadd.f32 0.0, %v8271
      %8273 = vmatmul.f32.gmra.mxu0 %v8063
      %v8274 = vpop.f32.mrf.mxu0
      %v8275 = vadd.f32 0.0, %v8274
      %8276 = vmatmul.f32.gmra.mxu0 %v8066
      %v8277 = vpop.f32.mrf.mxu0
      %v8278 = vadd.f32 0.0, %v8277
      %8279 = vmatmul.f32.gmra.mxu0 %v8069
      %v8280 = vpop.f32.mrf.mxu0
      %v8281 = vadd.f32 0.0, %v8280
      %8282 = vmatmul.f32.gmra.mxu0 %v8072
      %v8283 = vpop.f32.mrf.mxu0
      %v8284 = vadd.f32 0.0, %v8283
      %8285 = vmatmul.f32.gmra.mxu0 %v8075
      %v8286 = vpop.f32.mrf.mxu0
      %v8287 = vadd.f32 0.0, %v8286
      %8288 = vmatmul.f32.gmra.mxu0 %v8078
      %v8289 = vpop.f32.mrf.mxu0
      %v8290 = vadd.f32 0.0, %v8289
      %8291 = vmatmul.f32.gmra.mxu0 %v8081
      %v8292 = vpop.f32.mrf.mxu0
      %v8293 = vadd.f32 0.0, %v8292
      %8294 = vmatmul.f32.gmra.mxu0 %v8084
      %v8295 = vpop.f32.mrf.mxu0
      %v8296 = vadd.f32 0.0, %v8295
      %8297 = vmatmul.f32.gmra.mxu0 %v8087
      %v8298 = vpop.f32.mrf.mxu0
      %v8299 = vadd.f32 0.0, %v8298
      %8300 = vmatmul.f32.gmra.mxu0 %v8090
      %v8301 = vpop.f32.mrf.mxu0
      %v8302 = vadd.f32 0.0, %v8301
      %8303 = vmatmul.f32.gmra.mxu0 %v8093
      %v8304 = vpop.f32.mrf.mxu0
      %v8305 = vadd.f32 0.0, %v8304
      %8306 = vmatmul.f32.gmra.mxu0 %v8096
      %v8307 = vpop.f32.mrf.mxu0
      %v8308 = vadd.f32 0.0, %v8307
      %8309 = vmatmul.f32.gmra.mxu0 %v8099
      %v8310 = vpop.f32.mrf.mxu0
      %v8311 = vadd.f32 0.0, %v8310
      %8312 = vmatmul.f32.gmra.mxu0 %v8102
      %v8313 = vpop.f32.mrf.mxu0
      %v8314 = vadd.f32 0.0, %v8313
      %8315 = vmatmul.f32.gmra.mxu0 %v8105
      %v8316 = vpop.f32.mrf.mxu0
      %v8317 = vadd.f32 0.0, %v8316
      %8318 = vmatmul.f32.gmra.mxu0 %v8108
      %v8319 = vpop.f32.mrf.mxu0
      %v8320 = vadd.f32 0.0, %v8319
      %8321 = vmatmul.f32.gmra.mxu0 %v8111
      %v8322 = vpop.f32.mrf.mxu0
      %v8323 = vadd.f32 0.0, %v8322
      %8324 = vmatmul.f32.gmra.mxu0 %v8114
      %v8325 = vpop.f32.mrf.mxu0
      %v8326 = vadd.f32 0.0, %v8325
      %8327 = vmatmul.f32.gmra.mxu0 %v8117
      %v8328 = vpop.f32.mrf.mxu0
      %v8329 = vadd.f32 0.0, %v8328
      %8330 = vmatmul.f32.gmra.mxu0 %v8120
      %v8331 = vpop.f32.mrf.mxu0
      %v8332 = vadd.f32 0.0, %v8331
      %8333 = vmatmul.f32.gmra.mxu0 %v8123
      %v8334 = vpop.f32.mrf.mxu0
      %v8335 = vadd.f32 0.0, %v8334
      %8336 = vmatmul.f32.gmra.mxu0 %v8126
      %v8337 = vpop.f32.mrf.mxu0
      %v8338 = vadd.f32 0.0, %v8337
      %8339 = vmatmul.f32.gmra.mxu0 %v8129
      %v8340 = vpop.f32.mrf.mxu0
      %v8341 = vadd.f32 0.0, %v8340
      %8342 = vmatmul.f32.gmra.mxu0 %v8132
      %v8343 = vpop.f32.mrf.mxu0
      %v8344 = vadd.f32 0.0, %v8343
      %8345 = vmatmul.f32.gmra.mxu0 %v8135
      %v8346 = vpop.f32.mrf.mxu0
      %v8347 = vadd.f32 0.0, %v8346
      %8348 = vmatmul.f32.gmra.mxu0 %v8138
      %v8349 = vpop.f32.mrf.mxu0
      %v8350 = vadd.f32 0.0, %v8349
      %8351 = vmatmul.f32.gmra.mxu0 %v8141
      %v8352 = vpop.f32.mrf.mxu0
      %v8353 = vadd.f32 0.0, %v8352
      %8354 = vmatmul.f32.gmra.mxu0 %v8144
      %v8355 = vpop.f32.mrf.mxu0
      %v8356 = vadd.f32 0.0, %v8355
      %8357 = vmatmul.f32.gmra.mxu0 %v8147
      %v8358 = vpop.f32.mrf.mxu0
      %v8359 = vadd.f32 0.0, %v8358
      %8360 = vmatmul.f32.gmra.mxu0 %v8150
      %v8361 = vpop.f32.mrf.mxu0
      %v8362 = vadd.f32 0.0, %v8361
      %8363 = vmatmul.f32.gmra.mxu0 %v8153
      %v8364 = vpop.f32.mrf.mxu0
      %v8365 = vadd.f32 0.0, %v8364
      %8366 = vmatmul.f32.gmra.mxu0 %v8156
      %v8367 = vpop.f32.mrf.mxu0
      %v8368 = vadd.f32 0.0, %v8367
      %8369 = vmatmul.f32.gmra.mxu0 %v8159
      %v8370 = vpop.f32.mrf.mxu0
      %v8371 = vadd.f32 0.0, %v8370
      %8372 = vmatmul.f32.gmra.mxu0 %v8162
      %v8373 = vpop.f32.mrf.mxu0
      %v8374 = vadd.f32 0.0, %v8373
      %8375 = vmatmul.f32.gmra.mxu0 %v8165
      %v8376 = vpop.f32.mrf.mxu0
      %v8377 = vadd.f32 0.0, %v8376
      %8378 = vmatmul.f32.gmra.mxu0 %v8168
      %v8379 = vpop.f32.mrf.mxu0
      %v8380 = vadd.f32 0.0, %v8379
      %8381 = vmatmul.f32.gmra.mxu0 %v8171
      %v8382 = vpop.f32.mrf.mxu0
      %v8383 = vadd.f32 0.0, %v8382
      %8384 = vmatmul.f32.gmra.mxu0 %v8174
      %v8385 = vpop.f32.mrf.mxu0
      %v8386 = vadd.f32 0.0, %v8385
      %8387 = vmatmul.f32.gmra.mxu0 %v8177
      %v8388 = vpop.f32.mrf.mxu0
      %v8389 = vadd.f32 0.0, %v8388
      %8390 = vmatmul.f32.gmra.mxu0 %v8180
      %v8391 = vpop.f32.mrf.mxu0
      %v8392 = vadd.f32 0.0, %v8391
      %8393 = vmatmul.f32.gmra.mxu0 %v8183
      %v8394 = vpop.f32.mrf.mxu0
      %v8395 = vadd.f32 0.0, %v8394
      %8396 = vmatmul.f32.gmra.mxu0 %v8186
      %v8397 = vpop.f32.mrf.mxu0
      %v8398 = vadd.f32 0.0, %v8397
      %8399 = vmatmul.f32.gmra.mxu0 %v8189
      %v8400 = vpop.f32.mrf.mxu0
      %v8401 = vadd.f32 0.0, %v8400
      %8402 = vmatmul.f32.gmra.mxu0 %v8192
      %v8403 = vpop.f32.mrf.mxu0
      %v8404 = vadd.f32 0.0, %v8403
      %8405 = vmatmul.f32.gmra.mxu0 %v8195
      %v8406 = vpop.f32.mrf.mxu0
      %v8407 = vadd.f32 0.0, %v8406
      %8408 = vmatmul.f32.gmra.mxu0 %v8198
      %v8409 = vpop.f32.mrf.mxu0
      %v8410 = vadd.f32 0.0, %v8409
      %8411 = vmatmul.f32.gmra.mxu0 %v8201
      %v8412 = vpop.f32.mrf.mxu0
      %v8413 = vadd.f32 0.0, %v8412
      %8414 = vdwg.mxu0
      %v8415 = vadd.f32 %v7881, %v8224
      %v8416 = vadd.f32 %v7882, %v8227
      %v8417 = vadd.f32 %v7883, %v8230
      %v8418 = vadd.f32 %v7884, %v8233
      %v8419 = vadd.f32 %v7885, %v8236
      %v8420 = vadd.f32 %v7886, %v8239
      %v8421 = vadd.f32 %v7887, %v8242
      %v8422 = vadd.f32 %v7888, %v8245
      %v8423 = vadd.f32 %v7889, %v8248
      %v8424 = vadd.f32 %v7890, %v8251
      %v8425 = vadd.f32 %v7891, %v8254
      %v8426 = vadd.f32 %v7892, %v8257
      %v8427 = vadd.f32 %v7893, %v8260
      %v8428 = vadd.f32 %v7894, %v8263
      %v8429 = vadd.f32 %v7895, %v8266
      %v8430 = vadd.f32 %v7896, %v8269
      %v8431 = vadd.f32 %v7897, %v8272
      %v8432 = vadd.f32 %v7898, %v8275
      %v8433 = vadd.f32 %v7899, %v8278
      %v8434 = vadd.f32 %v7900, %v8281
      %v8435 = vadd.f32 %v7901, %v8284
      %v8436 = vadd.f32 %v7902, %v8287
      %v8437 = vadd.f32 %v7903, %v8290
      %v8438 = vadd.f32 %v7904, %v8293
      %v8439 = vadd.f32 %v7905, %v8296
      %v8440 = vadd.f32 %v7906, %v8299
      %v8441 = vadd.f32 %v7907, %v8302
      %v8442 = vadd.f32 %v7908, %v8305
      %v8443 = vadd.f32 %v7909, %v8308
      %v8444 = vadd.f32 %v7910, %v8311
      %v8445 = vadd.f32 %v7911, %v8314
      %v8446 = vadd.f32 %v7912, %v8317
      %v8447 = vadd.f32 %v7913, %v8320
      %v8448 = vadd.f32 %v7914, %v8323
      %v8449 = vadd.f32 %v7915, %v8326
      %v8450 = vadd.f32 %v7916, %v8329
      %v8451 = vadd.f32 %v7917, %v8332
      %v8452 = vadd.f32 %v7918, %v8335
      %v8453 = vadd.f32 %v7919, %v8338
      %v8454 = vadd.f32 %v7920, %v8341
      %v8455 = vadd.f32 %v7921, %v8344
      %v8456 = vadd.f32 %v7922, %v8347
      %v8457 = vadd.f32 %v7923, %v8350
      %v8458 = vadd.f32 %v7924, %v8353
      %v8459 = vadd.f32 %v7925, %v8356
      %v8460 = vadd.f32 %v7926, %v8359
      %v8461 = vadd.f32 %v7927, %v8362
      %v8462 = vadd.f32 %v7928, %v8365
      %v8463 = vadd.f32 %v7929, %v8368
      %v8464 = vadd.f32 %v7930, %v8371
      %v8465 = vadd.f32 %v7931, %v8374
      %v8466 = vadd.f32 %v7932, %v8377
      %v8467 = vadd.f32 %v7933, %v8380
      %v8468 = vadd.f32 %v7934, %v8383
      %v8469 = vadd.f32 %v7935, %v8386
      %v8470 = vadd.f32 %v7936, %v8389
      %v8471 = vadd.f32 %v7937, %v8392
      %v8472 = vadd.f32 %v7938, %v8395
      %v8473 = vadd.f32 %v7939, %v8398
      %v8474 = vadd.f32 %v7940, %v8401
      %v8475 = vadd.f32 %v7941, %v8404
      %v8476 = vadd.f32 %v7942, %v8407
      %v8477 = vadd.f32 %v7943, %v8410
      %v8478 = vadd.f32 %v7944, %v8413
      %s8479 = scalar_lea.vmem [#allocation2], 48
      %v8480 = vld [vmem:[%s8479] sm:$0xff]
      %v8481 = vld [vmem:[%s8479 + $0x8] sm:$0xff]
      %v8482 = vld [vmem:[%s8479 + $0x18] sm:$0xff]
      %v8483 = vld [vmem:[%s8479 + $0x20] sm:$0xff]
      %v8484 = vld [vmem:[%s8479 + $0x30] sm:$0xff]
      %v8485 = vld [vmem:[%s8479 + $0x38] sm:$0xff]
      %v8486 = vld [vmem:[%s8479 + $0x48] sm:$0xff]
      %v8487 = vld [vmem:[%s8479 + $0x50] sm:$0xff]
      %v8488 = vld [vmem:[%s8479 + $0x60] sm:$0xff]
      %v8489 = vld [vmem:[%s8479 + $0x68] sm:$0xff]
      %v8490 = vld [vmem:[%s8479 + $0x78] sm:$0xff]
      %v8491 = vld [vmem:[%s8479 + $0x80] sm:$0xff]
      %v8492 = vld [vmem:[%s8479 + $0x90] sm:$0xff]
      %v8493 = vld [vmem:[%s8479 + $0x98] sm:$0xff]
      %v8494 = vld [vmem:[%s8479 + $0xa8] sm:$0xff]
      %v8495 = vld [vmem:[%s8479 + $0xb0] sm:$0xff]
      %v8496 = vld [vmem:[%s8479 + $0xc0] sm:$0xff]
      %v8497 = vld [vmem:[%s8479 + $0xc8] sm:$0xff]
      %v8498 = vld [vmem:[%s8479 + $0xd8] sm:$0xff]
      %v8499 = vld [vmem:[%s8479 + $0xe0] sm:$0xff]
      %v8500 = vld [vmem:[%s8479 + $0xf0] sm:$0xff]
      %v8501 = vld [vmem:[%s8479 + $0xf8] sm:$0xff]
      %v8502 = vld [vmem:[%s8479 + $0x108] sm:$0xff]
      %v8503 = vld [vmem:[%s8479 + $0x110] sm:$0xff]
      %v8504 = vld [vmem:[%s8479 + $0x120] sm:$0xff]
      %v8505 = vld [vmem:[%s8479 + $0x128] sm:$0xff]
      %v8506 = vld [vmem:[%s8479 + $0x138] sm:$0xff]
      %v8507 = vld [vmem:[%s8479 + $0x140] sm:$0xff]
      %v8508 = vld [vmem:[%s8479 + $0x150] sm:$0xff]
      %v8509 = vld [vmem:[%s8479 + $0x158] sm:$0xff]
      %v8510 = vld [vmem:[%s8479 + $0x168] sm:$0xff]
      %v8511 = vld [vmem:[%s8479 + $0x170] sm:$0xff]
      %v8512 = vld [vmem:[%s8479 + $0x1b0] sm:$0xff]
      %v8513 = vld [vmem:[%s8479 + $0x1b8] sm:$0xff]
      %v8514 = vld [vmem:[%s8479 + $0x1c8] sm:$0xff]
      %v8515 = vld [vmem:[%s8479 + $0x1d0] sm:$0xff]
      %v8516 = vld [vmem:[%s8479 + $0x1e0] sm:$0xff]
      %v8517 = vld [vmem:[%s8479 + $0x1e8] sm:$0xff]
      %v8518 = vld [vmem:[%s8479 + $0x1f8] sm:$0xff]
      %v8519 = vld [vmem:[%s8479 + $0x200] sm:$0xff]
      %v8520 = vld [vmem:[%s8479 + $0x210] sm:$0xff]
      %v8521 = vld [vmem:[%s8479 + $0x218] sm:$0xff]
      %v8522 = vld [vmem:[%s8479 + $0x228] sm:$0xff]
      %v8523 = vld [vmem:[%s8479 + $0x230] sm:$0xff]
      %v8524 = vld [vmem:[%s8479 + $0x240] sm:$0xff]
      %v8525 = vld [vmem:[%s8479 + $0x248] sm:$0xff]
      %v8526 = vld [vmem:[%s8479 + $0x258] sm:$0xff]
      %v8527 = vld [vmem:[%s8479 + $0x260] sm:$0xff]
      %v8528 = vld [vmem:[%s8479 + $0x270] sm:$0xff]
      %v8529 = vld [vmem:[%s8479 + $0x278] sm:$0xff]
      %v8530 = vld [vmem:[%s8479 + $0x288] sm:$0xff]
      %v8531 = vld [vmem:[%s8479 + $0x290] sm:$0xff]
      %v8532 = vld [vmem:[%s8479 + $0x2a0] sm:$0xff]
      %v8533 = vld [vmem:[%s8479 + $0x2a8] sm:$0xff]
      %v8534 = vld [vmem:[%s8479 + $0x2b8] sm:$0xff]
      %v8535 = vld [vmem:[%s8479 + $0x2c0] sm:$0xff]
      %v8536 = vld [vmem:[%s8479 + $0x2d0] sm:$0xff]
      %v8537 = vld [vmem:[%s8479 + $0x2d8] sm:$0xff]
      %v8538 = vld [vmem:[%s8479 + $0x2e8] sm:$0xff]
      %v8539 = vld [vmem:[%s8479 + $0x2f0] sm:$0xff]
      %v8540 = vld [vmem:[%s8479 + $0x300] sm:$0xff]
      %v8541 = vld [vmem:[%s8479 + $0x308] sm:$0xff]
      %v8542 = vld [vmem:[%s8479 + $0x318] sm:$0xff]
      %v8543 = vld [vmem:[%s8479 + $0x320] sm:$0xff]
      %s8544 = scalar_lea.vmem %s2, 24
      %v8545 = vld [vmem:[%s8544] sm:$0xf]
      %v8547 = vsel %vm494, %v8480, 0
      %v8550 = vsel %vm494, %v8481, 0
      %v8553 = vsel %vm494, %v8482, 0
      %v8556 = vsel %vm494, %v8483, 0
      %v8559 = vsel %vm494, %v8484, 0
      %v8562 = vsel %vm494, %v8485, 0
      %v8565 = vsel %vm494, %v8486, 0
      %v8568 = vsel %vm494, %v8487, 0
      %v8571 = vsel %vm494, %v8488, 0
      %v8574 = vsel %vm494, %v8489, 0
      %v8577 = vsel %vm494, %v8490, 0
      %v8580 = vsel %vm494, %v8491, 0
      %v8583 = vsel %vm494, %v8492, 0
      %v8586 = vsel %vm494, %v8493, 0
      %v8589 = vsel %vm494, %v8494, 0
      %v8592 = vsel %vm494, %v8495, 0
      %v8595 = vsel %vm494, %v8496, 0
      %v8598 = vsel %vm494, %v8497, 0
      %v8601 = vsel %vm494, %v8498, 0
      %v8604 = vsel %vm494, %v8499, 0
      %v8607 = vsel %vm494, %v8500, 0
      %v8610 = vsel %vm494, %v8501, 0
      %v8613 = vsel %vm494, %v8502, 0
      %v8616 = vsel %vm494, %v8503, 0
      %v8619 = vsel %vm494, %v8504, 0
      %v8622 = vsel %vm494, %v8505, 0
      %v8625 = vsel %vm494, %v8506, 0
      %v8628 = vsel %vm494, %v8507, 0
      %v8631 = vsel %vm494, %v8508, 0
      %v8634 = vsel %vm494, %v8509, 0
      %v8637 = vsel %vm494, %v8510, 0
      %v8640 = vsel %vm494, %v8511, 0
      %v8643 = vsel %vm494, %v8512, 0
      %v8646 = vsel %vm494, %v8513, 0
      %v8649 = vsel %vm494, %v8514, 0
      %v8652 = vsel %vm494, %v8515, 0
      %v8655 = vsel %vm494, %v8516, 0
      %v8658 = vsel %vm494, %v8517, 0
      %v8661 = vsel %vm494, %v8518, 0
      %v8664 = vsel %vm494, %v8519, 0
      %v8667 = vsel %vm494, %v8520, 0
      %v8670 = vsel %vm494, %v8521, 0
      %v8673 = vsel %vm494, %v8522, 0
      %v8676 = vsel %vm494, %v8523, 0
      %v8679 = vsel %vm494, %v8524, 0
      %v8682 = vsel %vm494, %v8525, 0
      %v8685 = vsel %vm494, %v8526, 0
      %v8688 = vsel %vm494, %v8527, 0
      %v8691 = vsel %vm494, %v8528, 0
      %v8694 = vsel %vm494, %v8529, 0
      %v8697 = vsel %vm494, %v8530, 0
      %v8700 = vsel %vm494, %v8531, 0
      %v8703 = vsel %vm494, %v8532, 0
      %v8706 = vsel %vm494, %v8533, 0
      %v8709 = vsel %vm494, %v8534, 0
      %v8712 = vsel %vm494, %v8535, 0
      %v8715 = vsel %vm494, %v8536, 0
      %v8718 = vsel %vm494, %v8537, 0
      %v8721 = vsel %vm494, %v8538, 0
      %v8724 = vsel %vm494, %v8539, 0
      %v8727 = vsel %vm494, %v8540, 0
      %v8730 = vsel %vm494, %v8541, 0
      %v8733 = vsel %vm494, %v8542, 0
      %v8736 = vsel %vm494, %v8543, 0
      %v8739 = vsel %vm687, %v8545, 0
      %8741 = vmatpush.msra.mxu0 0.0
      %8742 = vmatpush.msra.mxu0 0.0
      %8743 = vmatpush.msra.mxu0 0.0
      %8744 = vmatpush.msra.mxu0 0.0
      %8745 = vmatpush.msra.mxu0 0.0
      %8746 = vmatpush.msra.mxu0 0.0
      %8747 = vmatpush.msra.mxu0 0.0
      %8748 = vmatpush.msra.mxu0 0.0
      %8749 = vmatpush.msra.mxu0 0.0
      %8750 = vmatpush.msra.mxu0 0.0
      %8751 = vmatpush.msra.mxu0 0.0
      %8752 = vmatpush.msra.mxu0 0.0
      %8753 = vmatpush.msra.mxu0 0.0
      %8754 = vmatpush.msra.mxu0 0.0
      %8755 = vmatpush.msra.mxu0 0.0
      %8756 = vmatpush.msra.mxu0 %v8739
      %8757 = vmatmul.f32.gmra.mxu0 %v8547
      %v8758 = vpop.f32.mrf.mxu0
      %v8759 = vadd.f32 0.0, %v8758
      %8760 = vmatmul.f32.gmra.mxu0 %v8550
      %v8761 = vpop.f32.mrf.mxu0
      %v8762 = vadd.f32 0.0, %v8761
      %8763 = vmatmul.f32.gmra.mxu0 %v8553
      %v8764 = vpop.f32.mrf.mxu0
      %v8765 = vadd.f32 0.0, %v8764
      %8766 = vmatmul.f32.gmra.mxu0 %v8556
      %v8767 = vpop.f32.mrf.mxu0
      %v8768 = vadd.f32 0.0, %v8767
      %8769 = vmatmul.f32.gmra.mxu0 %v8559
      %v8770 = vpop.f32.mrf.mxu0
      %v8771 = vadd.f32 0.0, %v8770
      %8772 = vmatmul.f32.gmra.mxu0 %v8562
      %v8773 = vpop.f32.mrf.mxu0
      %v8774 = vadd.f32 0.0, %v8773
      %8775 = vmatmul.f32.gmra.mxu0 %v8565
      %v8776 = vpop.f32.mrf.mxu0
      %v8777 = vadd.f32 0.0, %v8776
      %8778 = vmatmul.f32.gmra.mxu0 %v8568
      %v8779 = vpop.f32.mrf.mxu0
      %v8780 = vadd.f32 0.0, %v8779
      %8781 = vmatmul.f32.gmra.mxu0 %v8571
      %v8782 = vpop.f32.mrf.mxu0
      %v8783 = vadd.f32 0.0, %v8782
      %8784 = vmatmul.f32.gmra.mxu0 %v8574
      %v8785 = vpop.f32.mrf.mxu0
      %v8786 = vadd.f32 0.0, %v8785
      %8787 = vmatmul.f32.gmra.mxu0 %v8577
      %v8788 = vpop.f32.mrf.mxu0
      %v8789 = vadd.f32 0.0, %v8788
      %8790 = vmatmul.f32.gmra.mxu0 %v8580
      %v8791 = vpop.f32.mrf.mxu0
      %v8792 = vadd.f32 0.0, %v8791
      %8793 = vmatmul.f32.gmra.mxu0 %v8583
      %v8794 = vpop.f32.mrf.mxu0
      %v8795 = vadd.f32 0.0, %v8794
      %8796 = vmatmul.f32.gmra.mxu0 %v8586
      %v8797 = vpop.f32.mrf.mxu0
      %v8798 = vadd.f32 0.0, %v8797
      %8799 = vmatmul.f32.gmra.mxu0 %v8589
      %v8800 = vpop.f32.mrf.mxu0
      %v8801 = vadd.f32 0.0, %v8800
      %8802 = vmatmul.f32.gmra.mxu0 %v8592
      %v8803 = vpop.f32.mrf.mxu0
      %v8804 = vadd.f32 0.0, %v8803
      %8805 = vmatmul.f32.gmra.mxu0 %v8595
      %v8806 = vpop.f32.mrf.mxu0
      %v8807 = vadd.f32 0.0, %v8806
      %8808 = vmatmul.f32.gmra.mxu0 %v8598
      %v8809 = vpop.f32.mrf.mxu0
      %v8810 = vadd.f32 0.0, %v8809
      %8811 = vmatmul.f32.gmra.mxu0 %v8601
      %v8812 = vpop.f32.mrf.mxu0
      %v8813 = vadd.f32 0.0, %v8812
      %8814 = vmatmul.f32.gmra.mxu0 %v8604
      %v8815 = vpop.f32.mrf.mxu0
      %v8816 = vadd.f32 0.0, %v8815
      %8817 = vmatmul.f32.gmra.mxu0 %v8607
      %v8818 = vpop.f32.mrf.mxu0
      %v8819 = vadd.f32 0.0, %v8818
      %8820 = vmatmul.f32.gmra.mxu0 %v8610
      %v8821 = vpop.f32.mrf.mxu0
      %v8822 = vadd.f32 0.0, %v8821
      %8823 = vmatmul.f32.gmra.mxu0 %v8613
      %v8824 = vpop.f32.mrf.mxu0
      %v8825 = vadd.f32 0.0, %v8824
      %8826 = vmatmul.f32.gmra.mxu0 %v8616
      %v8827 = vpop.f32.mrf.mxu0
      %v8828 = vadd.f32 0.0, %v8827
      %8829 = vmatmul.f32.gmra.mxu0 %v8619
      %v8830 = vpop.f32.mrf.mxu0
      %v8831 = vadd.f32 0.0, %v8830
      %8832 = vmatmul.f32.gmra.mxu0 %v8622
      %v8833 = vpop.f32.mrf.mxu0
      %v8834 = vadd.f32 0.0, %v8833
      %8835 = vmatmul.f32.gmra.mxu0 %v8625
      %v8836 = vpop.f32.mrf.mxu0
      %v8837 = vadd.f32 0.0, %v8836
      %8838 = vmatmul.f32.gmra.mxu0 %v8628
      %v8839 = vpop.f32.mrf.mxu0
      %v8840 = vadd.f32 0.0, %v8839
      %8841 = vmatmul.f32.gmra.mxu0 %v8631
      %v8842 = vpop.f32.mrf.mxu0
      %v8843 = vadd.f32 0.0, %v8842
      %8844 = vmatmul.f32.gmra.mxu0 %v8634
      %v8845 = vpop.f32.mrf.mxu0
      %v8846 = vadd.f32 0.0, %v8845
      %8847 = vmatmul.f32.gmra.mxu0 %v8637
      %v8848 = vpop.f32.mrf.mxu0
      %v8849 = vadd.f32 0.0, %v8848
      %8850 = vmatmul.f32.gmra.mxu0 %v8640
      %v8851 = vpop.f32.mrf.mxu0
      %v8852 = vadd.f32 0.0, %v8851
      %8853 = vmatmul.f32.gmra.mxu0 %v8643
      %v8854 = vpop.f32.mrf.mxu0
      %v8855 = vadd.f32 0.0, %v8854
      %8856 = vmatmul.f32.gmra.mxu0 %v8646
      %v8857 = vpop.f32.mrf.mxu0
      %v8858 = vadd.f32 0.0, %v8857
      %8859 = vmatmul.f32.gmra.mxu0 %v8649
      %v8860 = vpop.f32.mrf.mxu0
      %v8861 = vadd.f32 0.0, %v8860
      %8862 = vmatmul.f32.gmra.mxu0 %v8652
      %v8863 = vpop.f32.mrf.mxu0
      %v8864 = vadd.f32 0.0, %v8863
      %8865 = vmatmul.f32.gmra.mxu0 %v8655
      %v8866 = vpop.f32.mrf.mxu0
      %v8867 = vadd.f32 0.0, %v8866
      %8868 = vmatmul.f32.gmra.mxu0 %v8658
      %v8869 = vpop.f32.mrf.mxu0
      %v8870 = vadd.f32 0.0, %v8869
      %8871 = vmatmul.f32.gmra.mxu0 %v8661
      %v8872 = vpop.f32.mrf.mxu0
      %v8873 = vadd.f32 0.0, %v8872
      %8874 = vmatmul.f32.gmra.mxu0 %v8664
      %v8875 = vpop.f32.mrf.mxu0
      %v8876 = vadd.f32 0.0, %v8875
      %8877 = vmatmul.f32.gmra.mxu0 %v8667
      %v8878 = vpop.f32.mrf.mxu0
      %v8879 = vadd.f32 0.0, %v8878
      %8880 = vmatmul.f32.gmra.mxu0 %v8670
      %v8881 = vpop.f32.mrf.mxu0
      %v8882 = vadd.f32 0.0, %v8881
      %8883 = vmatmul.f32.gmra.mxu0 %v8673
      %v8884 = vpop.f32.mrf.mxu0
      %v8885 = vadd.f32 0.0, %v8884
      %8886 = vmatmul.f32.gmra.mxu0 %v8676
      %v8887 = vpop.f32.mrf.mxu0
      %v8888 = vadd.f32 0.0, %v8887
      %8889 = vmatmul.f32.gmra.mxu0 %v8679
      %v8890 = vpop.f32.mrf.mxu0
      %v8891 = vadd.f32 0.0, %v8890
      %8892 = vmatmul.f32.gmra.mxu0 %v8682
      %v8893 = vpop.f32.mrf.mxu0
      %v8894 = vadd.f32 0.0, %v8893
      %8895 = vmatmul.f32.gmra.mxu0 %v8685
      %v8896 = vpop.f32.mrf.mxu0
      %v8897 = vadd.f32 0.0, %v8896
      %8898 = vmatmul.f32.gmra.mxu0 %v8688
      %v8899 = vpop.f32.mrf.mxu0
      %v8900 = vadd.f32 0.0, %v8899
      %8901 = vmatmul.f32.gmra.mxu0 %v8691
      %v8902 = vpop.f32.mrf.mxu0
      %v8903 = vadd.f32 0.0, %v8902
      %8904 = vmatmul.f32.gmra.mxu0 %v8694
      %v8905 = vpop.f32.mrf.mxu0
      %v8906 = vadd.f32 0.0, %v8905
      %8907 = vmatmul.f32.gmra.mxu0 %v8697
      %v8908 = vpop.f32.mrf.mxu0
      %v8909 = vadd.f32 0.0, %v8908
      %8910 = vmatmul.f32.gmra.mxu0 %v8700
      %v8911 = vpop.f32.mrf.mxu0
      %v8912 = vadd.f32 0.0, %v8911
      %8913 = vmatmul.f32.gmra.mxu0 %v8703
      %v8914 = vpop.f32.mrf.mxu0
      %v8915 = vadd.f32 0.0, %v8914
      %8916 = vmatmul.f32.gmra.mxu0 %v8706
      %v8917 = vpop.f32.mrf.mxu0
      %v8918 = vadd.f32 0.0, %v8917
      %8919 = vmatmul.f32.gmra.mxu0 %v8709
      %v8920 = vpop.f32.mrf.mxu0
      %v8921 = vadd.f32 0.0, %v8920
      %8922 = vmatmul.f32.gmra.mxu0 %v8712
      %v8923 = vpop.f32.mrf.mxu0
      %v8924 = vadd.f32 0.0, %v8923
      %8925 = vmatmul.f32.gmra.mxu0 %v8715
      %v8926 = vpop.f32.mrf.mxu0
      %v8927 = vadd.f32 0.0, %v8926
      %8928 = vmatmul.f32.gmra.mxu0 %v8718
      %v8929 = vpop.f32.mrf.mxu0
      %v8930 = vadd.f32 0.0, %v8929
      %8931 = vmatmul.f32.gmra.mxu0 %v8721
      %v8932 = vpop.f32.mrf.mxu0
      %v8933 = vadd.f32 0.0, %v8932
      %8934 = vmatmul.f32.gmra.mxu0 %v8724
      %v8935 = vpop.f32.mrf.mxu0
      %v8936 = vadd.f32 0.0, %v8935
      %8937 = vmatmul.f32.gmra.mxu0 %v8727
      %v8938 = vpop.f32.mrf.mxu0
      %v8939 = vadd.f32 0.0, %v8938
      %8940 = vmatmul.f32.gmra.mxu0 %v8730
      %v8941 = vpop.f32.mrf.mxu0
      %v8942 = vadd.f32 0.0, %v8941
      %8943 = vmatmul.f32.gmra.mxu0 %v8733
      %v8944 = vpop.f32.mrf.mxu0
      %v8945 = vadd.f32 0.0, %v8944
      %8946 = vmatmul.f32.gmra.mxu0 %v8736
      %v8947 = vpop.f32.mrf.mxu0
      %v8948 = vadd.f32 0.0, %v8947
      %8949 = vdwg.mxu0
      %v8950 = vadd.f32 %v8415, %v8759
      %v8951 = vadd.f32 %v8416, %v8762
      %v8952 = vadd.f32 %v8417, %v8765
      %v8953 = vadd.f32 %v8418, %v8768
      %v8954 = vadd.f32 %v8419, %v8771
      %v8955 = vadd.f32 %v8420, %v8774
      %v8956 = vadd.f32 %v8421, %v8777
      %v8957 = vadd.f32 %v8422, %v8780
      %v8958 = vadd.f32 %v8423, %v8783
      %v8959 = vadd.f32 %v8424, %v8786
      %v8960 = vadd.f32 %v8425, %v8789
      %v8961 = vadd.f32 %v8426, %v8792
      %v8962 = vadd.f32 %v8427, %v8795
      %v8963 = vadd.f32 %v8428, %v8798
      %v8964 = vadd.f32 %v8429, %v8801
      %v8965 = vadd.f32 %v8430, %v8804
      %v8966 = vadd.f32 %v8431, %v8807
      %v8967 = vadd.f32 %v8432, %v8810
      %v8968 = vadd.f32 %v8433, %v8813
      %v8969 = vadd.f32 %v8434, %v8816
      %v8970 = vadd.f32 %v8435, %v8819
      %v8971 = vadd.f32 %v8436, %v8822
      %v8972 = vadd.f32 %v8437, %v8825
      %v8973 = vadd.f32 %v8438, %v8828
      %v8974 = vadd.f32 %v8439, %v8831
      %v8975 = vadd.f32 %v8440, %v8834
      %v8976 = vadd.f32 %v8441, %v8837
      %v8977 = vadd.f32 %v8442, %v8840
      %v8978 = vadd.f32 %v8443, %v8843
      %v8979 = vadd.f32 %v8444, %v8846
      %v8980 = vadd.f32 %v8445, %v8849
      %v8981 = vadd.f32 %v8446, %v8852
      %v8982 = vadd.f32 %v8447, %v8855
      %v8983 = vadd.f32 %v8448, %v8858
      %v8984 = vadd.f32 %v8449, %v8861
      %v8985 = vadd.f32 %v8450, %v8864
      %v8986 = vadd.f32 %v8451, %v8867
      %v8987 = vadd.f32 %v8452, %v8870
      %v8988 = vadd.f32 %v8453, %v8873
      %v8989 = vadd.f32 %v8454, %v8876
      %v8990 = vadd.f32 %v8455, %v8879
      %v8991 = vadd.f32 %v8456, %v8882
      %v8992 = vadd.f32 %v8457, %v8885
      %v8993 = vadd.f32 %v8458, %v8888
      %v8994 = vadd.f32 %v8459, %v8891
      %v8995 = vadd.f32 %v8460, %v8894
      %v8996 = vadd.f32 %v8461, %v8897
      %v8997 = vadd.f32 %v8462, %v8900
      %v8998 = vadd.f32 %v8463, %v8903
      %v8999 = vadd.f32 %v8464, %v8906
      %v9000 = vadd.f32 %v8465, %v8909
      %v9001 = vadd.f32 %v8466, %v8912
      %v9002 = vadd.f32 %v8467, %v8915
      %v9003 = vadd.f32 %v8468, %v8918
      %v9004 = vadd.f32 %v8469, %v8921
      %v9005 = vadd.f32 %v8470, %v8924
      %v9006 = vadd.f32 %v8471, %v8927
      %v9007 = vadd.f32 %v8472, %v8930
      %v9008 = vadd.f32 %v8473, %v8933
      %v9009 = vadd.f32 %v8474, %v8936
      %v9010 = vadd.f32 %v8475, %v8939
      %v9011 = vadd.f32 %v8476, %v8942
      %v9012 = vadd.f32 %v8477, %v8945
      %v9013 = vadd.f32 %v8478, %v8948
      %v9014 = vld [vmem:[%s8479 + $0x1] sm:$0xff]
      %v9015 = vld [vmem:[%s8479 + $0x9] sm:$0xff]
      %v9016 = vld [vmem:[%s8479 + $0x19] sm:$0xff]
      %v9017 = vld [vmem:[%s8479 + $0x21] sm:$0xff]
      %v9018 = vld [vmem:[%s8479 + $0x31] sm:$0xff]
      %v9019 = vld [vmem:[%s8479 + $0x39] sm:$0xff]
      %v9020 = vld [vmem:[%s8479 + $0x49] sm:$0xff]
      %v9021 = vld [vmem:[%s8479 + $0x51] sm:$0xff]
      %v9022 = vld [vmem:[%s8479 + $0x61] sm:$0xff]
      %v9023 = vld [vmem:[%s8479 + $0x69] sm:$0xff]
      %v9024 = vld [vmem:[%s8479 + $0x79] sm:$0xff]
      %v9025 = vld [vmem:[%s8479 + $0x81] sm:$0xff]
      %v9026 = vld [vmem:[%s8479 + $0x91] sm:$0xff]
      %v9027 = vld [vmem:[%s8479 + $0x99] sm:$0xff]
      %v9028 = vld [vmem:[%s8479 + $0xa9] sm:$0xff]
      %v9029 = vld [vmem:[%s8479 + $0xb1] sm:$0xff]
      %v9030 = vld [vmem:[%s8479 + $0xc1] sm:$0xff]
      %v9031 = vld [vmem:[%s8479 + $0xc9] sm:$0xff]
      %v9032 = vld [vmem:[%s8479 + $0xd9] sm:$0xff]
      %v9033 = vld [vmem:[%s8479 + $0xe1] sm:$0xff]
      %v9034 = vld [vmem:[%s8479 + $0xf1] sm:$0xff]
      %v9035 = vld [vmem:[%s8479 + $0xf9] sm:$0xff]
      %v9036 = vld [vmem:[%s8479 + $0x109] sm:$0xff]
      %v9037 = vld [vmem:[%s8479 + $0x111] sm:$0xff]
      %v9038 = vld [vmem:[%s8479 + $0x121] sm:$0xff]
      %v9039 = vld [vmem:[%s8479 + $0x129] sm:$0xff]
      %v9040 = vld [vmem:[%s8479 + $0x139] sm:$0xff]
      %v9041 = vld [vmem:[%s8479 + $0x141] sm:$0xff]
      %v9042 = vld [vmem:[%s8479 + $0x151] sm:$0xff]
      %v9043 = vld [vmem:[%s8479 + $0x159] sm:$0xff]
      %v9044 = vld [vmem:[%s8479 + $0x169] sm:$0xff]
      %v9045 = vld [vmem:[%s8479 + $0x171] sm:$0xff]
      %v9046 = vld [vmem:[%s8479 + $0x1b1] sm:$0xff]
      %v9047 = vld [vmem:[%s8479 + $0x1b9] sm:$0xff]
      %v9048 = vld [vmem:[%s8479 + $0x1c9] sm:$0xff]
      %v9049 = vld [vmem:[%s8479 + $0x1d1] sm:$0xff]
      %v9050 = vld [vmem:[%s8479 + $0x1e1] sm:$0xff]
      %v9051 = vld [vmem:[%s8479 + $0x1e9] sm:$0xff]
      %v9052 = vld [vmem:[%s8479 + $0x1f9] sm:$0xff]
      %v9053 = vld [vmem:[%s8479 + $0x201] sm:$0xff]
      %v9054 = vld [vmem:[%s8479 + $0x211] sm:$0xff]
      %v9055 = vld [vmem:[%s8479 + $0x219] sm:$0xff]
      %v9056 = vld [vmem:[%s8479 + $0x229] sm:$0xff]
      %v9057 = vld [vmem:[%s8479 + $0x231] sm:$0xff]
      %v9058 = vld [vmem:[%s8479 + $0x241] sm:$0xff]
      %v9059 = vld [vmem:[%s8479 + $0x249] sm:$0xff]
      %v9060 = vld [vmem:[%s8479 + $0x259] sm:$0xff]
      %v9061 = vld [vmem:[%s8479 + $0x261] sm:$0xff]
      %v9062 = vld [vmem:[%s8479 + $0x271] sm:$0xff]
      %v9063 = vld [vmem:[%s8479 + $0x279] sm:$0xff]
      %v9064 = vld [vmem:[%s8479 + $0x289] sm:$0xff]
      %v9065 = vld [vmem:[%s8479 + $0x291] sm:$0xff]
      %v9066 = vld [vmem:[%s8479 + $0x2a1] sm:$0xff]
      %v9067 = vld [vmem:[%s8479 + $0x2a9] sm:$0xff]
      %v9068 = vld [vmem:[%s8479 + $0x2b9] sm:$0xff]
      %v9069 = vld [vmem:[%s8479 + $0x2c1] sm:$0xff]
      %v9070 = vld [vmem:[%s8479 + $0x2d1] sm:$0xff]
      %v9071 = vld [vmem:[%s8479 + $0x2d9] sm:$0xff]
      %v9072 = vld [vmem:[%s8479 + $0x2e9] sm:$0xff]
      %v9073 = vld [vmem:[%s8479 + $0x2f1] sm:$0xff]
      %v9074 = vld [vmem:[%s8479 + $0x301] sm:$0xff]
      %v9075 = vld [vmem:[%s8479 + $0x309] sm:$0xff]
      %v9076 = vld [vmem:[%s8479 + $0x319] sm:$0xff]
      %v9077 = vld [vmem:[%s8479 + $0x321] sm:$0xff]
      %s9078 = scalar_lea.vmem %s2, 28
      %v9079 = vld [vmem:[%s9078] sm:$0xf]
      %v9081 = vsel %vm494, %v9014, 0
      %v9084 = vsel %vm494, %v9015, 0
      %v9087 = vsel %vm494, %v9016, 0
      %v9090 = vsel %vm494, %v9017, 0
      %v9093 = vsel %vm494, %v9018, 0
      %v9096 = vsel %vm494, %v9019, 0
      %v9099 = vsel %vm494, %v9020, 0
      %v9102 = vsel %vm494, %v9021, 0
      %v9105 = vsel %vm494, %v9022, 0
      %v9108 = vsel %vm494, %v9023, 0
      %v9111 = vsel %vm494, %v9024, 0
      %v9114 = vsel %vm494, %v9025, 0
      %v9117 = vsel %vm494, %v9026, 0
      %v9120 = vsel %vm494, %v9027, 0
      %v9123 = vsel %vm494, %v9028, 0
      %v9126 = vsel %vm494, %v9029, 0
      %v9129 = vsel %vm494, %v9030, 0
      %v9132 = vsel %vm494, %v9031, 0
      %v9135 = vsel %vm494, %v9032, 0
      %v9138 = vsel %vm494, %v9033, 0
      %v9141 = vsel %vm494, %v9034, 0
      %v9144 = vsel %vm494, %v9035, 0
      %v9147 = vsel %vm494, %v9036, 0
      %v9150 = vsel %vm494, %v9037, 0
      %v9153 = vsel %vm494, %v9038, 0
      %v9156 = vsel %vm494, %v9039, 0
      %v9159 = vsel %vm494, %v9040, 0
      %v9162 = vsel %vm494, %v9041, 0
      %v9165 = vsel %vm494, %v9042, 0
      %v9168 = vsel %vm494, %v9043, 0
      %v9171 = vsel %vm494, %v9044, 0
      %v9174 = vsel %vm494, %v9045, 0
      %v9177 = vsel %vm494, %v9046, 0
      %v9180 = vsel %vm494, %v9047, 0
      %v9183 = vsel %vm494, %v9048, 0
      %v9186 = vsel %vm494, %v9049, 0
      %v9189 = vsel %vm494, %v9050, 0
      %v9192 = vsel %vm494, %v9051, 0
      %v9195 = vsel %vm494, %v9052, 0
      %v9198 = vsel %vm494, %v9053, 0
      %v9201 = vsel %vm494, %v9054, 0
      %v9204 = vsel %vm494, %v9055, 0
      %v9207 = vsel %vm494, %v9056, 0
      %v9210 = vsel %vm494, %v9057, 0
      %v9213 = vsel %vm494, %v9058, 0
      %v9216 = vsel %vm494, %v9059, 0
      %v9219 = vsel %vm494, %v9060, 0
      %v9222 = vsel %vm494, %v9061, 0
      %v9225 = vsel %vm494, %v9062, 0
      %v9228 = vsel %vm494, %v9063, 0
      %v9231 = vsel %vm494, %v9064, 0
      %v9234 = vsel %vm494, %v9065, 0
      %v9237 = vsel %vm494, %v9066, 0
      %v9240 = vsel %vm494, %v9067, 0
      %v9243 = vsel %vm494, %v9068, 0
      %v9246 = vsel %vm494, %v9069, 0
      %v9249 = vsel %vm494, %v9070, 0
      %v9252 = vsel %vm494, %v9071, 0
      %v9255 = vsel %vm494, %v9072, 0
      %v9258 = vsel %vm494, %v9073, 0
      %v9261 = vsel %vm494, %v9074, 0
      %v9264 = vsel %vm494, %v9075, 0
      %v9267 = vsel %vm494, %v9076, 0
      %v9270 = vsel %vm494, %v9077, 0
      %v9273 = vsel %vm687, %v9079, 0
      %9275 = vmatpush.msra.mxu0 0.0
      %9276 = vmatpush.msra.mxu0 0.0
      %9277 = vmatpush.msra.mxu0 0.0
      %9278 = vmatpush.msra.mxu0 0.0
      %9279 = vmatpush.msra.mxu0 0.0
      %9280 = vmatpush.msra.mxu0 0.0
      %9281 = vmatpush.msra.mxu0 0.0
      %9282 = vmatpush.msra.mxu0 0.0
      %9283 = vmatpush.msra.mxu0 0.0
      %9284 = vmatpush.msra.mxu0 0.0
      %9285 = vmatpush.msra.mxu0 0.0
      %9286 = vmatpush.msra.mxu0 0.0
      %9287 = vmatpush.msra.mxu0 0.0
      %9288 = vmatpush.msra.mxu0 0.0
      %9289 = vmatpush.msra.mxu0 0.0
      %9290 = vmatpush.msra.mxu0 %v9273
      %9291 = vmatmul.f32.gmra.mxu0 %v9081
      %v9292 = vpop.f32.mrf.mxu0
      %v9293 = vadd.f32 0.0, %v9292
      %9294 = vmatmul.f32.gmra.mxu0 %v9084
      %v9295 = vpop.f32.mrf.mxu0
      %v9296 = vadd.f32 0.0, %v9295
      %9297 = vmatmul.f32.gmra.mxu0 %v9087
      %v9298 = vpop.f32.mrf.mxu0
      %v9299 = vadd.f32 0.0, %v9298
      %9300 = vmatmul.f32.gmra.mxu0 %v9090
      %v9301 = vpop.f32.mrf.mxu0
      %v9302 = vadd.f32 0.0, %v9301
      %9303 = vmatmul.f32.gmra.mxu0 %v9093
      %v9304 = vpop.f32.mrf.mxu0
      %v9305 = vadd.f32 0.0, %v9304
      %9306 = vmatmul.f32.gmra.mxu0 %v9096
      %v9307 = vpop.f32.mrf.mxu0
      %v9308 = vadd.f32 0.0, %v9307
      %9309 = vmatmul.f32.gmra.mxu0 %v9099
      %v9310 = vpop.f32.mrf.mxu0
      %v9311 = vadd.f32 0.0, %v9310
      %9312 = vmatmul.f32.gmra.mxu0 %v9102
      %v9313 = vpop.f32.mrf.mxu0
      %v9314 = vadd.f32 0.0, %v9313
      %9315 = vmatmul.f32.gmra.mxu0 %v9105
      %v9316 = vpop.f32.mrf.mxu0
      %v9317 = vadd.f32 0.0, %v9316
      %9318 = vmatmul.f32.gmra.mxu0 %v9108
      %v9319 = vpop.f32.mrf.mxu0
      %v9320 = vadd.f32 0.0, %v9319
      %9321 = vmatmul.f32.gmra.mxu0 %v9111
      %v9322 = vpop.f32.mrf.mxu0
      %v9323 = vadd.f32 0.0, %v9322
      %9324 = vmatmul.f32.gmra.mxu0 %v9114
      %v9325 = vpop.f32.mrf.mxu0
      %v9326 = vadd.f32 0.0, %v9325
      %9327 = vmatmul.f32.gmra.mxu0 %v9117
      %v9328 = vpop.f32.mrf.mxu0
      %v9329 = vadd.f32 0.0, %v9328
      %9330 = vmatmul.f32.gmra.mxu0 %v9120
      %v9331 = vpop.f32.mrf.mxu0
      %v9332 = vadd.f32 0.0, %v9331
      %9333 = vmatmul.f32.gmra.mxu0 %v9123
      %v9334 = vpop.f32.mrf.mxu0
      %v9335 = vadd.f32 0.0, %v9334
      %9336 = vmatmul.f32.gmra.mxu0 %v9126
      %v9337 = vpop.f32.mrf.mxu0
      %v9338 = vadd.f32 0.0, %v9337
      %9339 = vmatmul.f32.gmra.mxu0 %v9129
      %v9340 = vpop.f32.mrf.mxu0
      %v9341 = vadd.f32 0.0, %v9340
      %9342 = vmatmul.f32.gmra.mxu0 %v9132
      %v9343 = vpop.f32.mrf.mxu0
      %v9344 = vadd.f32 0.0, %v9343
      %9345 = vmatmul.f32.gmra.mxu0 %v9135
      %v9346 = vpop.f32.mrf.mxu0
      %v9347 = vadd.f32 0.0, %v9346
      %9348 = vmatmul.f32.gmra.mxu0 %v9138
      %v9349 = vpop.f32.mrf.mxu0
      %v9350 = vadd.f32 0.0, %v9349
      %9351 = vmatmul.f32.gmra.mxu0 %v9141
      %v9352 = vpop.f32.mrf.mxu0
      %v9353 = vadd.f32 0.0, %v9352
      %9354 = vmatmul.f32.gmra.mxu0 %v9144
      %v9355 = vpop.f32.mrf.mxu0
      %v9356 = vadd.f32 0.0, %v9355
      %9357 = vmatmul.f32.gmra.mxu0 %v9147
      %v9358 = vpop.f32.mrf.mxu0
      %v9359 = vadd.f32 0.0, %v9358
      %9360 = vmatmul.f32.gmra.mxu0 %v9150
      %v9361 = vpop.f32.mrf.mxu0
      %v9362 = vadd.f32 0.0, %v9361
      %9363 = vmatmul.f32.gmra.mxu0 %v9153
      %v9364 = vpop.f32.mrf.mxu0
      %v9365 = vadd.f32 0.0, %v9364
      %9366 = vmatmul.f32.gmra.mxu0 %v9156
      %v9367 = vpop.f32.mrf.mxu0
      %v9368 = vadd.f32 0.0, %v9367
      %9369 = vmatmul.f32.gmra.mxu0 %v9159
      %v9370 = vpop.f32.mrf.mxu0
      %v9371 = vadd.f32 0.0, %v9370
      %9372 = vmatmul.f32.gmra.mxu0 %v9162
      %v9373 = vpop.f32.mrf.mxu0
      %v9374 = vadd.f32 0.0, %v9373
      %9375 = vmatmul.f32.gmra.mxu0 %v9165
      %v9376 = vpop.f32.mrf.mxu0
      %v9377 = vadd.f32 0.0, %v9376
      %9378 = vmatmul.f32.gmra.mxu0 %v9168
      %v9379 = vpop.f32.mrf.mxu0
      %v9380 = vadd.f32 0.0, %v9379
      %9381 = vmatmul.f32.gmra.mxu0 %v9171
      %v9382 = vpop.f32.mrf.mxu0
      %v9383 = vadd.f32 0.0, %v9382
      %9384 = vmatmul.f32.gmra.mxu0 %v9174
      %v9385 = vpop.f32.mrf.mxu0
      %v9386 = vadd.f32 0.0, %v9385
      %9387 = vmatmul.f32.gmra.mxu0 %v9177
      %v9388 = vpop.f32.mrf.mxu0
      %v9389 = vadd.f32 0.0, %v9388
      %9390 = vmatmul.f32.gmra.mxu0 %v9180
      %v9391 = vpop.f32.mrf.mxu0
      %v9392 = vadd.f32 0.0, %v9391
      %9393 = vmatmul.f32.gmra.mxu0 %v9183
      %v9394 = vpop.f32.mrf.mxu0
      %v9395 = vadd.f32 0.0, %v9394
      %9396 = vmatmul.f32.gmra.mxu0 %v9186
      %v9397 = vpop.f32.mrf.mxu0
      %v9398 = vadd.f32 0.0, %v9397
      %9399 = vmatmul.f32.gmra.mxu0 %v9189
      %v9400 = vpop.f32.mrf.mxu0
      %v9401 = vadd.f32 0.0, %v9400
      %9402 = vmatmul.f32.gmra.mxu0 %v9192
      %v9403 = vpop.f32.mrf.mxu0
      %v9404 = vadd.f32 0.0, %v9403
      %9405 = vmatmul.f32.gmra.mxu0 %v9195
      %v9406 = vpop.f32.mrf.mxu0
      %v9407 = vadd.f32 0.0, %v9406
      %9408 = vmatmul.f32.gmra.mxu0 %v9198
      %v9409 = vpop.f32.mrf.mxu0
      %v9410 = vadd.f32 0.0, %v9409
      %9411 = vmatmul.f32.gmra.mxu0 %v9201
      %v9412 = vpop.f32.mrf.mxu0
      %v9413 = vadd.f32 0.0, %v9412
      %9414 = vmatmul.f32.gmra.mxu0 %v9204
      %v9415 = vpop.f32.mrf.mxu0
      %v9416 = vadd.f32 0.0, %v9415
      %9417 = vmatmul.f32.gmra.mxu0 %v9207
      %v9418 = vpop.f32.mrf.mxu0
      %v9419 = vadd.f32 0.0, %v9418
      %9420 = vmatmul.f32.gmra.mxu0 %v9210
      %v9421 = vpop.f32.mrf.mxu0
      %v9422 = vadd.f32 0.0, %v9421
      %9423 = vmatmul.f32.gmra.mxu0 %v9213
      %v9424 = vpop.f32.mrf.mxu0
      %v9425 = vadd.f32 0.0, %v9424
      %9426 = vmatmul.f32.gmra.mxu0 %v9216
      %v9427 = vpop.f32.mrf.mxu0
      %v9428 = vadd.f32 0.0, %v9427
      %9429 = vmatmul.f32.gmra.mxu0 %v9219
      %v9430 = vpop.f32.mrf.mxu0
      %v9431 = vadd.f32 0.0, %v9430
      %9432 = vmatmul.f32.gmra.mxu0 %v9222
      %v9433 = vpop.f32.mrf.mxu0
      %v9434 = vadd.f32 0.0, %v9433
      %9435 = vmatmul.f32.gmra.mxu0 %v9225
      %v9436 = vpop.f32.mrf.mxu0
      %v9437 = vadd.f32 0.0, %v9436
      %9438 = vmatmul.f32.gmra.mxu0 %v9228
      %v9439 = vpop.f32.mrf.mxu0
      %v9440 = vadd.f32 0.0, %v9439
      %9441 = vmatmul.f32.gmra.mxu0 %v9231
      %v9442 = vpop.f32.mrf.mxu0
      %v9443 = vadd.f32 0.0, %v9442
      %9444 = vmatmul.f32.gmra.mxu0 %v9234
      %v9445 = vpop.f32.mrf.mxu0
      %v9446 = vadd.f32 0.0, %v9445
      %9447 = vmatmul.f32.gmra.mxu0 %v9237
      %v9448 = vpop.f32.mrf.mxu0
      %v9449 = vadd.f32 0.0, %v9448
      %9450 = vmatmul.f32.gmra.mxu0 %v9240
      %v9451 = vpop.f32.mrf.mxu0
      %v9452 = vadd.f32 0.0, %v9451
      %9453 = vmatmul.f32.gmra.mxu0 %v9243
      %v9454 = vpop.f32.mrf.mxu0
      %v9455 = vadd.f32 0.0, %v9454
      %9456 = vmatmul.f32.gmra.mxu0 %v9246
      %v9457 = vpop.f32.mrf.mxu0
      %v9458 = vadd.f32 0.0, %v9457
      %9459 = vmatmul.f32.gmra.mxu0 %v9249
      %v9460 = vpop.f32.mrf.mxu0
      %v9461 = vadd.f32 0.0, %v9460
      %9462 = vmatmul.f32.gmra.mxu0 %v9252
      %v9463 = vpop.f32.mrf.mxu0
      %v9464 = vadd.f32 0.0, %v9463
      %9465 = vmatmul.f32.gmra.mxu0 %v9255
      %v9466 = vpop.f32.mrf.mxu0
      %v9467 = vadd.f32 0.0, %v9466
      %9468 = vmatmul.f32.gmra.mxu0 %v9258
      %v9469 = vpop.f32.mrf.mxu0
      %v9470 = vadd.f32 0.0, %v9469
      %9471 = vmatmul.f32.gmra.mxu0 %v9261
      %v9472 = vpop.f32.mrf.mxu0
      %v9473 = vadd.f32 0.0, %v9472
      %9474 = vmatmul.f32.gmra.mxu0 %v9264
      %v9475 = vpop.f32.mrf.mxu0
      %v9476 = vadd.f32 0.0, %v9475
      %9477 = vmatmul.f32.gmra.mxu0 %v9267
      %v9478 = vpop.f32.mrf.mxu0
      %v9479 = vadd.f32 0.0, %v9478
      %9480 = vmatmul.f32.gmra.mxu0 %v9270
      %v9481 = vpop.f32.mrf.mxu0
      %v9482 = vadd.f32 0.0, %v9481
      %9483 = vdwg.mxu0
      %v9484 = vadd.f32 %v8950, %v9293
      %v9485 = vadd.f32 %v8951, %v9296
      %v9486 = vadd.f32 %v8952, %v9299
      %v9487 = vadd.f32 %v8953, %v9302
      %v9488 = vadd.f32 %v8954, %v9305
      %v9489 = vadd.f32 %v8955, %v9308
      %v9490 = vadd.f32 %v8956, %v9311
      %v9491 = vadd.f32 %v8957, %v9314
      %v9492 = vadd.f32 %v8958, %v9317
      %v9493 = vadd.f32 %v8959, %v9320
      %v9494 = vadd.f32 %v8960, %v9323
      %v9495 = vadd.f32 %v8961, %v9326
      %v9496 = vadd.f32 %v8962, %v9329
      %v9497 = vadd.f32 %v8963, %v9332
      %v9498 = vadd.f32 %v8964, %v9335
      %v9499 = vadd.f32 %v8965, %v9338
      %v9500 = vadd.f32 %v8966, %v9341
      %v9501 = vadd.f32 %v8967, %v9344
      %v9502 = vadd.f32 %v8968, %v9347
      %v9503 = vadd.f32 %v8969, %v9350
      %v9504 = vadd.f32 %v8970, %v9353
      %v9505 = vadd.f32 %v8971, %v9356
      %v9506 = vadd.f32 %v8972, %v9359
      %v9507 = vadd.f32 %v8973, %v9362
      %v9508 = vadd.f32 %v8974, %v9365
      %v9509 = vadd.f32 %v8975, %v9368
      %v9510 = vadd.f32 %v8976, %v9371
      %v9511 = vadd.f32 %v8977, %v9374
      %v9512 = vadd.f32 %v8978, %v9377
      %v9513 = vadd.f32 %v8979, %v9380
      %v9514 = vadd.f32 %v8980, %v9383
      %v9515 = vadd.f32 %v8981, %v9386
      %v9516 = vadd.f32 %v8982, %v9389
      %v9517 = vadd.f32 %v8983, %v9392
      %v9518 = vadd.f32 %v8984, %v9395
      %v9519 = vadd.f32 %v8985, %v9398
      %v9520 = vadd.f32 %v8986, %v9401
      %v9521 = vadd.f32 %v8987, %v9404
      %v9522 = vadd.f32 %v8988, %v9407
      %v9523 = vadd.f32 %v8989, %v9410
      %v9524 = vadd.f32 %v8990, %v9413
      %v9525 = vadd.f32 %v8991, %v9416
      %v9526 = vadd.f32 %v8992, %v9419
      %v9527 = vadd.f32 %v8993, %v9422
      %v9528 = vadd.f32 %v8994, %v9425
      %v9529 = vadd.f32 %v8995, %v9428
      %v9530 = vadd.f32 %v8996, %v9431
      %v9531 = vadd.f32 %v8997, %v9434
      %v9532 = vadd.f32 %v8998, %v9437
      %v9533 = vadd.f32 %v8999, %v9440
      %v9534 = vadd.f32 %v9000, %v9443
      %v9535 = vadd.f32 %v9001, %v9446
      %v9536 = vadd.f32 %v9002, %v9449
      %v9537 = vadd.f32 %v9003, %v9452
      %v9538 = vadd.f32 %v9004, %v9455
      %v9539 = vadd.f32 %v9005, %v9458
      %v9540 = vadd.f32 %v9006, %v9461
      %v9541 = vadd.f32 %v9007, %v9464
      %v9542 = vadd.f32 %v9008, %v9467
      %v9543 = vadd.f32 %v9009, %v9470
      %v9544 = vadd.f32 %v9010, %v9473
      %v9545 = vadd.f32 %v9011, %v9476
      %v9546 = vadd.f32 %v9012, %v9479
      %v9547 = vadd.f32 %v9013, %v9482
      %v9548 = vld [vmem:[%s8479 + $0x2] sm:$0xff]
      %v9549 = vld [vmem:[%s8479 + $0xa] sm:$0xff]
      %v9550 = vld [vmem:[%s8479 + $0x1a] sm:$0xff]
      %v9551 = vld [vmem:[%s8479 + $0x22] sm:$0xff]
      %v9552 = vld [vmem:[%s8479 + $0x32] sm:$0xff]
      %v9553 = vld [vmem:[%s8479 + $0x3a] sm:$0xff]
      %v9554 = vld [vmem:[%s8479 + $0x4a] sm:$0xff]
      %v9555 = vld [vmem:[%s8479 + $0x52] sm:$0xff]
      %v9556 = vld [vmem:[%s8479 + $0x62] sm:$0xff]
      %v9557 = vld [vmem:[%s8479 + $0x6a] sm:$0xff]
      %v9558 = vld [vmem:[%s8479 + $0x7a] sm:$0xff]
      %v9559 = vld [vmem:[%s8479 + $0x82] sm:$0xff]
      %v9560 = vld [vmem:[%s8479 + $0x92] sm:$0xff]
      %v9561 = vld [vmem:[%s8479 + $0x9a] sm:$0xff]
      %v9562 = vld [vmem:[%s8479 + $0xaa] sm:$0xff]
      %v9563 = vld [vmem:[%s8479 + $0xb2] sm:$0xff]
      %v9564 = vld [vmem:[%s8479 + $0xc2] sm:$0xff]
      %v9565 = vld [vmem:[%s8479 + $0xca] sm:$0xff]
      %v9566 = vld [vmem:[%s8479 + $0xda] sm:$0xff]
      %v9567 = vld [vmem:[%s8479 + $0xe2] sm:$0xff]
      %v9568 = vld [vmem:[%s8479 + $0xf2] sm:$0xff]
      %v9569 = vld [vmem:[%s8479 + $0xfa] sm:$0xff]
      %v9570 = vld [vmem:[%s8479 + $0x10a] sm:$0xff]
      %v9571 = vld [vmem:[%s8479 + $0x112] sm:$0xff]
      %v9572 = vld [vmem:[%s8479 + $0x122] sm:$0xff]
      %v9573 = vld [vmem:[%s8479 + $0x12a] sm:$0xff]
      %v9574 = vld [vmem:[%s8479 + $0x13a] sm:$0xff]
      %v9575 = vld [vmem:[%s8479 + $0x142] sm:$0xff]
      %v9576 = vld [vmem:[%s8479 + $0x152] sm:$0xff]
      %v9577 = vld [vmem:[%s8479 + $0x15a] sm:$0xff]
      %v9578 = vld [vmem:[%s8479 + $0x16a] sm:$0xff]
      %v9579 = vld [vmem:[%s8479 + $0x172] sm:$0xff]
      %v9580 = vld [vmem:[%s8479 + $0x1b2] sm:$0xff]
      %v9581 = vld [vmem:[%s8479 + $0x1ba] sm:$0xff]
      %v9582 = vld [vmem:[%s8479 + $0x1ca] sm:$0xff]
      %v9583 = vld [vmem:[%s8479 + $0x1d2] sm:$0xff]
      %v9584 = vld [vmem:[%s8479 + $0x1e2] sm:$0xff]
      %v9585 = vld [vmem:[%s8479 + $0x1ea] sm:$0xff]
      %v9586 = vld [vmem:[%s8479 + $0x1fa] sm:$0xff]
      %v9587 = vld [vmem:[%s8479 + $0x202] sm:$0xff]
      %v9588 = vld [vmem:[%s8479 + $0x212] sm:$0xff]
      %v9589 = vld [vmem:[%s8479 + $0x21a] sm:$0xff]
      %v9590 = vld [vmem:[%s8479 + $0x22a] sm:$0xff]
      %v9591 = vld [vmem:[%s8479 + $0x232] sm:$0xff]
      %v9592 = vld [vmem:[%s8479 + $0x242] sm:$0xff]
      %v9593 = vld [vmem:[%s8479 + $0x24a] sm:$0xff]
      %v9594 = vld [vmem:[%s8479 + $0x25a] sm:$0xff]
      %v9595 = vld [vmem:[%s8479 + $0x262] sm:$0xff]
      %v9596 = vld [vmem:[%s8479 + $0x272] sm:$0xff]
      %v9597 = vld [vmem:[%s8479 + $0x27a] sm:$0xff]
      %v9598 = vld [vmem:[%s8479 + $0x28a] sm:$0xff]
      %v9599 = vld [vmem:[%s8479 + $0x292] sm:$0xff]
      %v9600 = vld [vmem:[%s8479 + $0x2a2] sm:$0xff]
      %v9601 = vld [vmem:[%s8479 + $0x2aa] sm:$0xff]
      %v9602 = vld [vmem:[%s8479 + $0x2ba] sm:$0xff]
      %v9603 = vld [vmem:[%s8479 + $0x2c2] sm:$0xff]
      %v9604 = vld [vmem:[%s8479 + $0x2d2] sm:$0xff]
      %v9605 = vld [vmem:[%s8479 + $0x2da] sm:$0xff]
      %v9606 = vld [vmem:[%s8479 + $0x2ea] sm:$0xff]
      %v9607 = vld [vmem:[%s8479 + $0x2f2] sm:$0xff]
      %v9608 = vld [vmem:[%s8479 + $0x302] sm:$0xff]
      %v9609 = vld [vmem:[%s8479 + $0x30a] sm:$0xff]
      %v9610 = vld [vmem:[%s8479 + $0x31a] sm:$0xff]
      %v9611 = vld [vmem:[%s8479 + $0x322] sm:$0xff]
      %s9612 = scalar_lea.vmem %s2, 32
      %v9613 = vld [vmem:[%s9612] sm:$0xf]
      %v9615 = vsel %vm494, %v9548, 0
      %v9618 = vsel %vm494, %v9549, 0
      %v9621 = vsel %vm494, %v9550, 0
      %v9624 = vsel %vm494, %v9551, 0
      %v9627 = vsel %vm494, %v9552, 0
      %v9630 = vsel %vm494, %v9553, 0
      %v9633 = vsel %vm494, %v9554, 0
      %v9636 = vsel %vm494, %v9555, 0
      %v9639 = vsel %vm494, %v9556, 0
      %v9642 = vsel %vm494, %v9557, 0
      %v9645 = vsel %vm494, %v9558, 0
      %v9648 = vsel %vm494, %v9559, 0
      %v9651 = vsel %vm494, %v9560, 0
      %v9654 = vsel %vm494, %v9561, 0
      %v9657 = vsel %vm494, %v9562, 0
      %v9660 = vsel %vm494, %v9563, 0
      %v9663 = vsel %vm494, %v9564, 0
      %v9666 = vsel %vm494, %v9565, 0
      %v9669 = vsel %vm494, %v9566, 0
      %v9672 = vsel %vm494, %v9567, 0
      %v9675 = vsel %vm494, %v9568, 0
      %v9678 = vsel %vm494, %v9569, 0
      %v9681 = vsel %vm494, %v9570, 0
      %v9684 = vsel %vm494, %v9571, 0
      %v9687 = vsel %vm494, %v9572, 0
      %v9690 = vsel %vm494, %v9573, 0
      %v9693 = vsel %vm494, %v9574, 0
      %v9696 = vsel %vm494, %v9575, 0
      %v9699 = vsel %vm494, %v9576, 0
      %v9702 = vsel %vm494, %v9577, 0
      %v9705 = vsel %vm494, %v9578, 0
      %v9708 = vsel %vm494, %v9579, 0
      %v9711 = vsel %vm494, %v9580, 0
      %v9714 = vsel %vm494, %v9581, 0
      %v9717 = vsel %vm494, %v9582, 0
      %v9720 = vsel %vm494, %v9583, 0
      %v9723 = vsel %vm494, %v9584, 0
      %v9726 = vsel %vm494, %v9585, 0
      %v9729 = vsel %vm494, %v9586, 0
      %v9732 = vsel %vm494, %v9587, 0
      %v9735 = vsel %vm494, %v9588, 0
      %v9738 = vsel %vm494, %v9589, 0
      %v9741 = vsel %vm494, %v9590, 0
      %v9744 = vsel %vm494, %v9591, 0
      %v9747 = vsel %vm494, %v9592, 0
      %v9750 = vsel %vm494, %v9593, 0
      %v9753 = vsel %vm494, %v9594, 0
      %v9756 = vsel %vm494, %v9595, 0
      %v9759 = vsel %vm494, %v9596, 0
      %v9762 = vsel %vm494, %v9597, 0
      %v9765 = vsel %vm494, %v9598, 0
      %v9768 = vsel %vm494, %v9599, 0
      %v9771 = vsel %vm494, %v9600, 0
      %v9774 = vsel %vm494, %v9601, 0
      %v9777 = vsel %vm494, %v9602, 0
      %v9780 = vsel %vm494, %v9603, 0
      %v9783 = vsel %vm494, %v9604, 0
      %v9786 = vsel %vm494, %v9605, 0
      %v9789 = vsel %vm494, %v9606, 0
      %v9792 = vsel %vm494, %v9607, 0
      %v9795 = vsel %vm494, %v9608, 0
      %v9798 = vsel %vm494, %v9609, 0
      %v9801 = vsel %vm494, %v9610, 0
      %v9804 = vsel %vm494, %v9611, 0
      %v9807 = vsel %vm687, %v9613, 0
      %9809 = vmatpush.msra.mxu0 0.0
      %9810 = vmatpush.msra.mxu0 0.0
      %9811 = vmatpush.msra.mxu0 0.0
      %9812 = vmatpush.msra.mxu0 0.0
      %9813 = vmatpush.msra.mxu0 0.0
      %9814 = vmatpush.msra.mxu0 0.0
      %9815 = vmatpush.msra.mxu0 0.0
      %9816 = vmatpush.msra.mxu0 0.0
      %9817 = vmatpush.msra.mxu0 0.0
      %9818 = vmatpush.msra.mxu0 0.0
      %9819 = vmatpush.msra.mxu0 0.0
      %9820 = vmatpush.msra.mxu0 0.0
      %9821 = vmatpush.msra.mxu0 0.0
      %9822 = vmatpush.msra.mxu0 0.0
      %9823 = vmatpush.msra.mxu0 0.0
      %9824 = vmatpush.msra.mxu0 %v9807
      %9825 = vmatmul.f32.gmra.mxu0 %v9615
      %v9826 = vpop.f32.mrf.mxu0
      %v9827 = vadd.f32 0.0, %v9826
      %9828 = vmatmul.f32.gmra.mxu0 %v9618
      %v9829 = vpop.f32.mrf.mxu0
      %v9830 = vadd.f32 0.0, %v9829
      %9831 = vmatmul.f32.gmra.mxu0 %v9621
      %v9832 = vpop.f32.mrf.mxu0
      %v9833 = vadd.f32 0.0, %v9832
      %9834 = vmatmul.f32.gmra.mxu0 %v9624
      %v9835 = vpop.f32.mrf.mxu0
      %v9836 = vadd.f32 0.0, %v9835
      %9837 = vmatmul.f32.gmra.mxu0 %v9627
      %v9838 = vpop.f32.mrf.mxu0
      %v9839 = vadd.f32 0.0, %v9838
      %9840 = vmatmul.f32.gmra.mxu0 %v9630
      %v9841 = vpop.f32.mrf.mxu0
      %v9842 = vadd.f32 0.0, %v9841
      %9843 = vmatmul.f32.gmra.mxu0 %v9633
      %v9844 = vpop.f32.mrf.mxu0
      %v9845 = vadd.f32 0.0, %v9844
      %9846 = vmatmul.f32.gmra.mxu0 %v9636
      %v9847 = vpop.f32.mrf.mxu0
      %v9848 = vadd.f32 0.0, %v9847
      %9849 = vmatmul.f32.gmra.mxu0 %v9639
      %v9850 = vpop.f32.mrf.mxu0
      %v9851 = vadd.f32 0.0, %v9850
      %9852 = vmatmul.f32.gmra.mxu0 %v9642
      %v9853 = vpop.f32.mrf.mxu0
      %v9854 = vadd.f32 0.0, %v9853
      %9855 = vmatmul.f32.gmra.mxu0 %v9645
      %v9856 = vpop.f32.mrf.mxu0
      %v9857 = vadd.f32 0.0, %v9856
      %9858 = vmatmul.f32.gmra.mxu0 %v9648
      %v9859 = vpop.f32.mrf.mxu0
      %v9860 = vadd.f32 0.0, %v9859
      %9861 = vmatmul.f32.gmra.mxu0 %v9651
      %v9862 = vpop.f32.mrf.mxu0
      %v9863 = vadd.f32 0.0, %v9862
      %9864 = vmatmul.f32.gmra.mxu0 %v9654
      %v9865 = vpop.f32.mrf.mxu0
      %v9866 = vadd.f32 0.0, %v9865
      %9867 = vmatmul.f32.gmra.mxu0 %v9657
      %v9868 = vpop.f32.mrf.mxu0
      %v9869 = vadd.f32 0.0, %v9868
      %9870 = vmatmul.f32.gmra.mxu0 %v9660
      %v9871 = vpop.f32.mrf.mxu0
      %v9872 = vadd.f32 0.0, %v9871
      %9873 = vmatmul.f32.gmra.mxu0 %v9663
      %v9874 = vpop.f32.mrf.mxu0
      %v9875 = vadd.f32 0.0, %v9874
      %9876 = vmatmul.f32.gmra.mxu0 %v9666
      %v9877 = vpop.f32.mrf.mxu0
      %v9878 = vadd.f32 0.0, %v9877
      %9879 = vmatmul.f32.gmra.mxu0 %v9669
      %v9880 = vpop.f32.mrf.mxu0
      %v9881 = vadd.f32 0.0, %v9880
      %9882 = vmatmul.f32.gmra.mxu0 %v9672
      %v9883 = vpop.f32.mrf.mxu0
      %v9884 = vadd.f32 0.0, %v9883
      %9885 = vmatmul.f32.gmra.mxu0 %v9675
      %v9886 = vpop.f32.mrf.mxu0
      %v9887 = vadd.f32 0.0, %v9886
      %9888 = vmatmul.f32.gmra.mxu0 %v9678
      %v9889 = vpop.f32.mrf.mxu0
      %v9890 = vadd.f32 0.0, %v9889
      %9891 = vmatmul.f32.gmra.mxu0 %v9681
      %v9892 = vpop.f32.mrf.mxu0
      %v9893 = vadd.f32 0.0, %v9892
      %9894 = vmatmul.f32.gmra.mxu0 %v9684
      %v9895 = vpop.f32.mrf.mxu0
      %v9896 = vadd.f32 0.0, %v9895
      %9897 = vmatmul.f32.gmra.mxu0 %v9687
      %v9898 = vpop.f32.mrf.mxu0
      %v9899 = vadd.f32 0.0, %v9898
      %9900 = vmatmul.f32.gmra.mxu0 %v9690
      %v9901 = vpop.f32.mrf.mxu0
      %v9902 = vadd.f32 0.0, %v9901
      %9903 = vmatmul.f32.gmra.mxu0 %v9693
      %v9904 = vpop.f32.mrf.mxu0
      %v9905 = vadd.f32 0.0, %v9904
      %9906 = vmatmul.f32.gmra.mxu0 %v9696
      %v9907 = vpop.f32.mrf.mxu0
      %v9908 = vadd.f32 0.0, %v9907
      %9909 = vmatmul.f32.gmra.mxu0 %v9699
      %v9910 = vpop.f32.mrf.mxu0
      %v9911 = vadd.f32 0.0, %v9910
      %9912 = vmatmul.f32.gmra.mxu0 %v9702
      %v9913 = vpop.f32.mrf.mxu0
      %v9914 = vadd.f32 0.0, %v9913
      %9915 = vmatmul.f32.gmra.mxu0 %v9705
      %v9916 = vpop.f32.mrf.mxu0
      %v9917 = vadd.f32 0.0, %v9916
      %9918 = vmatmul.f32.gmra.mxu0 %v9708
      %v9919 = vpop.f32.mrf.mxu0
      %v9920 = vadd.f32 0.0, %v9919
      %9921 = vmatmul.f32.gmra.mxu0 %v9711
      %v9922 = vpop.f32.mrf.mxu0
      %v9923 = vadd.f32 0.0, %v9922
      %9924 = vmatmul.f32.gmra.mxu0 %v9714
      %v9925 = vpop.f32.mrf.mxu0
      %v9926 = vadd.f32 0.0, %v9925
      %9927 = vmatmul.f32.gmra.mxu0 %v9717
      %v9928 = vpop.f32.mrf.mxu0
      %v9929 = vadd.f32 0.0, %v9928
      %9930 = vmatmul.f32.gmra.mxu0 %v9720
      %v9931 = vpop.f32.mrf.mxu0
      %v9932 = vadd.f32 0.0, %v9931
      %9933 = vmatmul.f32.gmra.mxu0 %v9723
      %v9934 = vpop.f32.mrf.mxu0
      %v9935 = vadd.f32 0.0, %v9934
      %9936 = vmatmul.f32.gmra.mxu0 %v9726
      %v9937 = vpop.f32.mrf.mxu0
      %v9938 = vadd.f32 0.0, %v9937
      %9939 = vmatmul.f32.gmra.mxu0 %v9729
      %v9940 = vpop.f32.mrf.mxu0
      %v9941 = vadd.f32 0.0, %v9940
      %9942 = vmatmul.f32.gmra.mxu0 %v9732
      %v9943 = vpop.f32.mrf.mxu0
      %v9944 = vadd.f32 0.0, %v9943
      %9945 = vmatmul.f32.gmra.mxu0 %v9735
      %v9946 = vpop.f32.mrf.mxu0
      %v9947 = vadd.f32 0.0, %v9946
      %9948 = vmatmul.f32.gmra.mxu0 %v9738
      %v9949 = vpop.f32.mrf.mxu0
      %v9950 = vadd.f32 0.0, %v9949
      %9951 = vmatmul.f32.gmra.mxu0 %v9741
      %v9952 = vpop.f32.mrf.mxu0
      %v9953 = vadd.f32 0.0, %v9952
      %9954 = vmatmul.f32.gmra.mxu0 %v9744
      %v9955 = vpop.f32.mrf.mxu0
      %v9956 = vadd.f32 0.0, %v9955
      %9957 = vmatmul.f32.gmra.mxu0 %v9747
      %v9958 = vpop.f32.mrf.mxu0
      %v9959 = vadd.f32 0.0, %v9958
      %9960 = vmatmul.f32.gmra.mxu0 %v9750
      %v9961 = vpop.f32.mrf.mxu0
      %v9962 = vadd.f32 0.0, %v9961
      %9963 = vmatmul.f32.gmra.mxu0 %v9753
      %v9964 = vpop.f32.mrf.mxu0
      %v9965 = vadd.f32 0.0, %v9964
      %9966 = vmatmul.f32.gmra.mxu0 %v9756
      %v9967 = vpop.f32.mrf.mxu0
      %v9968 = vadd.f32 0.0, %v9967
      %9969 = vmatmul.f32.gmra.mxu0 %v9759
      %v9970 = vpop.f32.mrf.mxu0
      %v9971 = vadd.f32 0.0, %v9970
      %9972 = vmatmul.f32.gmra.mxu0 %v9762
      %v9973 = vpop.f32.mrf.mxu0
      %v9974 = vadd.f32 0.0, %v9973
      %9975 = vmatmul.f32.gmra.mxu0 %v9765
      %v9976 = vpop.f32.mrf.mxu0
      %v9977 = vadd.f32 0.0, %v9976
      %9978 = vmatmul.f32.gmra.mxu0 %v9768
      %v9979 = vpop.f32.mrf.mxu0
      %v9980 = vadd.f32 0.0, %v9979
      %9981 = vmatmul.f32.gmra.mxu0 %v9771
      %v9982 = vpop.f32.mrf.mxu0
      %v9983 = vadd.f32 0.0, %v9982
      %9984 = vmatmul.f32.gmra.mxu0 %v9774
      %v9985 = vpop.f32.mrf.mxu0
      %v9986 = vadd.f32 0.0, %v9985
      %9987 = vmatmul.f32.gmra.mxu0 %v9777
      %v9988 = vpop.f32.mrf.mxu0
      %v9989 = vadd.f32 0.0, %v9988
      %9990 = vmatmul.f32.gmra.mxu0 %v9780
      %v9991 = vpop.f32.mrf.mxu0
      %v9992 = vadd.f32 0.0, %v9991
      %9993 = vmatmul.f32.gmra.mxu0 %v9783
      %v9994 = vpop.f32.mrf.mxu0
      %v9995 = vadd.f32 0.0, %v9994
      %9996 = vmatmul.f32.gmra.mxu0 %v9786
      %v9997 = vpop.f32.mrf.mxu0
      %v9998 = vadd.f32 0.0, %v9997
      %9999 = vmatmul.f32.gmra.mxu0 %v9789
      %v10000 = vpop.f32.mrf.mxu0
      %v10001 = vadd.f32 0.0, %v10000
      %10002 = vmatmul.f32.gmra.mxu0 %v9792
      %v10003 = vpop.f32.mrf.mxu0
      %v10004 = vadd.f32 0.0, %v10003
      %10005 = vmatmul.f32.gmra.mxu0 %v9795
      %v10006 = vpop.f32.mrf.mxu0
      %v10007 = vadd.f32 0.0, %v10006
      %10008 = vmatmul.f32.gmra.mxu0 %v9798
      %v10009 = vpop.f32.mrf.mxu0
      %v10010 = vadd.f32 0.0, %v10009
      %10011 = vmatmul.f32.gmra.mxu0 %v9801
      %v10012 = vpop.f32.mrf.mxu0
      %v10013 = vadd.f32 0.0, %v10012
      %10014 = vmatmul.f32.gmra.mxu0 %v9804
      %v10015 = vpop.f32.mrf.mxu0
      %v10016 = vadd.f32 0.0, %v10015
      %10017 = vdwg.mxu0
      %v10018 = vadd.f32 %v9484, %v9827
      %v10019 = vadd.f32 %v9485, %v9830
      %v10020 = vadd.f32 %v9486, %v9833
      %v10021 = vadd.f32 %v9487, %v9836
      %v10022 = vadd.f32 %v9488, %v9839
      %v10023 = vadd.f32 %v9489, %v9842
      %v10024 = vadd.f32 %v9490, %v9845
      %v10025 = vadd.f32 %v9491, %v9848
      %v10026 = vadd.f32 %v9492, %v9851
      %v10027 = vadd.f32 %v9493, %v9854
      %v10028 = vadd.f32 %v9494, %v9857
      %v10029 = vadd.f32 %v9495, %v9860
      %v10030 = vadd.f32 %v9496, %v9863
      %v10031 = vadd.f32 %v9497, %v9866
      %v10032 = vadd.f32 %v9498, %v9869
      %v10033 = vadd.f32 %v9499, %v9872
      %v10034 = vadd.f32 %v9500, %v9875
      %v10035 = vadd.f32 %v9501, %v9878
      %v10036 = vadd.f32 %v9502, %v9881
      %v10037 = vadd.f32 %v9503, %v9884
      %v10038 = vadd.f32 %v9504, %v9887
      %v10039 = vadd.f32 %v9505, %v9890
      %v10040 = vadd.f32 %v9506, %v9893
      %v10041 = vadd.f32 %v9507, %v9896
      %v10042 = vadd.f32 %v9508, %v9899
      %v10043 = vadd.f32 %v9509, %v9902
      %v10044 = vadd.f32 %v9510, %v9905
      %v10045 = vadd.f32 %v9511, %v9908
      %v10046 = vadd.f32 %v9512, %v9911
      %v10047 = vadd.f32 %v9513, %v9914
      %v10048 = vadd.f32 %v9514, %v9917
      %v10049 = vadd.f32 %v9515, %v9920
      %v10050 = vadd.f32 %v9516, %v9923
      %v10051 = vadd.f32 %v9517, %v9926
      %v10052 = vadd.f32 %v9518, %v9929
      %v10053 = vadd.f32 %v9519, %v9932
      %v10054 = vadd.f32 %v9520, %v9935
      %v10055 = vadd.f32 %v9521, %v9938
      %v10056 = vadd.f32 %v9522, %v9941
      %v10057 = vadd.f32 %v9523, %v9944
      %v10058 = vadd.f32 %v9524, %v9947
      %v10059 = vadd.f32 %v9525, %v9950
      %v10060 = vadd.f32 %v9526, %v9953
      %v10061 = vadd.f32 %v9527, %v9956
      %v10062 = vadd.f32 %v9528, %v9959
      %v10063 = vadd.f32 %v9529, %v9962
      %v10064 = vadd.f32 %v9530, %v9965
      %v10065 = vadd.f32 %v9531, %v9968
      %v10066 = vadd.f32 %v9532, %v9971
      %v10067 = vadd.f32 %v9533, %v9974
      %v10068 = vadd.f32 %v9534, %v9977
      %v10069 = vadd.f32 %v9535, %v9980
      %v10070 = vadd.f32 %v9536, %v9983
      %v10071 = vadd.f32 %v9537, %v9986
      %v10072 = vadd.f32 %v9538, %v9989
      %v10073 = vadd.f32 %v9539, %v9992
      %v10074 = vadd.f32 %v9540, %v9995
      %v10075 = vadd.f32 %v9541, %v9998
      %v10076 = vadd.f32 %v9542, %v10001
      %v10077 = vadd.f32 %v9543, %v10004
      %v10078 = vadd.f32 %v9544, %v10007
      %v10079 = vadd.f32 %v9545, %v10010
      %v10080 = vadd.f32 %v9546, %v10013
      %v10081 = vadd.f32 %v9547, %v10016
      %v10082 = vld [vmem:[%s349] sm:$0x1]
      %v10083 = vld [vmem:[%s349 + $0x1] sm:$0x1]
      %v10086 = vperm.slane %v10082, 0
      %v10087 = vperm.slane %v10083, 0
      %v10090 = vmul.f32 %v10018, %v10086
      %v10091 = vmul.f32 %v10019, %v10086
      %v10092 = vmul.f32 %v10020, %v10086
      %v10093 = vmul.f32 %v10021, %v10086
      %v10094 = vmul.f32 %v10022, %v10086
      %v10095 = vmul.f32 %v10023, %v10086
      %v10096 = vmul.f32 %v10024, %v10086
      %v10097 = vmul.f32 %v10025, %v10086
      %v10098 = vmul.f32 %v10026, %v10086
      %v10099 = vmul.f32 %v10027, %v10086
      %v10100 = vmul.f32 %v10028, %v10086
      %v10101 = vmul.f32 %v10029, %v10086
      %v10102 = vmul.f32 %v10030, %v10086
      %v10103 = vmul.f32 %v10031, %v10086
      %v10104 = vmul.f32 %v10032, %v10086
      %v10105 = vmul.f32 %v10033, %v10086
      %v10106 = vmul.f32 %v10034, %v10086
      %v10107 = vmul.f32 %v10035, %v10086
      %v10108 = vmul.f32 %v10036, %v10086
      %v10109 = vmul.f32 %v10037, %v10086
      %v10110 = vmul.f32 %v10038, %v10086
      %v10111 = vmul.f32 %v10039, %v10086
      %v10112 = vmul.f32 %v10040, %v10086
      %v10113 = vmul.f32 %v10041, %v10086
      %v10114 = vmul.f32 %v10042, %v10086
      %v10115 = vmul.f32 %v10043, %v10086
      %v10116 = vmul.f32 %v10044, %v10086
      %v10117 = vmul.f32 %v10045, %v10086
      %v10118 = vmul.f32 %v10046, %v10086
      %v10119 = vmul.f32 %v10047, %v10086
      %v10120 = vmul.f32 %v10048, %v10086
      %v10121 = vmul.f32 %v10049, %v10086
      %v10122 = vmul.f32 %v10050, %v10087
      %v10123 = vmul.f32 %v10051, %v10087
      %v10124 = vmul.f32 %v10052, %v10087
      %v10125 = vmul.f32 %v10053, %v10087
      %v10126 = vmul.f32 %v10054, %v10087
      %v10127 = vmul.f32 %v10055, %v10087
      %v10128 = vmul.f32 %v10056, %v10087
      %v10129 = vmul.f32 %v10057, %v10087
      %v10130 = vmul.f32 %v10058, %v10087
      %v10131 = vmul.f32 %v10059, %v10087
      %v10132 = vmul.f32 %v10060, %v10087
      %v10133 = vmul.f32 %v10061, %v10087
      %v10134 = vmul.f32 %v10062, %v10087
      %v10135 = vmul.f32 %v10063, %v10087
      %v10136 = vmul.f32 %v10064, %v10087
      %v10137 = vmul.f32 %v10065, %v10087
      %v10138 = vmul.f32 %v10066, %v10087
      %v10139 = vmul.f32 %v10067, %v10087
      %v10140 = vmul.f32 %v10068, %v10087
      %v10141 = vmul.f32 %v10069, %v10087
      %v10142 = vmul.f32 %v10070, %v10087
      %v10143 = vmul.f32 %v10071, %v10087
      %v10144 = vmul.f32 %v10072, %v10087
      %v10145 = vmul.f32 %v10073, %v10087
      %v10146 = vmul.f32 %v10074, %v10087
      %v10147 = vmul.f32 %v10075, %v10087
      %v10148 = vmul.f32 %v10076, %v10087
      %v10149 = vmul.f32 %v10077, %v10087
      %v10150 = vmul.f32 %v10078, %v10087
      %v10151 = vmul.f32 %v10079, %v10087
      %v10152 = vmul.f32 %v10080, %v10087
      %v10153 = vmul.f32 %v10081, %v10087
      %v10154 = vld [vmem:[%s354] sm:$0x1]
      %v10155 = vld [vmem:[%s354 + $0x1] sm:$0x1]
      %v10158 = vperm.slane %v10154, 0
      %v10159 = vperm.slane %v10155, 0
      %v10162 = vadd.f32 %v10090, %v10158
      %v10163 = vadd.f32 %v10091, %v10158
      %v10164 = vadd.f32 %v10092, %v10158
      %v10165 = vadd.f32 %v10093, %v10158
      %v10166 = vadd.f32 %v10094, %v10158
      %v10167 = vadd.f32 %v10095, %v10158
      %v10168 = vadd.f32 %v10096, %v10158
      %v10169 = vadd.f32 %v10097, %v10158
      %v10170 = vadd.f32 %v10098, %v10158
      %v10171 = vadd.f32 %v10099, %v10158
      %v10172 = vadd.f32 %v10100, %v10158
      %v10173 = vadd.f32 %v10101, %v10158
      %v10174 = vadd.f32 %v10102, %v10158
      %v10175 = vadd.f32 %v10103, %v10158
      %v10176 = vadd.f32 %v10104, %v10158
      %v10177 = vadd.f32 %v10105, %v10158
      %v10178 = vadd.f32 %v10106, %v10158
      %v10179 = vadd.f32 %v10107, %v10158
      %v10180 = vadd.f32 %v10108, %v10158
      %v10181 = vadd.f32 %v10109, %v10158
      %v10182 = vadd.f32 %v10110, %v10158
      %v10183 = vadd.f32 %v10111, %v10158
      %v10184 = vadd.f32 %v10112, %v10158
      %v10185 = vadd.f32 %v10113, %v10158
      %v10186 = vadd.f32 %v10114, %v10158
      %v10187 = vadd.f32 %v10115, %v10158
      %v10188 = vadd.f32 %v10116, %v10158
      %v10189 = vadd.f32 %v10117, %v10158
      %v10190 = vadd.f32 %v10118, %v10158
      %v10191 = vadd.f32 %v10119, %v10158
      %v10192 = vadd.f32 %v10120, %v10158
      %v10193 = vadd.f32 %v10121, %v10158
      %v10194 = vadd.f32 %v10122, %v10159
      %v10195 = vadd.f32 %v10123, %v10159
      %v10196 = vadd.f32 %v10124, %v10159
      %v10197 = vadd.f32 %v10125, %v10159
      %v10198 = vadd.f32 %v10126, %v10159
      %v10199 = vadd.f32 %v10127, %v10159
      %v10200 = vadd.f32 %v10128, %v10159
      %v10201 = vadd.f32 %v10129, %v10159
      %v10202 = vadd.f32 %v10130, %v10159
      %v10203 = vadd.f32 %v10131, %v10159
      %v10204 = vadd.f32 %v10132, %v10159
      %v10205 = vadd.f32 %v10133, %v10159
      %v10206 = vadd.f32 %v10134, %v10159
      %v10207 = vadd.f32 %v10135, %v10159
      %v10208 = vadd.f32 %v10136, %v10159
      %v10209 = vadd.f32 %v10137, %v10159
      %v10210 = vadd.f32 %v10138, %v10159
      %v10211 = vadd.f32 %v10139, %v10159
      %v10212 = vadd.f32 %v10140, %v10159
      %v10213 = vadd.f32 %v10141, %v10159
      %v10214 = vadd.f32 %v10142, %v10159
      %v10215 = vadd.f32 %v10143, %v10159
      %v10216 = vadd.f32 %v10144, %v10159
      %v10217 = vadd.f32 %v10145, %v10159
      %v10218 = vadd.f32 %v10146, %v10159
      %v10219 = vadd.f32 %v10147, %v10159
      %v10220 = vadd.f32 %v10148, %v10159
      %v10221 = vadd.f32 %v10149, %v10159
      %v10222 = vadd.f32 %v10150, %v10159
      %v10223 = vadd.f32 %v10151, %v10159
      %v10224 = vadd.f32 %v10152, %v10159
      %v10225 = vadd.f32 %v10153, %v10159
      %v10226 = vld [vmem:[%s1838 + $0x1] sm:$0xff]
      %v10227 = vld [vmem:[%s1838 + $0x9] sm:$0xff]
      %v10228 = vld [vmem:[%s1838 + $0x19] sm:$0xff]
      %v10229 = vld [vmem:[%s1838 + $0x21] sm:$0xff]
      %v10230 = vld [vmem:[%s1838 + $0x31] sm:$0xff]
      %v10231 = vld [vmem:[%s1838 + $0x39] sm:$0xff]
      %v10232 = vld [vmem:[%s1838 + $0x49] sm:$0xff]
      %v10233 = vld [vmem:[%s1838 + $0x51] sm:$0xff]
      %v10234 = vld [vmem:[%s1838 + $0x61] sm:$0xff]
      %v10235 = vld [vmem:[%s1838 + $0x69] sm:$0xff]
      %v10236 = vld [vmem:[%s1838 + $0x79] sm:$0xff]
      %v10237 = vld [vmem:[%s1838 + $0x81] sm:$0xff]
      %v10238 = vld [vmem:[%s1838 + $0x91] sm:$0xff]
      %v10239 = vld [vmem:[%s1838 + $0x99] sm:$0xff]
      %v10240 = vld [vmem:[%s1838 + $0xa9] sm:$0xff]
      %v10241 = vld [vmem:[%s1838 + $0xb1] sm:$0xff]
      %v10242 = vld [vmem:[%s1838 + $0xc1] sm:$0xff]
      %v10243 = vld [vmem:[%s1838 + $0xc9] sm:$0xff]
      %v10244 = vld [vmem:[%s1838 + $0xd9] sm:$0xff]
      %v10245 = vld [vmem:[%s1838 + $0xe1] sm:$0xff]
      %v10246 = vld [vmem:[%s1838 + $0xf1] sm:$0xff]
      %v10247 = vld [vmem:[%s1838 + $0xf9] sm:$0xff]
      %v10248 = vld [vmem:[%s1838 + $0x109] sm:$0xff]
      %v10249 = vld [vmem:[%s1838 + $0x111] sm:$0xff]
      %v10250 = vld [vmem:[%s1838 + $0x121] sm:$0xff]
      %v10251 = vld [vmem:[%s1838 + $0x129] sm:$0xff]
      %v10252 = vld [vmem:[%s1838 + $0x139] sm:$0xff]
      %v10253 = vld [vmem:[%s1838 + $0x141] sm:$0xff]
      %v10254 = vld [vmem:[%s1838 + $0x151] sm:$0xff]
      %v10255 = vld [vmem:[%s1838 + $0x159] sm:$0xff]
      %v10256 = vld [vmem:[%s1838 + $0x169] sm:$0xff]
      %v10257 = vld [vmem:[%s1838 + $0x171] sm:$0xff]
      %v10258 = vld [vmem:[%s1838 + $0x1b1] sm:$0xff]
      %v10259 = vld [vmem:[%s1838 + $0x1b9] sm:$0xff]
      %v10260 = vld [vmem:[%s1838 + $0x1c9] sm:$0xff]
      %v10261 = vld [vmem:[%s1838 + $0x1d1] sm:$0xff]
      %v10262 = vld [vmem:[%s1838 + $0x1e1] sm:$0xff]
      %v10263 = vld [vmem:[%s1838 + $0x1e9] sm:$0xff]
      %v10264 = vld [vmem:[%s1838 + $0x1f9] sm:$0xff]
      %v10265 = vld [vmem:[%s1838 + $0x201] sm:$0xff]
      %v10266 = vld [vmem:[%s1838 + $0x211] sm:$0xff]
      %v10267 = vld [vmem:[%s1838 + $0x219] sm:$0xff]
      %v10268 = vld [vmem:[%s1838 + $0x229] sm:$0xff]
      %v10269 = vld [vmem:[%s1838 + $0x231] sm:$0xff]
      %v10270 = vld [vmem:[%s1838 + $0x241] sm:$0xff]
      %v10271 = vld [vmem:[%s1838 + $0x249] sm:$0xff]
      %v10272 = vld [vmem:[%s1838 + $0x259] sm:$0xff]
      %v10273 = vld [vmem:[%s1838 + $0x261] sm:$0xff]
      %v10274 = vld [vmem:[%s1838 + $0x271] sm:$0xff]
      %v10275 = vld [vmem:[%s1838 + $0x279] sm:$0xff]
      %v10276 = vld [vmem:[%s1838 + $0x289] sm:$0xff]
      %v10277 = vld [vmem:[%s1838 + $0x291] sm:$0xff]
      %v10278 = vld [vmem:[%s1838 + $0x2a1] sm:$0xff]
      %v10279 = vld [vmem:[%s1838 + $0x2a9] sm:$0xff]
      %v10280 = vld [vmem:[%s1838 + $0x2b9] sm:$0xff]
      %v10281 = vld [vmem:[%s1838 + $0x2c1] sm:$0xff]
      %v10282 = vld [vmem:[%s1838 + $0x2d1] sm:$0xff]
      %v10283 = vld [vmem:[%s1838 + $0x2d9] sm:$0xff]
      %v10284 = vld [vmem:[%s1838 + $0x2e9] sm:$0xff]
      %v10285 = vld [vmem:[%s1838 + $0x2f1] sm:$0xff]
      %v10286 = vld [vmem:[%s1838 + $0x301] sm:$0xff]
      %v10287 = vld [vmem:[%s1838 + $0x309] sm:$0xff]
      %v10288 = vld [vmem:[%s1838 + $0x319] sm:$0xff]
      %v10289 = vld [vmem:[%s1838 + $0x321] sm:$0xff]
      %v10290 = vadd.f32 %v10162, %v10226
      %v10291 = vadd.f32 %v10163, %v10227
      %v10292 = vadd.f32 %v10164, %v10228
      %v10293 = vadd.f32 %v10165, %v10229
      %v10294 = vadd.f32 %v10166, %v10230
      %v10295 = vadd.f32 %v10167, %v10231
      %v10296 = vadd.f32 %v10168, %v10232
      %v10297 = vadd.f32 %v10169, %v10233
      %v10298 = vadd.f32 %v10170, %v10234
      %v10299 = vadd.f32 %v10171, %v10235
      %v10300 = vadd.f32 %v10172, %v10236
      %v10301 = vadd.f32 %v10173, %v10237
      %v10302 = vadd.f32 %v10174, %v10238
      %v10303 = vadd.f32 %v10175, %v10239
      %v10304 = vadd.f32 %v10176, %v10240
      %v10305 = vadd.f32 %v10177, %v10241
      %v10306 = vadd.f32 %v10178, %v10242
      %v10307 = vadd.f32 %v10179, %v10243
      %v10308 = vadd.f32 %v10180, %v10244
      %v10309 = vadd.f32 %v10181, %v10245
      %v10310 = vadd.f32 %v10182, %v10246
      %v10311 = vadd.f32 %v10183, %v10247
      %v10312 = vadd.f32 %v10184, %v10248
      %v10313 = vadd.f32 %v10185, %v10249
      %v10314 = vadd.f32 %v10186, %v10250
      %v10315 = vadd.f32 %v10187, %v10251
      %v10316 = vadd.f32 %v10188, %v10252
      %v10317 = vadd.f32 %v10189, %v10253
      %v10318 = vadd.f32 %v10190, %v10254
      %v10319 = vadd.f32 %v10191, %v10255
      %v10320 = vadd.f32 %v10192, %v10256
      %v10321 = vadd.f32 %v10193, %v10257
      %v10322 = vadd.f32 %v10194, %v10258
      %v10323 = vadd.f32 %v10195, %v10259
      %v10324 = vadd.f32 %v10196, %v10260
      %v10325 = vadd.f32 %v10197, %v10261
      %v10326 = vadd.f32 %v10198, %v10262
      %v10327 = vadd.f32 %v10199, %v10263
      %v10328 = vadd.f32 %v10200, %v10264
      %v10329 = vadd.f32 %v10201, %v10265
      %v10330 = vadd.f32 %v10202, %v10266
      %v10331 = vadd.f32 %v10203, %v10267
      %v10332 = vadd.f32 %v10204, %v10268
      %v10333 = vadd.f32 %v10205, %v10269
      %v10334 = vadd.f32 %v10206, %v10270
      %v10335 = vadd.f32 %v10207, %v10271
      %v10336 = vadd.f32 %v10208, %v10272
      %v10337 = vadd.f32 %v10209, %v10273
      %v10338 = vadd.f32 %v10210, %v10274
      %v10339 = vadd.f32 %v10211, %v10275
      %v10340 = vadd.f32 %v10212, %v10276
      %v10341 = vadd.f32 %v10213, %v10277
      %v10342 = vadd.f32 %v10214, %v10278
      %v10343 = vadd.f32 %v10215, %v10279
      %v10344 = vadd.f32 %v10216, %v10280
      %v10345 = vadd.f32 %v10217, %v10281
      %v10346 = vadd.f32 %v10218, %v10282
      %v10347 = vadd.f32 %v10219, %v10283
      %v10348 = vadd.f32 %v10220, %v10284
      %v10349 = vadd.f32 %v10221, %v10285
      %v10350 = vadd.f32 %v10222, %v10286
      %v10351 = vadd.f32 %v10223, %v10287
      %v10352 = vadd.f32 %v10224, %v10288
      %v10353 = vadd.f32 %v10225, %v10289
      %v10354 = vmax.f32 %v10290, 0.0
      %v10355 = vmax.f32 %v10291, 0.0
      %v10356 = vmax.f32 %v10292, 0.0
      %v10357 = vmax.f32 %v10293, 0.0
      %v10358 = vmax.f32 %v10294, 0.0
      %v10359 = vmax.f32 %v10295, 0.0
      %v10360 = vmax.f32 %v10296, 0.0
      %v10361 = vmax.f32 %v10297, 0.0
      %v10362 = vmax.f32 %v10298, 0.0
      %v10363 = vmax.f32 %v10299, 0.0
      %v10364 = vmax.f32 %v10300, 0.0
      %v10365 = vmax.f32 %v10301, 0.0
      %v10366 = vmax.f32 %v10302, 0.0
      %v10367 = vmax.f32 %v10303, 0.0
      %v10368 = vmax.f32 %v10304, 0.0
      %v10369 = vmax.f32 %v10305, 0.0
      %v10370 = vmax.f32 %v10306, 0.0
      %v10371 = vmax.f32 %v10307, 0.0
      %v10372 = vmax.f32 %v10308, 0.0
      %v10373 = vmax.f32 %v10309, 0.0
      %v10374 = vmax.f32 %v10310, 0.0
      %v10375 = vmax.f32 %v10311, 0.0
      %v10376 = vmax.f32 %v10312, 0.0
      %v10377 = vmax.f32 %v10313, 0.0
      %v10378 = vmax.f32 %v10314, 0.0
      %v10379 = vmax.f32 %v10315, 0.0
      %v10380 = vmax.f32 %v10316, 0.0
      %v10381 = vmax.f32 %v10317, 0.0
      %v10382 = vmax.f32 %v10318, 0.0
      %v10383 = vmax.f32 %v10319, 0.0
      %v10384 = vmax.f32 %v10320, 0.0
      %v10385 = vmax.f32 %v10321, 0.0
      %v10386 = vmax.f32 %v10322, 0.0
      %v10387 = vmax.f32 %v10323, 0.0
      %v10388 = vmax.f32 %v10324, 0.0
      %v10389 = vmax.f32 %v10325, 0.0
      %v10390 = vmax.f32 %v10326, 0.0
      %v10391 = vmax.f32 %v10327, 0.0
      %v10392 = vmax.f32 %v10328, 0.0
      %v10393 = vmax.f32 %v10329, 0.0
      %v10394 = vmax.f32 %v10330, 0.0
      %v10395 = vmax.f32 %v10331, 0.0
      %v10396 = vmax.f32 %v10332, 0.0
      %v10397 = vmax.f32 %v10333, 0.0
      %v10398 = vmax.f32 %v10334, 0.0
      %v10399 = vmax.f32 %v10335, 0.0
      %v10400 = vmax.f32 %v10336, 0.0
      %v10401 = vmax.f32 %v10337, 0.0
      %v10402 = vmax.f32 %v10338, 0.0
      %v10403 = vmax.f32 %v10339, 0.0
      %v10404 = vmax.f32 %v10340, 0.0
      %v10405 = vmax.f32 %v10341, 0.0
      %v10406 = vmax.f32 %v10342, 0.0
      %v10407 = vmax.f32 %v10343, 0.0
      %v10408 = vmax.f32 %v10344, 0.0
      %v10409 = vmax.f32 %v10345, 0.0
      %v10410 = vmax.f32 %v10346, 0.0
      %v10411 = vmax.f32 %v10347, 0.0
      %v10412 = vmax.f32 %v10348, 0.0
      %v10413 = vmax.f32 %v10349, 0.0
      %v10414 = vmax.f32 %v10350, 0.0
      %v10415 = vmax.f32 %v10351, 0.0
      %v10416 = vmax.f32 %v10352, 0.0
      %v10417 = vmax.f32 %v10353, 0.0
      %10418 = vst.msk [vmem:[%s361] sm:$0xff] %vm494, %v10354
      %10419 = vst.msk [vmem:[%s361 + $0x8] sm:$0xff] %vm494, %v10355
      %10420 = vst.msk [vmem:[%s361 + $0x10] sm:$0xff] %vm494, %v10356
      %10421 = vst.msk [vmem:[%s361 + $0x18] sm:$0xff] %vm494, %v10357
      %10422 = vst.msk [vmem:[%s361 + $0x20] sm:$0xff] %vm494, %v10358
      %10423 = vst.msk [vmem:[%s361 + $0x28] sm:$0xff] %vm494, %v10359
      %10424 = vst.msk [vmem:[%s361 + $0x30] sm:$0xff] %vm494, %v10360
      %10425 = vst.msk [vmem:[%s361 + $0x38] sm:$0xff] %vm494, %v10361
      %10426 = vst.msk [vmem:[%s361 + $0x40] sm:$0xff] %vm494, %v10362
      %10427 = vst.msk [vmem:[%s361 + $0x48] sm:$0xff] %vm494, %v10363
      %10428 = vst.msk [vmem:[%s361 + $0x50] sm:$0xff] %vm494, %v10364
      %10429 = vst.msk [vmem:[%s361 + $0x58] sm:$0xff] %vm494, %v10365
      %10430 = vst.msk [vmem:[%s361 + $0x60] sm:$0xff] %vm494, %v10366
      %10431 = vst.msk [vmem:[%s361 + $0x68] sm:$0xff] %vm494, %v10367
      %10432 = vst.msk [vmem:[%s361 + $0x70] sm:$0xff] %vm494, %v10368
      %10433 = vst.msk [vmem:[%s361 + $0x78] sm:$0xff] %vm494, %v10369
      %10434 = vst.msk [vmem:[%s361 + $0x80] sm:$0xff] %vm494, %v10370
      %10435 = vst.msk [vmem:[%s361 + $0x88] sm:$0xff] %vm494, %v10371
      %10436 = vst.msk [vmem:[%s361 + $0x90] sm:$0xff] %vm494, %v10372
      %10437 = vst.msk [vmem:[%s361 + $0x98] sm:$0xff] %vm494, %v10373
      %10438 = vst.msk [vmem:[%s361 + $0xa0] sm:$0xff] %vm494, %v10374
      %10439 = vst.msk [vmem:[%s361 + $0xa8] sm:$0xff] %vm494, %v10375
      %10440 = vst.msk [vmem:[%s361 + $0xb0] sm:$0xff] %vm494, %v10376
      %10441 = vst.msk [vmem:[%s361 + $0xb8] sm:$0xff] %vm494, %v10377
      %10442 = vst.msk [vmem:[%s361 + $0xc0] sm:$0xff] %vm494, %v10378
      %10443 = vst.msk [vmem:[%s361 + $0xc8] sm:$0xff] %vm494, %v10379
      %10444 = vst.msk [vmem:[%s361 + $0xd0] sm:$0xff] %vm494, %v10380
      %10445 = vst.msk [vmem:[%s361 + $0xd8] sm:$0xff] %vm494, %v10381
      %10446 = vst.msk [vmem:[%s361 + $0xe0] sm:$0xff] %vm494, %v10382
      %10447 = vst.msk [vmem:[%s361 + $0xe8] sm:$0xff] %vm494, %v10383
      %10448 = vst.msk [vmem:[%s361 + $0xf0] sm:$0xff] %vm494, %v10384
      %10449 = vst.msk [vmem:[%s361 + $0xf8] sm:$0xff] %vm494, %v10385
      %10450 = vst.msk [vmem:[%s361 + $0x100] sm:$0xff] %vm494, %v10386
      %10451 = vst.msk [vmem:[%s361 + $0x108] sm:$0xff] %vm494, %v10387
      %10452 = vst.msk [vmem:[%s361 + $0x110] sm:$0xff] %vm494, %v10388
      %10453 = vst.msk [vmem:[%s361 + $0x118] sm:$0xff] %vm494, %v10389
      %10454 = vst.msk [vmem:[%s361 + $0x120] sm:$0xff] %vm494, %v10390
      %10455 = vst.msk [vmem:[%s361 + $0x128] sm:$0xff] %vm494, %v10391
      %10456 = vst.msk [vmem:[%s361 + $0x130] sm:$0xff] %vm494, %v10392
      %10457 = vst.msk [vmem:[%s361 + $0x138] sm:$0xff] %vm494, %v10393
      %10458 = vst.msk [vmem:[%s361 + $0x140] sm:$0xff] %vm494, %v10394
      %10459 = vst.msk [vmem:[%s361 + $0x148] sm:$0xff] %vm494, %v10395
      %10460 = vst.msk [vmem:[%s361 + $0x150] sm:$0xff] %vm494, %v10396
      %10461 = vst.msk [vmem:[%s361 + $0x158] sm:$0xff] %vm494, %v10397
      %10462 = vst.msk [vmem:[%s361 + $0x160] sm:$0xff] %vm494, %v10398
      %10463 = vst.msk [vmem:[%s361 + $0x168] sm:$0xff] %vm494, %v10399
      %10464 = vst.msk [vmem:[%s361 + $0x170] sm:$0xff] %vm494, %v10400
      %10465 = vst.msk [vmem:[%s361 + $0x178] sm:$0xff] %vm494, %v10401
      %10466 = vst.msk [vmem:[%s361 + $0x180] sm:$0xff] %vm494, %v10402
      %10467 = vst.msk [vmem:[%s361 + $0x188] sm:$0xff] %vm494, %v10403
      %10468 = vst.msk [vmem:[%s361 + $0x190] sm:$0xff] %vm494, %v10404
      %10469 = vst.msk [vmem:[%s361 + $0x198] sm:$0xff] %vm494, %v10405
      %10470 = vst.msk [vmem:[%s361 + $0x1a0] sm:$0xff] %vm494, %v10406
      %10471 = vst.msk [vmem:[%s361 + $0x1a8] sm:$0xff] %vm494, %v10407
      %10472 = vst.msk [vmem:[%s361 + $0x1b0] sm:$0xff] %vm494, %v10408
      %10473 = vst.msk [vmem:[%s361 + $0x1b8] sm:$0xff] %vm494, %v10409
      %10474 = vst.msk [vmem:[%s361 + $0x1c0] sm:$0xff] %vm494, %v10410
      %10475 = vst.msk [vmem:[%s361 + $0x1c8] sm:$0xff] %vm494, %v10411
      %10476 = vst.msk [vmem:[%s361 + $0x1d0] sm:$0xff] %vm494, %v10412
      %10477 = vst.msk [vmem:[%s361 + $0x1d8] sm:$0xff] %vm494, %v10413
      %10478 = vst.msk [vmem:[%s361 + $0x1e0] sm:$0xff] %vm494, %v10414
      %10479 = vst.msk [vmem:[%s361 + $0x1e8] sm:$0xff] %vm494, %v10415
      %10480 = vst.msk [vmem:[%s361 + $0x1f0] sm:$0xff] %vm494, %v10416
      %10481 = vst.msk [vmem:[%s361 + $0x1f8] sm:$0xff] %vm494, %v10417
      %s10482 = smul.u32 2, %s18
      %p10483 = scmp.lt.s32.totalorder %s10482, 9
      %s10484 = scalar_select %p10483, %s10482, 9
      %s10485 = smul.addr %s10484, 32
      %s10486 = smul.addr %s10485, 8
      %s10487 = scalar_lea.vmem %s7, %s10486
      // Predicated region
      $region49: #{tpu_custom_call.1} parent=47 // pred_check
        %p10488 = pneg %p208
      $region50: #{tpu_custom_call.1} parent=47 // pred_check_branch
        %10490 = sbr.rel (%p10488) target = $region52
      $region51: #{tpu_custom_call.1} parent=47 // pred_region
        %s10491 = smul.u32 2, %s18
      $region52: #{tpu_custom_call.1} parent=47 // pred_fallthru
        _
    $region48: #{tpu_custom_call.1} parent=5 // pred_fallthru
      _
    %p10492 = scmp.le.s32.totalorder 2, %s13
    // Predicated region
    $region53: #{tpu_custom_call.1} parent=5 // pred_check
      %p10493 = pneg %p10492
    $region54: #{tpu_custom_call.1} parent=5 // pred_check_branch
      %10495 = sbr.rel (%p10493) target = $region56
    $region55: #{tpu_custom_call.1} parent=5 // pred_region
      %s10496 = ssub.s32 %s13, 2
      // Predicated region
      $region57: #{tpu_custom_call.1} parent=55 // pred_check
        %p10497 = pneg %p214
      $region58: #{tpu_custom_call.1} parent=55 // pred_check_branch
        %10499 = sbr.rel (%p10497) target = $region60
      $region59: #{tpu_custom_call.1} parent=55 // pred_region
        %s10500 = smul.u32 2, %s19
        %p10501 = scmp.lt.s32.totalorder %s10500, 9
        %s10502 = scalar_select %p10501, %s10500, 9
        %s10503 = smul.addr %s10502, 32
        %s10504 = smul.addr %s10503, 8
        %s10505 = scalar_lea.vmem %s7, %s10504
      $region60: #{tpu_custom_call.1} parent=55 // pred_fallthru
        _
    $region56: #{tpu_custom_call.1} parent=5 // pred_fallthru
      _
  $region6: #{tpu_custom_call.1} parent=0 // loop_footer
    %s17 = sadd.s32 1, %s13
  $region7: #{tpu_custom_call.1} parent=0 // loop_footer_branch
    %12 = sbr.rel target = $region3
  $region8: #{tpu_custom_call.1} parent=0 // loop_exit
    _

</llo_original>
